<compile_context>
chip_gen: v7x
topology: tpu7x:2x2x1
jax: 0.10.0
libtpu: 0.0.40
codegen_flags: <defaults>
</compile_context>

<pallas_src>
import jax
import jax.numpy as jnp
from jax import lax
from jax.experimental import pallas as pl
from jax.experimental.pallas import tpu as pltpu


def _particle_filter_kernel(z_ref, obs_ref, noise_ref, u_ref, out_ref):
    D = z_ref.shape[1]
    T = noise_ref.shape[1]
    N = noise_ref.shape[3]

    # particles: (D, N)  -- state dim on sublanes, particles on the 128-lane axis
    p = jnp.broadcast_to(z_ref[0], (D, N)).astype(jnp.float32)
    # weights: (1, N)
    w = jnp.full((1, N), 1.0 / N, dtype=jnp.float32)

    # Hoisted (N, N) prefix masks: row = old particle i, col = summation index.
    row_i = lax.broadcasted_iota(jnp.int32, (N, N), 0)
    col_i = lax.broadcasted_iota(jnp.int32, (N, N), 1)
    tri_incl = (col_i <= row_i).astype(jnp.float32)   # inclusive prefix mask
    tri_excl = (col_i < row_i).astype(jnp.float32)    # exclusive prefix mask
    last_row = lax.broadcasted_iota(jnp.int32, (N, 1), 0) == (N - 1)

    for t in range(T):   # T is static and small -> full unroll
        # 1) transition: particles += 0.1 * N(0, 1)   (noise precomputed, (D, N))
        p = p + 0.1 * noise_ref[0, t]

        # 2) likelihood = exp(-0.5 * ||p - obs_t||^2) + 1e-8
        obs_t = obs_ref[0, :, pl.ds(t, 1)]                     # (D, 1), broadcast over lanes
        diff = p - obs_t
        sq = jnp.sum(diff * diff, axis=0, keepdims=True)       # (1, N) sublane reduce
        like = jnp.exp(-0.5 * sq) + 1e-8

        # 3) reweight + normalize
        w = w * like + 1e-10
        w = w / jnp.sum(w, axis=1, keepdims=True)

        # 4) multinomial resampling with replacement (inverse-CDF categorical).
        #    CDF bounds per old particle as (N, 1) columns via masked lane reductions
        #    (stays in f32, VPU/XLU only).
        cdf_hi = jnp.sum(tri_incl * w, axis=1, keepdims=True)  # inclusive cumsum (N, 1)
        cdf_lo = jnp.sum(tri_excl * w, axis=1, keepdims=True)  # exclusive cumsum (N, 1)
        cdf_hi = jnp.where(last_row, 1e30, cdf_hi)             # catch u >= cdf[-1] rounding

        u_t = u_ref[0, pl.ds(t, 1), :]                         # (1, N): one uniform per new slot
        sel = jnp.logical_and(cdf_lo <= u_t, u_t < cdf_hi).astype(jnp.float32)   # (N_old, N_new)

        # gather: new_p[:, j] = p[:, i*]  as one dense (D,N)@(N,N) matmul (128-lane output)
        p = jnp.dot(p, sel, preferred_element_type=jnp.float32,
                    precision=lax.Precision.HIGHEST)

        # NOTE: weights deliberately carry over un-permuted (matches the reference).

    # return particles.mean(dim=1)  -> lane reduce to (D, 1)
    out_ref[...] = jnp.mean(p, axis=1, keepdims=True)[None].astype(out_ref.dtype)


def particle_filter(z, observation, *, num_particles, seed=0):
    """z: (B, state_dim), observation: (B, obs_dim, T) with obs_dim == state_dim."""
    B, D = z.shape
    Bo, Do, T = observation.shape
    assert Bo == B and Do == D, "observation_dim must equal state_dim for the likelihood broadcast"
    N = num_particles

    z3 = z.astype(jnp.float32).reshape(B, D, 1)                # state dim on sublanes
    obs = observation.astype(jnp.float32)                      # (B, D, T), PyTorch layout as-is

    # Pre-generate all randomness (hoists PRNG/EUP off the serial time loop and keeps
    # the kernel free of TPU-only stateful PRNG primitives).
    key = jax.random.PRNGKey(seed)
    kn, ku = jax.random.split(key)
    noise = jax.random.normal(kn, (B, T, D, N), dtype=jnp.float32)   # transition noise
    unif = jax.random.uniform(ku, (B, T, N), dtype=jnp.float32)      # resampling uniforms

    out = pl.pallas_call(
        _particle_filter_kernel,
        out_shape=jax.ShapeDtypeStruct((B, D, 1), jnp.float32),
        grid=(B,),
        in_specs=[
            pl.BlockSpec((1, D, 1), lambda b: (b, 0, 0)),        # z
            pl.BlockSpec((1, D, T), lambda b: (b, 0, 0)),        # observation
            pl.BlockSpec((1, T, D, N), lambda b: (b, 0, 0, 0)),  # transition noise
            pl.BlockSpec((1, T, N), lambda b: (b, 0, 0)),        # uniforms
        ],
        out_specs=pl.BlockSpec((1, D, 1), lambda b: (b, 0, 0)),
        compiler_params=pltpu.CompilerParams(dimension_semantics=("parallel",)),
    )(z3, obs, noise, unif)

    return out.reshape(B, D).astype(z.dtype)


if __name__ == "__main__":
    key = jax.random.PRNGKey(0)
    k1, k2 = jax.random.split(key)

    B = 2            # batch
    D = 16           # state_dim == observation_dim
    T = 8            # number of observation time steps
    N = 128          # num_particles

    z = jax.random.normal(k1, (B, D), dtype=jnp.float32)
    observation = jax.random.normal(k2, (B, D, T), dtype=jnp.float32)

    out = particle_filter(z, observation, num_particles=N, seed=1234)
    out = jax.block_until_ready(out)

    assert out.shape == (B, D), out.shape
    assert bool(jnp.all(jnp.isfinite(out)))
    print("KERNEL_OK")
</pallas_src>

<mosaic_0001>
module attributes {stable_mosaic.version = 11 : i64} {
  func.func @_particle_filter_kernel(%arg0: i32, %arg1: memref<1x16x1xf32, #tpu.memory_space<vmem>>, %arg2: memref<1x16x8xf32, #tpu.memory_space<vmem>>, %arg3: memref<1x8x16x128xf32, #tpu.memory_space<vmem>>, %arg4: memref<1x8x128xf32, #tpu.memory_space<vmem>>, %arg5: memref<1x16x1xf32, #tpu.memory_space<vmem>>) attributes {dimension_semantics = [#tpu.dimension_semantics<parallel>], iteration_bounds = array<i64: 2>, scalar_prefetch = 0 : i64, scratch_operands = 0 : i64, tpu.core_type = #tpu.core_type<tc>, window_params = [{transform_indices = @transform_0, window_bounds = array<i64: 1, 16, 1>}, {transform_indices = @transform_1, window_bounds = array<i64: 1, 16, 8>}, {transform_indices = @transform_2, window_bounds = array<i64: 1, 8, 16, 128>}, {transform_indices = @transform_3, window_bounds = array<i64: 1, 8, 128>}, {transform_indices = @transform_4, window_bounds = array<i64: 1, 16, 1>}]} {
    %c0 = arith.constant 0 : index
    %c0_0 = arith.constant 0 : index
    %c0_1 = arith.constant 0 : index
    %0 = vector.load %arg1[%c0, %c0_0, %c0_1] : memref<1x16x1xf32, #tpu.memory_space<vmem>>, vector<1x16x1xf32>
    %1 = vector.shape_cast %0 : vector<1x16x1xf32> to vector<16x1xf32>
    %2 = vector.shape_cast %1 : vector<16x1xf32> to vector<16x1xf32>
    %3 = vector.broadcast %2 : vector<16x1xf32> to vector<16x128xf32>
    %cst = arith.constant 7.812500e-03 : f32
    %4 = vector.broadcast %cst : f32 to vector<1x128xf32>
    %5 = tpu.iota {dimensions = array<i32: 0>} : vector<128x128xi32>
    %6 = tpu.iota {dimensions = array<i32: 1>} : vector<128x128xi32>
    %7 = arith.cmpi sle, %6, %5 : vector<128x128xi32>
    %8 = arith.extui %7 : vector<128x128xi1> to vector<128x128xi32>
    %9 = arith.sitofp %8 : vector<128x128xi32> to vector<128x128xf32>
    %10 = arith.cmpi slt, %6, %5 : vector<128x128xi32>
    %11 = arith.extui %10 : vector<128x128xi1> to vector<128x128xi32>
    %12 = arith.sitofp %11 : vector<128x128xi32> to vector<128x128xf32>
    %13 = tpu.iota {dimensions = array<i32: 0>} : vector<128x1xi32>
    %c127_i32 = arith.constant 127 : i32
    %14 = vector.broadcast %c127_i32 : i32 to vector<128x1xi32>
    %15 = arith.cmpi eq, %13, %14 : vector<128x1xi32>
    %c0_2 = arith.constant 0 : index
    %c0_3 = arith.constant 0 : index
    %c0_4 = arith.constant 0 : index
    %c0_5 = arith.constant 0 : index
    %16 = vector.load %arg3[%c0_2, %c0_3, %c0_4, %c0_5] : memref<1x8x16x128xf32, #tpu.memory_space<vmem>>, vector<1x1x16x128xf32>
    %17 = vector.shape_cast %16 : vector<1x1x16x128xf32> to vector<16x128xf32>
    %cst_6 = arith.constant 1.000000e-01 : f32
    %18 = vector.broadcast %cst_6 : f32 to vector<16x128xf32>
    %19 = arith.mulf %18, %17 : vector<16x128xf32>
    %20 = arith.addf %3, %19 : vector<16x128xf32>
    %c0_7 = arith.constant 0 : index
    %c0_8 = arith.constant 0 : index
    %c0_9 = arith.constant 0 : index
    %21 = vector.load %arg2[%c0_7, %c0_8, %c0_9] : memref<1x16x8xf32, #tpu.memory_space<vmem>>, vector<1x16x1xf32>
    %22 = vector.shape_cast %21 : vector<1x16x1xf32> to vector<16x1xf32>
    %23 = vector.broadcast %22 : vector<16x1xf32> to vector<16x128xf32>
    %24 = arith.subf %20, %23 : vector<16x128xf32>
    %25 = arith.mulf %24, %24 : vector<16x128xf32>
    %cst_10 = arith.constant dense<0.000000e+00> : vector<128xf32>
    %26 = vector.multi_reduction <add>, %25, %cst_10 [0] : vector<16x128xf32> to vector<128xf32>
    %27 = vector.shape_cast %26 : vector<128xf32> to vector<1x128xf32>
    %cst_11 = arith.constant -5.000000e-01 : f32
    %28 = vector.broadcast %cst_11 : f32 to vector<1x128xf32>
    %29 = arith.mulf %28, %27 : vector<1x128xf32>
    %30 = math.exp %29 : vector<1x128xf32>
    %cst_12 = arith.constant 9.99999993E-9 : f32
    %31 = vector.broadcast %cst_12 : f32 to vector<1x128xf32>
    %32 = arith.addf %30, %31 : vector<1x128xf32>
    %33 = arith.mulf %4, %32 : vector<1x128xf32>
    %cst_13 = arith.constant 1.000000e-10 : f32
    %34 = vector.broadcast %cst_13 : f32 to vector<1x128xf32>
    %35 = arith.addf %33, %34 : vector<1x128xf32>
    %cst_14 = arith.constant dense<0.000000e+00> : vector<1xf32>
    %36 = vector.multi_reduction <add>, %35, %cst_14 [1] : vector<1x128xf32> to vector<1xf32>
    %37 = vector.shape_cast %36 : vector<1xf32> to vector<1x1xf32>
    %38 = vector.broadcast %37 : vector<1x1xf32> to vector<1x128xf32>
    %39 = arith.divf %35, %38 : vector<1x128xf32>
    %40 = vector.broadcast %39 : vector<1x128xf32> to vector<128x128xf32>
    %41 = arith.mulf %9, %40 : vector<128x128xf32>
    %cst_15 = arith.constant dense<0.000000e+00> : vector<128xf32>
    %42 = vector.multi_reduction <add>, %41, %cst_15 [1] : vector<128x128xf32> to vector<128xf32>
    %43 = vector.shape_cast %42 : vector<128xf32> to vector<128x1xf32>
    %44 = vector.broadcast %39 : vector<1x128xf32> to vector<128x128xf32>
    %45 = arith.mulf %12, %44 : vector<128x128xf32>
    %cst_16 = arith.constant dense<0.000000e+00> : vector<128xf32>
    %46 = vector.multi_reduction <add>, %45, %cst_16 [1] : vector<128x128xf32> to vector<128xf32>
    %47 = vector.shape_cast %46 : vector<128xf32> to vector<128x1xf32>
    %cst_17 = arith.constant 1.000000e+30 : f32
    %48 = vector.broadcast %cst_17 : f32 to vector<128x1xf32>
    %49 = arith.select %15, %48, %43 : vector<128x1xi1>, vector<128x1xf32>
    %c0_18 = arith.constant 0 : index
    %c0_19 = arith.constant 0 : index
    %c0_20 = arith.constant 0 : index
    %50 = vector.load %arg4[%c0_18, %c0_19, %c0_20] : memref<1x8x128xf32, #tpu.memory_space<vmem>>, vector<1x1x128xf32>
    %51 = vector.shape_cast %50 : vector<1x1x128xf32> to vector<1x128xf32>
    %52 = vector.broadcast %47 : vector<128x1xf32> to vector<128x128xf32>
    %53 = vector.broadcast %51 : vector<1x128xf32> to vector<128x128xf32>
    %54 = arith.cmpf ole, %52, %53 : vector<128x128xf32>
    %55 = vector.broadcast %51 : vector<1x128xf32> to vector<128x128xf32>
    %56 = vector.broadcast %49 : vector<128x1xf32> to vector<128x128xf32>
    %57 = arith.cmpf olt, %55, %56 : vector<128x128xf32>
    %58 = arith.andi %54, %57 : vector<128x128xi1>
    %59 = arith.extui %58 : vector<128x128xi1> to vector<128x128xi32>
    %60 = arith.sitofp %59 : vector<128x128xi32> to vector<128x128xf32>
    %cst_21 = arith.constant dense<0.000000e+00> : vector<16x128xf32>
    %61 = tpu.matmul %20, %60, %cst_21 {dimension_numbers = #tpu.dot_dimension_numbers<[1], [0], [0], [1], [0, 0, 1, 1], [], []>, precision = #tpu.contract_precision<fp32>} : vector<16x128xf32>, vector<128x128xf32>, vector<16x128xf32> -> vector<16x128xf32>
    %c0_22 = arith.constant 0 : index
    %c1 = arith.constant 1 : index
    %c0_23 = arith.constant 0 : index
    %c0_24 = arith.constant 0 : index
    %62 = vector.load %arg3[%c0_22, %c1, %c0_23, %c0_24] : memref<1x8x16x128xf32, #tpu.memory_space<vmem>>, vector<1x1x16x128xf32>
    %63 = vector.shape_cast %62 : vector<1x1x16x128xf32> to vector<16x128xf32>
    %cst_25 = arith.constant 1.000000e-01 : f32
    %64 = vector.broadcast %cst_25 : f32 to vector<16x128xf32>
    %65 = arith.mulf %64, %63 : vector<16x128xf32>
    %66 = arith.addf %61, %65 : vector<16x128xf32>
    %c0_26 = arith.constant 0 : index
    %c0_27 = arith.constant 0 : index
    %c1_28 = arith.constant 1 : index
    %67 = vector.load %arg2[%c0_26, %c0_27, %c1_28] : memref<1x16x8xf32, #tpu.memory_space<vmem>>, vector<1x16x1xf32>
    %68 = vector.shape_cast %67 : vector<1x16x1xf32> to vector<16x1xf32>
    %69 = vector.broadcast %68 : vector<16x1xf32> to vector<16x128xf32>
    %70 = arith.subf %66, %69 : vector<16x128xf32>
    %71 = arith.mulf %70, %70 : vector<16x128xf32>
    %cst_29 = arith.constant dense<0.000000e+00> : vector<128xf32>
    %72 = vector.multi_reduction <add>, %71, %cst_29 [0] : vector<16x128xf32> to vector<128xf32>
    %73 = vector.shape_cast %72 : vector<128xf32> to vector<1x128xf32>
    %cst_30 = arith.constant -5.000000e-01 : f32
    %74 = vector.broadcast %cst_30 : f32 to vector<1x128xf32>
    %75 = arith.mulf %74, %73 : vector<1x128xf32>
    %76 = math.exp %75 : vector<1x128xf32>
    %cst_31 = arith.constant 9.99999993E-9 : f32
    %77 = vector.broadcast %cst_31 : f32 to vector<1x128xf32>
    %78 = arith.addf %76, %77 : vector<1x128xf32>
    %79 = arith.mulf %39, %78 : vector<1x128xf32>
    %cst_32 = arith.constant 1.000000e-10 : f32
    %80 = vector.broadcast %cst_32 : f32 to vector<1x128xf32>
    %81 = arith.addf %79, %80 : vector<1x128xf32>
    %cst_33 = arith.constant dense<0.000000e+00> : vector<1xf32>
    %82 = vector.multi_reduction <add>, %81, %cst_33 [1] : vector<1x128xf32> to vector<1xf32>
    %83 = vector.shape_cast %82 : vector<1xf32> to vector<1x1xf32>
    %84 = vector.broadcast %83 : vector<1x1xf32> to vector<1x128xf32>
    %85 = arith.divf %81, %84 : vector<1x128xf32>
    %86 = vector.broadcast %85 : vector<1x128xf32> to vector<128x128xf32>
    %87 = arith.mulf %9, %86 : vector<128x128xf32>
    %cst_34 = arith.constant dense<0.000000e+00> : vector<128xf32>
    %88 = vector.multi_reduction <add>, %87, %cst_34 [1] : vector<128x128xf32> to vector<128xf32>
    %89 = vector.shape_cast %88 : vector<128xf32> to vector<128x1xf32>
    %90 = vector.broadcast %85 : vector<1x128xf32> to vector<128x128xf32>
    %91 = arith.mulf %12, %90 : vector<128x128xf32>
    %cst_35 = arith.constant dense<0.000000e+00> : vector<128xf32>
    %92 = vector.multi_reduction <add>, %91, %cst_35 [1] : vector<128x128xf32> to vector<128xf32>
    %93 = vector.shape_cast %92 : vector<128xf32> to vector<128x1xf32>
    %cst_36 = arith.constant 1.000000e+30 : f32
    %94 = vector.broadcast %cst_36 : f32 to vector<128x1xf32>
    %95 = arith.select %15, %94, %89 : vector<128x1xi1>, vector<128x1xf32>
    %c0_37 = arith.constant 0 : index
    %c1_38 = arith.constant 1 : index
    %c0_39 = arith.constant 0 : index
    %96 = vector.load %arg4[%c0_37, %c1_38, %c0_39] : memref<1x8x128xf32, #tpu.memory_space<vmem>>, vector<1x1x128xf32>
    %97 = vector.shape_cast %96 : vector<1x1x128xf32> to vector<1x128xf32>
    %98 = vector.broadcast %93 : vector<128x1xf32> to vector<128x128xf32>
    %99 = vector.broadcast %97 : vector<1x128xf32> to vector<128x128xf32>
    %100 = arith.cmpf ole, %98, %99 : vector<128x128xf32>
    %101 = vector.broadcast %97 : vector<1x128xf32> to vector<128x128xf32>
    %102 = vector.broadcast %95 : vector<128x1xf32> to vector<128x128xf32>
    %103 = arith.cmpf olt, %101, %102 : vector<128x128xf32>
    %104 = arith.andi %100, %103 : vector<128x128xi1>
    %105 = arith.extui %104 : vector<128x128xi1> to vector<128x128xi32>
    %106 = arith.sitofp %105 : vector<128x128xi32> to vector<128x128xf32>
    %cst_40 = arith.constant dense<0.000000e+00> : vector<16x128xf32>
    %107 = tpu.matmul %66, %106, %cst_40 {dimension_numbers = #tpu.dot_dimension_numbers<[1], [0], [0], [1], [0, 0, 1, 1], [], []>, precision = #tpu.contract_precision<fp32>} : vector<16x128xf32>, vector<128x128xf32>, vector<16x128xf32> -> vector<16x128xf32>
    %c0_41 = arith.constant 0 : index
    %c2 = arith.constant 2 : index
    %c0_42 = arith.constant 0 : index
    %c0_43 = arith.constant 0 : index
    %108 = vector.load %arg3[%c0_41, %c2, %c0_42, %c0_43] : memref<1x8x16x128xf32, #tpu.memory_space<vmem>>, vector<1x1x16x128xf32>
    %109 = vector.shape_cast %108 : vector<1x1x16x128xf32> to vector<16x128xf32>
    %cst_44 = arith.constant 1.000000e-01 : f32
    %110 = vector.broadcast %cst_44 : f32 to vector<16x128xf32>
    %111 = arith.mulf %110, %109 : vector<16x128xf32>
    %112 = arith.addf %107, %111 : vector<16x128xf32>
    %c0_45 = arith.constant 0 : index
    %c0_46 = arith.constant 0 : index
    %c2_47 = arith.constant 2 : index
    %113 = vector.load %arg2[%c0_45, %c0_46, %c2_47] : memref<1x16x8xf32, #tpu.memory_space<vmem>>, vector<1x16x1xf32>
    %114 = vector.shape_cast %113 : vector<1x16x1xf32> to vector<16x1xf32>
    %115 = vector.broadcast %114 : vector<16x1xf32> to vector<16x128xf32>
    %116 = arith.subf %112, %115 : vector<16x128xf32>
    %117 = arith.mulf %116, %116 : vector<16x128xf32>
    %cst_48 = arith.constant dense<0.000000e+00> : vector<128xf32>
    %118 = vector.multi_reduction <add>, %117, %cst_48 [0] : vector<16x128xf32> to vector<128xf32>
    %119 = vector.shape_cast %118 : vector<128xf32> to vector<1x128xf32>
    %cst_49 = arith.constant -5.000000e-01 : f32
    %120 = vector.broadcast %cst_49 : f32 to vector<1x128xf32>
    %121 = arith.mulf %120, %119 : vector<1x128xf32>
    %122 = math.exp %121 : vector<1x128xf32>
    %cst_50 = arith.constant 9.99999993E-9 : f32
    %123 = vector.broadcast %cst_50 : f32 to vector<1x128xf32>
    %124 = arith.addf %122, %123 : vector<1x128xf32>
    %125 = arith.mulf %85, %124 : vector<1x128xf32>
    %cst_51 = arith.constant 1.000000e-10 : f32
    %126 = vector.broadcast %cst_51 : f32 to vector<1x128xf32>
    %127 = arith.addf %125, %126 : vector<1x128xf32>
    %cst_52 = arith.constant dense<0.000000e+00> : vector<1xf32>
    %128 = vector.multi_reduction <add>, %127, %cst_52 [1] : vector<1x128xf32> to vector<1xf32>
    %129 = vector.shape_cast %128 : vector<1xf32> to vector<1x1xf32>
    %130 = vector.broadcast %129 : vector<1x1xf32> to vector<1x128xf32>
    %131 = arith.divf %127, %130 : vector<1x128xf32>
    %132 = vector.broadcast %131 : vector<1x128xf32> to vector<128x128xf32>
    %133 = arith.mulf %9, %132 : vector<128x128xf32>
    %cst_53 = arith.constant dense<0.000000e+00> : vector<128xf32>
    %134 = vector.multi_reduction <add>, %133, %cst_53 [1] : vector<128x128xf32> to vector<128xf32>
    %135 = vector.shape_cast %134 : vector<128xf32> to vector<128x1xf32>
    %136 = vector.broadcast %131 : vector<1x128xf32> to vector<128x128xf32>
    %137 = arith.mulf %12, %136 : vector<128x128xf32>
    %cst_54 = arith.constant dense<0.000000e+00> : vector<128xf32>
    %138 = vector.multi_reduction <add>, %137, %cst_54 [1] : vector<128x128xf32> to vector<128xf32>
    %139 = vector.shape_cast %138 : vector<128xf32> to vector<128x1xf32>
    %cst_55 = arith.constant 1.000000e+30 : f32
    %140 = vector.broadcast %cst_55 : f32 to vector<128x1xf32>
    %141 = arith.select %15, %140, %135 : vector<128x1xi1>, vector<128x1xf32>
    %c0_56 = arith.constant 0 : index
    %c2_57 = arith.constant 2 : index
    %c0_58 = arith.constant 0 : index
    %142 = vector.load %arg4[%c0_56, %c2_57, %c0_58] : memref<1x8x128xf32, #tpu.memory_space<vmem>>, vector<1x1x128xf32>
    %143 = vector.shape_cast %142 : vector<1x1x128xf32> to vector<1x128xf32>
    %144 = vector.broadcast %139 : vector<128x1xf32> to vector<128x128xf32>
    %145 = vector.broadcast %143 : vector<1x128xf32> to vector<128x128xf32>
    %146 = arith.cmpf ole, %144, %145 : vector<128x128xf32>
    %147 = vector.broadcast %143 : vector<1x128xf32> to vector<128x128xf32>
    %148 = vector.broadcast %141 : vector<128x1xf32> to vector<128x128xf32>
    %149 = arith.cmpf olt, %147, %148 : vector<128x128xf32>
    %150 = arith.andi %146, %149 : vector<128x128xi1>
    %151 = arith.extui %150 : vector<128x128xi1> to vector<128x128xi32>
    %152 = arith.sitofp %151 : vector<128x128xi32> to vector<128x128xf32>
    %cst_59 = arith.constant dense<0.000000e+00> : vector<16x128xf32>
    %153 = tpu.matmul %112, %152, %cst_59 {dimension_numbers = #tpu.dot_dimension_numbers<[1], [0], [0], [1], [0, 0, 1, 1], [], []>, precision = #tpu.contract_precision<fp32>} : vector<16x128xf32>, vector<128x128xf32>, vector<16x128xf32> -> vector<16x128xf32>
    %c0_60 = arith.constant 0 : index
    %c3 = arith.constant 3 : index
    %c0_61 = arith.constant 0 : index
    %c0_62 = arith.constant 0 : index
    %154 = vector.load %arg3[%c0_60, %c3, %c0_61, %c0_62] : memref<1x8x16x128xf32, #tpu.memory_space<vmem>>, vector<1x1x16x128xf32>
    %155 = vector.shape_cast %154 : vector<1x1x16x128xf32> to vector<16x128xf32>
    %cst_63 = arith.constant 1.000000e-01 : f32
    %156 = vector.broadcast %cst_63 : f32 to vector<16x128xf32>
    %157 = arith.mulf %156, %155 : vector<16x128xf32>
    %158 = arith.addf %153, %157 : vector<16x128xf32>
    %c0_64 = arith.constant 0 : index
    %c0_65 = arith.constant 0 : index
    %c3_66 = arith.constant 3 : index
    %159 = vector.load %arg2[%c0_64, %c0_65, %c3_66] : memref<1x16x8xf32, #tpu.memory_space<vmem>>, vector<1x16x1xf32>
    %160 = vector.shape_cast %159 : vector<1x16x1xf32> to vector<16x1xf32>
    %161 = vector.broadcast %160 : vector<16x1xf32> to vector<16x128xf32>
    %162 = arith.subf %158, %161 : vector<16x128xf32>
    %163 = arith.mulf %162, %162 : vector<16x128xf32>
    %cst_67 = arith.constant dense<0.000000e+00> : vector<128xf32>
    %164 = vector.multi_reduction <add>, %163, %cst_67 [0] : vector<16x128xf32> to vector<128xf32>
    %165 = vector.shape_cast %164 : vector<128xf32> to vector<1x128xf32>
    %cst_68 = arith.constant -5.000000e-01 : f32
    %166 = vector.broadcast %cst_68 : f32 to vector<1x128xf32>
    %167 = arith.mulf %166, %165 : vector<1x128xf32>
    %168 = math.exp %167 : vector<1x128xf32>
    %cst_69 = arith.constant 9.99999993E-9 : f32
    %169 = vector.broadcast %cst_69 : f32 to vector<1x128xf32>
    %170 = arith.addf %168, %169 : vector<1x128xf32>
    %171 = arith.mulf %131, %170 : vector<1x128xf32>
    %cst_70 = arith.constant 1.000000e-10 : f32
    %172 = vector.broadcast %cst_70 : f32 to vector<1x128xf32>
    %173 = arith.addf %171, %172 : vector<1x128xf32>
    %cst_71 = arith.constant dense<0.000000e+00> : vector<1xf32>
    %174 = vector.multi_reduction <add>, %173, %cst_71 [1] : vector<1x128xf32> to vector<1xf32>
    %175 = vector.shape_cast %174 : vector<1xf32> to vector<1x1xf32>
    %176 = vector.broadcast %175 : vector<1x1xf32> to vector<1x128xf32>
    %177 = arith.divf %173, %176 : vector<1x128xf32>
    %178 = vector.broadcast %177 : vector<1x128xf32> to vector<128x128xf32>
    %179 = arith.mulf %9, %178 : vector<128x128xf32>
    %cst_72 = arith.constant dense<0.000000e+00> : vector<128xf32>
    %180 = vector.multi_reduction <add>, %179, %cst_72 [1] : vector<128x128xf32> to vector<128xf32>
    %181 = vector.shape_cast %180 : vector<128xf32> to vector<128x1xf32>
    %182 = vector.broadcast %177 : vector<1x128xf32> to vector<128x128xf32>
    %183 = arith.mulf %12, %182 : vector<128x128xf32>
    %cst_73 = arith.constant dense<0.000000e+00> : vector<128xf32>
    %184 = vector.multi_reduction <add>, %183, %cst_73 [1] : vector<128x128xf32> to vector<128xf32>
    %185 = vector.shape_cast %184 : vector<128xf32> to vector<128x1xf32>
    %cst_74 = arith.constant 1.000000e+30 : f32
    %186 = vector.broadcast %cst_74 : f32 to vector<128x1xf32>
    %187 = arith.select %15, %186, %181 : vector<128x1xi1>, vector<128x1xf32>
    %c0_75 = arith.constant 0 : index
    %c3_76 = arith.constant 3 : index
    %c0_77 = arith.constant 0 : index
    %188 = vector.load %arg4[%c0_75, %c3_76, %c0_77] : memref<1x8x128xf32, #tpu.memory_space<vmem>>, vector<1x1x128xf32>
    %189 = vector.shape_cast %188 : vector<1x1x128xf32> to vector<1x128xf32>
    %190 = vector.broadcast %185 : vector<128x1xf32> to vector<128x128xf32>
    %191 = vector.broadcast %189 : vector<1x128xf32> to vector<128x128xf32>
    %192 = arith.cmpf ole, %190, %191 : vector<128x128xf32>
    %193 = vector.broadcast %189 : vector<1x128xf32> to vector<128x128xf32>
    %194 = vector.broadcast %187 : vector<128x1xf32> to vector<128x128xf32>
    %195 = arith.cmpf olt, %193, %194 : vector<128x128xf32>
    %196 = arith.andi %192, %195 : vector<128x128xi1>
    %197 = arith.extui %196 : vector<128x128xi1> to vector<128x128xi32>
    %198 = arith.sitofp %197 : vector<128x128xi32> to vector<128x128xf32>
    %cst_78 = arith.constant dense<0.000000e+00> : vector<16x128xf32>
    %199 = tpu.matmul %158, %198, %cst_78 {dimension_numbers = #tpu.dot_dimension_numbers<[1], [0], [0], [1], [0, 0, 1, 1], [], []>, precision = #tpu.contract_precision<fp32>} : vector<16x128xf32>, vector<128x128xf32>, vector<16x128xf32> -> vector<16x128xf32>
    %c0_79 = arith.constant 0 : index
    %c4 = arith.constant 4 : index
    %c0_80 = arith.constant 0 : index
    %c0_81 = arith.constant 0 : index
    %200 = vector.load %arg3[%c0_79, %c4, %c0_80, %c0_81] : memref<1x8x16x128xf32, #tpu.memory_space<vmem>>, vector<1x1x16x128xf32>
    %201 = vector.shape_cast %200 : vector<1x1x16x128xf32> to vector<16x128xf32>
    %cst_82 = arith.constant 1.000000e-01 : f32
    %202 = vector.broadcast %cst_82 : f32 to vector<16x128xf32>
    %203 = arith.mulf %202, %201 : vector<16x128xf32>
    %204 = arith.addf %199, %203 : vector<16x128xf32>
    %c0_83 = arith.constant 0 : index
    %c0_84 = arith.constant 0 : index
    %c4_85 = arith.constant 4 : index
    %205 = vector.load %arg2[%c0_83, %c0_84, %c4_85] : memref<1x16x8xf32, #tpu.memory_space<vmem>>, vector<1x16x1xf32>
    %206 = vector.shape_cast %205 : vector<1x16x1xf32> to vector<16x1xf32>
    %207 = vector.broadcast %206 : vector<16x1xf32> to vector<16x128xf32>
    %208 = arith.subf %204, %207 : vector<16x128xf32>
    %209 = arith.mulf %208, %208 : vector<16x128xf32>
    %cst_86 = arith.constant dense<0.000000e+00> : vector<128xf32>
    %210 = vector.multi_reduction <add>, %209, %cst_86 [0] : vector<16x128xf32> to vector<128xf32>
    %211 = vector.shape_cast %210 : vector<128xf32> to vector<1x128xf32>
    %cst_87 = arith.constant -5.000000e-01 : f32
    %212 = vector.broadcast %cst_87 : f32 to vector<1x128xf32>
    %213 = arith.mulf %212, %211 : vector<1x128xf32>
    %214 = math.exp %213 : vector<1x128xf32>
    %cst_88 = arith.constant 9.99999993E-9 : f32
    %215 = vector.broadcast %cst_88 : f32 to vector<1x128xf32>
    %216 = arith.addf %214, %215 : vector<1x128xf32>
    %217 = arith.mulf %177, %216 : vector<1x128xf32>
    %cst_89 = arith.constant 1.000000e-10 : f32
    %218 = vector.broadcast %cst_89 : f32 to vector<1x128xf32>
    %219 = arith.addf %217, %218 : vector<1x128xf32>
    %cst_90 = arith.constant dense<0.000000e+00> : vector<1xf32>
    %220 = vector.multi_reduction <add>, %219, %cst_90 [1] : vector<1x128xf32> to vector<1xf32>
    %221 = vector.shape_cast %220 : vector<1xf32> to vector<1x1xf32>
    %222 = vector.broadcast %221 : vector<1x1xf32> to vector<1x128xf32>
    %223 = arith.divf %219, %222 : vector<1x128xf32>
    %224 = vector.broadcast %223 : vector<1x128xf32> to vector<128x128xf32>
    %225 = arith.mulf %9, %224 : vector<128x128xf32>
    %cst_91 = arith.constant dense<0.000000e+00> : vector<128xf32>
    %226 = vector.multi_reduction <add>, %225, %cst_91 [1] : vector<128x128xf32> to vector<128xf32>
    %227 = vector.shape_cast %226 : vector<128xf32> to vector<128x1xf32>
    %228 = vector.broadcast %223 : vector<1x128xf32> to vector<128x128xf32>
    %229 = arith.mulf %12, %228 : vector<128x128xf32>
    %cst_92 = arith.constant dense<0.000000e+00> : vector<128xf32>
    %230 = vector.multi_reduction <add>, %229, %cst_92 [1] : vector<128x128xf32> to vector<128xf32>
    %231 = vector.shape_cast %230 : vector<128xf32> to vector<128x1xf32>
    %cst_93 = arith.constant 1.000000e+30 : f32
    %232 = vector.broadcast %cst_93 : f32 to vector<128x1xf32>
    %233 = arith.select %15, %232, %227 : vector<128x1xi1>, vector<128x1xf32>
    %c0_94 = arith.constant 0 : index
    %c4_95 = arith.constant 4 : index
    %c0_96 = arith.constant 0 : index
    %234 = vector.load %arg4[%c0_94, %c4_95, %c0_96] : memref<1x8x128xf32, #tpu.memory_space<vmem>>, vector<1x1x128xf32>
    %235 = vector.shape_cast %234 : vector<1x1x128xf32> to vector<1x128xf32>
    %236 = vector.broadcast %231 : vector<128x1xf32> to vector<128x128xf32>
    %237 = vector.broadcast %235 : vector<1x128xf32> to vector<128x128xf32>
    %238 = arith.cmpf ole, %236, %237 : vector<128x128xf32>
    %239 = vector.broadcast %235 : vector<1x128xf32> to vector<128x128xf32>
    %240 = vector.broadcast %233 : vector<128x1xf32> to vector<128x128xf32>
    %241 = arith.cmpf olt, %239, %240 : vector<128x128xf32>
    %242 = arith.andi %238, %241 : vector<128x128xi1>
    %243 = arith.extui %242 : vector<128x128xi1> to vector<128x128xi32>
    %244 = arith.sitofp %243 : vector<128x128xi32> to vector<128x128xf32>
    %cst_97 = arith.constant dense<0.000000e+00> : vector<16x128xf32>
    %245 = tpu.matmul %204, %244, %cst_97 {dimension_numbers = #tpu.dot_dimension_numbers<[1], [0], [0], [1], [0, 0, 1, 1], [], []>, precision = #tpu.contract_precision<fp32>} : vector<16x128xf32>, vector<128x128xf32>, vector<16x128xf32> -> vector<16x128xf32>
    %c0_98 = arith.constant 0 : index
    %c5 = arith.constant 5 : index
    %c0_99 = arith.constant 0 : index
    %c0_100 = arith.constant 0 : index
    %246 = vector.load %arg3[%c0_98, %c5, %c0_99, %c0_100] : memref<1x8x16x128xf32, #tpu.memory_space<vmem>>, vector<1x1x16x128xf32>
    %247 = vector.shape_cast %246 : vector<1x1x16x128xf32> to vector<16x128xf32>
    %cst_101 = arith.constant 1.000000e-01 : f32
    %248 = vector.broadcast %cst_101 : f32 to vector<16x128xf32>
    %249 = arith.mulf %248, %247 : vector<16x128xf32>
    %250 = arith.addf %245, %249 : vector<16x128xf32>
    %c0_102 = arith.constant 0 : index
    %c0_103 = arith.constant 0 : index
    %c5_104 = arith.constant 5 : index
    %251 = vector.load %arg2[%c0_102, %c0_103, %c5_104] : memref<1x16x8xf32, #tpu.memory_space<vmem>>, vector<1x16x1xf32>
    %252 = vector.shape_cast %251 : vector<1x16x1xf32> to vector<16x1xf32>
    %253 = vector.broadcast %252 : vector<16x1xf32> to vector<16x128xf32>
    %254 = arith.subf %250, %253 : vector<16x128xf32>
    %255 = arith.mulf %254, %254 : vector<16x128xf32>
    %cst_105 = arith.constant dense<0.000000e+00> : vector<128xf32>
    %256 = vector.multi_reduction <add>, %255, %cst_105 [0] : vector<16x128xf32> to vector<128xf32>
    %257 = vector.shape_cast %256 : vector<128xf32> to vector<1x128xf32>
    %cst_106 = arith.constant -5.000000e-01 : f32
    %258 = vector.broadcast %cst_106 : f32 to vector<1x128xf32>
    %259 = arith.mulf %258, %257 : vector<1x128xf32>
    %260 = math.exp %259 : vector<1x128xf32>
    %cst_107 = arith.constant 9.99999993E-9 : f32
    %261 = vector.broadcast %cst_107 : f32 to vector<1x128xf32>
    %262 = arith.addf %260, %261 : vector<1x128xf32>
    %263 = arith.mulf %223, %262 : vector<1x128xf32>
    %cst_108 = arith.constant 1.000000e-10 : f32
    %264 = vector.broadcast %cst_108 : f32 to vector<1x128xf32>
    %265 = arith.addf %263, %264 : vector<1x128xf32>
    %cst_109 = arith.constant dense<0.000000e+00> : vector<1xf32>
    %266 = vector.multi_reduction <add>, %265, %cst_109 [1] : vector<1x128xf32> to vector<1xf32>
    %267 = vector.shape_cast %266 : vector<1xf32> to vector<1x1xf32>
    %268 = vector.broadcast %267 : vector<1x1xf32> to vector<1x128xf32>
    %269 = arith.divf %265, %268 : vector<1x128xf32>
    %270 = vector.broadcast %269 : vector<1x128xf32> to vector<128x128xf32>
    %271 = arith.mulf %9, %270 : vector<128x128xf32>
    %cst_110 = arith.constant dense<0.000000e+00> : vector<128xf32>
    %272 = vector.multi_reduction <add>, %271, %cst_110 [1] : vector<128x128xf32> to vector<128xf32>
    %273 = vector.shape_cast %272 : vector<128xf32> to vector<128x1xf32>
    %274 = vector.broadcast %269 : vector<1x128xf32> to vector<128x128xf32>
    %275 = arith.mulf %12, %274 : vector<128x128xf32>
    %cst_111 = arith.constant dense<0.000000e+00> : vector<128xf32>
    %276 = vector.multi_reduction <add>, %275, %cst_111 [1] : vector<128x128xf32> to vector<128xf32>
    %277 = vector.shape_cast %276 : vector<128xf32> to vector<128x1xf32>
    %cst_112 = arith.constant 1.000000e+30 : f32
    %278 = vector.broadcast %cst_112 : f32 to vector<128x1xf32>
    %279 = arith.select %15, %278, %273 : vector<128x1xi1>, vector<128x1xf32>
    %c0_113 = arith.constant 0 : index
    %c5_114 = arith.constant 5 : index
    %c0_115 = arith.constant 0 : index
    %280 = vector.load %arg4[%c0_113, %c5_114, %c0_115] : memref<1x8x128xf32, #tpu.memory_space<vmem>>, vector<1x1x128xf32>
    %281 = vector.shape_cast %280 : vector<1x1x128xf32> to vector<1x128xf32>
    %282 = vector.broadcast %277 : vector<128x1xf32> to vector<128x128xf32>
    %283 = vector.broadcast %281 : vector<1x128xf32> to vector<128x128xf32>
    %284 = arith.cmpf ole, %282, %283 : vector<128x128xf32>
    %285 = vector.broadcast %281 : vector<1x128xf32> to vector<128x128xf32>
    %286 = vector.broadcast %279 : vector<128x1xf32> to vector<128x128xf32>
    %287 = arith.cmpf olt, %285, %286 : vector<128x128xf32>
    %288 = arith.andi %284, %287 : vector<128x128xi1>
    %289 = arith.extui %288 : vector<128x128xi1> to vector<128x128xi32>
    %290 = arith.sitofp %289 : vector<128x128xi32> to vector<128x128xf32>
    %cst_116 = arith.constant dense<0.000000e+00> : vector<16x128xf32>
    %291 = tpu.matmul %250, %290, %cst_116 {dimension_numbers = #tpu.dot_dimension_numbers<[1], [0], [0], [1], [0, 0, 1, 1], [], []>, precision = #tpu.contract_precision<fp32>} : vector<16x128xf32>, vector<128x128xf32>, vector<16x128xf32> -> vector<16x128xf32>
    %c0_117 = arith.constant 0 : index
    %c6 = arith.constant 6 : index
    %c0_118 = arith.constant 0 : index
    %c0_119 = arith.constant 0 : index
    %292 = vector.load %arg3[%c0_117, %c6, %c0_118, %c0_119] : memref<1x8x16x128xf32, #tpu.memory_space<vmem>>, vector<1x1x16x128xf32>
    %293 = vector.shape_cast %292 : vector<1x1x16x128xf32> to vector<16x128xf32>
    %cst_120 = arith.constant 1.000000e-01 : f32
    %294 = vector.broadcast %cst_120 : f32 to vector<16x128xf32>
    %295 = arith.mulf %294, %293 : vector<16x128xf32>
    %296 = arith.addf %291, %295 : vector<16x128xf32>
    %c0_121 = arith.constant 0 : index
    %c0_122 = arith.constant 0 : index
    %c6_123 = arith.constant 6 : index
    %297 = vector.load %arg2[%c0_121, %c0_122, %c6_123] : memref<1x16x8xf32, #tpu.memory_space<vmem>>, vector<1x16x1xf32>
    %298 = vector.shape_cast %297 : vector<1x16x1xf32> to vector<16x1xf32>
    %299 = vector.broadcast %298 : vector<16x1xf32> to vector<16x128xf32>
    %300 = arith.subf %296, %299 : vector<16x128xf32>
    %301 = arith.mulf %300, %300 : vector<16x128xf32>
    %cst_124 = arith.constant dense<0.000000e+00> : vector<128xf32>
    %302 = vector.multi_reduction <add>, %301, %cst_124 [0] : vector<16x128xf32> to vector<128xf32>
    %303 = vector.shape_cast %302 : vector<128xf32> to vector<1x128xf32>
    %cst_125 = arith.constant -5.000000e-01 : f32
    %304 = vector.broadcast %cst_125 : f32 to vector<1x128xf32>
    %305 = arith.mulf %304, %303 : vector<1x128xf32>
    %306 = math.exp %305 : vector<1x128xf32>
    %cst_126 = arith.constant 9.99999993E-9 : f32
    %307 = vector.broadcast %cst_126 : f32 to vector<1x128xf32>
    %308 = arith.addf %306, %307 : vector<1x128xf32>
    %309 = arith.mulf %269, %308 : vector<1x128xf32>
    %cst_127 = arith.constant 1.000000e-10 : f32
    %310 = vector.broadcast %cst_127 : f32 to vector<1x128xf32>
    %311 = arith.addf %309, %310 : vector<1x128xf32>
    %cst_128 = arith.constant dense<0.000000e+00> : vector<1xf32>
    %312 = vector.multi_reduction <add>, %311, %cst_128 [1] : vector<1x128xf32> to vector<1xf32>
    %313 = vector.shape_cast %312 : vector<1xf32> to vector<1x1xf32>
    %314 = vector.broadcast %313 : vector<1x1xf32> to vector<1x128xf32>
    %315 = arith.divf %311, %314 : vector<1x128xf32>
    %316 = vector.broadcast %315 : vector<1x128xf32> to vector<128x128xf32>
    %317 = arith.mulf %9, %316 : vector<128x128xf32>
    %cst_129 = arith.constant dense<0.000000e+00> : vector<128xf32>
    %318 = vector.multi_reduction <add>, %317, %cst_129 [1] : vector<128x128xf32> to vector<128xf32>
    %319 = vector.shape_cast %318 : vector<128xf32> to vector<128x1xf32>
    %320 = vector.broadcast %315 : vector<1x128xf32> to vector<128x128xf32>
    %321 = arith.mulf %12, %320 : vector<128x128xf32>
    %cst_130 = arith.constant dense<0.000000e+00> : vector<128xf32>
    %322 = vector.multi_reduction <add>, %321, %cst_130 [1] : vector<128x128xf32> to vector<128xf32>
    %323 = vector.shape_cast %322 : vector<128xf32> to vector<128x1xf32>
    %cst_131 = arith.constant 1.000000e+30 : f32
    %324 = vector.broadcast %cst_131 : f32 to vector<128x1xf32>
    %325 = arith.select %15, %324, %319 : vector<128x1xi1>, vector<128x1xf32>
    %c0_132 = arith.constant 0 : index
    %c6_133 = arith.constant 6 : index
    %c0_134 = arith.constant 0 : index
    %326 = vector.load %arg4[%c0_132, %c6_133, %c0_134] : memref<1x8x128xf32, #tpu.memory_space<vmem>>, vector<1x1x128xf32>
    %327 = vector.shape_cast %326 : vector<1x1x128xf32> to vector<1x128xf32>
    %328 = vector.broadcast %323 : vector<128x1xf32> to vector<128x128xf32>
    %329 = vector.broadcast %327 : vector<1x128xf32> to vector<128x128xf32>
    %330 = arith.cmpf ole, %328, %329 : vector<128x128xf32>
    %331 = vector.broadcast %327 : vector<1x128xf32> to vector<128x128xf32>
    %332 = vector.broadcast %325 : vector<128x1xf32> to vector<128x128xf32>
    %333 = arith.cmpf olt, %331, %332 : vector<128x128xf32>
    %334 = arith.andi %330, %333 : vector<128x128xi1>
    %335 = arith.extui %334 : vector<128x128xi1> to vector<128x128xi32>
    %336 = arith.sitofp %335 : vector<128x128xi32> to vector<128x128xf32>
    %cst_135 = arith.constant dense<0.000000e+00> : vector<16x128xf32>
    %337 = tpu.matmul %296, %336, %cst_135 {dimension_numbers = #tpu.dot_dimension_numbers<[1], [0], [0], [1], [0, 0, 1, 1], [], []>, precision = #tpu.contract_precision<fp32>} : vector<16x128xf32>, vector<128x128xf32>, vector<16x128xf32> -> vector<16x128xf32>
    %c0_136 = arith.constant 0 : index
    %c7 = arith.constant 7 : index
    %c0_137 = arith.constant 0 : index
    %c0_138 = arith.constant 0 : index
    %338 = vector.load %arg3[%c0_136, %c7, %c0_137, %c0_138] : memref<1x8x16x128xf32, #tpu.memory_space<vmem>>, vector<1x1x16x128xf32>
    %339 = vector.shape_cast %338 : vector<1x1x16x128xf32> to vector<16x128xf32>
    %cst_139 = arith.constant 1.000000e-01 : f32
    %340 = vector.broadcast %cst_139 : f32 to vector<16x128xf32>
    %341 = arith.mulf %340, %339 : vector<16x128xf32>
    %342 = arith.addf %337, %341 : vector<16x128xf32>
    %c0_140 = arith.constant 0 : index
    %c0_141 = arith.constant 0 : index
    %c7_142 = arith.constant 7 : index
    %343 = vector.load %arg2[%c0_140, %c0_141, %c7_142] : memref<1x16x8xf32, #tpu.memory_space<vmem>>, vector<1x16x1xf32>
    %344 = vector.shape_cast %343 : vector<1x16x1xf32> to vector<16x1xf32>
    %345 = vector.broadcast %344 : vector<16x1xf32> to vector<16x128xf32>
    %346 = arith.subf %342, %345 : vector<16x128xf32>
    %347 = arith.mulf %346, %346 : vector<16x128xf32>
    %cst_143 = arith.constant dense<0.000000e+00> : vector<128xf32>
    %348 = vector.multi_reduction <add>, %347, %cst_143 [0] : vector<16x128xf32> to vector<128xf32>
    %349 = vector.shape_cast %348 : vector<128xf32> to vector<1x128xf32>
    %cst_144 = arith.constant -5.000000e-01 : f32
    %350 = vector.broadcast %cst_144 : f32 to vector<1x128xf32>
    %351 = arith.mulf %350, %349 : vector<1x128xf32>
    %352 = math.exp %351 : vector<1x128xf32>
    %cst_145 = arith.constant 9.99999993E-9 : f32
    %353 = vector.broadcast %cst_145 : f32 to vector<1x128xf32>
    %354 = arith.addf %352, %353 : vector<1x128xf32>
    %355 = arith.mulf %315, %354 : vector<1x128xf32>
    %cst_146 = arith.constant 1.000000e-10 : f32
    %356 = vector.broadcast %cst_146 : f32 to vector<1x128xf32>
    %357 = arith.addf %355, %356 : vector<1x128xf32>
    %cst_147 = arith.constant dense<0.000000e+00> : vector<1xf32>
    %358 = vector.multi_reduction <add>, %357, %cst_147 [1] : vector<1x128xf32> to vector<1xf32>
    %359 = vector.shape_cast %358 : vector<1xf32> to vector<1x1xf32>
    %360 = vector.broadcast %359 : vector<1x1xf32> to vector<1x128xf32>
    %361 = arith.divf %357, %360 : vector<1x128xf32>
    %362 = vector.broadcast %361 : vector<1x128xf32> to vector<128x128xf32>
    %363 = arith.mulf %9, %362 : vector<128x128xf32>
    %cst_148 = arith.constant dense<0.000000e+00> : vector<128xf32>
    %364 = vector.multi_reduction <add>, %363, %cst_148 [1] : vector<128x128xf32> to vector<128xf32>
    %365 = vector.shape_cast %364 : vector<128xf32> to vector<128x1xf32>
    %366 = vector.broadcast %361 : vector<1x128xf32> to vector<128x128xf32>
    %367 = arith.mulf %12, %366 : vector<128x128xf32>
    %cst_149 = arith.constant dense<0.000000e+00> : vector<128xf32>
    %368 = vector.multi_reduction <add>, %367, %cst_149 [1] : vector<128x128xf32> to vector<128xf32>
    %369 = vector.shape_cast %368 : vector<128xf32> to vector<128x1xf32>
    %cst_150 = arith.constant 1.000000e+30 : f32
    %370 = vector.broadcast %cst_150 : f32 to vector<128x1xf32>
    %371 = arith.select %15, %370, %365 : vector<128x1xi1>, vector<128x1xf32>
    %c0_151 = arith.constant 0 : index
    %c7_152 = arith.constant 7 : index
    %c0_153 = arith.constant 0 : index
    %372 = vector.load %arg4[%c0_151, %c7_152, %c0_153] : memref<1x8x128xf32, #tpu.memory_space<vmem>>, vector<1x1x128xf32>
    %373 = vector.shape_cast %372 : vector<1x1x128xf32> to vector<1x128xf32>
    %374 = vector.broadcast %369 : vector<128x1xf32> to vector<128x128xf32>
    %375 = vector.broadcast %373 : vector<1x128xf32> to vector<128x128xf32>
    %376 = arith.cmpf ole, %374, %375 : vector<128x128xf32>
    %377 = vector.broadcast %373 : vector<1x128xf32> to vector<128x128xf32>
    %378 = vector.broadcast %371 : vector<128x1xf32> to vector<128x128xf32>
    %379 = arith.cmpf olt, %377, %378 : vector<128x128xf32>
    %380 = arith.andi %376, %379 : vector<128x128xi1>
    %381 = arith.extui %380 : vector<128x128xi1> to vector<128x128xi32>
    %382 = arith.sitofp %381 : vector<128x128xi32> to vector<128x128xf32>
    %cst_154 = arith.constant dense<0.000000e+00> : vector<16x128xf32>
    %383 = tpu.matmul %342, %382, %cst_154 {dimension_numbers = #tpu.dot_dimension_numbers<[1], [0], [0], [1], [0, 0, 1, 1], [], []>, precision = #tpu.contract_precision<fp32>} : vector<16x128xf32>, vector<128x128xf32>, vector<16x128xf32> -> vector<16x128xf32>
    %cst_155 = arith.constant dense<0.000000e+00> : vector<16xf32>
    %384 = vector.multi_reduction <add>, %383, %cst_155 [1] : vector<16x128xf32> to vector<16xf32>
    %385 = vector.shape_cast %384 : vector<16xf32> to vector<16x1xf32>
    %cst_156 = arith.constant 1.280000e+02 : f32
    %386 = vector.broadcast %cst_156 : f32 to vector<16x1xf32>
    %387 = arith.divf %385, %386 : vector<16x1xf32>
    %388 = vector.shape_cast %387 : vector<16x1xf32> to vector<1x16x1xf32>
    %c0_157 = arith.constant 0 : index
    %c0_158 = arith.constant 0 : index
    %c0_159 = arith.constant 0 : index
    %389 = vector.load %arg5[%c0_157, %c0_158, %c0_159] : memref<1x16x1xf32, #tpu.memory_space<vmem>>, vector<1x16x1xf32>
    tpu.vector_store %arg5[%c0_157, %c0_158, %c0_159], %388 {strides = array<i32>} : memref<1x16x1xf32, #tpu.memory_space<vmem>>, vector<1x16x1xf32>,
    return
  }
  func.func @transform_0(%arg0: i32) -> (i32, i32, i32) {
    %c0_i32 = arith.constant 0 : i32
    %c0_i32_0 = arith.constant 0 : i32
    %c0_i32_1 = arith.constant 0 : i32
    return %arg0, %c0_i32, %c0_i32_0 : i32, i32, i32
  }
  func.func @transform_1(%arg0: i32) -> (i32, i32, i32) {
    %c0_i32 = arith.constant 0 : i32
    %c0_i32_0 = arith.constant 0 : i32
    %c0_i32_1 = arith.constant 0 : i32
    return %arg0, %c0_i32, %c0_i32_0 : i32, i32, i32
  }
  func.func @transform_2(%arg0: i32) -> (i32, i32, i32, i32) {
    %c0_i32 = arith.constant 0 : i32
    %c0_i32_0 = arith.constant 0 : i32
    %c0_i32_1 = arith.constant 0 : i32
    %c0_i32_2 = arith.constant 0 : i32
    return %arg0, %c0_i32, %c0_i32_0, %c0_i32_1 : i32, i32, i32, i32
  }
  func.func @transform_3(%arg0: i32) -> (i32, i32, i32) {
    %c0_i32 = arith.constant 0 : i32
    %c0_i32_0 = arith.constant 0 : i32
    %c0_i32_1 = arith.constant 0 : i32
    return %arg0, %c0_i32, %c0_i32_0 : i32, i32, i32
  }
  func.func @transform_4(%arg0: i32) -> (i32, i32, i32) {
    %c0_i32 = arith.constant 0 : i32
    %c0_i32_0 = arith.constant 0 : i32
    %c0_i32_1 = arith.constant 0 : i32
    return %arg0, %c0_i32, %c0_i32_0 : i32, i32, i32
  }
}

</mosaic_0001>

<llo_original>
// kernel: tpu_custom_call.1
$region0: #{tpu_custom_call.1}
  #allocation0 [shape = 'u32[]', space=smem, size = 0x4, offset = 0x4, fixed_abs, tag = 'smem constant byte address 0x4 - core index']
  #allocation1 [shape = 'u32[144,128]{1,0:T(1,128)}', space=vmem, size = 0x12000, scoped, tag = 'internal scratch']
  %s0 = inlined_call_operand.vmem [shape: f32[2,16,1], index: 0, kind: input, shape index: {}]
  %s1 = inlined_call_operand.vmem [shape: f32[2,16,8], index: 1, kind: input, shape index: {}]
  %s2 = inlined_call_operand.hbm [shape: f32[2,8,16,128], index: 2, kind: input, shape index: {}]
  %s3 = inlined_call_operand.vmem [shape: f32[2,8,128], index: 3, kind: input, shape index: {}]
  %s4 = inlined_call_operand.vmem [shape: f32[2,16,1], index: 4, kind: output, shape index: {}]
  %s5 = sld [smem:[#allocation0]]
  $region53: #{tpu_custom_call.1} parent=0
    _
  %s7 = ssub.s32 1, %s5
  %s8 = scalar_select 0, %s7, %s5
  $region1: #{tpu_custom_call.1} parent=0
    #allocation2 [shape = 'u8[131072]{0}', space=vmem, size = 0x20000, scoped, tag = 'input window, operand 2']
    #allocation3 [shape = 's32[2]{0}', space=sflag, size = 0x8, scoped, tag = 'scoped memory for tpu_custom_call.1']
    %9 = vsyncpa [#allocation3], 0
    %s10 = scalar_lea.sflag [#allocation3], 1
    %11 = vsyncpa %s10, 0
    loop: start=0, step=1, limit=4
    $region2: #{tpu_custom_call.1} parent=1 // loop_pre_header
      _
    $region3: #{tpu_custom_call.1} parent=1 // loop_header
      %s13 = sphi 0, %s17
      %p14 = scmp.ge.s32.totalorder %s13, 4
      %s23 = sphi 0, %s25
      %s26 = sphi 0, %s23
      %s27 = sphi 0, %s26
      %s43 = sphi 0, %s27
      %s49 = sphi 0, %s51
      %s52 = sphi 0, %s49
      %s53 = sphi 0, %s52
      %s69 = sphi 0, %s53
      %s75 = sphi 0, %s77
      %s78 = sphi 0, %s75
      %s79 = sphi 0, %s78
      %s95 = sphi 0, %s79
      %s101 = sphi 0, %s103
      %s104 = sphi 0, %s101
      %s105 = sphi 0, %s104
      %s121 = sphi 0, %s105
      %s127 = sphi 0, %s129
      %s130 = sphi 0, %s127
      %s131 = sphi 0, %s130
      %s147 = sphi 0, %s131
    $region4: #{tpu_custom_call.1} parent=1 // loop_header_branch
      %16 = sbr.rel (%p14) target = $region8
    $region5: #{tpu_custom_call.1} parent=1 // loop_body
      %s18 = ssub.s32 %s13, 1
      %s19 = ssub.s32 %s13, 2
      %s20 = sadd.s32 %s13, 1
      %s21 = ssub.s32 %s13, %s20
      %p22 = scmp.eq.s32.totalorder %s21, 0
      %s24 = sadd.s32 %s23, 1
      %s25 = scalar_select %p22, %s23, %s24
      %p28 = pneg %p22
      %p29 = scmp.eq.s32.totalorder %s13, 1
      %p30 = por %p28, %p29
      %p31 = scmp.ne.s32.totalorder %s23, %s26
      %p32 = scmp.eq.s32.totalorder %s13, 0
      %p33 = por %p31, %p32
      %p34 = scmp.ne.s32.totalorder %s23, %s26
      %p35 = scmp.eq.s32.totalorder %s18, 1
      %p36 = por %p34, %p35
      %p37 = scmp.ne.s32.totalorder %s26, %s27
      %p38 = scmp.eq.s32.totalorder %s18, 0
      %p39 = por %p37, %p38
      %p40 = scmp.ne.s32.totalorder %s26, %s27
      %p41 = scmp.eq.s32.totalorder %s19, 1
      %p42 = por %p40, %p41
      %p44 = scmp.ne.s32.totalorder %s27, %s43
      %p45 = scmp.eq.s32.totalorder %s19, 0
      %p46 = por %p44, %p45
      %s47 = ssub.s32 %s13, %s20
      %p48 = scmp.eq.s32.totalorder %s47, 0
      %s50 = sadd.s32 %s49, 1
      %s51 = scalar_select %p48, %s49, %s50
      %p54 = pneg %p48
      %p55 = scmp.eq.s32.totalorder %s13, 1
      %p56 = por %p54, %p55
      %p57 = scmp.ne.s32.totalorder %s49, %s52
      %p58 = scmp.eq.s32.totalorder %s13, 0
      %p59 = por %p57, %p58
      %p60 = scmp.ne.s32.totalorder %s49, %s52
      %p61 = scmp.eq.s32.totalorder %s18, 1
      %p62 = por %p60, %p61
      %p63 = scmp.ne.s32.totalorder %s52, %s53
      %p64 = scmp.eq.s32.totalorder %s18, 0
      %p65 = por %p63, %p64
      %p66 = scmp.ne.s32.totalorder %s52, %s53
      %p67 = scmp.eq.s32.totalorder %s19, 1
      %p68 = por %p66, %p67
      %p70 = scmp.ne.s32.totalorder %s53, %s69
      %p71 = scmp.eq.s32.totalorder %s19, 0
      %p72 = por %p70, %p71
      %s73 = ssub.s32 %s13, %s20
      %p74 = scmp.eq.s32.totalorder %s73, 0
      %s76 = sadd.s32 %s75, 1
      %s77 = scalar_select %p74, %s75, %s76
      %p80 = pneg %p74
      %p81 = scmp.eq.s32.totalorder %s13, 1
      %p82 = por %p80, %p81
      %p83 = scmp.ne.s32.totalorder %s75, %s78
      %p84 = scmp.eq.s32.totalorder %s13, 0
      %p85 = por %p83, %p84
      %p86 = scmp.ne.s32.totalorder %s75, %s78
      %p87 = scmp.eq.s32.totalorder %s18, 1
      %p88 = por %p86, %p87
      %p89 = scmp.ne.s32.totalorder %s78, %s79
      %p90 = scmp.eq.s32.totalorder %s18, 0
      %p91 = por %p89, %p90
      %p92 = scmp.ne.s32.totalorder %s78, %s79
      %p93 = scmp.eq.s32.totalorder %s19, 1
      %p94 = por %p92, %p93
      %p96 = scmp.ne.s32.totalorder %s79, %s95
      %p97 = scmp.eq.s32.totalorder %s19, 0
      %p98 = por %p96, %p97
      %s99 = ssub.s32 %s13, %s20
      %p100 = scmp.eq.s32.totalorder %s99, 0
      %s102 = sadd.s32 %s101, 1
      %s103 = scalar_select %p100, %s101, %s102
      %p106 = pneg %p100
      %p107 = scmp.eq.s32.totalorder %s13, 1
      %p108 = por %p106, %p107
      %p109 = scmp.ne.s32.totalorder %s101, %s104
      %p110 = scmp.eq.s32.totalorder %s13, 0
      %p111 = por %p109, %p110
      %p112 = scmp.ne.s32.totalorder %s101, %s104
      %p113 = scmp.eq.s32.totalorder %s18, 1
      %p114 = por %p112, %p113
      %p115 = scmp.ne.s32.totalorder %s104, %s105
      %p116 = scmp.eq.s32.totalorder %s18, 0
      %p117 = por %p115, %p116
      %p118 = scmp.ne.s32.totalorder %s104, %s105
      %p119 = scmp.eq.s32.totalorder %s19, 1
      %p120 = por %p118, %p119
      %p122 = scmp.ne.s32.totalorder %s105, %s121
      %p123 = scmp.eq.s32.totalorder %s19, 0
      %p124 = por %p122, %p123
      %s125 = ssub.s32 %s13, %s20
      %p126 = scmp.eq.s32.totalorder %s125, 0
      %s128 = sadd.s32 %s127, 1
      %s129 = scalar_select %p126, %s127, %s128
      %p132 = pneg %p126
      %p133 = scmp.eq.s32.totalorder %s13, 1
      %p134 = por %p132, %p133
      %p135 = scmp.ne.s32.totalorder %s127, %s130
      %p136 = scmp.eq.s32.totalorder %s13, 0
      %p137 = por %p135, %p136
      %p138 = scmp.ne.s32.totalorder %s127, %s130
      %p139 = scmp.eq.s32.totalorder %s18, 1
      %p140 = por %p138, %p139
      %p141 = scmp.ne.s32.totalorder %s130, %s131
      %p142 = scmp.eq.s32.totalorder %s18, 0
      %p143 = por %p141, %p142
      %p144 = scmp.ne.s32.totalorder %s130, %s131
      %p145 = scmp.eq.s32.totalorder %s19, 1
      %p146 = por %p144, %p145
      %p148 = scmp.ne.s32.totalorder %s131, %s147
      %p149 = scmp.eq.s32.totalorder %s19, 0
      %p150 = por %p148, %p149
      %p151 = scmp.le.s32.totalorder 1, %s13
      %p152 = scmp.lt.s32.totalorder %s13, 3
      %p153 = pnand %p151, %p152
      %p154 = pneg %p153
      // Predicated region
      $region9: #{tpu_custom_call.1} parent=5 // pred_check
        _
      $region10: #{tpu_custom_call.1} parent=5 // pred_check_branch
        %156 = sbr.rel (%p153) target = $region12
      $region11: #{tpu_custom_call.1} parent=5 // pred_region
        %s157 = ssub.s32 %s13, 1
      $region12: #{tpu_custom_call.1} parent=5 // pred_fallthru
        _
      %p158 = scmp.lt.s32.totalorder %s13, 2
      // Predicated region
      $region13: #{tpu_custom_call.1} parent=5 // pred_check
        %p159 = pneg %p158
      $region14: #{tpu_custom_call.1} parent=5 // pred_check_branch
        %161 = sbr.rel (%p159) target = $region16
      $region15: #{tpu_custom_call.1} parent=5 // pred_region
        // Predicated region
        $region17: #{tpu_custom_call.1} parent=15 // pred_check
          %p162 = pneg %p33
        $region18: #{tpu_custom_call.1} parent=15 // pred_check_branch
          %164 = sbr.rel (%p162) target = $region20
        $region19: #{tpu_custom_call.1} parent=15 // pred_region
          %p165 = scmp.lt.s32.totalorder %s13, 1
          %s166 = scalar_select %p165, %s13, 1
          %s167 = smul.addr %s166, 2
          %s168 = smul.addr %s167, 8
          %s169 = scalar_lea.vmem %s0, %s168
        $region20: #{tpu_custom_call.1} parent=15 // pred_fallthru
          _
        // Predicated region
        $region21: #{tpu_custom_call.1} parent=15 // pred_check
          %p170 = pneg %p59
        $region22: #{tpu_custom_call.1} parent=15 // pred_check_branch
          %172 = sbr.rel (%p170) target = $region24
        $region23: #{tpu_custom_call.1} parent=15 // pred_region
          %p173 = scmp.lt.s32.totalorder %s13, 1
          %s174 = scalar_select %p173, %s13, 1
          %s175 = smul.addr %s174, 2
          %s176 = smul.addr %s175, 8
          %s177 = scalar_lea.vmem %s1, %s176
        $region24: #{tpu_custom_call.1} parent=15 // pred_fallthru
          _
        // Predicated region
        $region25: #{tpu_custom_call.1} parent=15 // pred_check
          %p178 = pneg %p85
        $region26: #{tpu_custom_call.1} parent=15 // pred_check_branch
          %180 = sbr.rel (%p178) target = $region28
        $region27: #{tpu_custom_call.1} parent=15 // pred_region
          %s181 = sand.u32 %s75, 1
          %s182 = scalar_lea.sflag [#allocation3], %s181
          %s183 = sand.u32 %s75, 1
          %s184 = smul.addr %s183, 128
          %s185 = scalar_lea.vmem [#allocation2], %s184
          %s187 = ssub.s32 2048, 2048
          %188 = vsyncadd %s182, %s187
          %s189 = smul.addr %s13, 16
          %s190 = smul.addr %s189, 128
          %s191 = scalar_lea.hbm %s2, %s190
          %s192 = sshll.u32 %s185, 4
          %s193 = int_to_ptr.vmem [resolvable:$true] %s192
          %198 = dma.hbm_to_vmem [thread:$0]  %s191, 2048, %s193, %s182, 128, 128, 8
        $region28: #{tpu_custom_call.1} parent=15 // pred_fallthru
          _
        // Predicated region
        $region29: #{tpu_custom_call.1} parent=15 // pred_check
          %p199 = pneg %p111
        $region30: #{tpu_custom_call.1} parent=15 // pred_check_branch
          %201 = sbr.rel (%p199) target = $region32
        $region31: #{tpu_custom_call.1} parent=15 // pred_region
          %p202 = scmp.lt.s32.totalorder %s13, 1
          %s203 = scalar_select %p202, %s13, 1
          %s204 = smul.addr %s203, 8
          %s205 = scalar_lea.vmem %s3, %s204
        $region32: #{tpu_custom_call.1} parent=15 // pred_fallthru
          _
      $region16: #{tpu_custom_call.1} parent=5 // pred_fallthru
        _
      %p206 = scmp.le.s32.totalorder 1, %s13
      %p207 = scmp.lt.s32.totalorder %s13, 3
      %p208 = pnand %p206, %p207
      %p209 = pneg %p208
      // Predicated region
      $region33: #{tpu_custom_call.1} parent=5 // pred_check
        _
      $region34: #{tpu_custom_call.1} parent=5 // pred_check_branch
        %211 = sbr.rel (%p208) target = $region36
      $region35: #{tpu_custom_call.1} parent=5 // pred_region
        %s212 = ssub.s32 %s13, 1
        %s213 = sand.u32 %s78, 1
        %s214 = scalar_lea.sflag [#allocation3], %s213
        %s215 = sand.u32 %s78, 1
        %s216 = smul.addr %s215, 128
        %s217 = scalar_lea.vmem [#allocation2], %s216
        // Predicated region
        $region37: #{tpu_custom_call.1} parent=35 // pred_check
          %p218 = pneg %p91
        $region38: #{tpu_custom_call.1} parent=35 // pred_check_branch
          %220 = sbr.rel (%p218) target = $region40
        $region39: #{tpu_custom_call.1} parent=35 // pred_region
          %221 = dma.done %s214, 2048
        $region40: #{tpu_custom_call.1} parent=35 // pred_fallthru
          _
        %p222 = scmp.lt.s32.totalorder %s18, 1
        %s223 = scalar_select %p222, %s18, 1
        %s224 = smul.addr %s223, 2
        %s225 = smul.addr %s224, 8
        %s226 = scalar_lea.vmem %s0, %s225
        %p227 = pneg %p39
        %p228 = pneg %p36
        %p229 = scmp.lt.s32.totalorder %s18, 1
        %s230 = scalar_select %p229, %s18, 1
        %s231 = smul.addr %s230, 2
        %s232 = smul.addr %s231, 8
        %s233 = scalar_lea.vmem %s1, %s232
        %p234 = pneg %p65
        %p235 = pneg %p62
        %s236 = sand.u32 %s78, 1
        %s237 = scalar_lea.sflag [#allocation3], %s236
        %s238 = sand.u32 %s78, 1
        %s239 = smul.addr %s238, 128
        %s240 = scalar_lea.vmem [#allocation2], %s239
        %p241 = pneg %p91
        %p242 = pneg %p88
        %p243 = scmp.lt.s32.totalorder %s18, 1
        %s244 = scalar_select %p243, %s18, 1
        %s245 = smul.addr %s244, 8
        %s246 = scalar_lea.vmem %s3, %s245
        %p247 = pneg %p117
        %p248 = pneg %p114
        %p249 = pneg %p143
        %p250 = pneg %p140
        %p251 = scmp.lt.s32.totalorder %s18, 1
        %s252 = scalar_select %p251, %s18, 1
        %s253 = smul.addr %s252, 2
        %s254 = smul.addr %s253, 8
        %s255 = scalar_lea.vmem %s4, %s254
        %p256 = scmp.lt.s32.totalorder %s18, 1
        %s257 = scalar_select %p256, %s18, 1
        %s258 = smul.addr %s257, 2
        %s259 = smul.addr %s258, 8
        %s260 = scalar_lea.vmem %s0, %s259
        %p261 = scmp.lt.s32.totalorder %s18, 1
        %s262 = scalar_select %p261, %s18, 1
        %s263 = smul.addr %s262, 2
        %s264 = smul.addr %s263, 8
        %s265 = scalar_lea.vmem %s1, %s264
        %p266 = scmp.lt.s32.totalorder %s18, 1
        %s267 = scalar_select %p266, %s18, 1
        %s268 = smul.addr %s267, 8
        %s269 = scalar_lea.vmem %s3, %s268
        %p270 = scmp.lt.s32.totalorder %s18, 1
        %s271 = scalar_select %p270, %s18, 1
        %s272 = smul.addr %s271, 2
        %s273 = smul.addr %s272, 8
        %s274 = scalar_lea.vmem %s4, %s273
        %v275 = vld [vmem:[%s260] sm:$0xff]
        %v276 = vld [vmem:[%s260 + $0x8] sm:$0xff]
        %278 = vset.pattern.permute.xlu0 0
        %279 = vperm.xlu0 %278, %v275
        %v280 = vpop.permute.xlu0 %279
        %283 = vset.pattern.permute.xlu0 0
        %284 = vperm.xlu0 %283, %v276
        %v285 = vpop.permute.xlu0 %284
        %v287 = vlaneseq
        %v288 = vshrl.u32 %v287, 7
        %v289 = vadd.s32 %v288, 8
        %v290 = vadd.s32 %v288, 16
        %v291 = vadd.s32 %v288, 24
        %v292 = vadd.s32 %v288, 32
        %v293 = vadd.s32 %v288, 40
        %v294 = vadd.s32 %v288, 48
        %v295 = vadd.s32 %v288, 56
        %v296 = vadd.s32 %v288, 64
        %v297 = vadd.s32 %v288, 72
        %v298 = vadd.s32 %v288, 80
        %v299 = vadd.s32 %v288, 88
        %v300 = vadd.s32 %v288, 96
        %v301 = vadd.s32 %v288, 104
        %v302 = vadd.s32 %v288, 112
        %v303 = vadd.s32 %v288, 120
        %v304 = vlaneseq
        %v305 = vand.u32 %v304, 127
        %vm306 = vcmp.le.s32.totalorder %v305, %v288
        %vm307 = vcmp.le.s32.totalorder %v305, %v289
        %vm308 = vcmp.le.s32.totalorder %v305, %v290
        %vm309 = vcmp.le.s32.totalorder %v305, %v291
        %vm310 = vcmp.le.s32.totalorder %v305, %v292
        %vm311 = vcmp.le.s32.totalorder %v305, %v293
        %vm312 = vcmp.le.s32.totalorder %v305, %v294
        %vm313 = vcmp.le.s32.totalorder %v305, %v295
        %vm314 = vcmp.le.s32.totalorder %v305, %v296
        %vm315 = vcmp.le.s32.totalorder %v305, %v297
        %vm316 = vcmp.le.s32.totalorder %v305, %v298
        %vm317 = vcmp.le.s32.totalorder %v305, %v299
        %vm318 = vcmp.le.s32.totalorder %v305, %v300
        %vm319 = vcmp.le.s32.totalorder %v305, %v301
        %vm320 = vcmp.le.s32.totalorder %v305, %v302
        %vm321 = vcmp.le.s32.totalorder %v305, %v303
        %v322 = vsel %vm306, 1, 0
        %v323 = vsel %vm307, 1, 0
        %v324 = vsel %vm308, 1, 0
        %v325 = vsel %vm309, 1, 0
        %v326 = vsel %vm310, 1, 0
        %v327 = vsel %vm311, 1, 0
        %v328 = vsel %vm312, 1, 0
        %v329 = vsel %vm313, 1, 0
        %v330 = vsel %vm314, 1, 0
        %v331 = vsel %vm315, 1, 0
        %v332 = vsel %vm316, 1, 0
        %v333 = vsel %vm317, 1, 0
        %v334 = vsel %vm318, 1, 0
        %v335 = vsel %vm319, 1, 0
        %v336 = vsel %vm320, 1, 0
        %v337 = vsel %vm321, 1, 0
        %v338 = vcvt.s32.f32 %v322
        %v339 = vcvt.s32.f32 %v323
        %v340 = vcvt.s32.f32 %v324
        %v341 = vcvt.s32.f32 %v325
        %v342 = vcvt.s32.f32 %v326
        %v343 = vcvt.s32.f32 %v327
        %v344 = vcvt.s32.f32 %v328
        %v345 = vcvt.s32.f32 %v329
        %v346 = vcvt.s32.f32 %v330
        %v347 = vcvt.s32.f32 %v331
        %v348 = vcvt.s32.f32 %v332
        %v349 = vcvt.s32.f32 %v333
        %v350 = vcvt.s32.f32 %v334
        %v351 = vcvt.s32.f32 %v335
        %v352 = vcvt.s32.f32 %v336
        %v353 = vcvt.s32.f32 %v337
        %vm354 = vcmp.lt.s32.totalorder %v305, %v288
        %vm355 = vcmp.lt.s32.totalorder %v305, %v289
        %vm356 = vcmp.lt.s32.totalorder %v305, %v290
        %vm357 = vcmp.lt.s32.totalorder %v305, %v291
        %vm358 = vcmp.lt.s32.totalorder %v305, %v292
        %vm359 = vcmp.lt.s32.totalorder %v305, %v293
        %vm360 = vcmp.lt.s32.totalorder %v305, %v294
        %vm361 = vcmp.lt.s32.totalorder %v305, %v295
        %vm362 = vcmp.lt.s32.totalorder %v305, %v296
        %vm363 = vcmp.lt.s32.totalorder %v305, %v297
        %vm364 = vcmp.lt.s32.totalorder %v305, %v298
        %vm365 = vcmp.lt.s32.totalorder %v305, %v299
        %vm366 = vcmp.lt.s32.totalorder %v305, %v300
        %vm367 = vcmp.lt.s32.totalorder %v305, %v301
        %vm368 = vcmp.lt.s32.totalorder %v305, %v302
        %vm369 = vcmp.lt.s32.totalorder %v305, %v303
        %v370 = vsel %vm354, 1, 0
        %v371 = vsel %vm355, 1, 0
        %v372 = vsel %vm356, 1, 0
        %v373 = vsel %vm357, 1, 0
        %v374 = vsel %vm358, 1, 0
        %v375 = vsel %vm359, 1, 0
        %v376 = vsel %vm360, 1, 0
        %v377 = vsel %vm361, 1, 0
        %v378 = vsel %vm362, 1, 0
        %v379 = vsel %vm363, 1, 0
        %v380 = vsel %vm364, 1, 0
        %v381 = vsel %vm365, 1, 0
        %v382 = vsel %vm366, 1, 0
        %v383 = vsel %vm367, 1, 0
        %v384 = vsel %vm368, 1, 0
        %v385 = vsel %vm369, 1, 0
        %v386 = vcvt.s32.f32 %v370
        %v387 = vcvt.s32.f32 %v371
        %v388 = vcvt.s32.f32 %v372
        %v389 = vcvt.s32.f32 %v373
        %v390 = vcvt.s32.f32 %v374
        %v391 = vcvt.s32.f32 %v375
        %v392 = vcvt.s32.f32 %v376
        %v393 = vcvt.s32.f32 %v377
        %v394 = vcvt.s32.f32 %v378
        %v395 = vcvt.s32.f32 %v379
        %v396 = vcvt.s32.f32 %v380
        %v397 = vcvt.s32.f32 %v381
        %v398 = vcvt.s32.f32 %v382
        %v399 = vcvt.s32.f32 %v383
        %v400 = vcvt.s32.f32 %v384
        %v401 = vcvt.s32.f32 %v385
        %vm402 = vcmp.eq.s32.totalorder %v288, 127
        %vm403 = vcmp.eq.s32.totalorder %v289, 127
        %vm404 = vcmp.eq.s32.totalorder %v290, 127
        %vm405 = vcmp.eq.s32.totalorder %v291, 127
        %vm406 = vcmp.eq.s32.totalorder %v292, 127
        %vm407 = vcmp.eq.s32.totalorder %v293, 127
        %vm408 = vcmp.eq.s32.totalorder %v294, 127
        %vm409 = vcmp.eq.s32.totalorder %v295, 127
        %vm410 = vcmp.eq.s32.totalorder %v296, 127
        %vm411 = vcmp.eq.s32.totalorder %v297, 127
        %vm412 = vcmp.eq.s32.totalorder %v298, 127
        %vm413 = vcmp.eq.s32.totalorder %v299, 127
        %vm414 = vcmp.eq.s32.totalorder %v300, 127
        %vm415 = vcmp.eq.s32.totalorder %v301, 127
        %vm416 = vcmp.eq.s32.totalorder %v302, 127
        %vm417 = vcmp.eq.s32.totalorder %v303, 127
        %v418 = vld [vmem:[%s217] sm:$0xff]
        %v419 = vld [vmem:[%s217 + $0x8] sm:$0xff]
        %v420 = vmul.f32 %v418, 0.1
        %v421 = vmul.f32 %v419, 0.1
        %v422 = vadd.f32 %v280, %v420
        %v423 = vadd.f32 %v285, %v421
        %v424 = vld [vmem:[%s265] sm:$0xff]
        %v425 = vld [vmem:[%s265 + $0x8] sm:$0xff]
        %427 = vset.pattern.permute.xlu0 0
        %428 = vperm.xlu0 %427, %v424
        %v429 = vpop.permute.xlu0 %428
        %432 = vset.pattern.permute.xlu0 0
        %433 = vperm.xlu0 %432, %v425
        %v434 = vpop.permute.xlu0 %433
        %v436 = vsub.f32 %v422, %v429
        %v437 = vsub.f32 %v423, %v434
        %v438 = vmul.f32 %v436, %v436
        %v439 = vmul.f32 %v437, %v437
        %v440 = vadd.f32 %v438, %v439
        %v441 = vrot.slane %v440, 4
        %v442 = vadd.f32 %v440, %v441
        %v443 = vrot.slane %v442, 2
        %v444 = vadd.f32 %v442, %v443
        %v445 = vrot.slane %v444, 1
        %v446 = vadd.f32 %v444, %v445
        %v447 = vmul.f32 %v446, -0.5
        %v448 = vmul.f32 %v447, 1.442695
        %v449 = vpow.pop %v448
        %v450 = vadd.f32 %v449, 1e-08
        %v451 = vmul.f32 %v450, 0.0078125
        %v452 = vadd.f32 %v451, 1e-10
        %453 = vadd.xlane.f32.xlu0 %v452
        %v454 = vpop.xlane.xlu0 %453
        %v455 = vrcp.pop %v454
        %v456 = vmul.f32 %v452, %v455
        %v457 = vmul.f32 %v338, %v456
        %v458 = vmul.f32 %v339, %v456
        %v459 = vmul.f32 %v340, %v456
        %v460 = vmul.f32 %v341, %v456
        %v461 = vmul.f32 %v342, %v456
        %v462 = vmul.f32 %v343, %v456
        %v463 = vmul.f32 %v344, %v456
        %v464 = vmul.f32 %v345, %v456
        %v465 = vmul.f32 %v346, %v456
        %v466 = vmul.f32 %v347, %v456
        %v467 = vmul.f32 %v348, %v456
        %v468 = vmul.f32 %v349, %v456
        %v469 = vmul.f32 %v350, %v456
        %v470 = vmul.f32 %v351, %v456
        %v471 = vmul.f32 %v352, %v456
        %v472 = vmul.f32 %v353, %v456
        %473 = vadd.xlane.f32.xlu0 %v457
        %v474 = vpop.xlane.xlu0 %473
        %475 = vadd.xlane.f32.xlu0 %v458
        %v476 = vpop.xlane.xlu0 %475
        %477 = vadd.xlane.f32.xlu0 %v459
        %v478 = vpop.xlane.xlu0 %477
        %479 = vadd.xlane.f32.xlu0 %v460
        %v480 = vpop.xlane.xlu0 %479
        %481 = vadd.xlane.f32.xlu0 %v461
        %v482 = vpop.xlane.xlu0 %481
        %483 = vadd.xlane.f32.xlu0 %v462
        %v484 = vpop.xlane.xlu0 %483
        %485 = vadd.xlane.f32.xlu0 %v463
        %v486 = vpop.xlane.xlu0 %485
        %487 = vadd.xlane.f32.xlu0 %v464
        %v488 = vpop.xlane.xlu0 %487
        %489 = vadd.xlane.f32.xlu0 %v465
        %v490 = vpop.xlane.xlu0 %489
        %491 = vadd.xlane.f32.xlu0 %v466
        %v492 = vpop.xlane.xlu0 %491
        %493 = vadd.xlane.f32.xlu0 %v467
        %v494 = vpop.xlane.xlu0 %493
        %495 = vadd.xlane.f32.xlu0 %v468
        %v496 = vpop.xlane.xlu0 %495
        %497 = vadd.xlane.f32.xlu0 %v469
        %v498 = vpop.xlane.xlu0 %497
        %499 = vadd.xlane.f32.xlu0 %v470
        %v500 = vpop.xlane.xlu0 %499
        %501 = vadd.xlane.f32.xlu0 %v471
        %v502 = vpop.xlane.xlu0 %501
        %503 = vadd.xlane.f32.xlu0 %v472
        %v504 = vpop.xlane.xlu0 %503
        %v505 = vmul.f32 %v386, %v456
        %v506 = vmul.f32 %v387, %v456
        %v507 = vmul.f32 %v388, %v456
        %v508 = vmul.f32 %v389, %v456
        %v509 = vmul.f32 %v390, %v456
        %v510 = vmul.f32 %v391, %v456
        %v511 = vmul.f32 %v392, %v456
        %v512 = vmul.f32 %v393, %v456
        %v513 = vmul.f32 %v394, %v456
        %v514 = vmul.f32 %v395, %v456
        %v515 = vmul.f32 %v396, %v456
        %v516 = vmul.f32 %v397, %v456
        %v517 = vmul.f32 %v398, %v456
        %v518 = vmul.f32 %v399, %v456
        %v519 = vmul.f32 %v400, %v456
        %v520 = vmul.f32 %v401, %v456
        %521 = vadd.xlane.f32.xlu0 %v505
        %v522 = vpop.xlane.xlu0 %521
        %523 = vadd.xlane.f32.xlu0 %v506
        %v524 = vpop.xlane.xlu0 %523
        %525 = vadd.xlane.f32.xlu0 %v507
        %v526 = vpop.xlane.xlu0 %525
        %527 = vadd.xlane.f32.xlu0 %v508
        %v528 = vpop.xlane.xlu0 %527
        %529 = vadd.xlane.f32.xlu0 %v509
        %v530 = vpop.xlane.xlu0 %529
        %531 = vadd.xlane.f32.xlu0 %v510
        %v532 = vpop.xlane.xlu0 %531
        %533 = vadd.xlane.f32.xlu0 %v511
        %v534 = vpop.xlane.xlu0 %533
        %535 = vadd.xlane.f32.xlu0 %v512
        %v536 = vpop.xlane.xlu0 %535
        %537 = vadd.xlane.f32.xlu0 %v513
        %v538 = vpop.xlane.xlu0 %537
        %539 = vadd.xlane.f32.xlu0 %v514
        %v540 = vpop.xlane.xlu0 %539
        %541 = vadd.xlane.f32.xlu0 %v515
        %v542 = vpop.xlane.xlu0 %541
        %543 = vadd.xlane.f32.xlu0 %v516
        %v544 = vpop.xlane.xlu0 %543
        %545 = vadd.xlane.f32.xlu0 %v517
        %v546 = vpop.xlane.xlu0 %545
        %547 = vadd.xlane.f32.xlu0 %v518
        %v548 = vpop.xlane.xlu0 %547
        %549 = vadd.xlane.f32.xlu0 %v519
        %v550 = vpop.xlane.xlu0 %549
        %551 = vadd.xlane.f32.xlu0 %v520
        %v552 = vpop.xlane.xlu0 %551
        %v553 = vsel %vm402, 1e+30, %v474
        %v554 = vsel %vm403, 1e+30, %v476
        %v555 = vsel %vm404, 1e+30, %v478
        %v556 = vsel %vm405, 1e+30, %v480
        %v557 = vsel %vm406, 1e+30, %v482
        %v558 = vsel %vm407, 1e+30, %v484
        %v559 = vsel %vm408, 1e+30, %v486
        %v560 = vsel %vm409, 1e+30, %v488
        %v561 = vsel %vm410, 1e+30, %v490
        %v562 = vsel %vm411, 1e+30, %v492
        %v563 = vsel %vm412, 1e+30, %v494
        %v564 = vsel %vm413, 1e+30, %v496
        %v565 = vsel %vm414, 1e+30, %v498
        %v566 = vsel %vm415, 1e+30, %v500
        %v567 = vsel %vm416, 1e+30, %v502
        %v568 = vsel %vm417, 1e+30, %v504
        %v569 = vld [vmem:[%s269] sm:$0x1]
        %v570 = vlaneseq
        %v571 = vshrl.u32 %v570, 7
        %v572 = vsub.s32 0, %v571
        %v573 = vrot.slane %v569, %v572
        %vm574 = vcmp.le.f32.partialorder %v522, %v573
        %vm575 = vcmp.le.f32.partialorder %v524, %v573
        %vm576 = vcmp.le.f32.partialorder %v526, %v573
        %vm577 = vcmp.le.f32.partialorder %v528, %v573
        %vm578 = vcmp.le.f32.partialorder %v530, %v573
        %vm579 = vcmp.le.f32.partialorder %v532, %v573
        %vm580 = vcmp.le.f32.partialorder %v534, %v573
        %vm581 = vcmp.le.f32.partialorder %v536, %v573
        %vm582 = vcmp.le.f32.partialorder %v538, %v573
        %vm583 = vcmp.le.f32.partialorder %v540, %v573
        %vm584 = vcmp.le.f32.partialorder %v542, %v573
        %vm585 = vcmp.le.f32.partialorder %v544, %v573
        %vm586 = vcmp.le.f32.partialorder %v546, %v573
        %vm587 = vcmp.le.f32.partialorder %v548, %v573
        %vm588 = vcmp.le.f32.partialorder %v550, %v573
        %vm589 = vcmp.le.f32.partialorder %v552, %v573
        %vm590 = vcmp.lt.f32.partialorder %v573, %v553
        %vm591 = vcmp.lt.f32.partialorder %v573, %v554
        %vm592 = vcmp.lt.f32.partialorder %v573, %v555
        %vm593 = vcmp.lt.f32.partialorder %v573, %v556
        %vm594 = vcmp.lt.f32.partialorder %v573, %v557
        %vm595 = vcmp.lt.f32.partialorder %v573, %v558
        %vm596 = vcmp.lt.f32.partialorder %v573, %v559
        %vm597 = vcmp.lt.f32.partialorder %v573, %v560
        %vm598 = vcmp.lt.f32.partialorder %v573, %v561
        %vm599 = vcmp.lt.f32.partialorder %v573, %v562
        %vm600 = vcmp.lt.f32.partialorder %v573, %v563
        %vm601 = vcmp.lt.f32.partialorder %v573, %v564
        %vm602 = vcmp.lt.f32.partialorder %v573, %v565
        %vm603 = vcmp.lt.f32.partialorder %v573, %v566
        %vm604 = vcmp.lt.f32.partialorder %v573, %v567
        %vm605 = vcmp.lt.f32.partialorder %v573, %v568
        %vm606 = vmand %vm574, %vm590
        %vm607 = vmand %vm575, %vm591
        %vm608 = vmand %vm576, %vm592
        %vm609 = vmand %vm577, %vm593
        %vm610 = vmand %vm578, %vm594
        %vm611 = vmand %vm579, %vm595
        %vm612 = vmand %vm580, %vm596
        %vm613 = vmand %vm581, %vm597
        %vm614 = vmand %vm582, %vm598
        %vm615 = vmand %vm583, %vm599
        %vm616 = vmand %vm584, %vm600
        %vm617 = vmand %vm585, %vm601
        %vm618 = vmand %vm586, %vm602
        %vm619 = vmand %vm587, %vm603
        %vm620 = vmand %vm588, %vm604
        %vm621 = vmand %vm589, %vm605
        %v622 = vsel %vm606, 1, 0
        %v623 = vsel %vm607, 1, 0
        %v624 = vsel %vm608, 1, 0
        %v625 = vsel %vm609, 1, 0
        %v626 = vsel %vm610, 1, 0
        %v627 = vsel %vm611, 1, 0
        %v628 = vsel %vm612, 1, 0
        %v629 = vsel %vm613, 1, 0
        %v630 = vsel %vm614, 1, 0
        %v631 = vsel %vm615, 1, 0
        %v632 = vsel %vm616, 1, 0
        %v633 = vsel %vm617, 1, 0
        %v634 = vsel %vm618, 1, 0
        %v635 = vsel %vm619, 1, 0
        %v636 = vsel %vm620, 1, 0
        %v637 = vsel %vm621, 1, 0
        %v638 = vcvt.s32.f32 %v622
        %v639 = vcvt.s32.f32 %v623
        %v640 = vcvt.s32.f32 %v624
        %v641 = vcvt.s32.f32 %v625
        %v642 = vcvt.s32.f32 %v626
        %v643 = vcvt.s32.f32 %v627
        %v644 = vcvt.s32.f32 %v628
        %v645 = vcvt.s32.f32 %v629
        %v646 = vcvt.s32.f32 %v630
        %v647 = vcvt.s32.f32 %v631
        %v648 = vcvt.s32.f32 %v632
        %v649 = vcvt.s32.f32 %v633
        %v650 = vcvt.s32.f32 %v634
        %v651 = vcvt.s32.f32 %v635
        %v652 = vcvt.s32.f32 %v636
        %v653 = vcvt.s32.f32 %v637
        %s654 = scalar_lea.vmem %s217, 16 [#allocation2]
        %v655 = vld [vmem:[%s654] sm:$0xff]
        %v656 = vld [vmem:[%s654 + $0x8] sm:$0xff]
        %v657 = vmul.f32 %v655, 0.1
        %v658 = vmul.f32 %v656, 0.1
        %659 = vmatprep.subr.mxu0 0.0
        %v660 = vand.u32 %v638, 4294901760
        %661 = vmatpush1.msra.mxu0 %v660
        %662 = vmatprep.subr.mxu0 0.0
        %v663 = vand.u32 %v639, 4294901760
        %664 = vmatpush1.msra.mxu0 %v663
        %665 = vmatprep.subr.mxu0 0.0
        %v666 = vand.u32 %v640, 4294901760
        %667 = vmatpush1.msra.mxu0 %v666
        %668 = vmatprep.subr.mxu0 0.0
        %v669 = vand.u32 %v641, 4294901760
        %670 = vmatpush1.msra.mxu0 %v669
        %671 = vmatprep.subr.mxu0 0.0
        %v672 = vand.u32 %v642, 4294901760
        %673 = vmatpush1.msra.mxu0 %v672
        %674 = vmatprep.subr.mxu0 0.0
        %v675 = vand.u32 %v643, 4294901760
        %676 = vmatpush1.msra.mxu0 %v675
        %677 = vmatprep.subr.mxu0 0.0
        %v678 = vand.u32 %v644, 4294901760
        %679 = vmatpush1.msra.mxu0 %v678
        %680 = vmatprep.subr.mxu0 0.0
        %v681 = vand.u32 %v645, 4294901760
        %682 = vmatpush1.msra.mxu0 %v681
        %683 = vmatprep.subr.mxu0 0.0
        %v684 = vand.u32 %v646, 4294901760
        %685 = vmatpush1.msra.mxu0 %v684
        %686 = vmatprep.subr.mxu0 0.0
        %v687 = vand.u32 %v647, 4294901760
        %688 = vmatpush1.msra.mxu0 %v687
        %689 = vmatprep.subr.mxu0 0.0
        %v690 = vand.u32 %v648, 4294901760
        %691 = vmatpush1.msra.mxu0 %v690
        %692 = vmatprep.subr.mxu0 0.0
        %v693 = vand.u32 %v649, 4294901760
        %694 = vmatpush1.msra.mxu0 %v693
        %695 = vmatprep.subr.mxu0 0.0
        %v696 = vand.u32 %v650, 4294901760
        %697 = vmatpush1.msra.mxu0 %v696
        %698 = vmatprep.subr.mxu0 0.0
        %v699 = vand.u32 %v651, 4294901760
        %700 = vmatpush1.msra.mxu0 %v699
        %701 = vmatprep.subr.mxu0 0.0
        %v702 = vand.u32 %v652, 4294901760
        %703 = vmatpush1.msra.mxu0 %v702
        %704 = vmatprep.subr.mxu0 0.0
        %v705 = vand.u32 %v653, 4294901760
        %706 = vmatpush1.msra.mxu0 %v705
        %707 = vmatprep.subr.mxu0 0.0
        %708 = vmatpush1.msra.mxu0 0.0
        %709 = vmatprep.subr.mxu0 0.0
        %710 = vmatpush1.msra.mxu0 0.0
        %711 = vmatprep.subr.mxu0 0.0
        %712 = vmatpush1.msra.mxu0 0.0
        %713 = vmatprep.subr.mxu0 0.0
        %714 = vmatpush1.msra.mxu0 0.0
        %715 = vmatprep.subr.mxu0 0.0
        %716 = vmatpush1.msra.mxu0 0.0
        %717 = vmatprep.subr.mxu0 0.0
        %718 = vmatpush1.msra.mxu0 0.0
        %719 = vmatprep.subr.mxu0 0.0
        %720 = vmatpush1.msra.mxu0 0.0
        %721 = vmatprep.subr.mxu0 0.0
        %722 = vmatpush1.msra.mxu0 0.0
        %723 = vmatprep.subr.mxu0 0.0
        %724 = vmatpush1.msra.mxu0 0.0
        %725 = vmatprep.subr.mxu0 0.0
        %726 = vmatpush1.msra.mxu0 0.0
        %727 = vmatprep.subr.mxu0 0.0
        %728 = vmatpush1.msra.mxu0 0.0
        %729 = vmatprep.subr.mxu0 0.0
        %730 = vmatpush1.msra.mxu0 0.0
        %731 = vmatprep.subr.mxu0 0.0
        %732 = vmatpush1.msra.mxu0 0.0
        %733 = vmatprep.subr.mxu0 0.0
        %734 = vmatpush1.msra.mxu0 0.0
        %735 = vmatprep.subr.mxu0 0.0
        %736 = vmatpush1.msra.mxu0 0.0
        %737 = vmatprep.subr.mxu0 0.0
        %738 = vmatpush1.msra.mxu0 0.0
        %739 = vmatprep.mubr.f32.mxu0 0.0
        %v740 = vand.u32 %v422, 4294901760
        %v741 = vsub.f32 %v422, %v740
        %v742 = vand.u32 %v741, 4294901760
        %v743 = vsub.f32 %v741, %v742
        %v744 = vand.u32 %v743, 4294901760
        %745 = vmatmul.mubr.f32.gmra.mrb[0].mxu0 %v744
        %v746 = vpop.f32.mrb[0].mxu0
        %v747 = vadd.f32 %v657, %v746
        %v748 = vpop.f32.mrb[0].mxu0
        %749 = vmatprep.mubr.f32.mxu0 0.0
        %v750 = vand.u32 %v423, 4294901760
        %v751 = vsub.f32 %v423, %v750
        %v752 = vand.u32 %v751, 4294901760
        %v753 = vsub.f32 %v751, %v752
        %v754 = vand.u32 %v753, 4294901760
        %755 = vmatmul.mubr.f32.gmra.mrb[0].mxu0 %v754
        %v756 = vpop.f32.mrb[0].mxu0
        %v757 = vadd.f32 %v658, %v756
        %v758 = vpop.f32.mrb[0].mxu0
        %759 = vdwg.mxu0
        %760 = vmatprep.subr.mxu0 0.0
        %v761 = vand.u32 %v638, 4294901760
        %v762 = vsub.f32 %v638, %v761
        %v763 = vand.u32 %v762, 4294901760
        %v764 = vsub.f32 %v762, %v763
        %v765 = vand.u32 %v764, 4294901760
        %766 = vmatpush1.msra.mxu0 %v765
        %767 = vmatprep.subr.mxu0 0.0
        %v768 = vand.u32 %v639, 4294901760
        %v769 = vsub.f32 %v639, %v768
        %v770 = vand.u32 %v769, 4294901760
        %v771 = vsub.f32 %v769, %v770
        %v772 = vand.u32 %v771, 4294901760
        %773 = vmatpush1.msra.mxu0 %v772
        %774 = vmatprep.subr.mxu0 0.0
        %v775 = vand.u32 %v640, 4294901760
        %v776 = vsub.f32 %v640, %v775
        %v777 = vand.u32 %v776, 4294901760
        %v778 = vsub.f32 %v776, %v777
        %v779 = vand.u32 %v778, 4294901760
        %780 = vmatpush1.msra.mxu0 %v779
        %781 = vmatprep.subr.mxu0 0.0
        %v782 = vand.u32 %v641, 4294901760
        %v783 = vsub.f32 %v641, %v782
        %v784 = vand.u32 %v783, 4294901760
        %v785 = vsub.f32 %v783, %v784
        %v786 = vand.u32 %v785, 4294901760
        %787 = vmatpush1.msra.mxu0 %v786
        %788 = vmatprep.subr.mxu0 0.0
        %v789 = vand.u32 %v642, 4294901760
        %v790 = vsub.f32 %v642, %v789
        %v791 = vand.u32 %v790, 4294901760
        %v792 = vsub.f32 %v790, %v791
        %v793 = vand.u32 %v792, 4294901760
        %794 = vmatpush1.msra.mxu0 %v793
        %795 = vmatprep.subr.mxu0 0.0
        %v796 = vand.u32 %v643, 4294901760
        %v797 = vsub.f32 %v643, %v796
        %v798 = vand.u32 %v797, 4294901760
        %v799 = vsub.f32 %v797, %v798
        %v800 = vand.u32 %v799, 4294901760
        %801 = vmatpush1.msra.mxu0 %v800
        %802 = vmatprep.subr.mxu0 0.0
        %v803 = vand.u32 %v644, 4294901760
        %v804 = vsub.f32 %v644, %v803
        %v805 = vand.u32 %v804, 4294901760
        %v806 = vsub.f32 %v804, %v805
        %v807 = vand.u32 %v806, 4294901760
        %808 = vmatpush1.msra.mxu0 %v807
        %809 = vmatprep.subr.mxu0 0.0
        %v810 = vand.u32 %v645, 4294901760
        %v811 = vsub.f32 %v645, %v810
        %v812 = vand.u32 %v811, 4294901760
        %v813 = vsub.f32 %v811, %v812
        %v814 = vand.u32 %v813, 4294901760
        %815 = vmatpush1.msra.mxu0 %v814
        %816 = vmatprep.subr.mxu0 0.0
        %v817 = vand.u32 %v646, 4294901760
        %v818 = vsub.f32 %v646, %v817
        %v819 = vand.u32 %v818, 4294901760
        %v820 = vsub.f32 %v818, %v819
        %v821 = vand.u32 %v820, 4294901760
        %822 = vmatpush1.msra.mxu0 %v821
        %823 = vmatprep.subr.mxu0 0.0
        %v824 = vand.u32 %v647, 4294901760
        %v825 = vsub.f32 %v647, %v824
        %v826 = vand.u32 %v825, 4294901760
        %v827 = vsub.f32 %v825, %v826
        %v828 = vand.u32 %v827, 4294901760
        %829 = vmatpush1.msra.mxu0 %v828
        %830 = vmatprep.subr.mxu0 0.0
        %v831 = vand.u32 %v648, 4294901760
        %v832 = vsub.f32 %v648, %v831
        %v833 = vand.u32 %v832, 4294901760
        %v834 = vsub.f32 %v832, %v833
        %v835 = vand.u32 %v834, 4294901760
        %836 = vmatpush1.msra.mxu0 %v835
        %837 = vmatprep.subr.mxu0 0.0
        %v838 = vand.u32 %v649, 4294901760
        %v839 = vsub.f32 %v649, %v838
        %v840 = vand.u32 %v839, 4294901760
        %v841 = vsub.f32 %v839, %v840
        %v842 = vand.u32 %v841, 4294901760
        %843 = vmatpush1.msra.mxu0 %v842
        %844 = vmatprep.subr.mxu0 0.0
        %v845 = vand.u32 %v650, 4294901760
        %v846 = vsub.f32 %v650, %v845
        %v847 = vand.u32 %v846, 4294901760
        %v848 = vsub.f32 %v846, %v847
        %v849 = vand.u32 %v848, 4294901760
        %850 = vmatpush1.msra.mxu0 %v849
        %851 = vmatprep.subr.mxu0 0.0
        %v852 = vand.u32 %v651, 4294901760
        %v853 = vsub.f32 %v651, %v852
        %v854 = vand.u32 %v853, 4294901760
        %v855 = vsub.f32 %v853, %v854
        %v856 = vand.u32 %v855, 4294901760
        %857 = vmatpush1.msra.mxu0 %v856
        %858 = vmatprep.subr.mxu0 0.0
        %v859 = vand.u32 %v652, 4294901760
        %v860 = vsub.f32 %v652, %v859
        %v861 = vand.u32 %v860, 4294901760
        %v862 = vsub.f32 %v860, %v861
        %v863 = vand.u32 %v862, 4294901760
        %864 = vmatpush1.msra.mxu0 %v863
        %865 = vmatprep.subr.mxu0 0.0
        %v866 = vand.u32 %v653, 4294901760
        %v867 = vsub.f32 %v653, %v866
        %v868 = vand.u32 %v867, 4294901760
        %v869 = vsub.f32 %v867, %v868
        %v870 = vand.u32 %v869, 4294901760
        %871 = vmatpush1.msra.mxu0 %v870
        %872 = vmatprep.subr.mxu0 0.0
        %873 = vmatpush1.msra.mxu0 0.0
        %874 = vmatprep.subr.mxu0 0.0
        %875 = vmatpush1.msra.mxu0 0.0
        %876 = vmatprep.subr.mxu0 0.0
        %877 = vmatpush1.msra.mxu0 0.0
        %878 = vmatprep.subr.mxu0 0.0
        %879 = vmatpush1.msra.mxu0 0.0
        %880 = vmatprep.subr.mxu0 0.0
        %881 = vmatpush1.msra.mxu0 0.0
        %882 = vmatprep.subr.mxu0 0.0
        %883 = vmatpush1.msra.mxu0 0.0
        %884 = vmatprep.subr.mxu0 0.0
        %885 = vmatpush1.msra.mxu0 0.0
        %886 = vmatprep.subr.mxu0 0.0
        %887 = vmatpush1.msra.mxu0 0.0
        %888 = vmatprep.subr.mxu0 0.0
        %889 = vmatpush1.msra.mxu0 0.0
        %890 = vmatprep.subr.mxu0 0.0
        %891 = vmatpush1.msra.mxu0 0.0
        %892 = vmatprep.subr.mxu0 0.0
        %893 = vmatpush1.msra.mxu0 0.0
        %894 = vmatprep.subr.mxu0 0.0
        %895 = vmatpush1.msra.mxu0 0.0
        %896 = vmatprep.subr.mxu0 0.0
        %897 = vmatpush1.msra.mxu0 0.0
        %898 = vmatprep.subr.mxu0 0.0
        %899 = vmatpush1.msra.mxu0 0.0
        %900 = vmatprep.subr.mxu0 0.0
        %901 = vmatpush1.msra.mxu0 0.0
        %902 = vmatprep.subr.mxu0 0.0
        %903 = vmatpush1.msra.mxu0 0.0
        %904 = vmatprep.mubr.f32.mxu0 0.0
        %v905 = vand.u32 %v422, 4294901760
        %906 = vmatmul.mubr.f32.gmra.mrb[0].mxu0 %v905
        %v907 = vpop.f32.mrb[0].mxu0
        %v908 = vadd.f32 %v747, %v907
        %v909 = vpop.f32.mrb[0].mxu0
        %910 = vmatprep.mubr.f32.mxu0 0.0
        %v911 = vand.u32 %v423, 4294901760
        %912 = vmatmul.mubr.f32.gmra.mrb[0].mxu0 %v911
        %v913 = vpop.f32.mrb[0].mxu0
        %v914 = vadd.f32 %v757, %v913
        %v915 = vpop.f32.mrb[0].mxu0
        %916 = vdwg.mxu0
        %917 = vmatprep.subr.mxu0 0.0
        %v918 = vand.u32 %v638, 4294901760
        %v919 = vsub.f32 %v638, %v918
        %920 = vmatpush1.msra.mxu0 %v919
        %921 = vmatprep.subr.mxu0 0.0
        %v922 = vand.u32 %v639, 4294901760
        %v923 = vsub.f32 %v639, %v922
        %924 = vmatpush1.msra.mxu0 %v923
        %925 = vmatprep.subr.mxu0 0.0
        %v926 = vand.u32 %v640, 4294901760
        %v927 = vsub.f32 %v640, %v926
        %928 = vmatpush1.msra.mxu0 %v927
        %929 = vmatprep.subr.mxu0 0.0
        %v930 = vand.u32 %v641, 4294901760
        %v931 = vsub.f32 %v641, %v930
        %932 = vmatpush1.msra.mxu0 %v931
        %933 = vmatprep.subr.mxu0 0.0
        %v934 = vand.u32 %v642, 4294901760
        %v935 = vsub.f32 %v642, %v934
        %936 = vmatpush1.msra.mxu0 %v935
        %937 = vmatprep.subr.mxu0 0.0
        %v938 = vand.u32 %v643, 4294901760
        %v939 = vsub.f32 %v643, %v938
        %940 = vmatpush1.msra.mxu0 %v939
        %941 = vmatprep.subr.mxu0 0.0
        %v942 = vand.u32 %v644, 4294901760
        %v943 = vsub.f32 %v644, %v942
        %944 = vmatpush1.msra.mxu0 %v943
        %945 = vmatprep.subr.mxu0 0.0
        %v946 = vand.u32 %v645, 4294901760
        %v947 = vsub.f32 %v645, %v946
        %948 = vmatpush1.msra.mxu0 %v947
        %949 = vmatprep.subr.mxu0 0.0
        %v950 = vand.u32 %v646, 4294901760
        %v951 = vsub.f32 %v646, %v950
        %952 = vmatpush1.msra.mxu0 %v951
        %953 = vmatprep.subr.mxu0 0.0
        %v954 = vand.u32 %v647, 4294901760
        %v955 = vsub.f32 %v647, %v954
        %956 = vmatpush1.msra.mxu0 %v955
        %957 = vmatprep.subr.mxu0 0.0
        %v958 = vand.u32 %v648, 4294901760
        %v959 = vsub.f32 %v648, %v958
        %960 = vmatpush1.msra.mxu0 %v959
        %961 = vmatprep.subr.mxu0 0.0
        %v962 = vand.u32 %v649, 4294901760
        %v963 = vsub.f32 %v649, %v962
        %964 = vmatpush1.msra.mxu0 %v963
        %965 = vmatprep.subr.mxu0 0.0
        %v966 = vand.u32 %v650, 4294901760
        %v967 = vsub.f32 %v650, %v966
        %968 = vmatpush1.msra.mxu0 %v967
        %969 = vmatprep.subr.mxu0 0.0
        %v970 = vand.u32 %v651, 4294901760
        %v971 = vsub.f32 %v651, %v970
        %972 = vmatpush1.msra.mxu0 %v971
        %973 = vmatprep.subr.mxu0 0.0
        %v974 = vand.u32 %v652, 4294901760
        %v975 = vsub.f32 %v652, %v974
        %976 = vmatpush1.msra.mxu0 %v975
        %977 = vmatprep.subr.mxu0 0.0
        %v978 = vand.u32 %v653, 4294901760
        %v979 = vsub.f32 %v653, %v978
        %980 = vmatpush1.msra.mxu0 %v979
        %981 = vmatprep.subr.mxu0 0.0
        %982 = vmatpush1.msra.mxu0 0.0
        %983 = vmatprep.subr.mxu0 0.0
        %984 = vmatpush1.msra.mxu0 0.0
        %985 = vmatprep.subr.mxu0 0.0
        %986 = vmatpush1.msra.mxu0 0.0
        %987 = vmatprep.subr.mxu0 0.0
        %988 = vmatpush1.msra.mxu0 0.0
        %989 = vmatprep.subr.mxu0 0.0
        %990 = vmatpush1.msra.mxu0 0.0
        %991 = vmatprep.subr.mxu0 0.0
        %992 = vmatpush1.msra.mxu0 0.0
        %993 = vmatprep.subr.mxu0 0.0
        %994 = vmatpush1.msra.mxu0 0.0
        %995 = vmatprep.subr.mxu0 0.0
        %996 = vmatpush1.msra.mxu0 0.0
        %997 = vmatprep.subr.mxu0 0.0
        %998 = vmatpush1.msra.mxu0 0.0
        %999 = vmatprep.subr.mxu0 0.0
        %1000 = vmatpush1.msra.mxu0 0.0
        %1001 = vmatprep.subr.mxu0 0.0
        %1002 = vmatpush1.msra.mxu0 0.0
        %1003 = vmatprep.subr.mxu0 0.0
        %1004 = vmatpush1.msra.mxu0 0.0
        %1005 = vmatprep.subr.mxu0 0.0
        %1006 = vmatpush1.msra.mxu0 0.0
        %1007 = vmatprep.subr.mxu0 0.0
        %1008 = vmatpush1.msra.mxu0 0.0
        %1009 = vmatprep.subr.mxu0 0.0
        %1010 = vmatpush1.msra.mxu0 0.0
        %1011 = vmatprep.subr.mxu0 0.0
        %1012 = vmatpush1.msra.mxu0 0.0
        %1013 = vmatprep.mubr.f32.mxu0 0.0
        %v1014 = vand.u32 %v422, 4294901760
        %v1015 = vsub.f32 %v422, %v1014
        %1016 = vmatmul.mubr.f32.gmra.mrb[0].mxu0 %v1015
        %v1017 = vpop.f32.mrb[0].mxu0
        %v1018 = vadd.f32 %v908, %v1017
        %v1019 = vpop.f32.mrb[0].mxu0
        %1020 = vmatprep.mubr.f32.mxu0 0.0
        %v1021 = vand.u32 %v423, 4294901760
        %v1022 = vsub.f32 %v423, %v1021
        %1023 = vmatmul.mubr.f32.gmra.mrb[0].mxu0 %v1022
        %v1024 = vpop.f32.mrb[0].mxu0
        %v1025 = vadd.f32 %v914, %v1024
        %v1026 = vpop.f32.mrb[0].mxu0
        %1027 = vdwg.mxu0
        %1028 = vmatprep.subr.mxu0 0.0
        %v1029 = vand.u32 %v638, 4294901760
        %1030 = vmatpush1.msra.mxu0 %v1029
        %1031 = vmatprep.subr.mxu0 0.0
        %v1032 = vand.u32 %v639, 4294901760
        %1033 = vmatpush1.msra.mxu0 %v1032
        %1034 = vmatprep.subr.mxu0 0.0
        %v1035 = vand.u32 %v640, 4294901760
        %1036 = vmatpush1.msra.mxu0 %v1035
        %1037 = vmatprep.subr.mxu0 0.0
        %v1038 = vand.u32 %v641, 4294901760
        %1039 = vmatpush1.msra.mxu0 %v1038
        %1040 = vmatprep.subr.mxu0 0.0
        %v1041 = vand.u32 %v642, 4294901760
        %1042 = vmatpush1.msra.mxu0 %v1041
        %1043 = vmatprep.subr.mxu0 0.0
        %v1044 = vand.u32 %v643, 4294901760
        %1045 = vmatpush1.msra.mxu0 %v1044
        %1046 = vmatprep.subr.mxu0 0.0
        %v1047 = vand.u32 %v644, 4294901760
        %1048 = vmatpush1.msra.mxu0 %v1047
        %1049 = vmatprep.subr.mxu0 0.0
        %v1050 = vand.u32 %v645, 4294901760
        %1051 = vmatpush1.msra.mxu0 %v1050
        %1052 = vmatprep.subr.mxu0 0.0
        %v1053 = vand.u32 %v646, 4294901760
        %1054 = vmatpush1.msra.mxu0 %v1053
        %1055 = vmatprep.subr.mxu0 0.0
        %v1056 = vand.u32 %v647, 4294901760
        %1057 = vmatpush1.msra.mxu0 %v1056
        %1058 = vmatprep.subr.mxu0 0.0
        %v1059 = vand.u32 %v648, 4294901760
        %1060 = vmatpush1.msra.mxu0 %v1059
        %1061 = vmatprep.subr.mxu0 0.0
        %v1062 = vand.u32 %v649, 4294901760
        %1063 = vmatpush1.msra.mxu0 %v1062
        %1064 = vmatprep.subr.mxu0 0.0
        %v1065 = vand.u32 %v650, 4294901760
        %1066 = vmatpush1.msra.mxu0 %v1065
        %1067 = vmatprep.subr.mxu0 0.0
        %v1068 = vand.u32 %v651, 4294901760
        %1069 = vmatpush1.msra.mxu0 %v1068
        %1070 = vmatprep.subr.mxu0 0.0
        %v1071 = vand.u32 %v652, 4294901760
        %1072 = vmatpush1.msra.mxu0 %v1071
        %1073 = vmatprep.subr.mxu0 0.0
        %v1074 = vand.u32 %v653, 4294901760
        %1075 = vmatpush1.msra.mxu0 %v1074
        %1076 = vmatprep.subr.mxu0 0.0
        %1077 = vmatpush1.msra.mxu0 0.0
        %1078 = vmatprep.subr.mxu0 0.0
        %1079 = vmatpush1.msra.mxu0 0.0
        %1080 = vmatprep.subr.mxu0 0.0
        %1081 = vmatpush1.msra.mxu0 0.0
        %1082 = vmatprep.subr.mxu0 0.0
        %1083 = vmatpush1.msra.mxu0 0.0
        %1084 = vmatprep.subr.mxu0 0.0
        %1085 = vmatpush1.msra.mxu0 0.0
        %1086 = vmatprep.subr.mxu0 0.0
        %1087 = vmatpush1.msra.mxu0 0.0
        %1088 = vmatprep.subr.mxu0 0.0
        %1089 = vmatpush1.msra.mxu0 0.0
        %1090 = vmatprep.subr.mxu0 0.0
        %1091 = vmatpush1.msra.mxu0 0.0
        %1092 = vmatprep.subr.mxu0 0.0
        %1093 = vmatpush1.msra.mxu0 0.0
        %1094 = vmatprep.subr.mxu0 0.0
        %1095 = vmatpush1.msra.mxu0 0.0
        %1096 = vmatprep.subr.mxu0 0.0
        %1097 = vmatpush1.msra.mxu0 0.0
        %1098 = vmatprep.subr.mxu0 0.0
        %1099 = vmatpush1.msra.mxu0 0.0
        %1100 = vmatprep.subr.mxu0 0.0
        %1101 = vmatpush1.msra.mxu0 0.0
        %1102 = vmatprep.subr.mxu0 0.0
        %1103 = vmatpush1.msra.mxu0 0.0
        %1104 = vmatprep.subr.mxu0 0.0
        %1105 = vmatpush1.msra.mxu0 0.0
        %1106 = vmatprep.subr.mxu0 0.0
        %1107 = vmatpush1.msra.mxu0 0.0
        %1108 = vmatprep.mubr.f32.mxu0 0.0
        %v1109 = vand.u32 %v422, 4294901760
        %v1110 = vsub.f32 %v422, %v1109
        %v1111 = vand.u32 %v1110, 4294901760
        %1112 = vmatmul.mubr.f32.gmra.mrb[0].mxu0 %v1111
        %v1113 = vpop.f32.mrb[0].mxu0
        %v1114 = vadd.f32 %v1018, %v1113
        %v1115 = vpop.f32.mrb[0].mxu0
        %1116 = vmatprep.mubr.f32.mxu0 0.0
        %v1117 = vand.u32 %v423, 4294901760
        %v1118 = vsub.f32 %v423, %v1117
        %v1119 = vand.u32 %v1118, 4294901760
        %1120 = vmatmul.mubr.f32.gmra.mrb[0].mxu0 %v1119
        %v1121 = vpop.f32.mrb[0].mxu0
        %v1122 = vadd.f32 %v1025, %v1121
        %v1123 = vpop.f32.mrb[0].mxu0
        %1124 = vdwg.mxu0
        %1125 = vmatprep.subr.mxu0 0.0
        %v1126 = vand.u32 %v638, 4294901760
        %v1127 = vsub.f32 %v638, %v1126
        %v1128 = vand.u32 %v1127, 4294901760
        %1129 = vmatpush1.msra.mxu0 %v1128
        %1130 = vmatprep.subr.mxu0 0.0
        %v1131 = vand.u32 %v639, 4294901760
        %v1132 = vsub.f32 %v639, %v1131
        %v1133 = vand.u32 %v1132, 4294901760
        %1134 = vmatpush1.msra.mxu0 %v1133
        %1135 = vmatprep.subr.mxu0 0.0
        %v1136 = vand.u32 %v640, 4294901760
        %v1137 = vsub.f32 %v640, %v1136
        %v1138 = vand.u32 %v1137, 4294901760
        %1139 = vmatpush1.msra.mxu0 %v1138
        %1140 = vmatprep.subr.mxu0 0.0
        %v1141 = vand.u32 %v641, 4294901760
        %v1142 = vsub.f32 %v641, %v1141
        %v1143 = vand.u32 %v1142, 4294901760
        %1144 = vmatpush1.msra.mxu0 %v1143
        %1145 = vmatprep.subr.mxu0 0.0
        %v1146 = vand.u32 %v642, 4294901760
        %v1147 = vsub.f32 %v642, %v1146
        %v1148 = vand.u32 %v1147, 4294901760
        %1149 = vmatpush1.msra.mxu0 %v1148
        %1150 = vmatprep.subr.mxu0 0.0
        %v1151 = vand.u32 %v643, 4294901760
        %v1152 = vsub.f32 %v643, %v1151
        %v1153 = vand.u32 %v1152, 4294901760
        %1154 = vmatpush1.msra.mxu0 %v1153
        %1155 = vmatprep.subr.mxu0 0.0
        %v1156 = vand.u32 %v644, 4294901760
        %v1157 = vsub.f32 %v644, %v1156
        %v1158 = vand.u32 %v1157, 4294901760
        %1159 = vmatpush1.msra.mxu0 %v1158
        %1160 = vmatprep.subr.mxu0 0.0
        %v1161 = vand.u32 %v645, 4294901760
        %v1162 = vsub.f32 %v645, %v1161
        %v1163 = vand.u32 %v1162, 4294901760
        %1164 = vmatpush1.msra.mxu0 %v1163
        %1165 = vmatprep.subr.mxu0 0.0
        %v1166 = vand.u32 %v646, 4294901760
        %v1167 = vsub.f32 %v646, %v1166
        %v1168 = vand.u32 %v1167, 4294901760
        %1169 = vmatpush1.msra.mxu0 %v1168
        %1170 = vmatprep.subr.mxu0 0.0
        %v1171 = vand.u32 %v647, 4294901760
        %v1172 = vsub.f32 %v647, %v1171
        %v1173 = vand.u32 %v1172, 4294901760
        %1174 = vmatpush1.msra.mxu0 %v1173
        %1175 = vmatprep.subr.mxu0 0.0
        %v1176 = vand.u32 %v648, 4294901760
        %v1177 = vsub.f32 %v648, %v1176
        %v1178 = vand.u32 %v1177, 4294901760
        %1179 = vmatpush1.msra.mxu0 %v1178
        %1180 = vmatprep.subr.mxu0 0.0
        %v1181 = vand.u32 %v649, 4294901760
        %v1182 = vsub.f32 %v649, %v1181
        %v1183 = vand.u32 %v1182, 4294901760
        %1184 = vmatpush1.msra.mxu0 %v1183
        %1185 = vmatprep.subr.mxu0 0.0
        %v1186 = vand.u32 %v650, 4294901760
        %v1187 = vsub.f32 %v650, %v1186
        %v1188 = vand.u32 %v1187, 4294901760
        %1189 = vmatpush1.msra.mxu0 %v1188
        %1190 = vmatprep.subr.mxu0 0.0
        %v1191 = vand.u32 %v651, 4294901760
        %v1192 = vsub.f32 %v651, %v1191
        %v1193 = vand.u32 %v1192, 4294901760
        %1194 = vmatpush1.msra.mxu0 %v1193
        %1195 = vmatprep.subr.mxu0 0.0
        %v1196 = vand.u32 %v652, 4294901760
        %v1197 = vsub.f32 %v652, %v1196
        %v1198 = vand.u32 %v1197, 4294901760
        %1199 = vmatpush1.msra.mxu0 %v1198
        %1200 = vmatprep.subr.mxu0 0.0
        %v1201 = vand.u32 %v653, 4294901760
        %v1202 = vsub.f32 %v653, %v1201
        %v1203 = vand.u32 %v1202, 4294901760
        %1204 = vmatpush1.msra.mxu0 %v1203
        %1205 = vmatprep.subr.mxu0 0.0
        %1206 = vmatpush1.msra.mxu0 0.0
        %1207 = vmatprep.subr.mxu0 0.0
        %1208 = vmatpush1.msra.mxu0 0.0
        %1209 = vmatprep.subr.mxu0 0.0
        %1210 = vmatpush1.msra.mxu0 0.0
        %1211 = vmatprep.subr.mxu0 0.0
        %1212 = vmatpush1.msra.mxu0 0.0
        %1213 = vmatprep.subr.mxu0 0.0
        %1214 = vmatpush1.msra.mxu0 0.0
        %1215 = vmatprep.subr.mxu0 0.0
        %1216 = vmatpush1.msra.mxu0 0.0
        %1217 = vmatprep.subr.mxu0 0.0
        %1218 = vmatpush1.msra.mxu0 0.0
        %1219 = vmatprep.subr.mxu0 0.0
        %1220 = vmatpush1.msra.mxu0 0.0
        %1221 = vmatprep.subr.mxu0 0.0
        %1222 = vmatpush1.msra.mxu0 0.0
        %1223 = vmatprep.subr.mxu0 0.0
        %1224 = vmatpush1.msra.mxu0 0.0
        %1225 = vmatprep.subr.mxu0 0.0
        %1226 = vmatpush1.msra.mxu0 0.0
        %1227 = vmatprep.subr.mxu0 0.0
        %1228 = vmatpush1.msra.mxu0 0.0
        %1229 = vmatprep.subr.mxu0 0.0
        %1230 = vmatpush1.msra.mxu0 0.0
        %1231 = vmatprep.subr.mxu0 0.0
        %1232 = vmatpush1.msra.mxu0 0.0
        %1233 = vmatprep.subr.mxu0 0.0
        %1234 = vmatpush1.msra.mxu0 0.0
        %1235 = vmatprep.subr.mxu0 0.0
        %1236 = vmatpush1.msra.mxu0 0.0
        %1237 = vmatprep.mubr.f32.mxu0 0.0
        %v1238 = vand.u32 %v422, 4294901760
        %1239 = vmatmul.mubr.f32.gmra.mrb[0].mxu0 %v1238
        %v1240 = vpop.f32.mrb[0].mxu0
        %v1241 = vadd.f32 %v1114, %v1240
        %v1242 = vpop.f32.mrb[0].mxu0
        %1243 = vmatprep.mubr.f32.mxu0 0.0
        %v1244 = vand.u32 %v423, 4294901760
        %1245 = vmatmul.mubr.f32.gmra.mrb[0].mxu0 %v1244
        %v1246 = vpop.f32.mrb[0].mxu0
        %v1247 = vadd.f32 %v1122, %v1246
        %v1248 = vpop.f32.mrb[0].mxu0
        %1249 = vdwg.mxu0
        %1250 = vmatprep.subr.mxu0 0.0
        %v1251 = vand.u32 %v638, 4294901760
        %1252 = vmatpush1.msra.mxu0 %v1251
        %1253 = vmatprep.subr.mxu0 0.0
        %v1254 = vand.u32 %v639, 4294901760
        %1255 = vmatpush1.msra.mxu0 %v1254
        %1256 = vmatprep.subr.mxu0 0.0
        %v1257 = vand.u32 %v640, 4294901760
        %1258 = vmatpush1.msra.mxu0 %v1257
        %1259 = vmatprep.subr.mxu0 0.0
        %v1260 = vand.u32 %v641, 4294901760
        %1261 = vmatpush1.msra.mxu0 %v1260
        %1262 = vmatprep.subr.mxu0 0.0
        %v1263 = vand.u32 %v642, 4294901760
        %1264 = vmatpush1.msra.mxu0 %v1263
        %1265 = vmatprep.subr.mxu0 0.0
        %v1266 = vand.u32 %v643, 4294901760
        %1267 = vmatpush1.msra.mxu0 %v1266
        %1268 = vmatprep.subr.mxu0 0.0
        %v1269 = vand.u32 %v644, 4294901760
        %1270 = vmatpush1.msra.mxu0 %v1269
        %1271 = vmatprep.subr.mxu0 0.0
        %v1272 = vand.u32 %v645, 4294901760
        %1273 = vmatpush1.msra.mxu0 %v1272
        %1274 = vmatprep.subr.mxu0 0.0
        %v1275 = vand.u32 %v646, 4294901760
        %1276 = vmatpush1.msra.mxu0 %v1275
        %1277 = vmatprep.subr.mxu0 0.0
        %v1278 = vand.u32 %v647, 4294901760
        %1279 = vmatpush1.msra.mxu0 %v1278
        %1280 = vmatprep.subr.mxu0 0.0
        %v1281 = vand.u32 %v648, 4294901760
        %1282 = vmatpush1.msra.mxu0 %v1281
        %1283 = vmatprep.subr.mxu0 0.0
        %v1284 = vand.u32 %v649, 4294901760
        %1285 = vmatpush1.msra.mxu0 %v1284
        %1286 = vmatprep.subr.mxu0 0.0
        %v1287 = vand.u32 %v650, 4294901760
        %1288 = vmatpush1.msra.mxu0 %v1287
        %1289 = vmatprep.subr.mxu0 0.0
        %v1290 = vand.u32 %v651, 4294901760
        %1291 = vmatpush1.msra.mxu0 %v1290
        %1292 = vmatprep.subr.mxu0 0.0
        %v1293 = vand.u32 %v652, 4294901760
        %1294 = vmatpush1.msra.mxu0 %v1293
        %1295 = vmatprep.subr.mxu0 0.0
        %v1296 = vand.u32 %v653, 4294901760
        %1297 = vmatpush1.msra.mxu0 %v1296
        %1298 = vmatprep.subr.mxu0 0.0
        %1299 = vmatpush1.msra.mxu0 0.0
        %1300 = vmatprep.subr.mxu0 0.0
        %1301 = vmatpush1.msra.mxu0 0.0
        %1302 = vmatprep.subr.mxu0 0.0
        %1303 = vmatpush1.msra.mxu0 0.0
        %1304 = vmatprep.subr.mxu0 0.0
        %1305 = vmatpush1.msra.mxu0 0.0
        %1306 = vmatprep.subr.mxu0 0.0
        %1307 = vmatpush1.msra.mxu0 0.0
        %1308 = vmatprep.subr.mxu0 0.0
        %1309 = vmatpush1.msra.mxu0 0.0
        %1310 = vmatprep.subr.mxu0 0.0
        %1311 = vmatpush1.msra.mxu0 0.0
        %1312 = vmatprep.subr.mxu0 0.0
        %1313 = vmatpush1.msra.mxu0 0.0
        %1314 = vmatprep.subr.mxu0 0.0
        %1315 = vmatpush1.msra.mxu0 0.0
        %1316 = vmatprep.subr.mxu0 0.0
        %1317 = vmatpush1.msra.mxu0 0.0
        %1318 = vmatprep.subr.mxu0 0.0
        %1319 = vmatpush1.msra.mxu0 0.0
        %1320 = vmatprep.subr.mxu0 0.0
        %1321 = vmatpush1.msra.mxu0 0.0
        %1322 = vmatprep.subr.mxu0 0.0
        %1323 = vmatpush1.msra.mxu0 0.0
        %1324 = vmatprep.subr.mxu0 0.0
        %1325 = vmatpush1.msra.mxu0 0.0
        %1326 = vmatprep.subr.mxu0 0.0
        %1327 = vmatpush1.msra.mxu0 0.0
        %1328 = vmatprep.subr.mxu0 0.0
        %1329 = vmatpush1.msra.mxu0 0.0
        %1330 = vmatprep.mubr.f32.mxu0 0.0
        %v1331 = vand.u32 %v422, 4294901760
        %1332 = vmatmul.mubr.f32.gmra.mrb[0].mxu0 %v1331
        %v1333 = vpop.f32.mrb[0].mxu0
        %v1334 = vadd.f32 %v1241, %v1333
        %v1335 = vpop.f32.mrb[0].mxu0
        %1336 = vmatprep.mubr.f32.mxu0 0.0
        %v1337 = vand.u32 %v423, 4294901760
        %1338 = vmatmul.mubr.f32.gmra.mrb[0].mxu0 %v1337
        %v1339 = vpop.f32.mrb[0].mxu0
        %v1340 = vadd.f32 %v1247, %v1339
        %v1341 = vpop.f32.mrb[0].mxu0
        %1342 = vdwg.mxu0
        %1343 = vset.pattern.permute.xlu0 1
        %1344 = vperm.xlu0 %1343, %v424
        %v1345 = vpop.permute.xlu0 %1344
        %1347 = vset.pattern.permute.xlu0 1
        %1348 = vperm.xlu0 %1347, %v425
        %v1349 = vpop.permute.xlu0 %1348
        %v1351 = vsub.f32 %v1334, %v1345
        %v1352 = vsub.f32 %v1340, %v1349
        %v1353 = vmul.f32 %v1351, %v1351
        %v1354 = vmul.f32 %v1352, %v1352
        %v1355 = vadd.f32 %v1353, %v1354
        %v1356 = vrot.slane %v1355, 4
        %v1357 = vadd.f32 %v1355, %v1356
        %v1358 = vrot.slane %v1357, 2
        %v1359 = vadd.f32 %v1357, %v1358
        %v1360 = vrot.slane %v1359, 1
        %v1361 = vadd.f32 %v1359, %v1360
        %v1362 = vmul.f32 %v1361, -0.5
        %v1363 = vmul.f32 %v1362, 1.442695
        %v1364 = vpow.pop %v1363
        %v1365 = vadd.f32 %v1364, 1e-08
        %v1366 = vmul.f32 %v456, %v1365
        %v1367 = vadd.f32 %v1366, 1e-10
        %1368 = vadd.xlane.f32.xlu0 %v1367
        %v1369 = vpop.xlane.xlu0 %1368
        %v1370 = vrcp.pop %v1369
        %v1371 = vmul.f32 %v1367, %v1370
        %v1372 = vmul.f32 %v338, %v1371
        %v1373 = vmul.f32 %v339, %v1371
        %v1374 = vmul.f32 %v340, %v1371
        %v1375 = vmul.f32 %v341, %v1371
        %v1376 = vmul.f32 %v342, %v1371
        %v1377 = vmul.f32 %v343, %v1371
        %v1378 = vmul.f32 %v344, %v1371
        %v1379 = vmul.f32 %v345, %v1371
        %v1380 = vmul.f32 %v346, %v1371
        %v1381 = vmul.f32 %v347, %v1371
        %v1382 = vmul.f32 %v348, %v1371
        %v1383 = vmul.f32 %v349, %v1371
        %v1384 = vmul.f32 %v350, %v1371
        %v1385 = vmul.f32 %v351, %v1371
        %v1386 = vmul.f32 %v352, %v1371
        %v1387 = vmul.f32 %v353, %v1371
        %1388 = vadd.xlane.f32.xlu0 %v1372
        %v1389 = vpop.xlane.xlu0 %1388
        %1390 = vadd.xlane.f32.xlu0 %v1373
        %v1391 = vpop.xlane.xlu0 %1390
        %1392 = vadd.xlane.f32.xlu0 %v1374
        %v1393 = vpop.xlane.xlu0 %1392
        %1394 = vadd.xlane.f32.xlu0 %v1375
        %v1395 = vpop.xlane.xlu0 %1394
        %1396 = vadd.xlane.f32.xlu0 %v1376
        %v1397 = vpop.xlane.xlu0 %1396
        %1398 = vadd.xlane.f32.xlu0 %v1377
        %v1399 = vpop.xlane.xlu0 %1398
        %1400 = vadd.xlane.f32.xlu0 %v1378
        %v1401 = vpop.xlane.xlu0 %1400
        %1402 = vadd.xlane.f32.xlu0 %v1379
        %v1403 = vpop.xlane.xlu0 %1402
        %1404 = vadd.xlane.f32.xlu0 %v1380
        %v1405 = vpop.xlane.xlu0 %1404
        %1406 = vadd.xlane.f32.xlu0 %v1381
        %v1407 = vpop.xlane.xlu0 %1406
        %1408 = vadd.xlane.f32.xlu0 %v1382
        %v1409 = vpop.xlane.xlu0 %1408
        %1410 = vadd.xlane.f32.xlu0 %v1383
        %v1411 = vpop.xlane.xlu0 %1410
        %1412 = vadd.xlane.f32.xlu0 %v1384
        %v1413 = vpop.xlane.xlu0 %1412
        %1414 = vadd.xlane.f32.xlu0 %v1385
        %v1415 = vpop.xlane.xlu0 %1414
        %1416 = vadd.xlane.f32.xlu0 %v1386
        %v1417 = vpop.xlane.xlu0 %1416
        %1418 = vadd.xlane.f32.xlu0 %v1387
        %v1419 = vpop.xlane.xlu0 %1418
        %v1420 = vmul.f32 %v386, %v1371
        %v1421 = vmul.f32 %v387, %v1371
        %v1422 = vmul.f32 %v388, %v1371
        %v1423 = vmul.f32 %v389, %v1371
        %v1424 = vmul.f32 %v390, %v1371
        %v1425 = vmul.f32 %v391, %v1371
        %v1426 = vmul.f32 %v392, %v1371
        %v1427 = vmul.f32 %v393, %v1371
        %v1428 = vmul.f32 %v394, %v1371
        %v1429 = vmul.f32 %v395, %v1371
        %v1430 = vmul.f32 %v396, %v1371
        %v1431 = vmul.f32 %v397, %v1371
        %v1432 = vmul.f32 %v398, %v1371
        %v1433 = vmul.f32 %v399, %v1371
        %v1434 = vmul.f32 %v400, %v1371
        %v1435 = vmul.f32 %v401, %v1371
        %1436 = vadd.xlane.f32.xlu0 %v1420
        %v1437 = vpop.xlane.xlu0 %1436
        %1438 = vadd.xlane.f32.xlu0 %v1421
        %v1439 = vpop.xlane.xlu0 %1438
        %1440 = vadd.xlane.f32.xlu0 %v1422
        %v1441 = vpop.xlane.xlu0 %1440
        %1442 = vadd.xlane.f32.xlu0 %v1423
        %v1443 = vpop.xlane.xlu0 %1442
        %1444 = vadd.xlane.f32.xlu0 %v1424
        %v1445 = vpop.xlane.xlu0 %1444
        %1446 = vadd.xlane.f32.xlu0 %v1425
        %v1447 = vpop.xlane.xlu0 %1446
        %1448 = vadd.xlane.f32.xlu0 %v1426
        %v1449 = vpop.xlane.xlu0 %1448
        %1450 = vadd.xlane.f32.xlu0 %v1427
        %v1451 = vpop.xlane.xlu0 %1450
        %1452 = vadd.xlane.f32.xlu0 %v1428
        %v1453 = vpop.xlane.xlu0 %1452
        %1454 = vadd.xlane.f32.xlu0 %v1429
        %v1455 = vpop.xlane.xlu0 %1454
        %1456 = vadd.xlane.f32.xlu0 %v1430
        %v1457 = vpop.xlane.xlu0 %1456
        %1458 = vadd.xlane.f32.xlu0 %v1431
        %v1459 = vpop.xlane.xlu0 %1458
        %1460 = vadd.xlane.f32.xlu0 %v1432
        %v1461 = vpop.xlane.xlu0 %1460
        %1462 = vadd.xlane.f32.xlu0 %v1433
        %v1463 = vpop.xlane.xlu0 %1462
        %1464 = vadd.xlane.f32.xlu0 %v1434
        %v1465 = vpop.xlane.xlu0 %1464
        %1466 = vadd.xlane.f32.xlu0 %v1435
        %v1467 = vpop.xlane.xlu0 %1466
        %v1468 = vsel %vm402, 1e+30, %v1389
        %v1469 = vsel %vm403, 1e+30, %v1391
        %v1470 = vsel %vm404, 1e+30, %v1393
        %v1471 = vsel %vm405, 1e+30, %v1395
        %v1472 = vsel %vm406, 1e+30, %v1397
        %v1473 = vsel %vm407, 1e+30, %v1399
        %v1474 = vsel %vm408, 1e+30, %v1401
        %v1475 = vsel %vm409, 1e+30, %v1403
        %v1476 = vsel %vm410, 1e+30, %v1405
        %v1477 = vsel %vm411, 1e+30, %v1407
        %v1478 = vsel %vm412, 1e+30, %v1409
        %v1479 = vsel %vm413, 1e+30, %v1411
        %v1480 = vsel %vm414, 1e+30, %v1413
        %v1481 = vsel %vm415, 1e+30, %v1415
        %v1482 = vsel %vm416, 1e+30, %v1417
        %v1483 = vsel %vm417, 1e+30, %v1419
        %v1484 = vld [vmem:[%s269 + $0x1] sm:$0x1]
        %v1485 = vlaneseq
        %v1486 = vshrl.u32 %v1485, 7
        %v1487 = vsub.s32 0, %v1486
        %v1488 = vrot.slane %v1484, %v1487
        %vm1489 = vcmp.le.f32.partialorder %v1437, %v1488
        %vm1490 = vcmp.le.f32.partialorder %v1439, %v1488
        %vm1491 = vcmp.le.f32.partialorder %v1441, %v1488
        %vm1492 = vcmp.le.f32.partialorder %v1443, %v1488
        %vm1493 = vcmp.le.f32.partialorder %v1445, %v1488
        %vm1494 = vcmp.le.f32.partialorder %v1447, %v1488
        %vm1495 = vcmp.le.f32.partialorder %v1449, %v1488
        %vm1496 = vcmp.le.f32.partialorder %v1451, %v1488
        %vm1497 = vcmp.le.f32.partialorder %v1453, %v1488
        %vm1498 = vcmp.le.f32.partialorder %v1455, %v1488
        %vm1499 = vcmp.le.f32.partialorder %v1457, %v1488
        %vm1500 = vcmp.le.f32.partialorder %v1459, %v1488
        %vm1501 = vcmp.le.f32.partialorder %v1461, %v1488
        %vm1502 = vcmp.le.f32.partialorder %v1463, %v1488
        %vm1503 = vcmp.le.f32.partialorder %v1465, %v1488
        %vm1504 = vcmp.le.f32.partialorder %v1467, %v1488
        %vm1505 = vcmp.lt.f32.partialorder %v1488, %v1468
        %vm1506 = vcmp.lt.f32.partialorder %v1488, %v1469
        %vm1507 = vcmp.lt.f32.partialorder %v1488, %v1470
        %vm1508 = vcmp.lt.f32.partialorder %v1488, %v1471
        %vm1509 = vcmp.lt.f32.partialorder %v1488, %v1472
        %vm1510 = vcmp.lt.f32.partialorder %v1488, %v1473
        %vm1511 = vcmp.lt.f32.partialorder %v1488, %v1474
        %vm1512 = vcmp.lt.f32.partialorder %v1488, %v1475
        %vm1513 = vcmp.lt.f32.partialorder %v1488, %v1476
        %vm1514 = vcmp.lt.f32.partialorder %v1488, %v1477
        %vm1515 = vcmp.lt.f32.partialorder %v1488, %v1478
        %vm1516 = vcmp.lt.f32.partialorder %v1488, %v1479
        %vm1517 = vcmp.lt.f32.partialorder %v1488, %v1480
        %vm1518 = vcmp.lt.f32.partialorder %v1488, %v1481
        %vm1519 = vcmp.lt.f32.partialorder %v1488, %v1482
        %vm1520 = vcmp.lt.f32.partialorder %v1488, %v1483
        %vm1521 = vmand %vm1489, %vm1505
        %vm1522 = vmand %vm1490, %vm1506
        %vm1523 = vmand %vm1491, %vm1507
        %vm1524 = vmand %vm1492, %vm1508
        %vm1525 = vmand %vm1493, %vm1509
        %vm1526 = vmand %vm1494, %vm1510
        %vm1527 = vmand %vm1495, %vm1511
        %vm1528 = vmand %vm1496, %vm1512
        %vm1529 = vmand %vm1497, %vm1513
        %vm1530 = vmand %vm1498, %vm1514
        %vm1531 = vmand %vm1499, %vm1515
        %vm1532 = vmand %vm1500, %vm1516
        %vm1533 = vmand %vm1501, %vm1517
        %vm1534 = vmand %vm1502, %vm1518
        %vm1535 = vmand %vm1503, %vm1519
        %vm1536 = vmand %vm1504, %vm1520
        %v1537 = vsel %vm1521, 1, 0
        %v1538 = vsel %vm1522, 1, 0
        %v1539 = vsel %vm1523, 1, 0
        %v1540 = vsel %vm1524, 1, 0
        %v1541 = vsel %vm1525, 1, 0
        %v1542 = vsel %vm1526, 1, 0
        %v1543 = vsel %vm1527, 1, 0
        %v1544 = vsel %vm1528, 1, 0
        %v1545 = vsel %vm1529, 1, 0
        %v1546 = vsel %vm1530, 1, 0
        %v1547 = vsel %vm1531, 1, 0
        %v1548 = vsel %vm1532, 1, 0
        %v1549 = vsel %vm1533, 1, 0
        %v1550 = vsel %vm1534, 1, 0
        %v1551 = vsel %vm1535, 1, 0
        %v1552 = vsel %vm1536, 1, 0
        %v1553 = vcvt.s32.f32 %v1537
        %v1554 = vcvt.s32.f32 %v1538
        %v1555 = vcvt.s32.f32 %v1539
        %v1556 = vcvt.s32.f32 %v1540
        %v1557 = vcvt.s32.f32 %v1541
        %v1558 = vcvt.s32.f32 %v1542
        %v1559 = vcvt.s32.f32 %v1543
        %v1560 = vcvt.s32.f32 %v1544
        %v1561 = vcvt.s32.f32 %v1545
        %v1562 = vcvt.s32.f32 %v1546
        %v1563 = vcvt.s32.f32 %v1547
        %v1564 = vcvt.s32.f32 %v1548
        %v1565 = vcvt.s32.f32 %v1549
        %v1566 = vcvt.s32.f32 %v1550
        %v1567 = vcvt.s32.f32 %v1551
        %v1568 = vcvt.s32.f32 %v1552
        %s1569 = scalar_lea.vmem %s217, 32 [#allocation2]
        %v1570 = vld [vmem:[%s1569] sm:$0xff]
        %v1571 = vld [vmem:[%s1569 + $0x8] sm:$0xff]
        %v1572 = vmul.f32 %v1570, 0.1
        %v1573 = vmul.f32 %v1571, 0.1
        %1574 = vmatprep.subr.mxu0 0.0
        %v1575 = vand.u32 %v1553, 4294901760
        %1576 = vmatpush1.msra.mxu0 %v1575
        %1577 = vmatprep.subr.mxu0 0.0
        %v1578 = vand.u32 %v1554, 4294901760
        %1579 = vmatpush1.msra.mxu0 %v1578
        %1580 = vmatprep.subr.mxu0 0.0
        %v1581 = vand.u32 %v1555, 4294901760
        %1582 = vmatpush1.msra.mxu0 %v1581
        %1583 = vmatprep.subr.mxu0 0.0
        %v1584 = vand.u32 %v1556, 4294901760
        %1585 = vmatpush1.msra.mxu0 %v1584
        %1586 = vmatprep.subr.mxu0 0.0
        %v1587 = vand.u32 %v1557, 4294901760
        %1588 = vmatpush1.msra.mxu0 %v1587
        %1589 = vmatprep.subr.mxu0 0.0
        %v1590 = vand.u32 %v1558, 4294901760
        %1591 = vmatpush1.msra.mxu0 %v1590
        %1592 = vmatprep.subr.mxu0 0.0
        %v1593 = vand.u32 %v1559, 4294901760
        %1594 = vmatpush1.msra.mxu0 %v1593
        %1595 = vmatprep.subr.mxu0 0.0
        %v1596 = vand.u32 %v1560, 4294901760
        %1597 = vmatpush1.msra.mxu0 %v1596
        %1598 = vmatprep.subr.mxu0 0.0
        %v1599 = vand.u32 %v1561, 4294901760
        %1600 = vmatpush1.msra.mxu0 %v1599
        %1601 = vmatprep.subr.mxu0 0.0
        %v1602 = vand.u32 %v1562, 4294901760
        %1603 = vmatpush1.msra.mxu0 %v1602
        %1604 = vmatprep.subr.mxu0 0.0
        %v1605 = vand.u32 %v1563, 4294901760
        %1606 = vmatpush1.msra.mxu0 %v1605
        %1607 = vmatprep.subr.mxu0 0.0
        %v1608 = vand.u32 %v1564, 4294901760
        %1609 = vmatpush1.msra.mxu0 %v1608
        %1610 = vmatprep.subr.mxu0 0.0
        %v1611 = vand.u32 %v1565, 4294901760
        %1612 = vmatpush1.msra.mxu0 %v1611
        %1613 = vmatprep.subr.mxu0 0.0
        %v1614 = vand.u32 %v1566, 4294901760
        %1615 = vmatpush1.msra.mxu0 %v1614
        %1616 = vmatprep.subr.mxu0 0.0
        %v1617 = vand.u32 %v1567, 4294901760
        %1618 = vmatpush1.msra.mxu0 %v1617
        %1619 = vmatprep.subr.mxu0 0.0
        %v1620 = vand.u32 %v1568, 4294901760
        %1621 = vmatpush1.msra.mxu0 %v1620
        %1622 = vmatprep.subr.mxu0 0.0
        %1623 = vmatpush1.msra.mxu0 0.0
        %1624 = vmatprep.subr.mxu0 0.0
        %1625 = vmatpush1.msra.mxu0 0.0
        %1626 = vmatprep.subr.mxu0 0.0
        %1627 = vmatpush1.msra.mxu0 0.0
        %1628 = vmatprep.subr.mxu0 0.0
        %1629 = vmatpush1.msra.mxu0 0.0
        %1630 = vmatprep.subr.mxu0 0.0
        %1631 = vmatpush1.msra.mxu0 0.0
        %1632 = vmatprep.subr.mxu0 0.0
        %1633 = vmatpush1.msra.mxu0 0.0
        %1634 = vmatprep.subr.mxu0 0.0
        %1635 = vmatpush1.msra.mxu0 0.0
        %1636 = vmatprep.subr.mxu0 0.0
        %1637 = vmatpush1.msra.mxu0 0.0
        %1638 = vmatprep.subr.mxu0 0.0
        %1639 = vmatpush1.msra.mxu0 0.0
        %1640 = vmatprep.subr.mxu0 0.0
        %1641 = vmatpush1.msra.mxu0 0.0
        %1642 = vmatprep.subr.mxu0 0.0
        %1643 = vmatpush1.msra.mxu0 0.0
        %1644 = vmatprep.subr.mxu0 0.0
        %1645 = vmatpush1.msra.mxu0 0.0
        %1646 = vmatprep.subr.mxu0 0.0
        %1647 = vmatpush1.msra.mxu0 0.0
        %1648 = vmatprep.subr.mxu0 0.0
        %1649 = vmatpush1.msra.mxu0 0.0
        %1650 = vmatprep.subr.mxu0 0.0
        %1651 = vmatpush1.msra.mxu0 0.0
        %1652 = vmatprep.subr.mxu0 0.0
        %1653 = vmatpush1.msra.mxu0 0.0
        %1654 = vmatprep.mubr.f32.mxu0 0.0
        %v1655 = vand.u32 %v1334, 4294901760
        %v1656 = vsub.f32 %v1334, %v1655
        %v1657 = vand.u32 %v1656, 4294901760
        %v1658 = vsub.f32 %v1656, %v1657
        %v1659 = vand.u32 %v1658, 4294901760
        %1660 = vmatmul.mubr.f32.gmra.mrb[0].mxu0 %v1659
        %v1661 = vpop.f32.mrb[0].mxu0
        %v1662 = vadd.f32 %v1572, %v1661
        %v1663 = vpop.f32.mrb[0].mxu0
        %1664 = vmatprep.mubr.f32.mxu0 0.0
        %v1665 = vand.u32 %v1340, 4294901760
        %v1666 = vsub.f32 %v1340, %v1665
        %v1667 = vand.u32 %v1666, 4294901760
        %v1668 = vsub.f32 %v1666, %v1667
        %v1669 = vand.u32 %v1668, 4294901760
        %1670 = vmatmul.mubr.f32.gmra.mrb[0].mxu0 %v1669
        %v1671 = vpop.f32.mrb[0].mxu0
        %v1672 = vadd.f32 %v1573, %v1671
        %v1673 = vpop.f32.mrb[0].mxu0
        %1674 = vdwg.mxu0
        %1675 = vmatprep.subr.mxu0 0.0
        %v1676 = vand.u32 %v1553, 4294901760
        %v1677 = vsub.f32 %v1553, %v1676
        %v1678 = vand.u32 %v1677, 4294901760
        %v1679 = vsub.f32 %v1677, %v1678
        %v1680 = vand.u32 %v1679, 4294901760
        %1681 = vmatpush1.msra.mxu0 %v1680
        %1682 = vmatprep.subr.mxu0 0.0
        %v1683 = vand.u32 %v1554, 4294901760
        %v1684 = vsub.f32 %v1554, %v1683
        %v1685 = vand.u32 %v1684, 4294901760
        %v1686 = vsub.f32 %v1684, %v1685
        %v1687 = vand.u32 %v1686, 4294901760
        %1688 = vmatpush1.msra.mxu0 %v1687
        %1689 = vmatprep.subr.mxu0 0.0
        %v1690 = vand.u32 %v1555, 4294901760
        %v1691 = vsub.f32 %v1555, %v1690
        %v1692 = vand.u32 %v1691, 4294901760
        %v1693 = vsub.f32 %v1691, %v1692
        %v1694 = vand.u32 %v1693, 4294901760
        %1695 = vmatpush1.msra.mxu0 %v1694
        %1696 = vmatprep.subr.mxu0 0.0
        %v1697 = vand.u32 %v1556, 4294901760
        %v1698 = vsub.f32 %v1556, %v1697
        %v1699 = vand.u32 %v1698, 4294901760
        %v1700 = vsub.f32 %v1698, %v1699
        %v1701 = vand.u32 %v1700, 4294901760
        %1702 = vmatpush1.msra.mxu0 %v1701
        %1703 = vmatprep.subr.mxu0 0.0
        %v1704 = vand.u32 %v1557, 4294901760
        %v1705 = vsub.f32 %v1557, %v1704
        %v1706 = vand.u32 %v1705, 4294901760
        %v1707 = vsub.f32 %v1705, %v1706
        %v1708 = vand.u32 %v1707, 4294901760
        %1709 = vmatpush1.msra.mxu0 %v1708
        %1710 = vmatprep.subr.mxu0 0.0
        %v1711 = vand.u32 %v1558, 4294901760
        %v1712 = vsub.f32 %v1558, %v1711
        %v1713 = vand.u32 %v1712, 4294901760
        %v1714 = vsub.f32 %v1712, %v1713
        %v1715 = vand.u32 %v1714, 4294901760
        %1716 = vmatpush1.msra.mxu0 %v1715
        %1717 = vmatprep.subr.mxu0 0.0
        %v1718 = vand.u32 %v1559, 4294901760
        %v1719 = vsub.f32 %v1559, %v1718
        %v1720 = vand.u32 %v1719, 4294901760
        %v1721 = vsub.f32 %v1719, %v1720
        %v1722 = vand.u32 %v1721, 4294901760
        %1723 = vmatpush1.msra.mxu0 %v1722
        %1724 = vmatprep.subr.mxu0 0.0
        %v1725 = vand.u32 %v1560, 4294901760
        %v1726 = vsub.f32 %v1560, %v1725
        %v1727 = vand.u32 %v1726, 4294901760
        %v1728 = vsub.f32 %v1726, %v1727
        %v1729 = vand.u32 %v1728, 4294901760
        %1730 = vmatpush1.msra.mxu0 %v1729
        %1731 = vmatprep.subr.mxu0 0.0
        %v1732 = vand.u32 %v1561, 4294901760
        %v1733 = vsub.f32 %v1561, %v1732
        %v1734 = vand.u32 %v1733, 4294901760
        %v1735 = vsub.f32 %v1733, %v1734
        %v1736 = vand.u32 %v1735, 4294901760
        %1737 = vmatpush1.msra.mxu0 %v1736
        %1738 = vmatprep.subr.mxu0 0.0
        %v1739 = vand.u32 %v1562, 4294901760
        %v1740 = vsub.f32 %v1562, %v1739
        %v1741 = vand.u32 %v1740, 4294901760
        %v1742 = vsub.f32 %v1740, %v1741
        %v1743 = vand.u32 %v1742, 4294901760
        %1744 = vmatpush1.msra.mxu0 %v1743
        %1745 = vmatprep.subr.mxu0 0.0
        %v1746 = vand.u32 %v1563, 4294901760
        %v1747 = vsub.f32 %v1563, %v1746
        %v1748 = vand.u32 %v1747, 4294901760
        %v1749 = vsub.f32 %v1747, %v1748
        %v1750 = vand.u32 %v1749, 4294901760
        %1751 = vmatpush1.msra.mxu0 %v1750
        %1752 = vmatprep.subr.mxu0 0.0
        %v1753 = vand.u32 %v1564, 4294901760
        %v1754 = vsub.f32 %v1564, %v1753
        %v1755 = vand.u32 %v1754, 4294901760
        %v1756 = vsub.f32 %v1754, %v1755
        %v1757 = vand.u32 %v1756, 4294901760
        %1758 = vmatpush1.msra.mxu0 %v1757
        %1759 = vmatprep.subr.mxu0 0.0
        %v1760 = vand.u32 %v1565, 4294901760
        %v1761 = vsub.f32 %v1565, %v1760
        %v1762 = vand.u32 %v1761, 4294901760
        %v1763 = vsub.f32 %v1761, %v1762
        %v1764 = vand.u32 %v1763, 4294901760
        %1765 = vmatpush1.msra.mxu0 %v1764
        %1766 = vmatprep.subr.mxu0 0.0
        %v1767 = vand.u32 %v1566, 4294901760
        %v1768 = vsub.f32 %v1566, %v1767
        %v1769 = vand.u32 %v1768, 4294901760
        %v1770 = vsub.f32 %v1768, %v1769
        %v1771 = vand.u32 %v1770, 4294901760
        %1772 = vmatpush1.msra.mxu0 %v1771
        %1773 = vmatprep.subr.mxu0 0.0
        %v1774 = vand.u32 %v1567, 4294901760
        %v1775 = vsub.f32 %v1567, %v1774
        %v1776 = vand.u32 %v1775, 4294901760
        %v1777 = vsub.f32 %v1775, %v1776
        %v1778 = vand.u32 %v1777, 4294901760
        %1779 = vmatpush1.msra.mxu0 %v1778
        %1780 = vmatprep.subr.mxu0 0.0
        %v1781 = vand.u32 %v1568, 4294901760
        %v1782 = vsub.f32 %v1568, %v1781
        %v1783 = vand.u32 %v1782, 4294901760
        %v1784 = vsub.f32 %v1782, %v1783
        %v1785 = vand.u32 %v1784, 4294901760
        %1786 = vmatpush1.msra.mxu0 %v1785
        %1787 = vmatprep.subr.mxu0 0.0
        %1788 = vmatpush1.msra.mxu0 0.0
        %1789 = vmatprep.subr.mxu0 0.0
        %1790 = vmatpush1.msra.mxu0 0.0
        %1791 = vmatprep.subr.mxu0 0.0
        %1792 = vmatpush1.msra.mxu0 0.0
        %1793 = vmatprep.subr.mxu0 0.0
        %1794 = vmatpush1.msra.mxu0 0.0
        %1795 = vmatprep.subr.mxu0 0.0
        %1796 = vmatpush1.msra.mxu0 0.0
        %1797 = vmatprep.subr.mxu0 0.0
        %1798 = vmatpush1.msra.mxu0 0.0
        %1799 = vmatprep.subr.mxu0 0.0
        %1800 = vmatpush1.msra.mxu0 0.0
        %1801 = vmatprep.subr.mxu0 0.0
        %1802 = vmatpush1.msra.mxu0 0.0
        %1803 = vmatprep.subr.mxu0 0.0
        %1804 = vmatpush1.msra.mxu0 0.0
        %1805 = vmatprep.subr.mxu0 0.0
        %1806 = vmatpush1.msra.mxu0 0.0
        %1807 = vmatprep.subr.mxu0 0.0
        %1808 = vmatpush1.msra.mxu0 0.0
        %1809 = vmatprep.subr.mxu0 0.0
        %1810 = vmatpush1.msra.mxu0 0.0
        %1811 = vmatprep.subr.mxu0 0.0
        %1812 = vmatpush1.msra.mxu0 0.0
        %1813 = vmatprep.subr.mxu0 0.0
        %1814 = vmatpush1.msra.mxu0 0.0
        %1815 = vmatprep.subr.mxu0 0.0
        %1816 = vmatpush1.msra.mxu0 0.0
        %1817 = vmatprep.subr.mxu0 0.0
        %1818 = vmatpush1.msra.mxu0 0.0
        %1819 = vmatprep.mubr.f32.mxu0 0.0
        %v1820 = vand.u32 %v1334, 4294901760
        %1821 = vmatmul.mubr.f32.gmra.mrb[0].mxu0 %v1820
        %v1822 = vpop.f32.mrb[0].mxu0
        %v1823 = vadd.f32 %v1662, %v1822
        %v1824 = vpop.f32.mrb[0].mxu0
        %1825 = vmatprep.mubr.f32.mxu0 0.0
        %v1826 = vand.u32 %v1340, 4294901760
        %1827 = vmatmul.mubr.f32.gmra.mrb[0].mxu0 %v1826
        %v1828 = vpop.f32.mrb[0].mxu0
        %v1829 = vadd.f32 %v1672, %v1828
        %v1830 = vpop.f32.mrb[0].mxu0
        %1831 = vdwg.mxu0
        %1832 = vmatprep.subr.mxu0 0.0
        %v1833 = vand.u32 %v1553, 4294901760
        %v1834 = vsub.f32 %v1553, %v1833
        %1835 = vmatpush1.msra.mxu0 %v1834
        %1836 = vmatprep.subr.mxu0 0.0
        %v1837 = vand.u32 %v1554, 4294901760
        %v1838 = vsub.f32 %v1554, %v1837
        %1839 = vmatpush1.msra.mxu0 %v1838
        %1840 = vmatprep.subr.mxu0 0.0
        %v1841 = vand.u32 %v1555, 4294901760
        %v1842 = vsub.f32 %v1555, %v1841
        %1843 = vmatpush1.msra.mxu0 %v1842
        %1844 = vmatprep.subr.mxu0 0.0
        %v1845 = vand.u32 %v1556, 4294901760
        %v1846 = vsub.f32 %v1556, %v1845
        %1847 = vmatpush1.msra.mxu0 %v1846
        %1848 = vmatprep.subr.mxu0 0.0
        %v1849 = vand.u32 %v1557, 4294901760
        %v1850 = vsub.f32 %v1557, %v1849
        %1851 = vmatpush1.msra.mxu0 %v1850
        %1852 = vmatprep.subr.mxu0 0.0
        %v1853 = vand.u32 %v1558, 4294901760
        %v1854 = vsub.f32 %v1558, %v1853
        %1855 = vmatpush1.msra.mxu0 %v1854
        %1856 = vmatprep.subr.mxu0 0.0
        %v1857 = vand.u32 %v1559, 4294901760
        %v1858 = vsub.f32 %v1559, %v1857
        %1859 = vmatpush1.msra.mxu0 %v1858
        %1860 = vmatprep.subr.mxu0 0.0
        %v1861 = vand.u32 %v1560, 4294901760
        %v1862 = vsub.f32 %v1560, %v1861
        %1863 = vmatpush1.msra.mxu0 %v1862
        %1864 = vmatprep.subr.mxu0 0.0
        %v1865 = vand.u32 %v1561, 4294901760
        %v1866 = vsub.f32 %v1561, %v1865
        %1867 = vmatpush1.msra.mxu0 %v1866
        %1868 = vmatprep.subr.mxu0 0.0
        %v1869 = vand.u32 %v1562, 4294901760
        %v1870 = vsub.f32 %v1562, %v1869
        %1871 = vmatpush1.msra.mxu0 %v1870
        %1872 = vmatprep.subr.mxu0 0.0
        %v1873 = vand.u32 %v1563, 4294901760
        %v1874 = vsub.f32 %v1563, %v1873
        %1875 = vmatpush1.msra.mxu0 %v1874
        %1876 = vmatprep.subr.mxu0 0.0
        %v1877 = vand.u32 %v1564, 4294901760
        %v1878 = vsub.f32 %v1564, %v1877
        %1879 = vmatpush1.msra.mxu0 %v1878
        %1880 = vmatprep.subr.mxu0 0.0
        %v1881 = vand.u32 %v1565, 4294901760
        %v1882 = vsub.f32 %v1565, %v1881
        %1883 = vmatpush1.msra.mxu0 %v1882
        %1884 = vmatprep.subr.mxu0 0.0
        %v1885 = vand.u32 %v1566, 4294901760
        %v1886 = vsub.f32 %v1566, %v1885
        %1887 = vmatpush1.msra.mxu0 %v1886
        %1888 = vmatprep.subr.mxu0 0.0
        %v1889 = vand.u32 %v1567, 4294901760
        %v1890 = vsub.f32 %v1567, %v1889
        %1891 = vmatpush1.msra.mxu0 %v1890
        %1892 = vmatprep.subr.mxu0 0.0
        %v1893 = vand.u32 %v1568, 4294901760
        %v1894 = vsub.f32 %v1568, %v1893
        %1895 = vmatpush1.msra.mxu0 %v1894
        %1896 = vmatprep.subr.mxu0 0.0
        %1897 = vmatpush1.msra.mxu0 0.0
        %1898 = vmatprep.subr.mxu0 0.0
        %1899 = vmatpush1.msra.mxu0 0.0
        %1900 = vmatprep.subr.mxu0 0.0
        %1901 = vmatpush1.msra.mxu0 0.0
        %1902 = vmatprep.subr.mxu0 0.0
        %1903 = vmatpush1.msra.mxu0 0.0
        %1904 = vmatprep.subr.mxu0 0.0
        %1905 = vmatpush1.msra.mxu0 0.0
        %1906 = vmatprep.subr.mxu0 0.0
        %1907 = vmatpush1.msra.mxu0 0.0
        %1908 = vmatprep.subr.mxu0 0.0
        %1909 = vmatpush1.msra.mxu0 0.0
        %1910 = vmatprep.subr.mxu0 0.0
        %1911 = vmatpush1.msra.mxu0 0.0
        %1912 = vmatprep.subr.mxu0 0.0
        %1913 = vmatpush1.msra.mxu0 0.0
        %1914 = vmatprep.subr.mxu0 0.0
        %1915 = vmatpush1.msra.mxu0 0.0
        %1916 = vmatprep.subr.mxu0 0.0
        %1917 = vmatpush1.msra.mxu0 0.0
        %1918 = vmatprep.subr.mxu0 0.0
        %1919 = vmatpush1.msra.mxu0 0.0
        %1920 = vmatprep.subr.mxu0 0.0
        %1921 = vmatpush1.msra.mxu0 0.0
        %1922 = vmatprep.subr.mxu0 0.0
        %1923 = vmatpush1.msra.mxu0 0.0
        %1924 = vmatprep.subr.mxu0 0.0
        %1925 = vmatpush1.msra.mxu0 0.0
        %1926 = vmatprep.subr.mxu0 0.0
        %1927 = vmatpush1.msra.mxu0 0.0
        %1928 = vmatprep.mubr.f32.mxu0 0.0
        %v1929 = vand.u32 %v1334, 4294901760
        %v1930 = vsub.f32 %v1334, %v1929
        %1931 = vmatmul.mubr.f32.gmra.mrb[0].mxu0 %v1930
        %v1932 = vpop.f32.mrb[0].mxu0
        %v1933 = vadd.f32 %v1823, %v1932
        %v1934 = vpop.f32.mrb[0].mxu0
        %1935 = vmatprep.mubr.f32.mxu0 0.0
        %v1936 = vand.u32 %v1340, 4294901760
        %v1937 = vsub.f32 %v1340, %v1936
        %1938 = vmatmul.mubr.f32.gmra.mrb[0].mxu0 %v1937
        %v1939 = vpop.f32.mrb[0].mxu0
        %v1940 = vadd.f32 %v1829, %v1939
        %v1941 = vpop.f32.mrb[0].mxu0
        %1942 = vdwg.mxu0
        %1943 = vmatprep.subr.mxu0 0.0
        %v1944 = vand.u32 %v1553, 4294901760
        %1945 = vmatpush1.msra.mxu0 %v1944
        %1946 = vmatprep.subr.mxu0 0.0
        %v1947 = vand.u32 %v1554, 4294901760
        %1948 = vmatpush1.msra.mxu0 %v1947
        %1949 = vmatprep.subr.mxu0 0.0
        %v1950 = vand.u32 %v1555, 4294901760
        %1951 = vmatpush1.msra.mxu0 %v1950
        %1952 = vmatprep.subr.mxu0 0.0
        %v1953 = vand.u32 %v1556, 4294901760
        %1954 = vmatpush1.msra.mxu0 %v1953
        %1955 = vmatprep.subr.mxu0 0.0
        %v1956 = vand.u32 %v1557, 4294901760
        %1957 = vmatpush1.msra.mxu0 %v1956
        %1958 = vmatprep.subr.mxu0 0.0
        %v1959 = vand.u32 %v1558, 4294901760
        %1960 = vmatpush1.msra.mxu0 %v1959
        %1961 = vmatprep.subr.mxu0 0.0
        %v1962 = vand.u32 %v1559, 4294901760
        %1963 = vmatpush1.msra.mxu0 %v1962
        %1964 = vmatprep.subr.mxu0 0.0
        %v1965 = vand.u32 %v1560, 4294901760
        %1966 = vmatpush1.msra.mxu0 %v1965
        %1967 = vmatprep.subr.mxu0 0.0
        %v1968 = vand.u32 %v1561, 4294901760
        %1969 = vmatpush1.msra.mxu0 %v1968
        %1970 = vmatprep.subr.mxu0 0.0
        %v1971 = vand.u32 %v1562, 4294901760
        %1972 = vmatpush1.msra.mxu0 %v1971
        %1973 = vmatprep.subr.mxu0 0.0
        %v1974 = vand.u32 %v1563, 4294901760
        %1975 = vmatpush1.msra.mxu0 %v1974
        %1976 = vmatprep.subr.mxu0 0.0
        %v1977 = vand.u32 %v1564, 4294901760
        %1978 = vmatpush1.msra.mxu0 %v1977
        %1979 = vmatprep.subr.mxu0 0.0
        %v1980 = vand.u32 %v1565, 4294901760
        %1981 = vmatpush1.msra.mxu0 %v1980
        %1982 = vmatprep.subr.mxu0 0.0
        %v1983 = vand.u32 %v1566, 4294901760
        %1984 = vmatpush1.msra.mxu0 %v1983
        %1985 = vmatprep.subr.mxu0 0.0
        %v1986 = vand.u32 %v1567, 4294901760
        %1987 = vmatpush1.msra.mxu0 %v1986
        %1988 = vmatprep.subr.mxu0 0.0
        %v1989 = vand.u32 %v1568, 4294901760
        %1990 = vmatpush1.msra.mxu0 %v1989
        %1991 = vmatprep.subr.mxu0 0.0
        %1992 = vmatpush1.msra.mxu0 0.0
        %1993 = vmatprep.subr.mxu0 0.0
        %1994 = vmatpush1.msra.mxu0 0.0
        %1995 = vmatprep.subr.mxu0 0.0
        %1996 = vmatpush1.msra.mxu0 0.0
        %1997 = vmatprep.subr.mxu0 0.0
        %1998 = vmatpush1.msra.mxu0 0.0
        %1999 = vmatprep.subr.mxu0 0.0
        %2000 = vmatpush1.msra.mxu0 0.0
        %2001 = vmatprep.subr.mxu0 0.0
        %2002 = vmatpush1.msra.mxu0 0.0
        %2003 = vmatprep.subr.mxu0 0.0
        %2004 = vmatpush1.msra.mxu0 0.0
        %2005 = vmatprep.subr.mxu0 0.0
        %2006 = vmatpush1.msra.mxu0 0.0
        %2007 = vmatprep.subr.mxu0 0.0
        %2008 = vmatpush1.msra.mxu0 0.0
        %2009 = vmatprep.subr.mxu0 0.0
        %2010 = vmatpush1.msra.mxu0 0.0
        %2011 = vmatprep.subr.mxu0 0.0
        %2012 = vmatpush1.msra.mxu0 0.0
        %2013 = vmatprep.subr.mxu0 0.0
        %2014 = vmatpush1.msra.mxu0 0.0
        %2015 = vmatprep.subr.mxu0 0.0
        %2016 = vmatpush1.msra.mxu0 0.0
        %2017 = vmatprep.subr.mxu0 0.0
        %2018 = vmatpush1.msra.mxu0 0.0
        %2019 = vmatprep.subr.mxu0 0.0
        %2020 = vmatpush1.msra.mxu0 0.0
        %2021 = vmatprep.subr.mxu0 0.0
        %2022 = vmatpush1.msra.mxu0 0.0
        %2023 = vmatprep.mubr.f32.mxu0 0.0
        %v2024 = vand.u32 %v1334, 4294901760
        %v2025 = vsub.f32 %v1334, %v2024
        %v2026 = vand.u32 %v2025, 4294901760
        %2027 = vmatmul.mubr.f32.gmra.mrb[0].mxu0 %v2026
        %v2028 = vpop.f32.mrb[0].mxu0
        %v2029 = vadd.f32 %v1933, %v2028
        %v2030 = vpop.f32.mrb[0].mxu0
        %2031 = vmatprep.mubr.f32.mxu0 0.0
        %v2032 = vand.u32 %v1340, 4294901760
        %v2033 = vsub.f32 %v1340, %v2032
        %v2034 = vand.u32 %v2033, 4294901760
        %2035 = vmatmul.mubr.f32.gmra.mrb[0].mxu0 %v2034
        %v2036 = vpop.f32.mrb[0].mxu0
        %v2037 = vadd.f32 %v1940, %v2036
        %v2038 = vpop.f32.mrb[0].mxu0
        %2039 = vdwg.mxu0
        %2040 = vmatprep.subr.mxu0 0.0
        %v2041 = vand.u32 %v1553, 4294901760
        %v2042 = vsub.f32 %v1553, %v2041
        %v2043 = vand.u32 %v2042, 4294901760
        %2044 = vmatpush1.msra.mxu0 %v2043
        %2045 = vmatprep.subr.mxu0 0.0
        %v2046 = vand.u32 %v1554, 4294901760
        %v2047 = vsub.f32 %v1554, %v2046
        %v2048 = vand.u32 %v2047, 4294901760
        %2049 = vmatpush1.msra.mxu0 %v2048
        %2050 = vmatprep.subr.mxu0 0.0
        %v2051 = vand.u32 %v1555, 4294901760
        %v2052 = vsub.f32 %v1555, %v2051
        %v2053 = vand.u32 %v2052, 4294901760
        %2054 = vmatpush1.msra.mxu0 %v2053
        %2055 = vmatprep.subr.mxu0 0.0
        %v2056 = vand.u32 %v1556, 4294901760
        %v2057 = vsub.f32 %v1556, %v2056
        %v2058 = vand.u32 %v2057, 4294901760
        %2059 = vmatpush1.msra.mxu0 %v2058
        %2060 = vmatprep.subr.mxu0 0.0
        %v2061 = vand.u32 %v1557, 4294901760
        %v2062 = vsub.f32 %v1557, %v2061
        %v2063 = vand.u32 %v2062, 4294901760
        %2064 = vmatpush1.msra.mxu0 %v2063
        %2065 = vmatprep.subr.mxu0 0.0
        %v2066 = vand.u32 %v1558, 4294901760
        %v2067 = vsub.f32 %v1558, %v2066
        %v2068 = vand.u32 %v2067, 4294901760
        %2069 = vmatpush1.msra.mxu0 %v2068
        %2070 = vmatprep.subr.mxu0 0.0
        %v2071 = vand.u32 %v1559, 4294901760
        %v2072 = vsub.f32 %v1559, %v2071
        %v2073 = vand.u32 %v2072, 4294901760
        %2074 = vmatpush1.msra.mxu0 %v2073
        %2075 = vmatprep.subr.mxu0 0.0
        %v2076 = vand.u32 %v1560, 4294901760
        %v2077 = vsub.f32 %v1560, %v2076
        %v2078 = vand.u32 %v2077, 4294901760
        %2079 = vmatpush1.msra.mxu0 %v2078
        %2080 = vmatprep.subr.mxu0 0.0
        %v2081 = vand.u32 %v1561, 4294901760
        %v2082 = vsub.f32 %v1561, %v2081
        %v2083 = vand.u32 %v2082, 4294901760
        %2084 = vmatpush1.msra.mxu0 %v2083
        %2085 = vmatprep.subr.mxu0 0.0
        %v2086 = vand.u32 %v1562, 4294901760
        %v2087 = vsub.f32 %v1562, %v2086
        %v2088 = vand.u32 %v2087, 4294901760
        %2089 = vmatpush1.msra.mxu0 %v2088
        %2090 = vmatprep.subr.mxu0 0.0
        %v2091 = vand.u32 %v1563, 4294901760
        %v2092 = vsub.f32 %v1563, %v2091
        %v2093 = vand.u32 %v2092, 4294901760
        %2094 = vmatpush1.msra.mxu0 %v2093
        %2095 = vmatprep.subr.mxu0 0.0
        %v2096 = vand.u32 %v1564, 4294901760
        %v2097 = vsub.f32 %v1564, %v2096
        %v2098 = vand.u32 %v2097, 4294901760
        %2099 = vmatpush1.msra.mxu0 %v2098
        %2100 = vmatprep.subr.mxu0 0.0
        %v2101 = vand.u32 %v1565, 4294901760
        %v2102 = vsub.f32 %v1565, %v2101
        %v2103 = vand.u32 %v2102, 4294901760
        %2104 = vmatpush1.msra.mxu0 %v2103
        %2105 = vmatprep.subr.mxu0 0.0
        %v2106 = vand.u32 %v1566, 4294901760
        %v2107 = vsub.f32 %v1566, %v2106
        %v2108 = vand.u32 %v2107, 4294901760
        %2109 = vmatpush1.msra.mxu0 %v2108
        %2110 = vmatprep.subr.mxu0 0.0
        %v2111 = vand.u32 %v1567, 4294901760
        %v2112 = vsub.f32 %v1567, %v2111
        %v2113 = vand.u32 %v2112, 4294901760
        %2114 = vmatpush1.msra.mxu0 %v2113
        %2115 = vmatprep.subr.mxu0 0.0
        %v2116 = vand.u32 %v1568, 4294901760
        %v2117 = vsub.f32 %v1568, %v2116
        %v2118 = vand.u32 %v2117, 4294901760
        %2119 = vmatpush1.msra.mxu0 %v2118
        %2120 = vmatprep.subr.mxu0 0.0
        %2121 = vmatpush1.msra.mxu0 0.0
        %2122 = vmatprep.subr.mxu0 0.0
        %2123 = vmatpush1.msra.mxu0 0.0
        %2124 = vmatprep.subr.mxu0 0.0
        %2125 = vmatpush1.msra.mxu0 0.0
        %2126 = vmatprep.subr.mxu0 0.0
        %2127 = vmatpush1.msra.mxu0 0.0
        %2128 = vmatprep.subr.mxu0 0.0
        %2129 = vmatpush1.msra.mxu0 0.0
        %2130 = vmatprep.subr.mxu0 0.0
        %2131 = vmatpush1.msra.mxu0 0.0
        %2132 = vmatprep.subr.mxu0 0.0
        %2133 = vmatpush1.msra.mxu0 0.0
        %2134 = vmatprep.subr.mxu0 0.0
        %2135 = vmatpush1.msra.mxu0 0.0
        %2136 = vmatprep.subr.mxu0 0.0
        %2137 = vmatpush1.msra.mxu0 0.0
        %2138 = vmatprep.subr.mxu0 0.0
        %2139 = vmatpush1.msra.mxu0 0.0
        %2140 = vmatprep.subr.mxu0 0.0
        %2141 = vmatpush1.msra.mxu0 0.0
        %2142 = vmatprep.subr.mxu0 0.0
        %2143 = vmatpush1.msra.mxu0 0.0
        %2144 = vmatprep.subr.mxu0 0.0
        %2145 = vmatpush1.msra.mxu0 0.0
        %2146 = vmatprep.subr.mxu0 0.0
        %2147 = vmatpush1.msra.mxu0 0.0
        %2148 = vmatprep.subr.mxu0 0.0
        %2149 = vmatpush1.msra.mxu0 0.0
        %2150 = vmatprep.subr.mxu0 0.0
        %2151 = vmatpush1.msra.mxu0 0.0
        %2152 = vmatprep.mubr.f32.mxu0 0.0
        %v2153 = vand.u32 %v1334, 4294901760
        %2154 = vmatmul.mubr.f32.gmra.mrb[0].mxu0 %v2153
        %v2155 = vpop.f32.mrb[0].mxu0
        %v2156 = vadd.f32 %v2029, %v2155
        %v2157 = vpop.f32.mrb[0].mxu0
        %2158 = vmatprep.mubr.f32.mxu0 0.0
        %v2159 = vand.u32 %v1340, 4294901760
        %2160 = vmatmul.mubr.f32.gmra.mrb[0].mxu0 %v2159
        %v2161 = vpop.f32.mrb[0].mxu0
        %v2162 = vadd.f32 %v2037, %v2161
        %v2163 = vpop.f32.mrb[0].mxu0
        %2164 = vdwg.mxu0
        %2165 = vmatprep.subr.mxu0 0.0
        %v2166 = vand.u32 %v1553, 4294901760
        %2167 = vmatpush1.msra.mxu0 %v2166
        %2168 = vmatprep.subr.mxu0 0.0
        %v2169 = vand.u32 %v1554, 4294901760
        %2170 = vmatpush1.msra.mxu0 %v2169
        %2171 = vmatprep.subr.mxu0 0.0
        %v2172 = vand.u32 %v1555, 4294901760
        %2173 = vmatpush1.msra.mxu0 %v2172
        %2174 = vmatprep.subr.mxu0 0.0
        %v2175 = vand.u32 %v1556, 4294901760
        %2176 = vmatpush1.msra.mxu0 %v2175
        %2177 = vmatprep.subr.mxu0 0.0
        %v2178 = vand.u32 %v1557, 4294901760
        %2179 = vmatpush1.msra.mxu0 %v2178
        %2180 = vmatprep.subr.mxu0 0.0
        %v2181 = vand.u32 %v1558, 4294901760
        %2182 = vmatpush1.msra.mxu0 %v2181
        %2183 = vmatprep.subr.mxu0 0.0
        %v2184 = vand.u32 %v1559, 4294901760
        %2185 = vmatpush1.msra.mxu0 %v2184
        %2186 = vmatprep.subr.mxu0 0.0
        %v2187 = vand.u32 %v1560, 4294901760
        %2188 = vmatpush1.msra.mxu0 %v2187
        %2189 = vmatprep.subr.mxu0 0.0
        %v2190 = vand.u32 %v1561, 4294901760
        %2191 = vmatpush1.msra.mxu0 %v2190
        %2192 = vmatprep.subr.mxu0 0.0
        %v2193 = vand.u32 %v1562, 4294901760
        %2194 = vmatpush1.msra.mxu0 %v2193
        %2195 = vmatprep.subr.mxu0 0.0
        %v2196 = vand.u32 %v1563, 4294901760
        %2197 = vmatpush1.msra.mxu0 %v2196
        %2198 = vmatprep.subr.mxu0 0.0
        %v2199 = vand.u32 %v1564, 4294901760
        %2200 = vmatpush1.msra.mxu0 %v2199
        %2201 = vmatprep.subr.mxu0 0.0
        %v2202 = vand.u32 %v1565, 4294901760
        %2203 = vmatpush1.msra.mxu0 %v2202
        %2204 = vmatprep.subr.mxu0 0.0
        %v2205 = vand.u32 %v1566, 4294901760
        %2206 = vmatpush1.msra.mxu0 %v2205
        %2207 = vmatprep.subr.mxu0 0.0
        %v2208 = vand.u32 %v1567, 4294901760
        %2209 = vmatpush1.msra.mxu0 %v2208
        %2210 = vmatprep.subr.mxu0 0.0
        %v2211 = vand.u32 %v1568, 4294901760
        %2212 = vmatpush1.msra.mxu0 %v2211
        %2213 = vmatprep.subr.mxu0 0.0
        %2214 = vmatpush1.msra.mxu0 0.0
        %2215 = vmatprep.subr.mxu0 0.0
        %2216 = vmatpush1.msra.mxu0 0.0
        %2217 = vmatprep.subr.mxu0 0.0
        %2218 = vmatpush1.msra.mxu0 0.0
        %2219 = vmatprep.subr.mxu0 0.0
        %2220 = vmatpush1.msra.mxu0 0.0
        %2221 = vmatprep.subr.mxu0 0.0
        %2222 = vmatpush1.msra.mxu0 0.0
        %2223 = vmatprep.subr.mxu0 0.0
        %2224 = vmatpush1.msra.mxu0 0.0
        %2225 = vmatprep.subr.mxu0 0.0
        %2226 = vmatpush1.msra.mxu0 0.0
        %2227 = vmatprep.subr.mxu0 0.0
        %2228 = vmatpush1.msra.mxu0 0.0
        %2229 = vmatprep.subr.mxu0 0.0
        %2230 = vmatpush1.msra.mxu0 0.0
        %2231 = vmatprep.subr.mxu0 0.0
        %2232 = vmatpush1.msra.mxu0 0.0
        %2233 = vmatprep.subr.mxu0 0.0
        %2234 = vmatpush1.msra.mxu0 0.0
        %2235 = vmatprep.subr.mxu0 0.0
        %2236 = vmatpush1.msra.mxu0 0.0
        %2237 = vmatprep.subr.mxu0 0.0
        %2238 = vmatpush1.msra.mxu0 0.0
        %2239 = vmatprep.subr.mxu0 0.0
        %2240 = vmatpush1.msra.mxu0 0.0
        %2241 = vmatprep.subr.mxu0 0.0
        %2242 = vmatpush1.msra.mxu0 0.0
        %2243 = vmatprep.subr.mxu0 0.0
        %2244 = vmatpush1.msra.mxu0 0.0
        %2245 = vmatprep.mubr.f32.mxu0 0.0
        %v2246 = vand.u32 %v1334, 4294901760
        %2247 = vmatmul.mubr.f32.gmra.mrb[0].mxu0 %v2246
        %v2248 = vpop.f32.mrb[0].mxu0
        %v2249 = vadd.f32 %v2156, %v2248
        %v2250 = vpop.f32.mrb[0].mxu0
        %2251 = vmatprep.mubr.f32.mxu0 0.0
        %v2252 = vand.u32 %v1340, 4294901760
        %2253 = vmatmul.mubr.f32.gmra.mrb[0].mxu0 %v2252
        %v2254 = vpop.f32.mrb[0].mxu0
        %v2255 = vadd.f32 %v2162, %v2254
        %v2256 = vpop.f32.mrb[0].mxu0
        %2257 = vdwg.mxu0
        %2258 = vset.pattern.permute.xlu0 2
        %2259 = vperm.xlu0 %2258, %v424
        %v2260 = vpop.permute.xlu0 %2259
        %2262 = vset.pattern.permute.xlu0 2
        %2263 = vperm.xlu0 %2262, %v425
        %v2264 = vpop.permute.xlu0 %2263
        %v2266 = vsub.f32 %v2249, %v2260
        %v2267 = vsub.f32 %v2255, %v2264
        %v2268 = vmul.f32 %v2266, %v2266
        %v2269 = vmul.f32 %v2267, %v2267
        %v2270 = vadd.f32 %v2268, %v2269
        %v2271 = vrot.slane %v2270, 4
        %v2272 = vadd.f32 %v2270, %v2271
        %v2273 = vrot.slane %v2272, 2
        %v2274 = vadd.f32 %v2272, %v2273
        %v2275 = vrot.slane %v2274, 1
        %v2276 = vadd.f32 %v2274, %v2275
        %v2277 = vmul.f32 %v2276, -0.5
        %v2278 = vmul.f32 %v2277, 1.442695
        %v2279 = vpow.pop %v2278
        %v2280 = vadd.f32 %v2279, 1e-08
        %v2281 = vmul.f32 %v1371, %v2280
        %v2282 = vadd.f32 %v2281, 1e-10
        %2283 = vadd.xlane.f32.xlu0 %v2282
        %v2284 = vpop.xlane.xlu0 %2283
        %v2285 = vrcp.pop %v2284
        %v2286 = vmul.f32 %v2282, %v2285
        %v2287 = vmul.f32 %v338, %v2286
        %v2288 = vmul.f32 %v339, %v2286
        %v2289 = vmul.f32 %v340, %v2286
        %v2290 = vmul.f32 %v341, %v2286
        %v2291 = vmul.f32 %v342, %v2286
        %v2292 = vmul.f32 %v343, %v2286
        %v2293 = vmul.f32 %v344, %v2286
        %v2294 = vmul.f32 %v345, %v2286
        %v2295 = vmul.f32 %v346, %v2286
        %v2296 = vmul.f32 %v347, %v2286
        %v2297 = vmul.f32 %v348, %v2286
        %v2298 = vmul.f32 %v349, %v2286
        %v2299 = vmul.f32 %v350, %v2286
        %v2300 = vmul.f32 %v351, %v2286
        %v2301 = vmul.f32 %v352, %v2286
        %v2302 = vmul.f32 %v353, %v2286
        %2303 = vadd.xlane.f32.xlu0 %v2287
        %v2304 = vpop.xlane.xlu0 %2303
        %2305 = vadd.xlane.f32.xlu0 %v2288
        %v2306 = vpop.xlane.xlu0 %2305
        %2307 = vadd.xlane.f32.xlu0 %v2289
        %v2308 = vpop.xlane.xlu0 %2307
        %2309 = vadd.xlane.f32.xlu0 %v2290
        %v2310 = vpop.xlane.xlu0 %2309
        %2311 = vadd.xlane.f32.xlu0 %v2291
        %v2312 = vpop.xlane.xlu0 %2311
        %2313 = vadd.xlane.f32.xlu0 %v2292
        %v2314 = vpop.xlane.xlu0 %2313
        %2315 = vadd.xlane.f32.xlu0 %v2293
        %v2316 = vpop.xlane.xlu0 %2315
        %2317 = vadd.xlane.f32.xlu0 %v2294
        %v2318 = vpop.xlane.xlu0 %2317
        %2319 = vadd.xlane.f32.xlu0 %v2295
        %v2320 = vpop.xlane.xlu0 %2319
        %2321 = vadd.xlane.f32.xlu0 %v2296
        %v2322 = vpop.xlane.xlu0 %2321
        %2323 = vadd.xlane.f32.xlu0 %v2297
        %v2324 = vpop.xlane.xlu0 %2323
        %2325 = vadd.xlane.f32.xlu0 %v2298
        %v2326 = vpop.xlane.xlu0 %2325
        %2327 = vadd.xlane.f32.xlu0 %v2299
        %v2328 = vpop.xlane.xlu0 %2327
        %2329 = vadd.xlane.f32.xlu0 %v2300
        %v2330 = vpop.xlane.xlu0 %2329
        %2331 = vadd.xlane.f32.xlu0 %v2301
        %v2332 = vpop.xlane.xlu0 %2331
        %2333 = vadd.xlane.f32.xlu0 %v2302
        %v2334 = vpop.xlane.xlu0 %2333
        %v2335 = vmul.f32 %v386, %v2286
        %v2336 = vmul.f32 %v387, %v2286
        %v2337 = vmul.f32 %v388, %v2286
        %v2338 = vmul.f32 %v389, %v2286
        %v2339 = vmul.f32 %v390, %v2286
        %v2340 = vmul.f32 %v391, %v2286
        %v2341 = vmul.f32 %v392, %v2286
        %v2342 = vmul.f32 %v393, %v2286
        %v2343 = vmul.f32 %v394, %v2286
        %v2344 = vmul.f32 %v395, %v2286
        %v2345 = vmul.f32 %v396, %v2286
        %v2346 = vmul.f32 %v397, %v2286
        %v2347 = vmul.f32 %v398, %v2286
        %v2348 = vmul.f32 %v399, %v2286
        %v2349 = vmul.f32 %v400, %v2286
        %v2350 = vmul.f32 %v401, %v2286
        %2351 = vadd.xlane.f32.xlu0 %v2335
        %v2352 = vpop.xlane.xlu0 %2351
        %2353 = vadd.xlane.f32.xlu0 %v2336
        %v2354 = vpop.xlane.xlu0 %2353
        %2355 = vadd.xlane.f32.xlu0 %v2337
        %v2356 = vpop.xlane.xlu0 %2355
        %2357 = vadd.xlane.f32.xlu0 %v2338
        %v2358 = vpop.xlane.xlu0 %2357
        %2359 = vadd.xlane.f32.xlu0 %v2339
        %v2360 = vpop.xlane.xlu0 %2359
        %2361 = vadd.xlane.f32.xlu0 %v2340
        %v2362 = vpop.xlane.xlu0 %2361
        %2363 = vadd.xlane.f32.xlu0 %v2341
        %v2364 = vpop.xlane.xlu0 %2363
        %2365 = vadd.xlane.f32.xlu0 %v2342
        %v2366 = vpop.xlane.xlu0 %2365
        %2367 = vadd.xlane.f32.xlu0 %v2343
        %v2368 = vpop.xlane.xlu0 %2367
        %2369 = vadd.xlane.f32.xlu0 %v2344
        %v2370 = vpop.xlane.xlu0 %2369
        %2371 = vadd.xlane.f32.xlu0 %v2345
        %v2372 = vpop.xlane.xlu0 %2371
        %2373 = vadd.xlane.f32.xlu0 %v2346
        %v2374 = vpop.xlane.xlu0 %2373
        %2375 = vadd.xlane.f32.xlu0 %v2347
        %v2376 = vpop.xlane.xlu0 %2375
        %2377 = vadd.xlane.f32.xlu0 %v2348
        %v2378 = vpop.xlane.xlu0 %2377
        %2379 = vadd.xlane.f32.xlu0 %v2349
        %v2380 = vpop.xlane.xlu0 %2379
        %2381 = vadd.xlane.f32.xlu0 %v2350
        %v2382 = vpop.xlane.xlu0 %2381
        %v2383 = vsel %vm402, 1e+30, %v2304
        %v2384 = vsel %vm403, 1e+30, %v2306
        %v2385 = vsel %vm404, 1e+30, %v2308
        %v2386 = vsel %vm405, 1e+30, %v2310
        %v2387 = vsel %vm406, 1e+30, %v2312
        %v2388 = vsel %vm407, 1e+30, %v2314
        %v2389 = vsel %vm408, 1e+30, %v2316
        %v2390 = vsel %vm409, 1e+30, %v2318
        %v2391 = vsel %vm410, 1e+30, %v2320
        %v2392 = vsel %vm411, 1e+30, %v2322
        %v2393 = vsel %vm412, 1e+30, %v2324
        %v2394 = vsel %vm413, 1e+30, %v2326
        %v2395 = vsel %vm414, 1e+30, %v2328
        %v2396 = vsel %vm415, 1e+30, %v2330
        %v2397 = vsel %vm416, 1e+30, %v2332
        %v2398 = vsel %vm417, 1e+30, %v2334
        %v2399 = vld [vmem:[%s269 + $0x2] sm:$0x1]
        %v2400 = vlaneseq
        %v2401 = vshrl.u32 %v2400, 7
        %v2402 = vsub.s32 0, %v2401
        %v2403 = vrot.slane %v2399, %v2402
        %vm2404 = vcmp.le.f32.partialorder %v2352, %v2403
        %vm2405 = vcmp.le.f32.partialorder %v2354, %v2403
        %vm2406 = vcmp.le.f32.partialorder %v2356, %v2403
        %vm2407 = vcmp.le.f32.partialorder %v2358, %v2403
        %vm2408 = vcmp.le.f32.partialorder %v2360, %v2403
        %vm2409 = vcmp.le.f32.partialorder %v2362, %v2403
        %vm2410 = vcmp.le.f32.partialorder %v2364, %v2403
        %vm2411 = vcmp.le.f32.partialorder %v2366, %v2403
        %vm2412 = vcmp.le.f32.partialorder %v2368, %v2403
        %vm2413 = vcmp.le.f32.partialorder %v2370, %v2403
        %vm2414 = vcmp.le.f32.partialorder %v2372, %v2403
        %vm2415 = vcmp.le.f32.partialorder %v2374, %v2403
        %vm2416 = vcmp.le.f32.partialorder %v2376, %v2403
        %vm2417 = vcmp.le.f32.partialorder %v2378, %v2403
        %vm2418 = vcmp.le.f32.partialorder %v2380, %v2403
        %vm2419 = vcmp.le.f32.partialorder %v2382, %v2403
        %vm2420 = vcmp.lt.f32.partialorder %v2403, %v2383
        %vm2421 = vcmp.lt.f32.partialorder %v2403, %v2384
        %vm2422 = vcmp.lt.f32.partialorder %v2403, %v2385
        %vm2423 = vcmp.lt.f32.partialorder %v2403, %v2386
        %vm2424 = vcmp.lt.f32.partialorder %v2403, %v2387
        %vm2425 = vcmp.lt.f32.partialorder %v2403, %v2388
        %vm2426 = vcmp.lt.f32.partialorder %v2403, %v2389
        %vm2427 = vcmp.lt.f32.partialorder %v2403, %v2390
        %vm2428 = vcmp.lt.f32.partialorder %v2403, %v2391
        %vm2429 = vcmp.lt.f32.partialorder %v2403, %v2392
        %vm2430 = vcmp.lt.f32.partialorder %v2403, %v2393
        %vm2431 = vcmp.lt.f32.partialorder %v2403, %v2394
        %vm2432 = vcmp.lt.f32.partialorder %v2403, %v2395
        %vm2433 = vcmp.lt.f32.partialorder %v2403, %v2396
        %vm2434 = vcmp.lt.f32.partialorder %v2403, %v2397
        %vm2435 = vcmp.lt.f32.partialorder %v2403, %v2398
        %vm2436 = vmand %vm2404, %vm2420
        %vm2437 = vmand %vm2405, %vm2421
        %vm2438 = vmand %vm2406, %vm2422
        %vm2439 = vmand %vm2407, %vm2423
        %vm2440 = vmand %vm2408, %vm2424
        %vm2441 = vmand %vm2409, %vm2425
        %vm2442 = vmand %vm2410, %vm2426
        %vm2443 = vmand %vm2411, %vm2427
        %vm2444 = vmand %vm2412, %vm2428
        %vm2445 = vmand %vm2413, %vm2429
        %vm2446 = vmand %vm2414, %vm2430
        %vm2447 = vmand %vm2415, %vm2431
        %vm2448 = vmand %vm2416, %vm2432
        %vm2449 = vmand %vm2417, %vm2433
        %vm2450 = vmand %vm2418, %vm2434
        %vm2451 = vmand %vm2419, %vm2435
        %v2452 = vsel %vm2436, 1, 0
        %v2453 = vsel %vm2437, 1, 0
        %v2454 = vsel %vm2438, 1, 0
        %v2455 = vsel %vm2439, 1, 0
        %v2456 = vsel %vm2440, 1, 0
        %v2457 = vsel %vm2441, 1, 0
        %v2458 = vsel %vm2442, 1, 0
        %v2459 = vsel %vm2443, 1, 0
        %v2460 = vsel %vm2444, 1, 0
        %v2461 = vsel %vm2445, 1, 0
        %v2462 = vsel %vm2446, 1, 0
        %v2463 = vsel %vm2447, 1, 0
        %v2464 = vsel %vm2448, 1, 0
        %v2465 = vsel %vm2449, 1, 0
        %v2466 = vsel %vm2450, 1, 0
        %v2467 = vsel %vm2451, 1, 0
        %v2468 = vcvt.s32.f32 %v2452
        %v2469 = vcvt.s32.f32 %v2453
        %v2470 = vcvt.s32.f32 %v2454
        %v2471 = vcvt.s32.f32 %v2455
        %v2472 = vcvt.s32.f32 %v2456
        %v2473 = vcvt.s32.f32 %v2457
        %v2474 = vcvt.s32.f32 %v2458
        %v2475 = vcvt.s32.f32 %v2459
        %v2476 = vcvt.s32.f32 %v2460
        %v2477 = vcvt.s32.f32 %v2461
        %v2478 = vcvt.s32.f32 %v2462
        %v2479 = vcvt.s32.f32 %v2463
        %v2480 = vcvt.s32.f32 %v2464
        %v2481 = vcvt.s32.f32 %v2465
        %v2482 = vcvt.s32.f32 %v2466
        %v2483 = vcvt.s32.f32 %v2467
        %s2484 = scalar_lea.vmem %s217, 48 [#allocation2]
        %v2485 = vld [vmem:[%s2484] sm:$0xff]
        %v2486 = vld [vmem:[%s2484 + $0x8] sm:$0xff]
        %v2487 = vmul.f32 %v2485, 0.1
        %v2488 = vmul.f32 %v2486, 0.1
        %2489 = vmatprep.subr.mxu0 0.0
        %v2490 = vand.u32 %v2468, 4294901760
        %2491 = vmatpush1.msra.mxu0 %v2490
        %2492 = vmatprep.subr.mxu0 0.0
        %v2493 = vand.u32 %v2469, 4294901760
        %2494 = vmatpush1.msra.mxu0 %v2493
        %2495 = vmatprep.subr.mxu0 0.0
        %v2496 = vand.u32 %v2470, 4294901760
        %2497 = vmatpush1.msra.mxu0 %v2496
        %2498 = vmatprep.subr.mxu0 0.0
        %v2499 = vand.u32 %v2471, 4294901760
        %2500 = vmatpush1.msra.mxu0 %v2499
        %2501 = vmatprep.subr.mxu0 0.0
        %v2502 = vand.u32 %v2472, 4294901760
        %2503 = vmatpush1.msra.mxu0 %v2502
        %2504 = vmatprep.subr.mxu0 0.0
        %v2505 = vand.u32 %v2473, 4294901760
        %2506 = vmatpush1.msra.mxu0 %v2505
        %2507 = vmatprep.subr.mxu0 0.0
        %v2508 = vand.u32 %v2474, 4294901760
        %2509 = vmatpush1.msra.mxu0 %v2508
        %2510 = vmatprep.subr.mxu0 0.0
        %v2511 = vand.u32 %v2475, 4294901760
        %2512 = vmatpush1.msra.mxu0 %v2511
        %2513 = vmatprep.subr.mxu0 0.0
        %v2514 = vand.u32 %v2476, 4294901760
        %2515 = vmatpush1.msra.mxu0 %v2514
        %2516 = vmatprep.subr.mxu0 0.0
        %v2517 = vand.u32 %v2477, 4294901760
        %2518 = vmatpush1.msra.mxu0 %v2517
        %2519 = vmatprep.subr.mxu0 0.0
        %v2520 = vand.u32 %v2478, 4294901760
        %2521 = vmatpush1.msra.mxu0 %v2520
        %2522 = vmatprep.subr.mxu0 0.0
        %v2523 = vand.u32 %v2479, 4294901760
        %2524 = vmatpush1.msra.mxu0 %v2523
        %2525 = vmatprep.subr.mxu0 0.0
        %v2526 = vand.u32 %v2480, 4294901760
        %2527 = vmatpush1.msra.mxu0 %v2526
        %2528 = vmatprep.subr.mxu0 0.0
        %v2529 = vand.u32 %v2481, 4294901760
        %2530 = vmatpush1.msra.mxu0 %v2529
        %2531 = vmatprep.subr.mxu0 0.0
        %v2532 = vand.u32 %v2482, 4294901760
        %2533 = vmatpush1.msra.mxu0 %v2532
        %2534 = vmatprep.subr.mxu0 0.0
        %v2535 = vand.u32 %v2483, 4294901760
        %2536 = vmatpush1.msra.mxu0 %v2535
        %2537 = vmatprep.subr.mxu0 0.0
        %2538 = vmatpush1.msra.mxu0 0.0
        %2539 = vmatprep.subr.mxu0 0.0
        %2540 = vmatpush1.msra.mxu0 0.0
        %2541 = vmatprep.subr.mxu0 0.0
        %2542 = vmatpush1.msra.mxu0 0.0
        %2543 = vmatprep.subr.mxu0 0.0
        %2544 = vmatpush1.msra.mxu0 0.0
        %2545 = vmatprep.subr.mxu0 0.0
        %2546 = vmatpush1.msra.mxu0 0.0
        %2547 = vmatprep.subr.mxu0 0.0
        %2548 = vmatpush1.msra.mxu0 0.0
        %2549 = vmatprep.subr.mxu0 0.0
        %2550 = vmatpush1.msra.mxu0 0.0
        %2551 = vmatprep.subr.mxu0 0.0
        %2552 = vmatpush1.msra.mxu0 0.0
        %2553 = vmatprep.subr.mxu0 0.0
        %2554 = vmatpush1.msra.mxu0 0.0
        %2555 = vmatprep.subr.mxu0 0.0
        %2556 = vmatpush1.msra.mxu0 0.0
        %2557 = vmatprep.subr.mxu0 0.0
        %2558 = vmatpush1.msra.mxu0 0.0
        %2559 = vmatprep.subr.mxu0 0.0
        %2560 = vmatpush1.msra.mxu0 0.0
        %2561 = vmatprep.subr.mxu0 0.0
        %2562 = vmatpush1.msra.mxu0 0.0
        %2563 = vmatprep.subr.mxu0 0.0
        %2564 = vmatpush1.msra.mxu0 0.0
        %2565 = vmatprep.subr.mxu0 0.0
        %2566 = vmatpush1.msra.mxu0 0.0
        %2567 = vmatprep.subr.mxu0 0.0
        %2568 = vmatpush1.msra.mxu0 0.0
        %2569 = vmatprep.mubr.f32.mxu0 0.0
        %v2570 = vand.u32 %v2249, 4294901760
        %v2571 = vsub.f32 %v2249, %v2570
        %v2572 = vand.u32 %v2571, 4294901760
        %v2573 = vsub.f32 %v2571, %v2572
        %v2574 = vand.u32 %v2573, 4294901760
        %2575 = vmatmul.mubr.f32.gmra.mrb[0].mxu0 %v2574
        %v2576 = vpop.f32.mrb[0].mxu0
        %v2577 = vadd.f32 %v2487, %v2576
        %v2578 = vpop.f32.mrb[0].mxu0
        %2579 = vmatprep.mubr.f32.mxu0 0.0
        %v2580 = vand.u32 %v2255, 4294901760
        %v2581 = vsub.f32 %v2255, %v2580
        %v2582 = vand.u32 %v2581, 4294901760
        %v2583 = vsub.f32 %v2581, %v2582
        %v2584 = vand.u32 %v2583, 4294901760
        %2585 = vmatmul.mubr.f32.gmra.mrb[0].mxu0 %v2584
        %v2586 = vpop.f32.mrb[0].mxu0
        %v2587 = vadd.f32 %v2488, %v2586
        %v2588 = vpop.f32.mrb[0].mxu0
        %2589 = vdwg.mxu0
        %2590 = vmatprep.subr.mxu0 0.0
        %v2591 = vand.u32 %v2468, 4294901760
        %v2592 = vsub.f32 %v2468, %v2591
        %v2593 = vand.u32 %v2592, 4294901760
        %v2594 = vsub.f32 %v2592, %v2593
        %v2595 = vand.u32 %v2594, 4294901760
        %2596 = vmatpush1.msra.mxu0 %v2595
        %2597 = vmatprep.subr.mxu0 0.0
        %v2598 = vand.u32 %v2469, 4294901760
        %v2599 = vsub.f32 %v2469, %v2598
        %v2600 = vand.u32 %v2599, 4294901760
        %v2601 = vsub.f32 %v2599, %v2600
        %v2602 = vand.u32 %v2601, 4294901760
        %2603 = vmatpush1.msra.mxu0 %v2602
        %2604 = vmatprep.subr.mxu0 0.0
        %v2605 = vand.u32 %v2470, 4294901760
        %v2606 = vsub.f32 %v2470, %v2605
        %v2607 = vand.u32 %v2606, 4294901760
        %v2608 = vsub.f32 %v2606, %v2607
        %v2609 = vand.u32 %v2608, 4294901760
        %2610 = vmatpush1.msra.mxu0 %v2609
        %2611 = vmatprep.subr.mxu0 0.0
        %v2612 = vand.u32 %v2471, 4294901760
        %v2613 = vsub.f32 %v2471, %v2612
        %v2614 = vand.u32 %v2613, 4294901760
        %v2615 = vsub.f32 %v2613, %v2614
        %v2616 = vand.u32 %v2615, 4294901760
        %2617 = vmatpush1.msra.mxu0 %v2616
        %2618 = vmatprep.subr.mxu0 0.0
        %v2619 = vand.u32 %v2472, 4294901760
        %v2620 = vsub.f32 %v2472, %v2619
        %v2621 = vand.u32 %v2620, 4294901760
        %v2622 = vsub.f32 %v2620, %v2621
        %v2623 = vand.u32 %v2622, 4294901760
        %2624 = vmatpush1.msra.mxu0 %v2623
        %2625 = vmatprep.subr.mxu0 0.0
        %v2626 = vand.u32 %v2473, 4294901760
        %v2627 = vsub.f32 %v2473, %v2626
        %v2628 = vand.u32 %v2627, 4294901760
        %v2629 = vsub.f32 %v2627, %v2628
        %v2630 = vand.u32 %v2629, 4294901760
        %2631 = vmatpush1.msra.mxu0 %v2630
        %2632 = vmatprep.subr.mxu0 0.0
        %v2633 = vand.u32 %v2474, 4294901760
        %v2634 = vsub.f32 %v2474, %v2633
        %v2635 = vand.u32 %v2634, 4294901760
        %v2636 = vsub.f32 %v2634, %v2635
        %v2637 = vand.u32 %v2636, 4294901760
        %2638 = vmatpush1.msra.mxu0 %v2637
        %2639 = vmatprep.subr.mxu0 0.0
        %v2640 = vand.u32 %v2475, 4294901760
        %v2641 = vsub.f32 %v2475, %v2640
        %v2642 = vand.u32 %v2641, 4294901760
        %v2643 = vsub.f32 %v2641, %v2642
        %v2644 = vand.u32 %v2643, 4294901760
        %2645 = vmatpush1.msra.mxu0 %v2644
        %2646 = vmatprep.subr.mxu0 0.0
        %v2647 = vand.u32 %v2476, 4294901760
        %v2648 = vsub.f32 %v2476, %v2647
        %v2649 = vand.u32 %v2648, 4294901760
        %v2650 = vsub.f32 %v2648, %v2649
        %v2651 = vand.u32 %v2650, 4294901760
        %2652 = vmatpush1.msra.mxu0 %v2651
        %2653 = vmatprep.subr.mxu0 0.0
        %v2654 = vand.u32 %v2477, 4294901760
        %v2655 = vsub.f32 %v2477, %v2654
        %v2656 = vand.u32 %v2655, 4294901760
        %v2657 = vsub.f32 %v2655, %v2656
        %v2658 = vand.u32 %v2657, 4294901760
        %2659 = vmatpush1.msra.mxu0 %v2658
        %2660 = vmatprep.subr.mxu0 0.0
        %v2661 = vand.u32 %v2478, 4294901760
        %v2662 = vsub.f32 %v2478, %v2661
        %v2663 = vand.u32 %v2662, 4294901760
        %v2664 = vsub.f32 %v2662, %v2663
        %v2665 = vand.u32 %v2664, 4294901760
        %2666 = vmatpush1.msra.mxu0 %v2665
        %2667 = vmatprep.subr.mxu0 0.0
        %v2668 = vand.u32 %v2479, 4294901760
        %v2669 = vsub.f32 %v2479, %v2668
        %v2670 = vand.u32 %v2669, 4294901760
        %v2671 = vsub.f32 %v2669, %v2670
        %v2672 = vand.u32 %v2671, 4294901760
        %2673 = vmatpush1.msra.mxu0 %v2672
        %2674 = vmatprep.subr.mxu0 0.0
        %v2675 = vand.u32 %v2480, 4294901760
        %v2676 = vsub.f32 %v2480, %v2675
        %v2677 = vand.u32 %v2676, 4294901760
        %v2678 = vsub.f32 %v2676, %v2677
        %v2679 = vand.u32 %v2678, 4294901760
        %2680 = vmatpush1.msra.mxu0 %v2679
        %2681 = vmatprep.subr.mxu0 0.0
        %v2682 = vand.u32 %v2481, 4294901760
        %v2683 = vsub.f32 %v2481, %v2682
        %v2684 = vand.u32 %v2683, 4294901760
        %v2685 = vsub.f32 %v2683, %v2684
        %v2686 = vand.u32 %v2685, 4294901760
        %2687 = vmatpush1.msra.mxu0 %v2686
        %2688 = vmatprep.subr.mxu0 0.0
        %v2689 = vand.u32 %v2482, 4294901760
        %v2690 = vsub.f32 %v2482, %v2689
        %v2691 = vand.u32 %v2690, 4294901760
        %v2692 = vsub.f32 %v2690, %v2691
        %v2693 = vand.u32 %v2692, 4294901760
        %2694 = vmatpush1.msra.mxu0 %v2693
        %2695 = vmatprep.subr.mxu0 0.0
        %v2696 = vand.u32 %v2483, 4294901760
        %v2697 = vsub.f32 %v2483, %v2696
        %v2698 = vand.u32 %v2697, 4294901760
        %v2699 = vsub.f32 %v2697, %v2698
        %v2700 = vand.u32 %v2699, 4294901760
        %2701 = vmatpush1.msra.mxu0 %v2700
        %2702 = vmatprep.subr.mxu0 0.0
        %2703 = vmatpush1.msra.mxu0 0.0
        %2704 = vmatprep.subr.mxu0 0.0
        %2705 = vmatpush1.msra.mxu0 0.0
        %2706 = vmatprep.subr.mxu0 0.0
        %2707 = vmatpush1.msra.mxu0 0.0
        %2708 = vmatprep.subr.mxu0 0.0
        %2709 = vmatpush1.msra.mxu0 0.0
        %2710 = vmatprep.subr.mxu0 0.0
        %2711 = vmatpush1.msra.mxu0 0.0
        %2712 = vmatprep.subr.mxu0 0.0
        %2713 = vmatpush1.msra.mxu0 0.0
        %2714 = vmatprep.subr.mxu0 0.0
        %2715 = vmatpush1.msra.mxu0 0.0
        %2716 = vmatprep.subr.mxu0 0.0
        %2717 = vmatpush1.msra.mxu0 0.0
        %2718 = vmatprep.subr.mxu0 0.0
        %2719 = vmatpush1.msra.mxu0 0.0
        %2720 = vmatprep.subr.mxu0 0.0
        %2721 = vmatpush1.msra.mxu0 0.0
        %2722 = vmatprep.subr.mxu0 0.0
        %2723 = vmatpush1.msra.mxu0 0.0
        %2724 = vmatprep.subr.mxu0 0.0
        %2725 = vmatpush1.msra.mxu0 0.0
        %2726 = vmatprep.subr.mxu0 0.0
        %2727 = vmatpush1.msra.mxu0 0.0
        %2728 = vmatprep.subr.mxu0 0.0
        %2729 = vmatpush1.msra.mxu0 0.0
        %2730 = vmatprep.subr.mxu0 0.0
        %2731 = vmatpush1.msra.mxu0 0.0
        %2732 = vmatprep.subr.mxu0 0.0
        %2733 = vmatpush1.msra.mxu0 0.0
        %2734 = vmatprep.mubr.f32.mxu0 0.0
        %v2735 = vand.u32 %v2249, 4294901760
        %2736 = vmatmul.mubr.f32.gmra.mrb[0].mxu0 %v2735
        %v2737 = vpop.f32.mrb[0].mxu0
        %v2738 = vadd.f32 %v2577, %v2737
        %v2739 = vpop.f32.mrb[0].mxu0
        %2740 = vmatprep.mubr.f32.mxu0 0.0
        %v2741 = vand.u32 %v2255, 4294901760
        %2742 = vmatmul.mubr.f32.gmra.mrb[0].mxu0 %v2741
        %v2743 = vpop.f32.mrb[0].mxu0
        %v2744 = vadd.f32 %v2587, %v2743
        %v2745 = vpop.f32.mrb[0].mxu0
        %2746 = vdwg.mxu0
        %2747 = vmatprep.subr.mxu0 0.0
        %v2748 = vand.u32 %v2468, 4294901760
        %v2749 = vsub.f32 %v2468, %v2748
        %2750 = vmatpush1.msra.mxu0 %v2749
        %2751 = vmatprep.subr.mxu0 0.0
        %v2752 = vand.u32 %v2469, 4294901760
        %v2753 = vsub.f32 %v2469, %v2752
        %2754 = vmatpush1.msra.mxu0 %v2753
        %2755 = vmatprep.subr.mxu0 0.0
        %v2756 = vand.u32 %v2470, 4294901760
        %v2757 = vsub.f32 %v2470, %v2756
        %2758 = vmatpush1.msra.mxu0 %v2757
        %2759 = vmatprep.subr.mxu0 0.0
        %v2760 = vand.u32 %v2471, 4294901760
        %v2761 = vsub.f32 %v2471, %v2760
        %2762 = vmatpush1.msra.mxu0 %v2761
        %2763 = vmatprep.subr.mxu0 0.0
        %v2764 = vand.u32 %v2472, 4294901760
        %v2765 = vsub.f32 %v2472, %v2764
        %2766 = vmatpush1.msra.mxu0 %v2765
        %2767 = vmatprep.subr.mxu0 0.0
        %v2768 = vand.u32 %v2473, 4294901760
        %v2769 = vsub.f32 %v2473, %v2768
        %2770 = vmatpush1.msra.mxu0 %v2769
        %2771 = vmatprep.subr.mxu0 0.0
        %v2772 = vand.u32 %v2474, 4294901760
        %v2773 = vsub.f32 %v2474, %v2772
        %2774 = vmatpush1.msra.mxu0 %v2773
        %2775 = vmatprep.subr.mxu0 0.0
        %v2776 = vand.u32 %v2475, 4294901760
        %v2777 = vsub.f32 %v2475, %v2776
        %2778 = vmatpush1.msra.mxu0 %v2777
        %2779 = vmatprep.subr.mxu0 0.0
        %v2780 = vand.u32 %v2476, 4294901760
        %v2781 = vsub.f32 %v2476, %v2780
        %2782 = vmatpush1.msra.mxu0 %v2781
        %2783 = vmatprep.subr.mxu0 0.0
        %v2784 = vand.u32 %v2477, 4294901760
        %v2785 = vsub.f32 %v2477, %v2784
        %2786 = vmatpush1.msra.mxu0 %v2785
        %2787 = vmatprep.subr.mxu0 0.0
        %v2788 = vand.u32 %v2478, 4294901760
        %v2789 = vsub.f32 %v2478, %v2788
        %2790 = vmatpush1.msra.mxu0 %v2789
        %2791 = vmatprep.subr.mxu0 0.0
        %v2792 = vand.u32 %v2479, 4294901760
        %v2793 = vsub.f32 %v2479, %v2792
        %2794 = vmatpush1.msra.mxu0 %v2793
        %2795 = vmatprep.subr.mxu0 0.0
        %v2796 = vand.u32 %v2480, 4294901760
        %v2797 = vsub.f32 %v2480, %v2796
        %2798 = vmatpush1.msra.mxu0 %v2797
        %2799 = vmatprep.subr.mxu0 0.0
        %v2800 = vand.u32 %v2481, 4294901760
        %v2801 = vsub.f32 %v2481, %v2800
        %2802 = vmatpush1.msra.mxu0 %v2801
        %2803 = vmatprep.subr.mxu0 0.0
        %v2804 = vand.u32 %v2482, 4294901760
        %v2805 = vsub.f32 %v2482, %v2804
        %2806 = vmatpush1.msra.mxu0 %v2805
        %2807 = vmatprep.subr.mxu0 0.0
        %v2808 = vand.u32 %v2483, 4294901760
        %v2809 = vsub.f32 %v2483, %v2808
        %2810 = vmatpush1.msra.mxu0 %v2809
        %2811 = vmatprep.subr.mxu0 0.0
        %2812 = vmatpush1.msra.mxu0 0.0
        %2813 = vmatprep.subr.mxu0 0.0
        %2814 = vmatpush1.msra.mxu0 0.0
        %2815 = vmatprep.subr.mxu0 0.0
        %2816 = vmatpush1.msra.mxu0 0.0
        %2817 = vmatprep.subr.mxu0 0.0
        %2818 = vmatpush1.msra.mxu0 0.0
        %2819 = vmatprep.subr.mxu0 0.0
        %2820 = vmatpush1.msra.mxu0 0.0
        %2821 = vmatprep.subr.mxu0 0.0
        %2822 = vmatpush1.msra.mxu0 0.0
        %2823 = vmatprep.subr.mxu0 0.0
        %2824 = vmatpush1.msra.mxu0 0.0
        %2825 = vmatprep.subr.mxu0 0.0
        %2826 = vmatpush1.msra.mxu0 0.0
        %2827 = vmatprep.subr.mxu0 0.0
        %2828 = vmatpush1.msra.mxu0 0.0
        %2829 = vmatprep.subr.mxu0 0.0
        %2830 = vmatpush1.msra.mxu0 0.0
        %2831 = vmatprep.subr.mxu0 0.0
        %2832 = vmatpush1.msra.mxu0 0.0
        %2833 = vmatprep.subr.mxu0 0.0
        %2834 = vmatpush1.msra.mxu0 0.0
        %2835 = vmatprep.subr.mxu0 0.0
        %2836 = vmatpush1.msra.mxu0 0.0
        %2837 = vmatprep.subr.mxu0 0.0
        %2838 = vmatpush1.msra.mxu0 0.0
        %2839 = vmatprep.subr.mxu0 0.0
        %2840 = vmatpush1.msra.mxu0 0.0
        %2841 = vmatprep.subr.mxu0 0.0
        %2842 = vmatpush1.msra.mxu0 0.0
        %2843 = vmatprep.mubr.f32.mxu0 0.0
        %v2844 = vand.u32 %v2249, 4294901760
        %v2845 = vsub.f32 %v2249, %v2844
        %2846 = vmatmul.mubr.f32.gmra.mrb[0].mxu0 %v2845
        %v2847 = vpop.f32.mrb[0].mxu0
        %v2848 = vadd.f32 %v2738, %v2847
        %v2849 = vpop.f32.mrb[0].mxu0
        %2850 = vmatprep.mubr.f32.mxu0 0.0
        %v2851 = vand.u32 %v2255, 4294901760
        %v2852 = vsub.f32 %v2255, %v2851
        %2853 = vmatmul.mubr.f32.gmra.mrb[0].mxu0 %v2852
        %v2854 = vpop.f32.mrb[0].mxu0
        %v2855 = vadd.f32 %v2744, %v2854
        %v2856 = vpop.f32.mrb[0].mxu0
        %2857 = vdwg.mxu0
        %2858 = vmatprep.subr.mxu0 0.0
        %v2859 = vand.u32 %v2468, 4294901760
        %2860 = vmatpush1.msra.mxu0 %v2859
        %2861 = vmatprep.subr.mxu0 0.0
        %v2862 = vand.u32 %v2469, 4294901760
        %2863 = vmatpush1.msra.mxu0 %v2862
        %2864 = vmatprep.subr.mxu0 0.0
        %v2865 = vand.u32 %v2470, 4294901760
        %2866 = vmatpush1.msra.mxu0 %v2865
        %2867 = vmatprep.subr.mxu0 0.0
        %v2868 = vand.u32 %v2471, 4294901760
        %2869 = vmatpush1.msra.mxu0 %v2868
        %2870 = vmatprep.subr.mxu0 0.0
        %v2871 = vand.u32 %v2472, 4294901760
        %2872 = vmatpush1.msra.mxu0 %v2871
        %2873 = vmatprep.subr.mxu0 0.0
        %v2874 = vand.u32 %v2473, 4294901760
        %2875 = vmatpush1.msra.mxu0 %v2874
        %2876 = vmatprep.subr.mxu0 0.0
        %v2877 = vand.u32 %v2474, 4294901760
        %2878 = vmatpush1.msra.mxu0 %v2877
        %2879 = vmatprep.subr.mxu0 0.0
        %v2880 = vand.u32 %v2475, 4294901760
        %2881 = vmatpush1.msra.mxu0 %v2880
        %2882 = vmatprep.subr.mxu0 0.0
        %v2883 = vand.u32 %v2476, 4294901760
        %2884 = vmatpush1.msra.mxu0 %v2883
        %2885 = vmatprep.subr.mxu0 0.0
        %v2886 = vand.u32 %v2477, 4294901760
        %2887 = vmatpush1.msra.mxu0 %v2886
        %2888 = vmatprep.subr.mxu0 0.0
        %v2889 = vand.u32 %v2478, 4294901760
        %2890 = vmatpush1.msra.mxu0 %v2889
        %2891 = vmatprep.subr.mxu0 0.0
        %v2892 = vand.u32 %v2479, 4294901760
        %2893 = vmatpush1.msra.mxu0 %v2892
        %2894 = vmatprep.subr.mxu0 0.0
        %v2895 = vand.u32 %v2480, 4294901760
        %2896 = vmatpush1.msra.mxu0 %v2895
        %2897 = vmatprep.subr.mxu0 0.0
        %v2898 = vand.u32 %v2481, 4294901760
        %2899 = vmatpush1.msra.mxu0 %v2898
        %2900 = vmatprep.subr.mxu0 0.0
        %v2901 = vand.u32 %v2482, 4294901760
        %2902 = vmatpush1.msra.mxu0 %v2901
        %2903 = vmatprep.subr.mxu0 0.0
        %v2904 = vand.u32 %v2483, 4294901760
        %2905 = vmatpush1.msra.mxu0 %v2904
        %2906 = vmatprep.subr.mxu0 0.0
        %2907 = vmatpush1.msra.mxu0 0.0
        %2908 = vmatprep.subr.mxu0 0.0
        %2909 = vmatpush1.msra.mxu0 0.0
        %2910 = vmatprep.subr.mxu0 0.0
        %2911 = vmatpush1.msra.mxu0 0.0
        %2912 = vmatprep.subr.mxu0 0.0
        %2913 = vmatpush1.msra.mxu0 0.0
        %2914 = vmatprep.subr.mxu0 0.0
        %2915 = vmatpush1.msra.mxu0 0.0
        %2916 = vmatprep.subr.mxu0 0.0
        %2917 = vmatpush1.msra.mxu0 0.0
        %2918 = vmatprep.subr.mxu0 0.0
        %2919 = vmatpush1.msra.mxu0 0.0
        %2920 = vmatprep.subr.mxu0 0.0
        %2921 = vmatpush1.msra.mxu0 0.0
        %2922 = vmatprep.subr.mxu0 0.0
        %2923 = vmatpush1.msra.mxu0 0.0
        %2924 = vmatprep.subr.mxu0 0.0
        %2925 = vmatpush1.msra.mxu0 0.0
        %2926 = vmatprep.subr.mxu0 0.0
        %2927 = vmatpush1.msra.mxu0 0.0
        %2928 = vmatprep.subr.mxu0 0.0
        %2929 = vmatpush1.msra.mxu0 0.0
        %2930 = vmatprep.subr.mxu0 0.0
        %2931 = vmatpush1.msra.mxu0 0.0
        %2932 = vmatprep.subr.mxu0 0.0
        %2933 = vmatpush1.msra.mxu0 0.0
        %2934 = vmatprep.subr.mxu0 0.0
        %2935 = vmatpush1.msra.mxu0 0.0
        %2936 = vmatprep.subr.mxu0 0.0
        %2937 = vmatpush1.msra.mxu0 0.0
        %2938 = vmatprep.mubr.f32.mxu0 0.0
        %v2939 = vand.u32 %v2249, 4294901760
        %v2940 = vsub.f32 %v2249, %v2939
        %v2941 = vand.u32 %v2940, 4294901760
        %2942 = vmatmul.mubr.f32.gmra.mrb[0].mxu0 %v2941
        %v2943 = vpop.f32.mrb[0].mxu0
        %v2944 = vadd.f32 %v2848, %v2943
        %v2945 = vpop.f32.mrb[0].mxu0
        %2946 = vmatprep.mubr.f32.mxu0 0.0
        %v2947 = vand.u32 %v2255, 4294901760
        %v2948 = vsub.f32 %v2255, %v2947
        %v2949 = vand.u32 %v2948, 4294901760
        %2950 = vmatmul.mubr.f32.gmra.mrb[0].mxu0 %v2949
        %v2951 = vpop.f32.mrb[0].mxu0
        %v2952 = vadd.f32 %v2855, %v2951
        %v2953 = vpop.f32.mrb[0].mxu0
        %2954 = vdwg.mxu0
        %2955 = vmatprep.subr.mxu0 0.0
        %v2956 = vand.u32 %v2468, 4294901760
        %v2957 = vsub.f32 %v2468, %v2956
        %v2958 = vand.u32 %v2957, 4294901760
        %2959 = vmatpush1.msra.mxu0 %v2958
        %2960 = vmatprep.subr.mxu0 0.0
        %v2961 = vand.u32 %v2469, 4294901760
        %v2962 = vsub.f32 %v2469, %v2961
        %v2963 = vand.u32 %v2962, 4294901760
        %2964 = vmatpush1.msra.mxu0 %v2963
        %2965 = vmatprep.subr.mxu0 0.0
        %v2966 = vand.u32 %v2470, 4294901760
        %v2967 = vsub.f32 %v2470, %v2966
        %v2968 = vand.u32 %v2967, 4294901760
        %2969 = vmatpush1.msra.mxu0 %v2968
        %2970 = vmatprep.subr.mxu0 0.0
        %v2971 = vand.u32 %v2471, 4294901760
        %v2972 = vsub.f32 %v2471, %v2971
        %v2973 = vand.u32 %v2972, 4294901760
        %2974 = vmatpush1.msra.mxu0 %v2973
        %2975 = vmatprep.subr.mxu0 0.0
        %v2976 = vand.u32 %v2472, 4294901760
        %v2977 = vsub.f32 %v2472, %v2976
        %v2978 = vand.u32 %v2977, 4294901760
        %2979 = vmatpush1.msra.mxu0 %v2978
        %2980 = vmatprep.subr.mxu0 0.0
        %v2981 = vand.u32 %v2473, 4294901760
        %v2982 = vsub.f32 %v2473, %v2981
        %v2983 = vand.u32 %v2982, 4294901760
        %2984 = vmatpush1.msra.mxu0 %v2983
        %2985 = vmatprep.subr.mxu0 0.0
        %v2986 = vand.u32 %v2474, 4294901760
        %v2987 = vsub.f32 %v2474, %v2986
        %v2988 = vand.u32 %v2987, 4294901760
        %2989 = vmatpush1.msra.mxu0 %v2988
        %2990 = vmatprep.subr.mxu0 0.0
        %v2991 = vand.u32 %v2475, 4294901760
        %v2992 = vsub.f32 %v2475, %v2991
        %v2993 = vand.u32 %v2992, 4294901760
        %2994 = vmatpush1.msra.mxu0 %v2993
        %2995 = vmatprep.subr.mxu0 0.0
        %v2996 = vand.u32 %v2476, 4294901760
        %v2997 = vsub.f32 %v2476, %v2996
        %v2998 = vand.u32 %v2997, 4294901760
        %2999 = vmatpush1.msra.mxu0 %v2998
        %3000 = vmatprep.subr.mxu0 0.0
        %v3001 = vand.u32 %v2477, 4294901760
        %v3002 = vsub.f32 %v2477, %v3001
        %v3003 = vand.u32 %v3002, 4294901760
        %3004 = vmatpush1.msra.mxu0 %v3003
        %3005 = vmatprep.subr.mxu0 0.0
        %v3006 = vand.u32 %v2478, 4294901760
        %v3007 = vsub.f32 %v2478, %v3006
        %v3008 = vand.u32 %v3007, 4294901760
        %3009 = vmatpush1.msra.mxu0 %v3008
        %3010 = vmatprep.subr.mxu0 0.0
        %v3011 = vand.u32 %v2479, 4294901760
        %v3012 = vsub.f32 %v2479, %v3011
        %v3013 = vand.u32 %v3012, 4294901760
        %3014 = vmatpush1.msra.mxu0 %v3013
        %3015 = vmatprep.subr.mxu0 0.0
        %v3016 = vand.u32 %v2480, 4294901760
        %v3017 = vsub.f32 %v2480, %v3016
        %v3018 = vand.u32 %v3017, 4294901760
        %3019 = vmatpush1.msra.mxu0 %v3018
        %3020 = vmatprep.subr.mxu0 0.0
        %v3021 = vand.u32 %v2481, 4294901760
        %v3022 = vsub.f32 %v2481, %v3021
        %v3023 = vand.u32 %v3022, 4294901760
        %3024 = vmatpush1.msra.mxu0 %v3023
        %3025 = vmatprep.subr.mxu0 0.0
        %v3026 = vand.u32 %v2482, 4294901760
        %v3027 = vsub.f32 %v2482, %v3026
        %v3028 = vand.u32 %v3027, 4294901760
        %3029 = vmatpush1.msra.mxu0 %v3028
        %3030 = vmatprep.subr.mxu0 0.0
        %v3031 = vand.u32 %v2483, 4294901760
        %v3032 = vsub.f32 %v2483, %v3031
        %v3033 = vand.u32 %v3032, 4294901760
        %3034 = vmatpush1.msra.mxu0 %v3033
        %3035 = vmatprep.subr.mxu0 0.0
        %3036 = vmatpush1.msra.mxu0 0.0
        %3037 = vmatprep.subr.mxu0 0.0
        %3038 = vmatpush1.msra.mxu0 0.0
        %3039 = vmatprep.subr.mxu0 0.0
        %3040 = vmatpush1.msra.mxu0 0.0
        %3041 = vmatprep.subr.mxu0 0.0
        %3042 = vmatpush1.msra.mxu0 0.0
        %3043 = vmatprep.subr.mxu0 0.0
        %3044 = vmatpush1.msra.mxu0 0.0
        %3045 = vmatprep.subr.mxu0 0.0
        %3046 = vmatpush1.msra.mxu0 0.0
        %3047 = vmatprep.subr.mxu0 0.0
        %3048 = vmatpush1.msra.mxu0 0.0
        %3049 = vmatprep.subr.mxu0 0.0
        %3050 = vmatpush1.msra.mxu0 0.0
        %3051 = vmatprep.subr.mxu0 0.0
        %3052 = vmatpush1.msra.mxu0 0.0
        %3053 = vmatprep.subr.mxu0 0.0
        %3054 = vmatpush1.msra.mxu0 0.0
        %3055 = vmatprep.subr.mxu0 0.0
        %3056 = vmatpush1.msra.mxu0 0.0
        %3057 = vmatprep.subr.mxu0 0.0
        %3058 = vmatpush1.msra.mxu0 0.0
        %3059 = vmatprep.subr.mxu0 0.0
        %3060 = vmatpush1.msra.mxu0 0.0
        %3061 = vmatprep.subr.mxu0 0.0
        %3062 = vmatpush1.msra.mxu0 0.0
        %3063 = vmatprep.subr.mxu0 0.0
        %3064 = vmatpush1.msra.mxu0 0.0
        %3065 = vmatprep.subr.mxu0 0.0
        %3066 = vmatpush1.msra.mxu0 0.0
        %3067 = vmatprep.mubr.f32.mxu0 0.0
        %v3068 = vand.u32 %v2249, 4294901760
        %3069 = vmatmul.mubr.f32.gmra.mrb[0].mxu0 %v3068
        %v3070 = vpop.f32.mrb[0].mxu0
        %v3071 = vadd.f32 %v2944, %v3070
        %v3072 = vpop.f32.mrb[0].mxu0
        %3073 = vmatprep.mubr.f32.mxu0 0.0
        %v3074 = vand.u32 %v2255, 4294901760
        %3075 = vmatmul.mubr.f32.gmra.mrb[0].mxu0 %v3074
        %v3076 = vpop.f32.mrb[0].mxu0
        %v3077 = vadd.f32 %v2952, %v3076
        %v3078 = vpop.f32.mrb[0].mxu0
        %3079 = vdwg.mxu0
        %3080 = vmatprep.subr.mxu0 0.0
        %v3081 = vand.u32 %v2468, 4294901760
        %3082 = vmatpush1.msra.mxu0 %v3081
        %3083 = vmatprep.subr.mxu0 0.0
        %v3084 = vand.u32 %v2469, 4294901760
        %3085 = vmatpush1.msra.mxu0 %v3084
        %3086 = vmatprep.subr.mxu0 0.0
        %v3087 = vand.u32 %v2470, 4294901760
        %3088 = vmatpush1.msra.mxu0 %v3087
        %3089 = vmatprep.subr.mxu0 0.0
        %v3090 = vand.u32 %v2471, 4294901760
        %3091 = vmatpush1.msra.mxu0 %v3090
        %3092 = vmatprep.subr.mxu0 0.0
        %v3093 = vand.u32 %v2472, 4294901760
        %3094 = vmatpush1.msra.mxu0 %v3093
        %3095 = vmatprep.subr.mxu0 0.0
        %v3096 = vand.u32 %v2473, 4294901760
        %3097 = vmatpush1.msra.mxu0 %v3096
        %3098 = vmatprep.subr.mxu0 0.0
        %v3099 = vand.u32 %v2474, 4294901760
        %3100 = vmatpush1.msra.mxu0 %v3099
        %3101 = vmatprep.subr.mxu0 0.0
        %v3102 = vand.u32 %v2475, 4294901760
        %3103 = vmatpush1.msra.mxu0 %v3102
        %3104 = vmatprep.subr.mxu0 0.0
        %v3105 = vand.u32 %v2476, 4294901760
        %3106 = vmatpush1.msra.mxu0 %v3105
        %3107 = vmatprep.subr.mxu0 0.0
        %v3108 = vand.u32 %v2477, 4294901760
        %3109 = vmatpush1.msra.mxu0 %v3108
        %3110 = vmatprep.subr.mxu0 0.0
        %v3111 = vand.u32 %v2478, 4294901760
        %3112 = vmatpush1.msra.mxu0 %v3111
        %3113 = vmatprep.subr.mxu0 0.0
        %v3114 = vand.u32 %v2479, 4294901760
        %3115 = vmatpush1.msra.mxu0 %v3114
        %3116 = vmatprep.subr.mxu0 0.0
        %v3117 = vand.u32 %v2480, 4294901760
        %3118 = vmatpush1.msra.mxu0 %v3117
        %3119 = vmatprep.subr.mxu0 0.0
        %v3120 = vand.u32 %v2481, 4294901760
        %3121 = vmatpush1.msra.mxu0 %v3120
        %3122 = vmatprep.subr.mxu0 0.0
        %v3123 = vand.u32 %v2482, 4294901760
        %3124 = vmatpush1.msra.mxu0 %v3123
        %3125 = vmatprep.subr.mxu0 0.0
        %v3126 = vand.u32 %v2483, 4294901760
        %3127 = vmatpush1.msra.mxu0 %v3126
        %3128 = vmatprep.subr.mxu0 0.0
        %3129 = vmatpush1.msra.mxu0 0.0
        %3130 = vmatprep.subr.mxu0 0.0
        %3131 = vmatpush1.msra.mxu0 0.0
        %3132 = vmatprep.subr.mxu0 0.0
        %3133 = vmatpush1.msra.mxu0 0.0
        %3134 = vmatprep.subr.mxu0 0.0
        %3135 = vmatpush1.msra.mxu0 0.0
        %3136 = vmatprep.subr.mxu0 0.0
        %3137 = vmatpush1.msra.mxu0 0.0
        %3138 = vmatprep.subr.mxu0 0.0
        %3139 = vmatpush1.msra.mxu0 0.0
        %3140 = vmatprep.subr.mxu0 0.0
        %3141 = vmatpush1.msra.mxu0 0.0
        %3142 = vmatprep.subr.mxu0 0.0
        %3143 = vmatpush1.msra.mxu0 0.0
        %3144 = vmatprep.subr.mxu0 0.0
        %3145 = vmatpush1.msra.mxu0 0.0
        %3146 = vmatprep.subr.mxu0 0.0
        %3147 = vmatpush1.msra.mxu0 0.0
        %3148 = vmatprep.subr.mxu0 0.0
        %3149 = vmatpush1.msra.mxu0 0.0
        %3150 = vmatprep.subr.mxu0 0.0
        %3151 = vmatpush1.msra.mxu0 0.0
        %3152 = vmatprep.subr.mxu0 0.0
        %3153 = vmatpush1.msra.mxu0 0.0
        %3154 = vmatprep.subr.mxu0 0.0
        %3155 = vmatpush1.msra.mxu0 0.0
        %3156 = vmatprep.subr.mxu0 0.0
        %3157 = vmatpush1.msra.mxu0 0.0
        %3158 = vmatprep.subr.mxu0 0.0
        %3159 = vmatpush1.msra.mxu0 0.0
        %3160 = vmatprep.mubr.f32.mxu0 0.0
        %v3161 = vand.u32 %v2249, 4294901760
        %3162 = vmatmul.mubr.f32.gmra.mrb[0].mxu0 %v3161
        %v3163 = vpop.f32.mrb[0].mxu0
        %v3164 = vadd.f32 %v3071, %v3163
        %v3165 = vpop.f32.mrb[0].mxu0
        %3166 = vmatprep.mubr.f32.mxu0 0.0
        %v3167 = vand.u32 %v2255, 4294901760
        %3168 = vmatmul.mubr.f32.gmra.mrb[0].mxu0 %v3167
        %v3169 = vpop.f32.mrb[0].mxu0
        %v3170 = vadd.f32 %v3077, %v3169
        %v3171 = vpop.f32.mrb[0].mxu0
        %3172 = vdwg.mxu0
        %3173 = vset.pattern.permute.xlu0 3
        %3174 = vperm.xlu0 %3173, %v424
        %v3175 = vpop.permute.xlu0 %3174
        %3177 = vset.pattern.permute.xlu0 3
        %3178 = vperm.xlu0 %3177, %v425
        %v3179 = vpop.permute.xlu0 %3178
        %v3181 = vsub.f32 %v3164, %v3175
        %v3182 = vsub.f32 %v3170, %v3179
        %v3183 = vmul.f32 %v3181, %v3181
        %v3184 = vmul.f32 %v3182, %v3182
        %v3185 = vadd.f32 %v3183, %v3184
        %v3186 = vrot.slane %v3185, 4
        %v3187 = vadd.f32 %v3185, %v3186
        %v3188 = vrot.slane %v3187, 2
        %v3189 = vadd.f32 %v3187, %v3188
        %v3190 = vrot.slane %v3189, 1
        %v3191 = vadd.f32 %v3189, %v3190
        %v3192 = vmul.f32 %v3191, -0.5
        %v3193 = vmul.f32 %v3192, 1.442695
        %v3194 = vpow.pop %v3193
        %v3195 = vadd.f32 %v3194, 1e-08
        %v3196 = vmul.f32 %v2286, %v3195
        %v3197 = vadd.f32 %v3196, 1e-10
        %3198 = vadd.xlane.f32.xlu0 %v3197
        %v3199 = vpop.xlane.xlu0 %3198
        %v3200 = vrcp.pop %v3199
        %v3201 = vmul.f32 %v3197, %v3200
        %v3202 = vmul.f32 %v338, %v3201
        %v3203 = vmul.f32 %v339, %v3201
        %v3204 = vmul.f32 %v340, %v3201
        %v3205 = vmul.f32 %v341, %v3201
        %v3206 = vmul.f32 %v342, %v3201
        %v3207 = vmul.f32 %v343, %v3201
        %v3208 = vmul.f32 %v344, %v3201
        %v3209 = vmul.f32 %v345, %v3201
        %v3210 = vmul.f32 %v346, %v3201
        %v3211 = vmul.f32 %v347, %v3201
        %v3212 = vmul.f32 %v348, %v3201
        %v3213 = vmul.f32 %v349, %v3201
        %v3214 = vmul.f32 %v350, %v3201
        %v3215 = vmul.f32 %v351, %v3201
        %v3216 = vmul.f32 %v352, %v3201
        %v3217 = vmul.f32 %v353, %v3201
        %3218 = vadd.xlane.f32.xlu0 %v3202
        %v3219 = vpop.xlane.xlu0 %3218
        %3220 = vadd.xlane.f32.xlu0 %v3203
        %v3221 = vpop.xlane.xlu0 %3220
        %3222 = vadd.xlane.f32.xlu0 %v3204
        %v3223 = vpop.xlane.xlu0 %3222
        %3224 = vadd.xlane.f32.xlu0 %v3205
        %v3225 = vpop.xlane.xlu0 %3224
        %3226 = vadd.xlane.f32.xlu0 %v3206
        %v3227 = vpop.xlane.xlu0 %3226
        %3228 = vadd.xlane.f32.xlu0 %v3207
        %v3229 = vpop.xlane.xlu0 %3228
        %3230 = vadd.xlane.f32.xlu0 %v3208
        %v3231 = vpop.xlane.xlu0 %3230
        %3232 = vadd.xlane.f32.xlu0 %v3209
        %v3233 = vpop.xlane.xlu0 %3232
        %3234 = vadd.xlane.f32.xlu0 %v3210
        %v3235 = vpop.xlane.xlu0 %3234
        %3236 = vadd.xlane.f32.xlu0 %v3211
        %v3237 = vpop.xlane.xlu0 %3236
        %3238 = vadd.xlane.f32.xlu0 %v3212
        %v3239 = vpop.xlane.xlu0 %3238
        %3240 = vadd.xlane.f32.xlu0 %v3213
        %v3241 = vpop.xlane.xlu0 %3240
        %3242 = vadd.xlane.f32.xlu0 %v3214
        %v3243 = vpop.xlane.xlu0 %3242
        %3244 = vadd.xlane.f32.xlu0 %v3215
        %v3245 = vpop.xlane.xlu0 %3244
        %3246 = vadd.xlane.f32.xlu0 %v3216
        %v3247 = vpop.xlane.xlu0 %3246
        %3248 = vadd.xlane.f32.xlu0 %v3217
        %v3249 = vpop.xlane.xlu0 %3248
        %v3250 = vmul.f32 %v386, %v3201
        %v3251 = vmul.f32 %v387, %v3201
        %v3252 = vmul.f32 %v388, %v3201
        %v3253 = vmul.f32 %v389, %v3201
        %v3254 = vmul.f32 %v390, %v3201
        %v3255 = vmul.f32 %v391, %v3201
        %v3256 = vmul.f32 %v392, %v3201
        %v3257 = vmul.f32 %v393, %v3201
        %v3258 = vmul.f32 %v394, %v3201
        %v3259 = vmul.f32 %v395, %v3201
        %v3260 = vmul.f32 %v396, %v3201
        %v3261 = vmul.f32 %v397, %v3201
        %v3262 = vmul.f32 %v398, %v3201
        %v3263 = vmul.f32 %v399, %v3201
        %v3264 = vmul.f32 %v400, %v3201
        %v3265 = vmul.f32 %v401, %v3201
        %3266 = vadd.xlane.f32.xlu0 %v3250
        %v3267 = vpop.xlane.xlu0 %3266
        %3268 = vadd.xlane.f32.xlu0 %v3251
        %v3269 = vpop.xlane.xlu0 %3268
        %3270 = vadd.xlane.f32.xlu0 %v3252
        %v3271 = vpop.xlane.xlu0 %3270
        %3272 = vadd.xlane.f32.xlu0 %v3253
        %v3273 = vpop.xlane.xlu0 %3272
        %3274 = vadd.xlane.f32.xlu0 %v3254
        %v3275 = vpop.xlane.xlu0 %3274
        %3276 = vadd.xlane.f32.xlu0 %v3255
        %v3277 = vpop.xlane.xlu0 %3276
        %3278 = vadd.xlane.f32.xlu0 %v3256
        %v3279 = vpop.xlane.xlu0 %3278
        %3280 = vadd.xlane.f32.xlu0 %v3257
        %v3281 = vpop.xlane.xlu0 %3280
        %3282 = vadd.xlane.f32.xlu0 %v3258
        %v3283 = vpop.xlane.xlu0 %3282
        %3284 = vadd.xlane.f32.xlu0 %v3259
        %v3285 = vpop.xlane.xlu0 %3284
        %3286 = vadd.xlane.f32.xlu0 %v3260
        %v3287 = vpop.xlane.xlu0 %3286
        %3288 = vadd.xlane.f32.xlu0 %v3261
        %v3289 = vpop.xlane.xlu0 %3288
        %3290 = vadd.xlane.f32.xlu0 %v3262
        %v3291 = vpop.xlane.xlu0 %3290
        %3292 = vadd.xlane.f32.xlu0 %v3263
        %v3293 = vpop.xlane.xlu0 %3292
        %3294 = vadd.xlane.f32.xlu0 %v3264
        %v3295 = vpop.xlane.xlu0 %3294
        %3296 = vadd.xlane.f32.xlu0 %v3265
        %v3297 = vpop.xlane.xlu0 %3296
        %v3298 = vsel %vm402, 1e+30, %v3219
        %v3299 = vsel %vm403, 1e+30, %v3221
        %v3300 = vsel %vm404, 1e+30, %v3223
        %v3301 = vsel %vm405, 1e+30, %v3225
        %v3302 = vsel %vm406, 1e+30, %v3227
        %v3303 = vsel %vm407, 1e+30, %v3229
        %v3304 = vsel %vm408, 1e+30, %v3231
        %v3305 = vsel %vm409, 1e+30, %v3233
        %v3306 = vsel %vm410, 1e+30, %v3235
        %v3307 = vsel %vm411, 1e+30, %v3237
        %v3308 = vsel %vm412, 1e+30, %v3239
        %v3309 = vsel %vm413, 1e+30, %v3241
        %v3310 = vsel %vm414, 1e+30, %v3243
        %v3311 = vsel %vm415, 1e+30, %v3245
        %v3312 = vsel %vm416, 1e+30, %v3247
        %v3313 = vsel %vm417, 1e+30, %v3249
        %v3314 = vld [vmem:[%s269 + $0x3] sm:$0x1]
        %v3315 = vlaneseq
        %v3316 = vshrl.u32 %v3315, 7
        %v3317 = vsub.s32 0, %v3316
        %v3318 = vrot.slane %v3314, %v3317
        %vm3319 = vcmp.le.f32.partialorder %v3267, %v3318
        %vm3320 = vcmp.le.f32.partialorder %v3269, %v3318
        %vm3321 = vcmp.le.f32.partialorder %v3271, %v3318
        %vm3322 = vcmp.le.f32.partialorder %v3273, %v3318
        %vm3323 = vcmp.le.f32.partialorder %v3275, %v3318
        %vm3324 = vcmp.le.f32.partialorder %v3277, %v3318
        %vm3325 = vcmp.le.f32.partialorder %v3279, %v3318
        %vm3326 = vcmp.le.f32.partialorder %v3281, %v3318
        %vm3327 = vcmp.le.f32.partialorder %v3283, %v3318
        %vm3328 = vcmp.le.f32.partialorder %v3285, %v3318
        %vm3329 = vcmp.le.f32.partialorder %v3287, %v3318
        %vm3330 = vcmp.le.f32.partialorder %v3289, %v3318
        %vm3331 = vcmp.le.f32.partialorder %v3291, %v3318
        %vm3332 = vcmp.le.f32.partialorder %v3293, %v3318
        %vm3333 = vcmp.le.f32.partialorder %v3295, %v3318
        %vm3334 = vcmp.le.f32.partialorder %v3297, %v3318
        %vm3335 = vcmp.lt.f32.partialorder %v3318, %v3298
        %vm3336 = vcmp.lt.f32.partialorder %v3318, %v3299
        %vm3337 = vcmp.lt.f32.partialorder %v3318, %v3300
        %vm3338 = vcmp.lt.f32.partialorder %v3318, %v3301
        %vm3339 = vcmp.lt.f32.partialorder %v3318, %v3302
        %vm3340 = vcmp.lt.f32.partialorder %v3318, %v3303
        %vm3341 = vcmp.lt.f32.partialorder %v3318, %v3304
        %vm3342 = vcmp.lt.f32.partialorder %v3318, %v3305
        %vm3343 = vcmp.lt.f32.partialorder %v3318, %v3306
        %vm3344 = vcmp.lt.f32.partialorder %v3318, %v3307
        %vm3345 = vcmp.lt.f32.partialorder %v3318, %v3308
        %vm3346 = vcmp.lt.f32.partialorder %v3318, %v3309
        %vm3347 = vcmp.lt.f32.partialorder %v3318, %v3310
        %vm3348 = vcmp.lt.f32.partialorder %v3318, %v3311
        %vm3349 = vcmp.lt.f32.partialorder %v3318, %v3312
        %vm3350 = vcmp.lt.f32.partialorder %v3318, %v3313
        %vm3351 = vmand %vm3319, %vm3335
        %vm3352 = vmand %vm3320, %vm3336
        %vm3353 = vmand %vm3321, %vm3337
        %vm3354 = vmand %vm3322, %vm3338
        %vm3355 = vmand %vm3323, %vm3339
        %vm3356 = vmand %vm3324, %vm3340
        %vm3357 = vmand %vm3325, %vm3341
        %vm3358 = vmand %vm3326, %vm3342
        %vm3359 = vmand %vm3327, %vm3343
        %vm3360 = vmand %vm3328, %vm3344
        %vm3361 = vmand %vm3329, %vm3345
        %vm3362 = vmand %vm3330, %vm3346
        %vm3363 = vmand %vm3331, %vm3347
        %vm3364 = vmand %vm3332, %vm3348
        %vm3365 = vmand %vm3333, %vm3349
        %vm3366 = vmand %vm3334, %vm3350
        %v3367 = vsel %vm3351, 1, 0
        %v3368 = vsel %vm3352, 1, 0
        %v3369 = vsel %vm3353, 1, 0
        %v3370 = vsel %vm3354, 1, 0
        %v3371 = vsel %vm3355, 1, 0
        %v3372 = vsel %vm3356, 1, 0
        %v3373 = vsel %vm3357, 1, 0
        %v3374 = vsel %vm3358, 1, 0
        %v3375 = vsel %vm3359, 1, 0
        %v3376 = vsel %vm3360, 1, 0
        %v3377 = vsel %vm3361, 1, 0
        %v3378 = vsel %vm3362, 1, 0
        %v3379 = vsel %vm3363, 1, 0
        %v3380 = vsel %vm3364, 1, 0
        %v3381 = vsel %vm3365, 1, 0
        %v3382 = vsel %vm3366, 1, 0
        %v3383 = vcvt.s32.f32 %v3367
        %v3384 = vcvt.s32.f32 %v3368
        %v3385 = vcvt.s32.f32 %v3369
        %v3386 = vcvt.s32.f32 %v3370
        %v3387 = vcvt.s32.f32 %v3371
        %v3388 = vcvt.s32.f32 %v3372
        %v3389 = vcvt.s32.f32 %v3373
        %v3390 = vcvt.s32.f32 %v3374
        %v3391 = vcvt.s32.f32 %v3375
        %v3392 = vcvt.s32.f32 %v3376
        %v3393 = vcvt.s32.f32 %v3377
        %v3394 = vcvt.s32.f32 %v3378
        %v3395 = vcvt.s32.f32 %v3379
        %v3396 = vcvt.s32.f32 %v3380
        %v3397 = vcvt.s32.f32 %v3381
        %v3398 = vcvt.s32.f32 %v3382
        %s3399 = scalar_lea.vmem %s217, 64 [#allocation2]
        %v3400 = vld [vmem:[%s3399] sm:$0xff]
        %v3401 = vld [vmem:[%s3399 + $0x8] sm:$0xff]
        %v3402 = vmul.f32 %v3400, 0.1
        %v3403 = vmul.f32 %v3401, 0.1
        %3404 = vmatprep.subr.mxu0 0.0
        %v3405 = vand.u32 %v3383, 4294901760
        %3406 = vmatpush1.msra.mxu0 %v3405
        %3407 = vmatprep.subr.mxu0 0.0
        %v3408 = vand.u32 %v3384, 4294901760
        %3409 = vmatpush1.msra.mxu0 %v3408
        %3410 = vmatprep.subr.mxu0 0.0
        %v3411 = vand.u32 %v3385, 4294901760
        %3412 = vmatpush1.msra.mxu0 %v3411
        %3413 = vmatprep.subr.mxu0 0.0
        %v3414 = vand.u32 %v3386, 4294901760
        %3415 = vmatpush1.msra.mxu0 %v3414
        %3416 = vmatprep.subr.mxu0 0.0
        %v3417 = vand.u32 %v3387, 4294901760
        %3418 = vmatpush1.msra.mxu0 %v3417
        %3419 = vmatprep.subr.mxu0 0.0
        %v3420 = vand.u32 %v3388, 4294901760
        %3421 = vmatpush1.msra.mxu0 %v3420
        %3422 = vmatprep.subr.mxu0 0.0
        %v3423 = vand.u32 %v3389, 4294901760
        %3424 = vmatpush1.msra.mxu0 %v3423
        %3425 = vmatprep.subr.mxu0 0.0
        %v3426 = vand.u32 %v3390, 4294901760
        %3427 = vmatpush1.msra.mxu0 %v3426
        %3428 = vmatprep.subr.mxu0 0.0
        %v3429 = vand.u32 %v3391, 4294901760
        %3430 = vmatpush1.msra.mxu0 %v3429
        %3431 = vmatprep.subr.mxu0 0.0
        %v3432 = vand.u32 %v3392, 4294901760
        %3433 = vmatpush1.msra.mxu0 %v3432
        %3434 = vmatprep.subr.mxu0 0.0
        %v3435 = vand.u32 %v3393, 4294901760
        %3436 = vmatpush1.msra.mxu0 %v3435
        %3437 = vmatprep.subr.mxu0 0.0
        %v3438 = vand.u32 %v3394, 4294901760
        %3439 = vmatpush1.msra.mxu0 %v3438
        %3440 = vmatprep.subr.mxu0 0.0
        %v3441 = vand.u32 %v3395, 4294901760
        %3442 = vmatpush1.msra.mxu0 %v3441
        %3443 = vmatprep.subr.mxu0 0.0
        %v3444 = vand.u32 %v3396, 4294901760
        %3445 = vmatpush1.msra.mxu0 %v3444
        %3446 = vmatprep.subr.mxu0 0.0
        %v3447 = vand.u32 %v3397, 4294901760
        %3448 = vmatpush1.msra.mxu0 %v3447
        %3449 = vmatprep.subr.mxu0 0.0
        %v3450 = vand.u32 %v3398, 4294901760
        %3451 = vmatpush1.msra.mxu0 %v3450
        %3452 = vmatprep.subr.mxu0 0.0
        %3453 = vmatpush1.msra.mxu0 0.0
        %3454 = vmatprep.subr.mxu0 0.0
        %3455 = vmatpush1.msra.mxu0 0.0
        %3456 = vmatprep.subr.mxu0 0.0
        %3457 = vmatpush1.msra.mxu0 0.0
        %3458 = vmatprep.subr.mxu0 0.0
        %3459 = vmatpush1.msra.mxu0 0.0
        %3460 = vmatprep.subr.mxu0 0.0
        %3461 = vmatpush1.msra.mxu0 0.0
        %3462 = vmatprep.subr.mxu0 0.0
        %3463 = vmatpush1.msra.mxu0 0.0
        %3464 = vmatprep.subr.mxu0 0.0
        %3465 = vmatpush1.msra.mxu0 0.0
        %3466 = vmatprep.subr.mxu0 0.0
        %3467 = vmatpush1.msra.mxu0 0.0
        %3468 = vmatprep.subr.mxu0 0.0
        %3469 = vmatpush1.msra.mxu0 0.0
        %3470 = vmatprep.subr.mxu0 0.0
        %3471 = vmatpush1.msra.mxu0 0.0
        %3472 = vmatprep.subr.mxu0 0.0
        %3473 = vmatpush1.msra.mxu0 0.0
        %3474 = vmatprep.subr.mxu0 0.0
        %3475 = vmatpush1.msra.mxu0 0.0
        %3476 = vmatprep.subr.mxu0 0.0
        %3477 = vmatpush1.msra.mxu0 0.0
        %3478 = vmatprep.subr.mxu0 0.0
        %3479 = vmatpush1.msra.mxu0 0.0
        %3480 = vmatprep.subr.mxu0 0.0
        %3481 = vmatpush1.msra.mxu0 0.0
        %3482 = vmatprep.subr.mxu0 0.0
        %3483 = vmatpush1.msra.mxu0 0.0
        %3484 = vmatprep.mubr.f32.mxu0 0.0
        %v3485 = vand.u32 %v3164, 4294901760
        %v3486 = vsub.f32 %v3164, %v3485
        %v3487 = vand.u32 %v3486, 4294901760
        %v3488 = vsub.f32 %v3486, %v3487
        %v3489 = vand.u32 %v3488, 4294901760
        %3490 = vmatmul.mubr.f32.gmra.mrb[0].mxu0 %v3489
        %v3491 = vpop.f32.mrb[0].mxu0
        %v3492 = vadd.f32 %v3402, %v3491
        %v3493 = vpop.f32.mrb[0].mxu0
        %3494 = vmatprep.mubr.f32.mxu0 0.0
        %v3495 = vand.u32 %v3170, 4294901760
        %v3496 = vsub.f32 %v3170, %v3495
        %v3497 = vand.u32 %v3496, 4294901760
        %v3498 = vsub.f32 %v3496, %v3497
        %v3499 = vand.u32 %v3498, 4294901760
        %3500 = vmatmul.mubr.f32.gmra.mrb[0].mxu0 %v3499
        %v3501 = vpop.f32.mrb[0].mxu0
        %v3502 = vadd.f32 %v3403, %v3501
        %v3503 = vpop.f32.mrb[0].mxu0
        %3504 = vdwg.mxu0
        %3505 = vmatprep.subr.mxu0 0.0
        %v3506 = vand.u32 %v3383, 4294901760
        %v3507 = vsub.f32 %v3383, %v3506
        %v3508 = vand.u32 %v3507, 4294901760
        %v3509 = vsub.f32 %v3507, %v3508
        %v3510 = vand.u32 %v3509, 4294901760
        %3511 = vmatpush1.msra.mxu0 %v3510
        %3512 = vmatprep.subr.mxu0 0.0
        %v3513 = vand.u32 %v3384, 4294901760
        %v3514 = vsub.f32 %v3384, %v3513
        %v3515 = vand.u32 %v3514, 4294901760
        %v3516 = vsub.f32 %v3514, %v3515
        %v3517 = vand.u32 %v3516, 4294901760
        %3518 = vmatpush1.msra.mxu0 %v3517
        %3519 = vmatprep.subr.mxu0 0.0
        %v3520 = vand.u32 %v3385, 4294901760
        %v3521 = vsub.f32 %v3385, %v3520
        %v3522 = vand.u32 %v3521, 4294901760
        %v3523 = vsub.f32 %v3521, %v3522
        %v3524 = vand.u32 %v3523, 4294901760
        %3525 = vmatpush1.msra.mxu0 %v3524
        %3526 = vmatprep.subr.mxu0 0.0
        %v3527 = vand.u32 %v3386, 4294901760
        %v3528 = vsub.f32 %v3386, %v3527
        %v3529 = vand.u32 %v3528, 4294901760
        %v3530 = vsub.f32 %v3528, %v3529
        %v3531 = vand.u32 %v3530, 4294901760
        %3532 = vmatpush1.msra.mxu0 %v3531
        %3533 = vmatprep.subr.mxu0 0.0
        %v3534 = vand.u32 %v3387, 4294901760
        %v3535 = vsub.f32 %v3387, %v3534
        %v3536 = vand.u32 %v3535, 4294901760
        %v3537 = vsub.f32 %v3535, %v3536
        %v3538 = vand.u32 %v3537, 4294901760
        %3539 = vmatpush1.msra.mxu0 %v3538
        %3540 = vmatprep.subr.mxu0 0.0
        %v3541 = vand.u32 %v3388, 4294901760
        %v3542 = vsub.f32 %v3388, %v3541
        %v3543 = vand.u32 %v3542, 4294901760
        %v3544 = vsub.f32 %v3542, %v3543
        %v3545 = vand.u32 %v3544, 4294901760
        %3546 = vmatpush1.msra.mxu0 %v3545
        %3547 = vmatprep.subr.mxu0 0.0
        %v3548 = vand.u32 %v3389, 4294901760
        %v3549 = vsub.f32 %v3389, %v3548
        %v3550 = vand.u32 %v3549, 4294901760
        %v3551 = vsub.f32 %v3549, %v3550
        %v3552 = vand.u32 %v3551, 4294901760
        %3553 = vmatpush1.msra.mxu0 %v3552
        %3554 = vmatprep.subr.mxu0 0.0
        %v3555 = vand.u32 %v3390, 4294901760
        %v3556 = vsub.f32 %v3390, %v3555
        %v3557 = vand.u32 %v3556, 4294901760
        %v3558 = vsub.f32 %v3556, %v3557
        %v3559 = vand.u32 %v3558, 4294901760
        %3560 = vmatpush1.msra.mxu0 %v3559
        %3561 = vmatprep.subr.mxu0 0.0
        %v3562 = vand.u32 %v3391, 4294901760
        %v3563 = vsub.f32 %v3391, %v3562
        %v3564 = vand.u32 %v3563, 4294901760
        %v3565 = vsub.f32 %v3563, %v3564
        %v3566 = vand.u32 %v3565, 4294901760
        %3567 = vmatpush1.msra.mxu0 %v3566
        %3568 = vmatprep.subr.mxu0 0.0
        %v3569 = vand.u32 %v3392, 4294901760
        %v3570 = vsub.f32 %v3392, %v3569
        %v3571 = vand.u32 %v3570, 4294901760
        %v3572 = vsub.f32 %v3570, %v3571
        %v3573 = vand.u32 %v3572, 4294901760
        %3574 = vmatpush1.msra.mxu0 %v3573
        %3575 = vmatprep.subr.mxu0 0.0
        %v3576 = vand.u32 %v3393, 4294901760
        %v3577 = vsub.f32 %v3393, %v3576
        %v3578 = vand.u32 %v3577, 4294901760
        %v3579 = vsub.f32 %v3577, %v3578
        %v3580 = vand.u32 %v3579, 4294901760
        %3581 = vmatpush1.msra.mxu0 %v3580
        %3582 = vmatprep.subr.mxu0 0.0
        %v3583 = vand.u32 %v3394, 4294901760
        %v3584 = vsub.f32 %v3394, %v3583
        %v3585 = vand.u32 %v3584, 4294901760
        %v3586 = vsub.f32 %v3584, %v3585
        %v3587 = vand.u32 %v3586, 4294901760
        %3588 = vmatpush1.msra.mxu0 %v3587
        %3589 = vmatprep.subr.mxu0 0.0
        %v3590 = vand.u32 %v3395, 4294901760
        %v3591 = vsub.f32 %v3395, %v3590
        %v3592 = vand.u32 %v3591, 4294901760
        %v3593 = vsub.f32 %v3591, %v3592
        %v3594 = vand.u32 %v3593, 4294901760
        %3595 = vmatpush1.msra.mxu0 %v3594
        %3596 = vmatprep.subr.mxu0 0.0
        %v3597 = vand.u32 %v3396, 4294901760
        %v3598 = vsub.f32 %v3396, %v3597
        %v3599 = vand.u32 %v3598, 4294901760
        %v3600 = vsub.f32 %v3598, %v3599
        %v3601 = vand.u32 %v3600, 4294901760
        %3602 = vmatpush1.msra.mxu0 %v3601
        %3603 = vmatprep.subr.mxu0 0.0
        %v3604 = vand.u32 %v3397, 4294901760
        %v3605 = vsub.f32 %v3397, %v3604
        %v3606 = vand.u32 %v3605, 4294901760
        %v3607 = vsub.f32 %v3605, %v3606
        %v3608 = vand.u32 %v3607, 4294901760
        %3609 = vmatpush1.msra.mxu0 %v3608
        %3610 = vmatprep.subr.mxu0 0.0
        %v3611 = vand.u32 %v3398, 4294901760
        %v3612 = vsub.f32 %v3398, %v3611
        %v3613 = vand.u32 %v3612, 4294901760
        %v3614 = vsub.f32 %v3612, %v3613
        %v3615 = vand.u32 %v3614, 4294901760
        %3616 = vmatpush1.msra.mxu0 %v3615
        %3617 = vmatprep.subr.mxu0 0.0
        %3618 = vmatpush1.msra.mxu0 0.0
        %3619 = vmatprep.subr.mxu0 0.0
        %3620 = vmatpush1.msra.mxu0 0.0
        %3621 = vmatprep.subr.mxu0 0.0
        %3622 = vmatpush1.msra.mxu0 0.0
        %3623 = vmatprep.subr.mxu0 0.0
        %3624 = vmatpush1.msra.mxu0 0.0
        %3625 = vmatprep.subr.mxu0 0.0
        %3626 = vmatpush1.msra.mxu0 0.0
        %3627 = vmatprep.subr.mxu0 0.0
        %3628 = vmatpush1.msra.mxu0 0.0
        %3629 = vmatprep.subr.mxu0 0.0
        %3630 = vmatpush1.msra.mxu0 0.0
        %3631 = vmatprep.subr.mxu0 0.0
        %3632 = vmatpush1.msra.mxu0 0.0
        %3633 = vmatprep.subr.mxu0 0.0
        %3634 = vmatpush1.msra.mxu0 0.0
        %3635 = vmatprep.subr.mxu0 0.0
        %3636 = vmatpush1.msra.mxu0 0.0
        %3637 = vmatprep.subr.mxu0 0.0
        %3638 = vmatpush1.msra.mxu0 0.0
        %3639 = vmatprep.subr.mxu0 0.0
        %3640 = vmatpush1.msra.mxu0 0.0
        %3641 = vmatprep.subr.mxu0 0.0
        %3642 = vmatpush1.msra.mxu0 0.0
        %3643 = vmatprep.subr.mxu0 0.0
        %3644 = vmatpush1.msra.mxu0 0.0
        %3645 = vmatprep.subr.mxu0 0.0
        %3646 = vmatpush1.msra.mxu0 0.0
        %3647 = vmatprep.subr.mxu0 0.0
        %3648 = vmatpush1.msra.mxu0 0.0
        %3649 = vmatprep.mubr.f32.mxu0 0.0
        %v3650 = vand.u32 %v3164, 4294901760
        %3651 = vmatmul.mubr.f32.gmra.mrb[0].mxu0 %v3650
        %v3652 = vpop.f32.mrb[0].mxu0
        %v3653 = vadd.f32 %v3492, %v3652
        %v3654 = vpop.f32.mrb[0].mxu0
        %3655 = vmatprep.mubr.f32.mxu0 0.0
        %v3656 = vand.u32 %v3170, 4294901760
        %3657 = vmatmul.mubr.f32.gmra.mrb[0].mxu0 %v3656
        %v3658 = vpop.f32.mrb[0].mxu0
        %v3659 = vadd.f32 %v3502, %v3658
        %v3660 = vpop.f32.mrb[0].mxu0
        %3661 = vdwg.mxu0
        %3662 = vmatprep.subr.mxu0 0.0
        %v3663 = vand.u32 %v3383, 4294901760
        %v3664 = vsub.f32 %v3383, %v3663
        %3665 = vmatpush1.msra.mxu0 %v3664
        %3666 = vmatprep.subr.mxu0 0.0
        %v3667 = vand.u32 %v3384, 4294901760
        %v3668 = vsub.f32 %v3384, %v3667
        %3669 = vmatpush1.msra.mxu0 %v3668
        %3670 = vmatprep.subr.mxu0 0.0
        %v3671 = vand.u32 %v3385, 4294901760
        %v3672 = vsub.f32 %v3385, %v3671
        %3673 = vmatpush1.msra.mxu0 %v3672
        %3674 = vmatprep.subr.mxu0 0.0
        %v3675 = vand.u32 %v3386, 4294901760
        %v3676 = vsub.f32 %v3386, %v3675
        %3677 = vmatpush1.msra.mxu0 %v3676
        %3678 = vmatprep.subr.mxu0 0.0
        %v3679 = vand.u32 %v3387, 4294901760
        %v3680 = vsub.f32 %v3387, %v3679
        %3681 = vmatpush1.msra.mxu0 %v3680
        %3682 = vmatprep.subr.mxu0 0.0
        %v3683 = vand.u32 %v3388, 4294901760
        %v3684 = vsub.f32 %v3388, %v3683
        %3685 = vmatpush1.msra.mxu0 %v3684
        %3686 = vmatprep.subr.mxu0 0.0
        %v3687 = vand.u32 %v3389, 4294901760
        %v3688 = vsub.f32 %v3389, %v3687
        %3689 = vmatpush1.msra.mxu0 %v3688
        %3690 = vmatprep.subr.mxu0 0.0
        %v3691 = vand.u32 %v3390, 4294901760
        %v3692 = vsub.f32 %v3390, %v3691
        %3693 = vmatpush1.msra.mxu0 %v3692
        %3694 = vmatprep.subr.mxu0 0.0
        %v3695 = vand.u32 %v3391, 4294901760
        %v3696 = vsub.f32 %v3391, %v3695
        %3697 = vmatpush1.msra.mxu0 %v3696
        %3698 = vmatprep.subr.mxu0 0.0
        %v3699 = vand.u32 %v3392, 4294901760
        %v3700 = vsub.f32 %v3392, %v3699
        %3701 = vmatpush1.msra.mxu0 %v3700
        %3702 = vmatprep.subr.mxu0 0.0
        %v3703 = vand.u32 %v3393, 4294901760
        %v3704 = vsub.f32 %v3393, %v3703
        %3705 = vmatpush1.msra.mxu0 %v3704
        %3706 = vmatprep.subr.mxu0 0.0
        %v3707 = vand.u32 %v3394, 4294901760
        %v3708 = vsub.f32 %v3394, %v3707
        %3709 = vmatpush1.msra.mxu0 %v3708
        %3710 = vmatprep.subr.mxu0 0.0
        %v3711 = vand.u32 %v3395, 4294901760
        %v3712 = vsub.f32 %v3395, %v3711
        %3713 = vmatpush1.msra.mxu0 %v3712
        %3714 = vmatprep.subr.mxu0 0.0
        %v3715 = vand.u32 %v3396, 4294901760
        %v3716 = vsub.f32 %v3396, %v3715
        %3717 = vmatpush1.msra.mxu0 %v3716
        %3718 = vmatprep.subr.mxu0 0.0
        %v3719 = vand.u32 %v3397, 4294901760
        %v3720 = vsub.f32 %v3397, %v3719
        %3721 = vmatpush1.msra.mxu0 %v3720
        %3722 = vmatprep.subr.mxu0 0.0
        %v3723 = vand.u32 %v3398, 4294901760
        %v3724 = vsub.f32 %v3398, %v3723
        %3725 = vmatpush1.msra.mxu0 %v3724
        %3726 = vmatprep.subr.mxu0 0.0
        %3727 = vmatpush1.msra.mxu0 0.0
        %3728 = vmatprep.subr.mxu0 0.0
        %3729 = vmatpush1.msra.mxu0 0.0
        %3730 = vmatprep.subr.mxu0 0.0
        %3731 = vmatpush1.msra.mxu0 0.0
        %3732 = vmatprep.subr.mxu0 0.0
        %3733 = vmatpush1.msra.mxu0 0.0
        %3734 = vmatprep.subr.mxu0 0.0
        %3735 = vmatpush1.msra.mxu0 0.0
        %3736 = vmatprep.subr.mxu0 0.0
        %3737 = vmatpush1.msra.mxu0 0.0
        %3738 = vmatprep.subr.mxu0 0.0
        %3739 = vmatpush1.msra.mxu0 0.0
        %3740 = vmatprep.subr.mxu0 0.0
        %3741 = vmatpush1.msra.mxu0 0.0
        %3742 = vmatprep.subr.mxu0 0.0
        %3743 = vmatpush1.msra.mxu0 0.0
        %3744 = vmatprep.subr.mxu0 0.0
        %3745 = vmatpush1.msra.mxu0 0.0
        %3746 = vmatprep.subr.mxu0 0.0
        %3747 = vmatpush1.msra.mxu0 0.0
        %3748 = vmatprep.subr.mxu0 0.0
        %3749 = vmatpush1.msra.mxu0 0.0
        %3750 = vmatprep.subr.mxu0 0.0
        %3751 = vmatpush1.msra.mxu0 0.0
        %3752 = vmatprep.subr.mxu0 0.0
        %3753 = vmatpush1.msra.mxu0 0.0
        %3754 = vmatprep.subr.mxu0 0.0
        %3755 = vmatpush1.msra.mxu0 0.0
        %3756 = vmatprep.subr.mxu0 0.0
        %3757 = vmatpush1.msra.mxu0 0.0
        %3758 = vmatprep.mubr.f32.mxu0 0.0
        %v3759 = vand.u32 %v3164, 4294901760
        %v3760 = vsub.f32 %v3164, %v3759
        %3761 = vmatmul.mubr.f32.gmra.mrb[0].mxu0 %v3760
        %v3762 = vpop.f32.mrb[0].mxu0
        %v3763 = vadd.f32 %v3653, %v3762
        %v3764 = vpop.f32.mrb[0].mxu0
        %3765 = vmatprep.mubr.f32.mxu0 0.0
        %v3766 = vand.u32 %v3170, 4294901760
        %v3767 = vsub.f32 %v3170, %v3766
        %3768 = vmatmul.mubr.f32.gmra.mrb[0].mxu0 %v3767
        %v3769 = vpop.f32.mrb[0].mxu0
        %v3770 = vadd.f32 %v3659, %v3769
        %v3771 = vpop.f32.mrb[0].mxu0
        %3772 = vdwg.mxu0
        %3773 = vmatprep.subr.mxu0 0.0
        %v3774 = vand.u32 %v3383, 4294901760
        %3775 = vmatpush1.msra.mxu0 %v3774
        %3776 = vmatprep.subr.mxu0 0.0
        %v3777 = vand.u32 %v3384, 4294901760
        %3778 = vmatpush1.msra.mxu0 %v3777
        %3779 = vmatprep.subr.mxu0 0.0
        %v3780 = vand.u32 %v3385, 4294901760
        %3781 = vmatpush1.msra.mxu0 %v3780
        %3782 = vmatprep.subr.mxu0 0.0
        %v3783 = vand.u32 %v3386, 4294901760
        %3784 = vmatpush1.msra.mxu0 %v3783
        %3785 = vmatprep.subr.mxu0 0.0
        %v3786 = vand.u32 %v3387, 4294901760
        %3787 = vmatpush1.msra.mxu0 %v3786
        %3788 = vmatprep.subr.mxu0 0.0
        %v3789 = vand.u32 %v3388, 4294901760
        %3790 = vmatpush1.msra.mxu0 %v3789
        %3791 = vmatprep.subr.mxu0 0.0
        %v3792 = vand.u32 %v3389, 4294901760
        %3793 = vmatpush1.msra.mxu0 %v3792
        %3794 = vmatprep.subr.mxu0 0.0
        %v3795 = vand.u32 %v3390, 4294901760
        %3796 = vmatpush1.msra.mxu0 %v3795
        %3797 = vmatprep.subr.mxu0 0.0
        %v3798 = vand.u32 %v3391, 4294901760
        %3799 = vmatpush1.msra.mxu0 %v3798
        %3800 = vmatprep.subr.mxu0 0.0
        %v3801 = vand.u32 %v3392, 4294901760
        %3802 = vmatpush1.msra.mxu0 %v3801
        %3803 = vmatprep.subr.mxu0 0.0
        %v3804 = vand.u32 %v3393, 4294901760
        %3805 = vmatpush1.msra.mxu0 %v3804
        %3806 = vmatprep.subr.mxu0 0.0
        %v3807 = vand.u32 %v3394, 4294901760
        %3808 = vmatpush1.msra.mxu0 %v3807
        %3809 = vmatprep.subr.mxu0 0.0
        %v3810 = vand.u32 %v3395, 4294901760
        %3811 = vmatpush1.msra.mxu0 %v3810
        %3812 = vmatprep.subr.mxu0 0.0
        %v3813 = vand.u32 %v3396, 4294901760
        %3814 = vmatpush1.msra.mxu0 %v3813
        %3815 = vmatprep.subr.mxu0 0.0
        %v3816 = vand.u32 %v3397, 4294901760
        %3817 = vmatpush1.msra.mxu0 %v3816
        %3818 = vmatprep.subr.mxu0 0.0
        %v3819 = vand.u32 %v3398, 4294901760
        %3820 = vmatpush1.msra.mxu0 %v3819
        %3821 = vmatprep.subr.mxu0 0.0
        %3822 = vmatpush1.msra.mxu0 0.0
        %3823 = vmatprep.subr.mxu0 0.0
        %3824 = vmatpush1.msra.mxu0 0.0
        %3825 = vmatprep.subr.mxu0 0.0
        %3826 = vmatpush1.msra.mxu0 0.0
        %3827 = vmatprep.subr.mxu0 0.0
        %3828 = vmatpush1.msra.mxu0 0.0
        %3829 = vmatprep.subr.mxu0 0.0
        %3830 = vmatpush1.msra.mxu0 0.0
        %3831 = vmatprep.subr.mxu0 0.0
        %3832 = vmatpush1.msra.mxu0 0.0
        %3833 = vmatprep.subr.mxu0 0.0
        %3834 = vmatpush1.msra.mxu0 0.0
        %3835 = vmatprep.subr.mxu0 0.0
        %3836 = vmatpush1.msra.mxu0 0.0
        %3837 = vmatprep.subr.mxu0 0.0
        %3838 = vmatpush1.msra.mxu0 0.0
        %3839 = vmatprep.subr.mxu0 0.0
        %3840 = vmatpush1.msra.mxu0 0.0
        %3841 = vmatprep.subr.mxu0 0.0
        %3842 = vmatpush1.msra.mxu0 0.0
        %3843 = vmatprep.subr.mxu0 0.0
        %3844 = vmatpush1.msra.mxu0 0.0
        %3845 = vmatprep.subr.mxu0 0.0
        %3846 = vmatpush1.msra.mxu0 0.0
        %3847 = vmatprep.subr.mxu0 0.0
        %3848 = vmatpush1.msra.mxu0 0.0
        %3849 = vmatprep.subr.mxu0 0.0
        %3850 = vmatpush1.msra.mxu0 0.0
        %3851 = vmatprep.subr.mxu0 0.0
        %3852 = vmatpush1.msra.mxu0 0.0
        %3853 = vmatprep.mubr.f32.mxu0 0.0
        %v3854 = vand.u32 %v3164, 4294901760
        %v3855 = vsub.f32 %v3164, %v3854
        %v3856 = vand.u32 %v3855, 4294901760
        %3857 = vmatmul.mubr.f32.gmra.mrb[0].mxu0 %v3856
        %v3858 = vpop.f32.mrb[0].mxu0
        %v3859 = vadd.f32 %v3763, %v3858
        %v3860 = vpop.f32.mrb[0].mxu0
        %3861 = vmatprep.mubr.f32.mxu0 0.0
        %v3862 = vand.u32 %v3170, 4294901760
        %v3863 = vsub.f32 %v3170, %v3862
        %v3864 = vand.u32 %v3863, 4294901760
        %3865 = vmatmul.mubr.f32.gmra.mrb[0].mxu0 %v3864
        %v3866 = vpop.f32.mrb[0].mxu0
        %v3867 = vadd.f32 %v3770, %v3866
        %v3868 = vpop.f32.mrb[0].mxu0
        %3869 = vdwg.mxu0
        %3870 = vmatprep.subr.mxu0 0.0
        %v3871 = vand.u32 %v3383, 4294901760
        %v3872 = vsub.f32 %v3383, %v3871
        %v3873 = vand.u32 %v3872, 4294901760
        %3874 = vmatpush1.msra.mxu0 %v3873
        %3875 = vmatprep.subr.mxu0 0.0
        %v3876 = vand.u32 %v3384, 4294901760
        %v3877 = vsub.f32 %v3384, %v3876
        %v3878 = vand.u32 %v3877, 4294901760
        %3879 = vmatpush1.msra.mxu0 %v3878
        %3880 = vmatprep.subr.mxu0 0.0
        %v3881 = vand.u32 %v3385, 4294901760
        %v3882 = vsub.f32 %v3385, %v3881
        %v3883 = vand.u32 %v3882, 4294901760
        %3884 = vmatpush1.msra.mxu0 %v3883
        %3885 = vmatprep.subr.mxu0 0.0
        %v3886 = vand.u32 %v3386, 4294901760
        %v3887 = vsub.f32 %v3386, %v3886
        %v3888 = vand.u32 %v3887, 4294901760
        %3889 = vmatpush1.msra.mxu0 %v3888
        %3890 = vmatprep.subr.mxu0 0.0
        %v3891 = vand.u32 %v3387, 4294901760
        %v3892 = vsub.f32 %v3387, %v3891
        %v3893 = vand.u32 %v3892, 4294901760
        %3894 = vmatpush1.msra.mxu0 %v3893
        %3895 = vmatprep.subr.mxu0 0.0
        %v3896 = vand.u32 %v3388, 4294901760
        %v3897 = vsub.f32 %v3388, %v3896
        %v3898 = vand.u32 %v3897, 4294901760
        %3899 = vmatpush1.msra.mxu0 %v3898
        %3900 = vmatprep.subr.mxu0 0.0
        %v3901 = vand.u32 %v3389, 4294901760
        %v3902 = vsub.f32 %v3389, %v3901
        %v3903 = vand.u32 %v3902, 4294901760
        %3904 = vmatpush1.msra.mxu0 %v3903
        %3905 = vmatprep.subr.mxu0 0.0
        %v3906 = vand.u32 %v3390, 4294901760
        %v3907 = vsub.f32 %v3390, %v3906
        %v3908 = vand.u32 %v3907, 4294901760
        %3909 = vmatpush1.msra.mxu0 %v3908
        %3910 = vmatprep.subr.mxu0 0.0
        %v3911 = vand.u32 %v3391, 4294901760
        %v3912 = vsub.f32 %v3391, %v3911
        %v3913 = vand.u32 %v3912, 4294901760
        %3914 = vmatpush1.msra.mxu0 %v3913
        %3915 = vmatprep.subr.mxu0 0.0
        %v3916 = vand.u32 %v3392, 4294901760
        %v3917 = vsub.f32 %v3392, %v3916
        %v3918 = vand.u32 %v3917, 4294901760
        %3919 = vmatpush1.msra.mxu0 %v3918
        %3920 = vmatprep.subr.mxu0 0.0
        %v3921 = vand.u32 %v3393, 4294901760
        %v3922 = vsub.f32 %v3393, %v3921
        %v3923 = vand.u32 %v3922, 4294901760
        %3924 = vmatpush1.msra.mxu0 %v3923
        %3925 = vmatprep.subr.mxu0 0.0
        %v3926 = vand.u32 %v3394, 4294901760
        %v3927 = vsub.f32 %v3394, %v3926
        %v3928 = vand.u32 %v3927, 4294901760
        %3929 = vmatpush1.msra.mxu0 %v3928
        %3930 = vmatprep.subr.mxu0 0.0
        %v3931 = vand.u32 %v3395, 4294901760
        %v3932 = vsub.f32 %v3395, %v3931
        %v3933 = vand.u32 %v3932, 4294901760
        %3934 = vmatpush1.msra.mxu0 %v3933
        %3935 = vmatprep.subr.mxu0 0.0
        %v3936 = vand.u32 %v3396, 4294901760
        %v3937 = vsub.f32 %v3396, %v3936
        %v3938 = vand.u32 %v3937, 4294901760
        %3939 = vmatpush1.msra.mxu0 %v3938
        %3940 = vmatprep.subr.mxu0 0.0
        %v3941 = vand.u32 %v3397, 4294901760
        %v3942 = vsub.f32 %v3397, %v3941
        %v3943 = vand.u32 %v3942, 4294901760
        %3944 = vmatpush1.msra.mxu0 %v3943
        %3945 = vmatprep.subr.mxu0 0.0
        %v3946 = vand.u32 %v3398, 4294901760
        %v3947 = vsub.f32 %v3398, %v3946
        %v3948 = vand.u32 %v3947, 4294901760
        %3949 = vmatpush1.msra.mxu0 %v3948
        %3950 = vmatprep.subr.mxu0 0.0
        %3951 = vmatpush1.msra.mxu0 0.0
        %3952 = vmatprep.subr.mxu0 0.0
        %3953 = vmatpush1.msra.mxu0 0.0
        %3954 = vmatprep.subr.mxu0 0.0
        %3955 = vmatpush1.msra.mxu0 0.0
        %3956 = vmatprep.subr.mxu0 0.0
        %3957 = vmatpush1.msra.mxu0 0.0
        %3958 = vmatprep.subr.mxu0 0.0
        %3959 = vmatpush1.msra.mxu0 0.0
        %3960 = vmatprep.subr.mxu0 0.0
        %3961 = vmatpush1.msra.mxu0 0.0
        %3962 = vmatprep.subr.mxu0 0.0
        %3963 = vmatpush1.msra.mxu0 0.0
        %3964 = vmatprep.subr.mxu0 0.0
        %3965 = vmatpush1.msra.mxu0 0.0
        %3966 = vmatprep.subr.mxu0 0.0
        %3967 = vmatpush1.msra.mxu0 0.0
        %3968 = vmatprep.subr.mxu0 0.0
        %3969 = vmatpush1.msra.mxu0 0.0
        %3970 = vmatprep.subr.mxu0 0.0
        %3971 = vmatpush1.msra.mxu0 0.0
        %3972 = vmatprep.subr.mxu0 0.0
        %3973 = vmatpush1.msra.mxu0 0.0
        %3974 = vmatprep.subr.mxu0 0.0
        %3975 = vmatpush1.msra.mxu0 0.0
        %3976 = vmatprep.subr.mxu0 0.0
        %3977 = vmatpush1.msra.mxu0 0.0
        %3978 = vmatprep.subr.mxu0 0.0
        %3979 = vmatpush1.msra.mxu0 0.0
        %3980 = vmatprep.subr.mxu0 0.0
        %3981 = vmatpush1.msra.mxu0 0.0
        %3982 = vmatprep.mubr.f32.mxu0 0.0
        %v3983 = vand.u32 %v3164, 4294901760
        %3984 = vmatmul.mubr.f32.gmra.mrb[0].mxu0 %v3983
        %v3985 = vpop.f32.mrb[0].mxu0
        %v3986 = vadd.f32 %v3859, %v3985
        %v3987 = vpop.f32.mrb[0].mxu0
        %3988 = vmatprep.mubr.f32.mxu0 0.0
        %v3989 = vand.u32 %v3170, 4294901760
        %3990 = vmatmul.mubr.f32.gmra.mrb[0].mxu0 %v3989
        %v3991 = vpop.f32.mrb[0].mxu0
        %v3992 = vadd.f32 %v3867, %v3991
        %v3993 = vpop.f32.mrb[0].mxu0
        %3994 = vdwg.mxu0
        %3995 = vmatprep.subr.mxu0 0.0
        %v3996 = vand.u32 %v3383, 4294901760
        %3997 = vmatpush1.msra.mxu0 %v3996
        %3998 = vmatprep.subr.mxu0 0.0
        %v3999 = vand.u32 %v3384, 4294901760
        %4000 = vmatpush1.msra.mxu0 %v3999
        %4001 = vmatprep.subr.mxu0 0.0
        %v4002 = vand.u32 %v3385, 4294901760
        %4003 = vmatpush1.msra.mxu0 %v4002
        %4004 = vmatprep.subr.mxu0 0.0
        %v4005 = vand.u32 %v3386, 4294901760
        %4006 = vmatpush1.msra.mxu0 %v4005
        %4007 = vmatprep.subr.mxu0 0.0
        %v4008 = vand.u32 %v3387, 4294901760
        %4009 = vmatpush1.msra.mxu0 %v4008
        %4010 = vmatprep.subr.mxu0 0.0
        %v4011 = vand.u32 %v3388, 4294901760
        %4012 = vmatpush1.msra.mxu0 %v4011
        %4013 = vmatprep.subr.mxu0 0.0
        %v4014 = vand.u32 %v3389, 4294901760
        %4015 = vmatpush1.msra.mxu0 %v4014
        %4016 = vmatprep.subr.mxu0 0.0
        %v4017 = vand.u32 %v3390, 4294901760
        %4018 = vmatpush1.msra.mxu0 %v4017
        %4019 = vmatprep.subr.mxu0 0.0
        %v4020 = vand.u32 %v3391, 4294901760
        %4021 = vmatpush1.msra.mxu0 %v4020
        %4022 = vmatprep.subr.mxu0 0.0
        %v4023 = vand.u32 %v3392, 4294901760
        %4024 = vmatpush1.msra.mxu0 %v4023
        %4025 = vmatprep.subr.mxu0 0.0
        %v4026 = vand.u32 %v3393, 4294901760
        %4027 = vmatpush1.msra.mxu0 %v4026
        %4028 = vmatprep.subr.mxu0 0.0
        %v4029 = vand.u32 %v3394, 4294901760
        %4030 = vmatpush1.msra.mxu0 %v4029
        %4031 = vmatprep.subr.mxu0 0.0
        %v4032 = vand.u32 %v3395, 4294901760
        %4033 = vmatpush1.msra.mxu0 %v4032
        %4034 = vmatprep.subr.mxu0 0.0
        %v4035 = vand.u32 %v3396, 4294901760
        %4036 = vmatpush1.msra.mxu0 %v4035
        %4037 = vmatprep.subr.mxu0 0.0
        %v4038 = vand.u32 %v3397, 4294901760
        %4039 = vmatpush1.msra.mxu0 %v4038
        %4040 = vmatprep.subr.mxu0 0.0
        %v4041 = vand.u32 %v3398, 4294901760
        %4042 = vmatpush1.msra.mxu0 %v4041
        %4043 = vmatprep.subr.mxu0 0.0
        %4044 = vmatpush1.msra.mxu0 0.0
        %4045 = vmatprep.subr.mxu0 0.0
        %4046 = vmatpush1.msra.mxu0 0.0
        %4047 = vmatprep.subr.mxu0 0.0
        %4048 = vmatpush1.msra.mxu0 0.0
        %4049 = vmatprep.subr.mxu0 0.0
        %4050 = vmatpush1.msra.mxu0 0.0
        %4051 = vmatprep.subr.mxu0 0.0
        %4052 = vmatpush1.msra.mxu0 0.0
        %4053 = vmatprep.subr.mxu0 0.0
        %4054 = vmatpush1.msra.mxu0 0.0
        %4055 = vmatprep.subr.mxu0 0.0
        %4056 = vmatpush1.msra.mxu0 0.0
        %4057 = vmatprep.subr.mxu0 0.0
        %4058 = vmatpush1.msra.mxu0 0.0
        %4059 = vmatprep.subr.mxu0 0.0
        %4060 = vmatpush1.msra.mxu0 0.0
        %4061 = vmatprep.subr.mxu0 0.0
        %4062 = vmatpush1.msra.mxu0 0.0
        %4063 = vmatprep.subr.mxu0 0.0
        %4064 = vmatpush1.msra.mxu0 0.0
        %4065 = vmatprep.subr.mxu0 0.0
        %4066 = vmatpush1.msra.mxu0 0.0
        %4067 = vmatprep.subr.mxu0 0.0
        %4068 = vmatpush1.msra.mxu0 0.0
        %4069 = vmatprep.subr.mxu0 0.0
        %4070 = vmatpush1.msra.mxu0 0.0
        %4071 = vmatprep.subr.mxu0 0.0
        %4072 = vmatpush1.msra.mxu0 0.0
        %4073 = vmatprep.subr.mxu0 0.0
        %4074 = vmatpush1.msra.mxu0 0.0
        %4075 = vmatprep.mubr.f32.mxu0 0.0
        %v4076 = vand.u32 %v3164, 4294901760
        %4077 = vmatmul.mubr.f32.gmra.mrb[0].mxu0 %v4076
        %v4078 = vpop.f32.mrb[0].mxu0
        %v4079 = vadd.f32 %v3986, %v4078
        %v4080 = vpop.f32.mrb[0].mxu0
        %4081 = vmatprep.mubr.f32.mxu0 0.0
        %v4082 = vand.u32 %v3170, 4294901760
        %4083 = vmatmul.mubr.f32.gmra.mrb[0].mxu0 %v4082
        %v4084 = vpop.f32.mrb[0].mxu0
        %v4085 = vadd.f32 %v3992, %v4084
        %v4086 = vpop.f32.mrb[0].mxu0
        %4087 = vdwg.mxu0
        %4088 = vset.pattern.permute.xlu0 4
        %4089 = vperm.xlu0 %4088, %v424
        %v4090 = vpop.permute.xlu0 %4089
        %4092 = vset.pattern.permute.xlu0 4
        %4093 = vperm.xlu0 %4092, %v425
        %v4094 = vpop.permute.xlu0 %4093
        %v4096 = vsub.f32 %v4079, %v4090
        %v4097 = vsub.f32 %v4085, %v4094
        %v4098 = vmul.f32 %v4096, %v4096
        %v4099 = vmul.f32 %v4097, %v4097
        %v4100 = vadd.f32 %v4098, %v4099
        %v4101 = vrot.slane %v4100, 4
        %v4102 = vadd.f32 %v4100, %v4101
        %v4103 = vrot.slane %v4102, 2
        %v4104 = vadd.f32 %v4102, %v4103
        %v4105 = vrot.slane %v4104, 1
        %v4106 = vadd.f32 %v4104, %v4105
        %v4107 = vmul.f32 %v4106, -0.5
        %v4108 = vmul.f32 %v4107, 1.442695
        %v4109 = vpow.pop %v4108
        %v4110 = vadd.f32 %v4109, 1e-08
        %v4111 = vmul.f32 %v3201, %v4110
        %v4112 = vadd.f32 %v4111, 1e-10
        %4113 = vadd.xlane.f32.xlu0 %v4112
        %v4114 = vpop.xlane.xlu0 %4113
        %v4115 = vrcp.pop %v4114
        %v4116 = vmul.f32 %v4112, %v4115
        %v4117 = vmul.f32 %v338, %v4116
        %v4118 = vmul.f32 %v339, %v4116
        %v4119 = vmul.f32 %v340, %v4116
        %v4120 = vmul.f32 %v341, %v4116
        %v4121 = vmul.f32 %v342, %v4116
        %v4122 = vmul.f32 %v343, %v4116
        %v4123 = vmul.f32 %v344, %v4116
        %v4124 = vmul.f32 %v345, %v4116
        %v4125 = vmul.f32 %v346, %v4116
        %v4126 = vmul.f32 %v347, %v4116
        %v4127 = vmul.f32 %v348, %v4116
        %v4128 = vmul.f32 %v349, %v4116
        %v4129 = vmul.f32 %v350, %v4116
        %v4130 = vmul.f32 %v351, %v4116
        %v4131 = vmul.f32 %v352, %v4116
        %v4132 = vmul.f32 %v353, %v4116
        %4133 = vadd.xlane.f32.xlu0 %v4117
        %v4134 = vpop.xlane.xlu0 %4133
        %4135 = vadd.xlane.f32.xlu0 %v4118
        %v4136 = vpop.xlane.xlu0 %4135
        %4137 = vadd.xlane.f32.xlu0 %v4119
        %v4138 = vpop.xlane.xlu0 %4137
        %4139 = vadd.xlane.f32.xlu0 %v4120
        %v4140 = vpop.xlane.xlu0 %4139
        %4141 = vadd.xlane.f32.xlu0 %v4121
        %v4142 = vpop.xlane.xlu0 %4141
        %4143 = vadd.xlane.f32.xlu0 %v4122
        %v4144 = vpop.xlane.xlu0 %4143
        %4145 = vadd.xlane.f32.xlu0 %v4123
        %v4146 = vpop.xlane.xlu0 %4145
        %4147 = vadd.xlane.f32.xlu0 %v4124
        %v4148 = vpop.xlane.xlu0 %4147
        %4149 = vadd.xlane.f32.xlu0 %v4125
        %v4150 = vpop.xlane.xlu0 %4149
        %4151 = vadd.xlane.f32.xlu0 %v4126
        %v4152 = vpop.xlane.xlu0 %4151
        %4153 = vadd.xlane.f32.xlu0 %v4127
        %v4154 = vpop.xlane.xlu0 %4153
        %4155 = vadd.xlane.f32.xlu0 %v4128
        %v4156 = vpop.xlane.xlu0 %4155
        %4157 = vadd.xlane.f32.xlu0 %v4129
        %v4158 = vpop.xlane.xlu0 %4157
        %4159 = vadd.xlane.f32.xlu0 %v4130
        %v4160 = vpop.xlane.xlu0 %4159
        %4161 = vadd.xlane.f32.xlu0 %v4131
        %v4162 = vpop.xlane.xlu0 %4161
        %4163 = vadd.xlane.f32.xlu0 %v4132
        %v4164 = vpop.xlane.xlu0 %4163
        %v4165 = vmul.f32 %v386, %v4116
        %v4166 = vmul.f32 %v387, %v4116
        %v4167 = vmul.f32 %v388, %v4116
        %v4168 = vmul.f32 %v389, %v4116
        %v4169 = vmul.f32 %v390, %v4116
        %v4170 = vmul.f32 %v391, %v4116
        %v4171 = vmul.f32 %v392, %v4116
        %v4172 = vmul.f32 %v393, %v4116
        %v4173 = vmul.f32 %v394, %v4116
        %v4174 = vmul.f32 %v395, %v4116
        %v4175 = vmul.f32 %v396, %v4116
        %v4176 = vmul.f32 %v397, %v4116
        %v4177 = vmul.f32 %v398, %v4116
        %v4178 = vmul.f32 %v399, %v4116
        %v4179 = vmul.f32 %v400, %v4116
        %v4180 = vmul.f32 %v401, %v4116
        %4181 = vadd.xlane.f32.xlu0 %v4165
        %v4182 = vpop.xlane.xlu0 %4181
        %4183 = vadd.xlane.f32.xlu0 %v4166
        %v4184 = vpop.xlane.xlu0 %4183
        %4185 = vadd.xlane.f32.xlu0 %v4167
        %v4186 = vpop.xlane.xlu0 %4185
        %4187 = vadd.xlane.f32.xlu0 %v4168
        %v4188 = vpop.xlane.xlu0 %4187
        %4189 = vadd.xlane.f32.xlu0 %v4169
        %v4190 = vpop.xlane.xlu0 %4189
        %4191 = vadd.xlane.f32.xlu0 %v4170
        %v4192 = vpop.xlane.xlu0 %4191
        %4193 = vadd.xlane.f32.xlu0 %v4171
        %v4194 = vpop.xlane.xlu0 %4193
        %4195 = vadd.xlane.f32.xlu0 %v4172
        %v4196 = vpop.xlane.xlu0 %4195
        %4197 = vadd.xlane.f32.xlu0 %v4173
        %v4198 = vpop.xlane.xlu0 %4197
        %4199 = vadd.xlane.f32.xlu0 %v4174
        %v4200 = vpop.xlane.xlu0 %4199
        %4201 = vadd.xlane.f32.xlu0 %v4175
        %v4202 = vpop.xlane.xlu0 %4201
        %4203 = vadd.xlane.f32.xlu0 %v4176
        %v4204 = vpop.xlane.xlu0 %4203
        %4205 = vadd.xlane.f32.xlu0 %v4177
        %v4206 = vpop.xlane.xlu0 %4205
        %4207 = vadd.xlane.f32.xlu0 %v4178
        %v4208 = vpop.xlane.xlu0 %4207
        %4209 = vadd.xlane.f32.xlu0 %v4179
        %v4210 = vpop.xlane.xlu0 %4209
        %4211 = vadd.xlane.f32.xlu0 %v4180
        %v4212 = vpop.xlane.xlu0 %4211
        %v4213 = vsel %vm402, 1e+30, %v4134
        %v4214 = vsel %vm403, 1e+30, %v4136
        %v4215 = vsel %vm404, 1e+30, %v4138
        %v4216 = vsel %vm405, 1e+30, %v4140
        %v4217 = vsel %vm406, 1e+30, %v4142
        %v4218 = vsel %vm407, 1e+30, %v4144
        %v4219 = vsel %vm408, 1e+30, %v4146
        %v4220 = vsel %vm409, 1e+30, %v4148
        %v4221 = vsel %vm410, 1e+30, %v4150
        %v4222 = vsel %vm411, 1e+30, %v4152
        %v4223 = vsel %vm412, 1e+30, %v4154
        %v4224 = vsel %vm413, 1e+30, %v4156
        %v4225 = vsel %vm414, 1e+30, %v4158
        %v4226 = vsel %vm415, 1e+30, %v4160
        %v4227 = vsel %vm416, 1e+30, %v4162
        %v4228 = vsel %vm417, 1e+30, %v4164
        %v4229 = vld [vmem:[%s269 + $0x4] sm:$0x1]
        %v4230 = vlaneseq
        %v4231 = vshrl.u32 %v4230, 7
        %v4232 = vsub.s32 0, %v4231
        %v4233 = vrot.slane %v4229, %v4232
        %vm4234 = vcmp.le.f32.partialorder %v4182, %v4233
        %vm4235 = vcmp.le.f32.partialorder %v4184, %v4233
        %vm4236 = vcmp.le.f32.partialorder %v4186, %v4233
        %vm4237 = vcmp.le.f32.partialorder %v4188, %v4233
        %vm4238 = vcmp.le.f32.partialorder %v4190, %v4233
        %vm4239 = vcmp.le.f32.partialorder %v4192, %v4233
        %vm4240 = vcmp.le.f32.partialorder %v4194, %v4233
        %vm4241 = vcmp.le.f32.partialorder %v4196, %v4233
        %vm4242 = vcmp.le.f32.partialorder %v4198, %v4233
        %vm4243 = vcmp.le.f32.partialorder %v4200, %v4233
        %vm4244 = vcmp.le.f32.partialorder %v4202, %v4233
        %vm4245 = vcmp.le.f32.partialorder %v4204, %v4233
        %vm4246 = vcmp.le.f32.partialorder %v4206, %v4233
        %vm4247 = vcmp.le.f32.partialorder %v4208, %v4233
        %vm4248 = vcmp.le.f32.partialorder %v4210, %v4233
        %vm4249 = vcmp.le.f32.partialorder %v4212, %v4233
        %vm4250 = vcmp.lt.f32.partialorder %v4233, %v4213
        %vm4251 = vcmp.lt.f32.partialorder %v4233, %v4214
        %vm4252 = vcmp.lt.f32.partialorder %v4233, %v4215
        %vm4253 = vcmp.lt.f32.partialorder %v4233, %v4216
        %vm4254 = vcmp.lt.f32.partialorder %v4233, %v4217
        %vm4255 = vcmp.lt.f32.partialorder %v4233, %v4218
        %vm4256 = vcmp.lt.f32.partialorder %v4233, %v4219
        %vm4257 = vcmp.lt.f32.partialorder %v4233, %v4220
        %vm4258 = vcmp.lt.f32.partialorder %v4233, %v4221
        %vm4259 = vcmp.lt.f32.partialorder %v4233, %v4222
        %vm4260 = vcmp.lt.f32.partialorder %v4233, %v4223
        %vm4261 = vcmp.lt.f32.partialorder %v4233, %v4224
        %vm4262 = vcmp.lt.f32.partialorder %v4233, %v4225
        %vm4263 = vcmp.lt.f32.partialorder %v4233, %v4226
        %vm4264 = vcmp.lt.f32.partialorder %v4233, %v4227
        %vm4265 = vcmp.lt.f32.partialorder %v4233, %v4228
        %vm4266 = vmand %vm4234, %vm4250
        %vm4267 = vmand %vm4235, %vm4251
        %vm4268 = vmand %vm4236, %vm4252
        %vm4269 = vmand %vm4237, %vm4253
        %vm4270 = vmand %vm4238, %vm4254
        %vm4271 = vmand %vm4239, %vm4255
        %vm4272 = vmand %vm4240, %vm4256
        %vm4273 = vmand %vm4241, %vm4257
        %vm4274 = vmand %vm4242, %vm4258
        %vm4275 = vmand %vm4243, %vm4259
        %vm4276 = vmand %vm4244, %vm4260
        %vm4277 = vmand %vm4245, %vm4261
        %vm4278 = vmand %vm4246, %vm4262
        %vm4279 = vmand %vm4247, %vm4263
        %vm4280 = vmand %vm4248, %vm4264
        %vm4281 = vmand %vm4249, %vm4265
        %v4282 = vsel %vm4266, 1, 0
        %v4283 = vsel %vm4267, 1, 0
        %v4284 = vsel %vm4268, 1, 0
        %v4285 = vsel %vm4269, 1, 0
        %v4286 = vsel %vm4270, 1, 0
        %v4287 = vsel %vm4271, 1, 0
        %v4288 = vsel %vm4272, 1, 0
        %v4289 = vsel %vm4273, 1, 0
        %v4290 = vsel %vm4274, 1, 0
        %v4291 = vsel %vm4275, 1, 0
        %v4292 = vsel %vm4276, 1, 0
        %v4293 = vsel %vm4277, 1, 0
        %v4294 = vsel %vm4278, 1, 0
        %v4295 = vsel %vm4279, 1, 0
        %v4296 = vsel %vm4280, 1, 0
        %v4297 = vsel %vm4281, 1, 0
        %v4298 = vcvt.s32.f32 %v4282
        %v4299 = vcvt.s32.f32 %v4283
        %v4300 = vcvt.s32.f32 %v4284
        %v4301 = vcvt.s32.f32 %v4285
        %v4302 = vcvt.s32.f32 %v4286
        %v4303 = vcvt.s32.f32 %v4287
        %v4304 = vcvt.s32.f32 %v4288
        %v4305 = vcvt.s32.f32 %v4289
        %v4306 = vcvt.s32.f32 %v4290
        %v4307 = vcvt.s32.f32 %v4291
        %v4308 = vcvt.s32.f32 %v4292
        %v4309 = vcvt.s32.f32 %v4293
        %v4310 = vcvt.s32.f32 %v4294
        %v4311 = vcvt.s32.f32 %v4295
        %v4312 = vcvt.s32.f32 %v4296
        %v4313 = vcvt.s32.f32 %v4297
        %s4314 = scalar_lea.vmem %s217, 80 [#allocation2]
        %v4315 = vld [vmem:[%s4314] sm:$0xff]
        %v4316 = vld [vmem:[%s4314 + $0x8] sm:$0xff]
        %v4317 = vmul.f32 %v4315, 0.1
        %v4318 = vmul.f32 %v4316, 0.1
        %4319 = vmatprep.subr.mxu0 0.0
        %v4320 = vand.u32 %v4298, 4294901760
        %4321 = vmatpush1.msra.mxu0 %v4320
        %4322 = vmatprep.subr.mxu0 0.0
        %v4323 = vand.u32 %v4299, 4294901760
        %4324 = vmatpush1.msra.mxu0 %v4323
        %4325 = vmatprep.subr.mxu0 0.0
        %v4326 = vand.u32 %v4300, 4294901760
        %4327 = vmatpush1.msra.mxu0 %v4326
        %4328 = vmatprep.subr.mxu0 0.0
        %v4329 = vand.u32 %v4301, 4294901760
        %4330 = vmatpush1.msra.mxu0 %v4329
        %4331 = vmatprep.subr.mxu0 0.0
        %v4332 = vand.u32 %v4302, 4294901760
        %4333 = vmatpush1.msra.mxu0 %v4332
        %4334 = vmatprep.subr.mxu0 0.0
        %v4335 = vand.u32 %v4303, 4294901760
        %4336 = vmatpush1.msra.mxu0 %v4335
        %4337 = vmatprep.subr.mxu0 0.0
        %v4338 = vand.u32 %v4304, 4294901760
        %4339 = vmatpush1.msra.mxu0 %v4338
        %4340 = vmatprep.subr.mxu0 0.0
        %v4341 = vand.u32 %v4305, 4294901760
        %4342 = vmatpush1.msra.mxu0 %v4341
        %4343 = vmatprep.subr.mxu0 0.0
        %v4344 = vand.u32 %v4306, 4294901760
        %4345 = vmatpush1.msra.mxu0 %v4344
        %4346 = vmatprep.subr.mxu0 0.0
        %v4347 = vand.u32 %v4307, 4294901760
        %4348 = vmatpush1.msra.mxu0 %v4347
        %4349 = vmatprep.subr.mxu0 0.0
        %v4350 = vand.u32 %v4308, 4294901760
        %4351 = vmatpush1.msra.mxu0 %v4350
        %4352 = vmatprep.subr.mxu0 0.0
        %v4353 = vand.u32 %v4309, 4294901760
        %4354 = vmatpush1.msra.mxu0 %v4353
        %4355 = vmatprep.subr.mxu0 0.0
        %v4356 = vand.u32 %v4310, 4294901760
        %4357 = vmatpush1.msra.mxu0 %v4356
        %4358 = vmatprep.subr.mxu0 0.0
        %v4359 = vand.u32 %v4311, 4294901760
        %4360 = vmatpush1.msra.mxu0 %v4359
        %4361 = vmatprep.subr.mxu0 0.0
        %v4362 = vand.u32 %v4312, 4294901760
        %4363 = vmatpush1.msra.mxu0 %v4362
        %4364 = vmatprep.subr.mxu0 0.0
        %v4365 = vand.u32 %v4313, 4294901760
        %4366 = vmatpush1.msra.mxu0 %v4365
        %4367 = vmatprep.subr.mxu0 0.0
        %4368 = vmatpush1.msra.mxu0 0.0
        %4369 = vmatprep.subr.mxu0 0.0
        %4370 = vmatpush1.msra.mxu0 0.0
        %4371 = vmatprep.subr.mxu0 0.0
        %4372 = vmatpush1.msra.mxu0 0.0
        %4373 = vmatprep.subr.mxu0 0.0
        %4374 = vmatpush1.msra.mxu0 0.0
        %4375 = vmatprep.subr.mxu0 0.0
        %4376 = vmatpush1.msra.mxu0 0.0
        %4377 = vmatprep.subr.mxu0 0.0
        %4378 = vmatpush1.msra.mxu0 0.0
        %4379 = vmatprep.subr.mxu0 0.0
        %4380 = vmatpush1.msra.mxu0 0.0
        %4381 = vmatprep.subr.mxu0 0.0
        %4382 = vmatpush1.msra.mxu0 0.0
        %4383 = vmatprep.subr.mxu0 0.0
        %4384 = vmatpush1.msra.mxu0 0.0
        %4385 = vmatprep.subr.mxu0 0.0
        %4386 = vmatpush1.msra.mxu0 0.0
        %4387 = vmatprep.subr.mxu0 0.0
        %4388 = vmatpush1.msra.mxu0 0.0
        %4389 = vmatprep.subr.mxu0 0.0
        %4390 = vmatpush1.msra.mxu0 0.0
        %4391 = vmatprep.subr.mxu0 0.0
        %4392 = vmatpush1.msra.mxu0 0.0
        %4393 = vmatprep.subr.mxu0 0.0
        %4394 = vmatpush1.msra.mxu0 0.0
        %4395 = vmatprep.subr.mxu0 0.0
        %4396 = vmatpush1.msra.mxu0 0.0
        %4397 = vmatprep.subr.mxu0 0.0
        %4398 = vmatpush1.msra.mxu0 0.0
        %4399 = vmatprep.mubr.f32.mxu0 0.0
        %v4400 = vand.u32 %v4079, 4294901760
        %v4401 = vsub.f32 %v4079, %v4400
        %v4402 = vand.u32 %v4401, 4294901760
        %v4403 = vsub.f32 %v4401, %v4402
        %v4404 = vand.u32 %v4403, 4294901760
        %4405 = vmatmul.mubr.f32.gmra.mrb[0].mxu0 %v4404
        %v4406 = vpop.f32.mrb[0].mxu0
        %v4407 = vadd.f32 %v4317, %v4406
        %v4408 = vpop.f32.mrb[0].mxu0
        %4409 = vmatprep.mubr.f32.mxu0 0.0
        %v4410 = vand.u32 %v4085, 4294901760
        %v4411 = vsub.f32 %v4085, %v4410
        %v4412 = vand.u32 %v4411, 4294901760
        %v4413 = vsub.f32 %v4411, %v4412
        %v4414 = vand.u32 %v4413, 4294901760
        %4415 = vmatmul.mubr.f32.gmra.mrb[0].mxu0 %v4414
        %v4416 = vpop.f32.mrb[0].mxu0
        %v4417 = vadd.f32 %v4318, %v4416
        %v4418 = vpop.f32.mrb[0].mxu0
        %4419 = vdwg.mxu0
        %4420 = vmatprep.subr.mxu0 0.0
        %v4421 = vand.u32 %v4298, 4294901760
        %v4422 = vsub.f32 %v4298, %v4421
        %v4423 = vand.u32 %v4422, 4294901760
        %v4424 = vsub.f32 %v4422, %v4423
        %v4425 = vand.u32 %v4424, 4294901760
        %4426 = vmatpush1.msra.mxu0 %v4425
        %4427 = vmatprep.subr.mxu0 0.0
        %v4428 = vand.u32 %v4299, 4294901760
        %v4429 = vsub.f32 %v4299, %v4428
        %v4430 = vand.u32 %v4429, 4294901760
        %v4431 = vsub.f32 %v4429, %v4430
        %v4432 = vand.u32 %v4431, 4294901760
        %4433 = vmatpush1.msra.mxu0 %v4432
        %4434 = vmatprep.subr.mxu0 0.0
        %v4435 = vand.u32 %v4300, 4294901760
        %v4436 = vsub.f32 %v4300, %v4435
        %v4437 = vand.u32 %v4436, 4294901760
        %v4438 = vsub.f32 %v4436, %v4437
        %v4439 = vand.u32 %v4438, 4294901760
        %4440 = vmatpush1.msra.mxu0 %v4439
        %4441 = vmatprep.subr.mxu0 0.0
        %v4442 = vand.u32 %v4301, 4294901760
        %v4443 = vsub.f32 %v4301, %v4442
        %v4444 = vand.u32 %v4443, 4294901760
        %v4445 = vsub.f32 %v4443, %v4444
        %v4446 = vand.u32 %v4445, 4294901760
        %4447 = vmatpush1.msra.mxu0 %v4446
        %4448 = vmatprep.subr.mxu0 0.0
        %v4449 = vand.u32 %v4302, 4294901760
        %v4450 = vsub.f32 %v4302, %v4449
        %v4451 = vand.u32 %v4450, 4294901760
        %v4452 = vsub.f32 %v4450, %v4451
        %v4453 = vand.u32 %v4452, 4294901760
        %4454 = vmatpush1.msra.mxu0 %v4453
        %4455 = vmatprep.subr.mxu0 0.0
        %v4456 = vand.u32 %v4303, 4294901760
        %v4457 = vsub.f32 %v4303, %v4456
        %v4458 = vand.u32 %v4457, 4294901760
        %v4459 = vsub.f32 %v4457, %v4458
        %v4460 = vand.u32 %v4459, 4294901760
        %4461 = vmatpush1.msra.mxu0 %v4460
        %4462 = vmatprep.subr.mxu0 0.0
        %v4463 = vand.u32 %v4304, 4294901760
        %v4464 = vsub.f32 %v4304, %v4463
        %v4465 = vand.u32 %v4464, 4294901760
        %v4466 = vsub.f32 %v4464, %v4465
        %v4467 = vand.u32 %v4466, 4294901760
        %4468 = vmatpush1.msra.mxu0 %v4467
        %4469 = vmatprep.subr.mxu0 0.0
        %v4470 = vand.u32 %v4305, 4294901760
        %v4471 = vsub.f32 %v4305, %v4470
        %v4472 = vand.u32 %v4471, 4294901760
        %v4473 = vsub.f32 %v4471, %v4472
        %v4474 = vand.u32 %v4473, 4294901760
        %4475 = vmatpush1.msra.mxu0 %v4474
        %4476 = vmatprep.subr.mxu0 0.0
        %v4477 = vand.u32 %v4306, 4294901760
        %v4478 = vsub.f32 %v4306, %v4477
        %v4479 = vand.u32 %v4478, 4294901760
        %v4480 = vsub.f32 %v4478, %v4479
        %v4481 = vand.u32 %v4480, 4294901760
        %4482 = vmatpush1.msra.mxu0 %v4481
        %4483 = vmatprep.subr.mxu0 0.0
        %v4484 = vand.u32 %v4307, 4294901760
        %v4485 = vsub.f32 %v4307, %v4484
        %v4486 = vand.u32 %v4485, 4294901760
        %v4487 = vsub.f32 %v4485, %v4486
        %v4488 = vand.u32 %v4487, 4294901760
        %4489 = vmatpush1.msra.mxu0 %v4488
        %4490 = vmatprep.subr.mxu0 0.0
        %v4491 = vand.u32 %v4308, 4294901760
        %v4492 = vsub.f32 %v4308, %v4491
        %v4493 = vand.u32 %v4492, 4294901760
        %v4494 = vsub.f32 %v4492, %v4493
        %v4495 = vand.u32 %v4494, 4294901760
        %4496 = vmatpush1.msra.mxu0 %v4495
        %4497 = vmatprep.subr.mxu0 0.0
        %v4498 = vand.u32 %v4309, 4294901760
        %v4499 = vsub.f32 %v4309, %v4498
        %v4500 = vand.u32 %v4499, 4294901760
        %v4501 = vsub.f32 %v4499, %v4500
        %v4502 = vand.u32 %v4501, 4294901760
        %4503 = vmatpush1.msra.mxu0 %v4502
        %4504 = vmatprep.subr.mxu0 0.0
        %v4505 = vand.u32 %v4310, 4294901760
        %v4506 = vsub.f32 %v4310, %v4505
        %v4507 = vand.u32 %v4506, 4294901760
        %v4508 = vsub.f32 %v4506, %v4507
        %v4509 = vand.u32 %v4508, 4294901760
        %4510 = vmatpush1.msra.mxu0 %v4509
        %4511 = vmatprep.subr.mxu0 0.0
        %v4512 = vand.u32 %v4311, 4294901760
        %v4513 = vsub.f32 %v4311, %v4512
        %v4514 = vand.u32 %v4513, 4294901760
        %v4515 = vsub.f32 %v4513, %v4514
        %v4516 = vand.u32 %v4515, 4294901760
        %4517 = vmatpush1.msra.mxu0 %v4516
        %4518 = vmatprep.subr.mxu0 0.0
        %v4519 = vand.u32 %v4312, 4294901760
        %v4520 = vsub.f32 %v4312, %v4519
        %v4521 = vand.u32 %v4520, 4294901760
        %v4522 = vsub.f32 %v4520, %v4521
        %v4523 = vand.u32 %v4522, 4294901760
        %4524 = vmatpush1.msra.mxu0 %v4523
        %4525 = vmatprep.subr.mxu0 0.0
        %v4526 = vand.u32 %v4313, 4294901760
        %v4527 = vsub.f32 %v4313, %v4526
        %v4528 = vand.u32 %v4527, 4294901760
        %v4529 = vsub.f32 %v4527, %v4528
        %v4530 = vand.u32 %v4529, 4294901760
        %4531 = vmatpush1.msra.mxu0 %v4530
        %4532 = vmatprep.subr.mxu0 0.0
        %4533 = vmatpush1.msra.mxu0 0.0
        %4534 = vmatprep.subr.mxu0 0.0
        %4535 = vmatpush1.msra.mxu0 0.0
        %4536 = vmatprep.subr.mxu0 0.0
        %4537 = vmatpush1.msra.mxu0 0.0
        %4538 = vmatprep.subr.mxu0 0.0
        %4539 = vmatpush1.msra.mxu0 0.0
        %4540 = vmatprep.subr.mxu0 0.0
        %4541 = vmatpush1.msra.mxu0 0.0
        %4542 = vmatprep.subr.mxu0 0.0
        %4543 = vmatpush1.msra.mxu0 0.0
        %4544 = vmatprep.subr.mxu0 0.0
        %4545 = vmatpush1.msra.mxu0 0.0
        %4546 = vmatprep.subr.mxu0 0.0
        %4547 = vmatpush1.msra.mxu0 0.0
        %4548 = vmatprep.subr.mxu0 0.0
        %4549 = vmatpush1.msra.mxu0 0.0
        %4550 = vmatprep.subr.mxu0 0.0
        %4551 = vmatpush1.msra.mxu0 0.0
        %4552 = vmatprep.subr.mxu0 0.0
        %4553 = vmatpush1.msra.mxu0 0.0
        %4554 = vmatprep.subr.mxu0 0.0
        %4555 = vmatpush1.msra.mxu0 0.0
        %4556 = vmatprep.subr.mxu0 0.0
        %4557 = vmatpush1.msra.mxu0 0.0
        %4558 = vmatprep.subr.mxu0 0.0
        %4559 = vmatpush1.msra.mxu0 0.0
        %4560 = vmatprep.subr.mxu0 0.0
        %4561 = vmatpush1.msra.mxu0 0.0
        %4562 = vmatprep.subr.mxu0 0.0
        %4563 = vmatpush1.msra.mxu0 0.0
        %4564 = vmatprep.mubr.f32.mxu0 0.0
        %v4565 = vand.u32 %v4079, 4294901760
        %4566 = vmatmul.mubr.f32.gmra.mrb[0].mxu0 %v4565
        %v4567 = vpop.f32.mrb[0].mxu0
        %v4568 = vadd.f32 %v4407, %v4567
        %v4569 = vpop.f32.mrb[0].mxu0
        %4570 = vmatprep.mubr.f32.mxu0 0.0
        %v4571 = vand.u32 %v4085, 4294901760
        %4572 = vmatmul.mubr.f32.gmra.mrb[0].mxu0 %v4571
        %v4573 = vpop.f32.mrb[0].mxu0
        %v4574 = vadd.f32 %v4417, %v4573
        %v4575 = vpop.f32.mrb[0].mxu0
        %4576 = vdwg.mxu0
        %4577 = vmatprep.subr.mxu0 0.0
        %v4578 = vand.u32 %v4298, 4294901760
        %v4579 = vsub.f32 %v4298, %v4578
        %4580 = vmatpush1.msra.mxu0 %v4579
        %4581 = vmatprep.subr.mxu0 0.0
        %v4582 = vand.u32 %v4299, 4294901760
        %v4583 = vsub.f32 %v4299, %v4582
        %4584 = vmatpush1.msra.mxu0 %v4583
        %4585 = vmatprep.subr.mxu0 0.0
        %v4586 = vand.u32 %v4300, 4294901760
        %v4587 = vsub.f32 %v4300, %v4586
        %4588 = vmatpush1.msra.mxu0 %v4587
        %4589 = vmatprep.subr.mxu0 0.0
        %v4590 = vand.u32 %v4301, 4294901760
        %v4591 = vsub.f32 %v4301, %v4590
        %4592 = vmatpush1.msra.mxu0 %v4591
        %4593 = vmatprep.subr.mxu0 0.0
        %v4594 = vand.u32 %v4302, 4294901760
        %v4595 = vsub.f32 %v4302, %v4594
        %4596 = vmatpush1.msra.mxu0 %v4595
        %4597 = vmatprep.subr.mxu0 0.0
        %v4598 = vand.u32 %v4303, 4294901760
        %v4599 = vsub.f32 %v4303, %v4598
        %4600 = vmatpush1.msra.mxu0 %v4599
        %4601 = vmatprep.subr.mxu0 0.0
        %v4602 = vand.u32 %v4304, 4294901760
        %v4603 = vsub.f32 %v4304, %v4602
        %4604 = vmatpush1.msra.mxu0 %v4603
        %4605 = vmatprep.subr.mxu0 0.0
        %v4606 = vand.u32 %v4305, 4294901760
        %v4607 = vsub.f32 %v4305, %v4606
        %4608 = vmatpush1.msra.mxu0 %v4607
        %4609 = vmatprep.subr.mxu0 0.0
        %v4610 = vand.u32 %v4306, 4294901760
        %v4611 = vsub.f32 %v4306, %v4610
        %4612 = vmatpush1.msra.mxu0 %v4611
        %4613 = vmatprep.subr.mxu0 0.0
        %v4614 = vand.u32 %v4307, 4294901760
        %v4615 = vsub.f32 %v4307, %v4614
        %4616 = vmatpush1.msra.mxu0 %v4615
        %4617 = vmatprep.subr.mxu0 0.0
        %v4618 = vand.u32 %v4308, 4294901760
        %v4619 = vsub.f32 %v4308, %v4618
        %4620 = vmatpush1.msra.mxu0 %v4619
        %4621 = vmatprep.subr.mxu0 0.0
        %v4622 = vand.u32 %v4309, 4294901760
        %v4623 = vsub.f32 %v4309, %v4622
        %4624 = vmatpush1.msra.mxu0 %v4623
        %4625 = vmatprep.subr.mxu0 0.0
        %v4626 = vand.u32 %v4310, 4294901760
        %v4627 = vsub.f32 %v4310, %v4626
        %4628 = vmatpush1.msra.mxu0 %v4627
        %4629 = vmatprep.subr.mxu0 0.0
        %v4630 = vand.u32 %v4311, 4294901760
        %v4631 = vsub.f32 %v4311, %v4630
        %4632 = vmatpush1.msra.mxu0 %v4631
        %4633 = vmatprep.subr.mxu0 0.0
        %v4634 = vand.u32 %v4312, 4294901760
        %v4635 = vsub.f32 %v4312, %v4634
        %4636 = vmatpush1.msra.mxu0 %v4635
        %4637 = vmatprep.subr.mxu0 0.0
        %v4638 = vand.u32 %v4313, 4294901760
        %v4639 = vsub.f32 %v4313, %v4638
        %4640 = vmatpush1.msra.mxu0 %v4639
        %4641 = vmatprep.subr.mxu0 0.0
        %4642 = vmatpush1.msra.mxu0 0.0
        %4643 = vmatprep.subr.mxu0 0.0
        %4644 = vmatpush1.msra.mxu0 0.0
        %4645 = vmatprep.subr.mxu0 0.0
        %4646 = vmatpush1.msra.mxu0 0.0
        %4647 = vmatprep.subr.mxu0 0.0
        %4648 = vmatpush1.msra.mxu0 0.0
        %4649 = vmatprep.subr.mxu0 0.0
        %4650 = vmatpush1.msra.mxu0 0.0
        %4651 = vmatprep.subr.mxu0 0.0
        %4652 = vmatpush1.msra.mxu0 0.0
        %4653 = vmatprep.subr.mxu0 0.0
        %4654 = vmatpush1.msra.mxu0 0.0
        %4655 = vmatprep.subr.mxu0 0.0
        %4656 = vmatpush1.msra.mxu0 0.0
        %4657 = vmatprep.subr.mxu0 0.0
        %4658 = vmatpush1.msra.mxu0 0.0
        %4659 = vmatprep.subr.mxu0 0.0
        %4660 = vmatpush1.msra.mxu0 0.0
        %4661 = vmatprep.subr.mxu0 0.0
        %4662 = vmatpush1.msra.mxu0 0.0
        %4663 = vmatprep.subr.mxu0 0.0
        %4664 = vmatpush1.msra.mxu0 0.0
        %4665 = vmatprep.subr.mxu0 0.0
        %4666 = vmatpush1.msra.mxu0 0.0
        %4667 = vmatprep.subr.mxu0 0.0
        %4668 = vmatpush1.msra.mxu0 0.0
        %4669 = vmatprep.subr.mxu0 0.0
        %4670 = vmatpush1.msra.mxu0 0.0
        %4671 = vmatprep.subr.mxu0 0.0
        %4672 = vmatpush1.msra.mxu0 0.0
        %4673 = vmatprep.mubr.f32.mxu0 0.0
        %v4674 = vand.u32 %v4079, 4294901760
        %v4675 = vsub.f32 %v4079, %v4674
        %4676 = vmatmul.mubr.f32.gmra.mrb[0].mxu0 %v4675
        %v4677 = vpop.f32.mrb[0].mxu0
        %v4678 = vadd.f32 %v4568, %v4677
        %v4679 = vpop.f32.mrb[0].mxu0
        %4680 = vmatprep.mubr.f32.mxu0 0.0
        %v4681 = vand.u32 %v4085, 4294901760
        %v4682 = vsub.f32 %v4085, %v4681
        %4683 = vmatmul.mubr.f32.gmra.mrb[0].mxu0 %v4682
        %v4684 = vpop.f32.mrb[0].mxu0
        %v4685 = vadd.f32 %v4574, %v4684
        %v4686 = vpop.f32.mrb[0].mxu0
        %4687 = vdwg.mxu0
        %4688 = vmatprep.subr.mxu0 0.0
        %v4689 = vand.u32 %v4298, 4294901760
        %4690 = vmatpush1.msra.mxu0 %v4689
        %4691 = vmatprep.subr.mxu0 0.0
        %v4692 = vand.u32 %v4299, 4294901760
        %4693 = vmatpush1.msra.mxu0 %v4692
        %4694 = vmatprep.subr.mxu0 0.0
        %v4695 = vand.u32 %v4300, 4294901760
        %4696 = vmatpush1.msra.mxu0 %v4695
        %4697 = vmatprep.subr.mxu0 0.0
        %v4698 = vand.u32 %v4301, 4294901760
        %4699 = vmatpush1.msra.mxu0 %v4698
        %4700 = vmatprep.subr.mxu0 0.0
        %v4701 = vand.u32 %v4302, 4294901760
        %4702 = vmatpush1.msra.mxu0 %v4701
        %4703 = vmatprep.subr.mxu0 0.0
        %v4704 = vand.u32 %v4303, 4294901760
        %4705 = vmatpush1.msra.mxu0 %v4704
        %4706 = vmatprep.subr.mxu0 0.0
        %v4707 = vand.u32 %v4304, 4294901760
        %4708 = vmatpush1.msra.mxu0 %v4707
        %4709 = vmatprep.subr.mxu0 0.0
        %v4710 = vand.u32 %v4305, 4294901760
        %4711 = vmatpush1.msra.mxu0 %v4710
        %4712 = vmatprep.subr.mxu0 0.0
        %v4713 = vand.u32 %v4306, 4294901760
        %4714 = vmatpush1.msra.mxu0 %v4713
        %4715 = vmatprep.subr.mxu0 0.0
        %v4716 = vand.u32 %v4307, 4294901760
        %4717 = vmatpush1.msra.mxu0 %v4716
        %4718 = vmatprep.subr.mxu0 0.0
        %v4719 = vand.u32 %v4308, 4294901760
        %4720 = vmatpush1.msra.mxu0 %v4719
        %4721 = vmatprep.subr.mxu0 0.0
        %v4722 = vand.u32 %v4309, 4294901760
        %4723 = vmatpush1.msra.mxu0 %v4722
        %4724 = vmatprep.subr.mxu0 0.0
        %v4725 = vand.u32 %v4310, 4294901760
        %4726 = vmatpush1.msra.mxu0 %v4725
        %4727 = vmatprep.subr.mxu0 0.0
        %v4728 = vand.u32 %v4311, 4294901760
        %4729 = vmatpush1.msra.mxu0 %v4728
        %4730 = vmatprep.subr.mxu0 0.0
        %v4731 = vand.u32 %v4312, 4294901760
        %4732 = vmatpush1.msra.mxu0 %v4731
        %4733 = vmatprep.subr.mxu0 0.0
        %v4734 = vand.u32 %v4313, 4294901760
        %4735 = vmatpush1.msra.mxu0 %v4734
        %4736 = vmatprep.subr.mxu0 0.0
        %4737 = vmatpush1.msra.mxu0 0.0
        %4738 = vmatprep.subr.mxu0 0.0
        %4739 = vmatpush1.msra.mxu0 0.0
        %4740 = vmatprep.subr.mxu0 0.0
        %4741 = vmatpush1.msra.mxu0 0.0
        %4742 = vmatprep.subr.mxu0 0.0
        %4743 = vmatpush1.msra.mxu0 0.0
        %4744 = vmatprep.subr.mxu0 0.0
        %4745 = vmatpush1.msra.mxu0 0.0
        %4746 = vmatprep.subr.mxu0 0.0
        %4747 = vmatpush1.msra.mxu0 0.0
        %4748 = vmatprep.subr.mxu0 0.0
        %4749 = vmatpush1.msra.mxu0 0.0
        %4750 = vmatprep.subr.mxu0 0.0
        %4751 = vmatpush1.msra.mxu0 0.0
        %4752 = vmatprep.subr.mxu0 0.0
        %4753 = vmatpush1.msra.mxu0 0.0
        %4754 = vmatprep.subr.mxu0 0.0
        %4755 = vmatpush1.msra.mxu0 0.0
        %4756 = vmatprep.subr.mxu0 0.0
        %4757 = vmatpush1.msra.mxu0 0.0
        %4758 = vmatprep.subr.mxu0 0.0
        %4759 = vmatpush1.msra.mxu0 0.0
        %4760 = vmatprep.subr.mxu0 0.0
        %4761 = vmatpush1.msra.mxu0 0.0
        %4762 = vmatprep.subr.mxu0 0.0
        %4763 = vmatpush1.msra.mxu0 0.0
        %4764 = vmatprep.subr.mxu0 0.0
        %4765 = vmatpush1.msra.mxu0 0.0
        %4766 = vmatprep.subr.mxu0 0.0
        %4767 = vmatpush1.msra.mxu0 0.0
        %4768 = vmatprep.mubr.f32.mxu0 0.0
        %v4769 = vand.u32 %v4079, 4294901760
        %v4770 = vsub.f32 %v4079, %v4769
        %v4771 = vand.u32 %v4770, 4294901760
        %4772 = vmatmul.mubr.f32.gmra.mrb[0].mxu0 %v4771
        %v4773 = vpop.f32.mrb[0].mxu0
        %v4774 = vadd.f32 %v4678, %v4773
        %v4775 = vpop.f32.mrb[0].mxu0
        %4776 = vmatprep.mubr.f32.mxu0 0.0
        %v4777 = vand.u32 %v4085, 4294901760
        %v4778 = vsub.f32 %v4085, %v4777
        %v4779 = vand.u32 %v4778, 4294901760
        %4780 = vmatmul.mubr.f32.gmra.mrb[0].mxu0 %v4779
        %v4781 = vpop.f32.mrb[0].mxu0
        %v4782 = vadd.f32 %v4685, %v4781
        %v4783 = vpop.f32.mrb[0].mxu0
        %4784 = vdwg.mxu0
        %4785 = vmatprep.subr.mxu0 0.0
        %v4786 = vand.u32 %v4298, 4294901760
        %v4787 = vsub.f32 %v4298, %v4786
        %v4788 = vand.u32 %v4787, 4294901760
        %4789 = vmatpush1.msra.mxu0 %v4788
        %4790 = vmatprep.subr.mxu0 0.0
        %v4791 = vand.u32 %v4299, 4294901760
        %v4792 = vsub.f32 %v4299, %v4791
        %v4793 = vand.u32 %v4792, 4294901760
        %4794 = vmatpush1.msra.mxu0 %v4793
        %4795 = vmatprep.subr.mxu0 0.0
        %v4796 = vand.u32 %v4300, 4294901760
        %v4797 = vsub.f32 %v4300, %v4796
        %v4798 = vand.u32 %v4797, 4294901760
        %4799 = vmatpush1.msra.mxu0 %v4798
        %4800 = vmatprep.subr.mxu0 0.0
        %v4801 = vand.u32 %v4301, 4294901760
        %v4802 = vsub.f32 %v4301, %v4801
        %v4803 = vand.u32 %v4802, 4294901760
        %4804 = vmatpush1.msra.mxu0 %v4803
        %4805 = vmatprep.subr.mxu0 0.0
        %v4806 = vand.u32 %v4302, 4294901760
        %v4807 = vsub.f32 %v4302, %v4806
        %v4808 = vand.u32 %v4807, 4294901760
        %4809 = vmatpush1.msra.mxu0 %v4808
        %4810 = vmatprep.subr.mxu0 0.0
        %v4811 = vand.u32 %v4303, 4294901760
        %v4812 = vsub.f32 %v4303, %v4811
        %v4813 = vand.u32 %v4812, 4294901760
        %4814 = vmatpush1.msra.mxu0 %v4813
        %4815 = vmatprep.subr.mxu0 0.0
        %v4816 = vand.u32 %v4304, 4294901760
        %v4817 = vsub.f32 %v4304, %v4816
        %v4818 = vand.u32 %v4817, 4294901760
        %4819 = vmatpush1.msra.mxu0 %v4818
        %4820 = vmatprep.subr.mxu0 0.0
        %v4821 = vand.u32 %v4305, 4294901760
        %v4822 = vsub.f32 %v4305, %v4821
        %v4823 = vand.u32 %v4822, 4294901760
        %4824 = vmatpush1.msra.mxu0 %v4823
        %4825 = vmatprep.subr.mxu0 0.0
        %v4826 = vand.u32 %v4306, 4294901760
        %v4827 = vsub.f32 %v4306, %v4826
        %v4828 = vand.u32 %v4827, 4294901760
        %4829 = vmatpush1.msra.mxu0 %v4828
        %4830 = vmatprep.subr.mxu0 0.0
        %v4831 = vand.u32 %v4307, 4294901760
        %v4832 = vsub.f32 %v4307, %v4831
        %v4833 = vand.u32 %v4832, 4294901760
        %4834 = vmatpush1.msra.mxu0 %v4833
        %4835 = vmatprep.subr.mxu0 0.0
        %v4836 = vand.u32 %v4308, 4294901760
        %v4837 = vsub.f32 %v4308, %v4836
        %v4838 = vand.u32 %v4837, 4294901760
        %4839 = vmatpush1.msra.mxu0 %v4838
        %4840 = vmatprep.subr.mxu0 0.0
        %v4841 = vand.u32 %v4309, 4294901760
        %v4842 = vsub.f32 %v4309, %v4841
        %v4843 = vand.u32 %v4842, 4294901760
        %4844 = vmatpush1.msra.mxu0 %v4843
        %4845 = vmatprep.subr.mxu0 0.0
        %v4846 = vand.u32 %v4310, 4294901760
        %v4847 = vsub.f32 %v4310, %v4846
        %v4848 = vand.u32 %v4847, 4294901760
        %4849 = vmatpush1.msra.mxu0 %v4848
        %4850 = vmatprep.subr.mxu0 0.0
        %v4851 = vand.u32 %v4311, 4294901760
        %v4852 = vsub.f32 %v4311, %v4851
        %v4853 = vand.u32 %v4852, 4294901760
        %4854 = vmatpush1.msra.mxu0 %v4853
        %4855 = vmatprep.subr.mxu0 0.0
        %v4856 = vand.u32 %v4312, 4294901760
        %v4857 = vsub.f32 %v4312, %v4856
        %v4858 = vand.u32 %v4857, 4294901760
        %4859 = vmatpush1.msra.mxu0 %v4858
        %4860 = vmatprep.subr.mxu0 0.0
        %v4861 = vand.u32 %v4313, 4294901760
        %v4862 = vsub.f32 %v4313, %v4861
        %v4863 = vand.u32 %v4862, 4294901760
        %4864 = vmatpush1.msra.mxu0 %v4863
        %4865 = vmatprep.subr.mxu0 0.0
        %4866 = vmatpush1.msra.mxu0 0.0
        %4867 = vmatprep.subr.mxu0 0.0
        %4868 = vmatpush1.msra.mxu0 0.0
        %4869 = vmatprep.subr.mxu0 0.0
        %4870 = vmatpush1.msra.mxu0 0.0
        %4871 = vmatprep.subr.mxu0 0.0
        %4872 = vmatpush1.msra.mxu0 0.0
        %4873 = vmatprep.subr.mxu0 0.0
        %4874 = vmatpush1.msra.mxu0 0.0
        %4875 = vmatprep.subr.mxu0 0.0
        %4876 = vmatpush1.msra.mxu0 0.0
        %4877 = vmatprep.subr.mxu0 0.0
        %4878 = vmatpush1.msra.mxu0 0.0
        %4879 = vmatprep.subr.mxu0 0.0
        %4880 = vmatpush1.msra.mxu0 0.0
        %4881 = vmatprep.subr.mxu0 0.0
        %4882 = vmatpush1.msra.mxu0 0.0
        %4883 = vmatprep.subr.mxu0 0.0
        %4884 = vmatpush1.msra.mxu0 0.0
        %4885 = vmatprep.subr.mxu0 0.0
        %4886 = vmatpush1.msra.mxu0 0.0
        %4887 = vmatprep.subr.mxu0 0.0
        %4888 = vmatpush1.msra.mxu0 0.0
        %4889 = vmatprep.subr.mxu0 0.0
        %4890 = vmatpush1.msra.mxu0 0.0
        %4891 = vmatprep.subr.mxu0 0.0
        %4892 = vmatpush1.msra.mxu0 0.0
        %4893 = vmatprep.subr.mxu0 0.0
        %4894 = vmatpush1.msra.mxu0 0.0
        %4895 = vmatprep.subr.mxu0 0.0
        %4896 = vmatpush1.msra.mxu0 0.0
        %4897 = vmatprep.mubr.f32.mxu0 0.0
        %v4898 = vand.u32 %v4079, 4294901760
        %4899 = vmatmul.mubr.f32.gmra.mrb[0].mxu0 %v4898
        %v4900 = vpop.f32.mrb[0].mxu0
        %v4901 = vadd.f32 %v4774, %v4900
        %v4902 = vpop.f32.mrb[0].mxu0
        %4903 = vmatprep.mubr.f32.mxu0 0.0
        %v4904 = vand.u32 %v4085, 4294901760
        %4905 = vmatmul.mubr.f32.gmra.mrb[0].mxu0 %v4904
        %v4906 = vpop.f32.mrb[0].mxu0
        %v4907 = vadd.f32 %v4782, %v4906
        %v4908 = vpop.f32.mrb[0].mxu0
        %4909 = vdwg.mxu0
        %4910 = vmatprep.subr.mxu0 0.0
        %v4911 = vand.u32 %v4298, 4294901760
        %4912 = vmatpush1.msra.mxu0 %v4911
        %4913 = vmatprep.subr.mxu0 0.0
        %v4914 = vand.u32 %v4299, 4294901760
        %4915 = vmatpush1.msra.mxu0 %v4914
        %4916 = vmatprep.subr.mxu0 0.0
        %v4917 = vand.u32 %v4300, 4294901760
        %4918 = vmatpush1.msra.mxu0 %v4917
        %4919 = vmatprep.subr.mxu0 0.0
        %v4920 = vand.u32 %v4301, 4294901760
        %4921 = vmatpush1.msra.mxu0 %v4920
        %4922 = vmatprep.subr.mxu0 0.0
        %v4923 = vand.u32 %v4302, 4294901760
        %4924 = vmatpush1.msra.mxu0 %v4923
        %4925 = vmatprep.subr.mxu0 0.0
        %v4926 = vand.u32 %v4303, 4294901760
        %4927 = vmatpush1.msra.mxu0 %v4926
        %4928 = vmatprep.subr.mxu0 0.0
        %v4929 = vand.u32 %v4304, 4294901760
        %4930 = vmatpush1.msra.mxu0 %v4929
        %4931 = vmatprep.subr.mxu0 0.0
        %v4932 = vand.u32 %v4305, 4294901760
        %4933 = vmatpush1.msra.mxu0 %v4932
        %4934 = vmatprep.subr.mxu0 0.0
        %v4935 = vand.u32 %v4306, 4294901760
        %4936 = vmatpush1.msra.mxu0 %v4935
        %4937 = vmatprep.subr.mxu0 0.0
        %v4938 = vand.u32 %v4307, 4294901760
        %4939 = vmatpush1.msra.mxu0 %v4938
        %4940 = vmatprep.subr.mxu0 0.0
        %v4941 = vand.u32 %v4308, 4294901760
        %4942 = vmatpush1.msra.mxu0 %v4941
        %4943 = vmatprep.subr.mxu0 0.0
        %v4944 = vand.u32 %v4309, 4294901760
        %4945 = vmatpush1.msra.mxu0 %v4944
        %4946 = vmatprep.subr.mxu0 0.0
        %v4947 = vand.u32 %v4310, 4294901760
        %4948 = vmatpush1.msra.mxu0 %v4947
        %4949 = vmatprep.subr.mxu0 0.0
        %v4950 = vand.u32 %v4311, 4294901760
        %4951 = vmatpush1.msra.mxu0 %v4950
        %4952 = vmatprep.subr.mxu0 0.0
        %v4953 = vand.u32 %v4312, 4294901760
        %4954 = vmatpush1.msra.mxu0 %v4953
        %4955 = vmatprep.subr.mxu0 0.0
        %v4956 = vand.u32 %v4313, 4294901760
        %4957 = vmatpush1.msra.mxu0 %v4956
        %4958 = vmatprep.subr.mxu0 0.0
        %4959 = vmatpush1.msra.mxu0 0.0
        %4960 = vmatprep.subr.mxu0 0.0
        %4961 = vmatpush1.msra.mxu0 0.0
        %4962 = vmatprep.subr.mxu0 0.0
        %4963 = vmatpush1.msra.mxu0 0.0
        %4964 = vmatprep.subr.mxu0 0.0
        %4965 = vmatpush1.msra.mxu0 0.0
        %4966 = vmatprep.subr.mxu0 0.0
        %4967 = vmatpush1.msra.mxu0 0.0
        %4968 = vmatprep.subr.mxu0 0.0
        %4969 = vmatpush1.msra.mxu0 0.0
        %4970 = vmatprep.subr.mxu0 0.0
        %4971 = vmatpush1.msra.mxu0 0.0
        %4972 = vmatprep.subr.mxu0 0.0
        %4973 = vmatpush1.msra.mxu0 0.0
        %4974 = vmatprep.subr.mxu0 0.0
        %4975 = vmatpush1.msra.mxu0 0.0
        %4976 = vmatprep.subr.mxu0 0.0
        %4977 = vmatpush1.msra.mxu0 0.0
        %4978 = vmatprep.subr.mxu0 0.0
        %4979 = vmatpush1.msra.mxu0 0.0
        %4980 = vmatprep.subr.mxu0 0.0
        %4981 = vmatpush1.msra.mxu0 0.0
        %4982 = vmatprep.subr.mxu0 0.0
        %4983 = vmatpush1.msra.mxu0 0.0
        %4984 = vmatprep.subr.mxu0 0.0
        %4985 = vmatpush1.msra.mxu0 0.0
        %4986 = vmatprep.subr.mxu0 0.0
        %4987 = vmatpush1.msra.mxu0 0.0
        %4988 = vmatprep.subr.mxu0 0.0
        %4989 = vmatpush1.msra.mxu0 0.0
        %4990 = vmatprep.mubr.f32.mxu0 0.0
        %v4991 = vand.u32 %v4079, 4294901760
        %4992 = vmatmul.mubr.f32.gmra.mrb[0].mxu0 %v4991
        %v4993 = vpop.f32.mrb[0].mxu0
        %v4994 = vadd.f32 %v4901, %v4993
        %v4995 = vpop.f32.mrb[0].mxu0
        %4996 = vmatprep.mubr.f32.mxu0 0.0
        %v4997 = vand.u32 %v4085, 4294901760
        %4998 = vmatmul.mubr.f32.gmra.mrb[0].mxu0 %v4997
        %v4999 = vpop.f32.mrb[0].mxu0
        %v5000 = vadd.f32 %v4907, %v4999
        %v5001 = vpop.f32.mrb[0].mxu0
        %5002 = vdwg.mxu0
        %5003 = vset.pattern.permute.xlu0 5
        %5004 = vperm.xlu0 %5003, %v424
        %v5005 = vpop.permute.xlu0 %5004
        %5007 = vset.pattern.permute.xlu0 5
        %5008 = vperm.xlu0 %5007, %v425
        %v5009 = vpop.permute.xlu0 %5008
        %v5011 = vsub.f32 %v4994, %v5005
        %v5012 = vsub.f32 %v5000, %v5009
        %v5013 = vmul.f32 %v5011, %v5011
        %v5014 = vmul.f32 %v5012, %v5012
        %v5015 = vadd.f32 %v5013, %v5014
        %v5016 = vrot.slane %v5015, 4
        %v5017 = vadd.f32 %v5015, %v5016
        %v5018 = vrot.slane %v5017, 2
        %v5019 = vadd.f32 %v5017, %v5018
        %v5020 = vrot.slane %v5019, 1
        %v5021 = vadd.f32 %v5019, %v5020
        %v5022 = vmul.f32 %v5021, -0.5
        %v5023 = vmul.f32 %v5022, 1.442695
        %v5024 = vpow.pop %v5023
        %v5025 = vadd.f32 %v5024, 1e-08
        %v5026 = vmul.f32 %v4116, %v5025
        %v5027 = vadd.f32 %v5026, 1e-10
        %5028 = vadd.xlane.f32.xlu0 %v5027
        %v5029 = vpop.xlane.xlu0 %5028
        %v5030 = vrcp.pop %v5029
        %v5031 = vmul.f32 %v5027, %v5030
        %v5032 = vmul.f32 %v338, %v5031
        %v5033 = vmul.f32 %v339, %v5031
        %v5034 = vmul.f32 %v340, %v5031
        %v5035 = vmul.f32 %v341, %v5031
        %v5036 = vmul.f32 %v342, %v5031
        %v5037 = vmul.f32 %v343, %v5031
        %v5038 = vmul.f32 %v344, %v5031
        %v5039 = vmul.f32 %v345, %v5031
        %v5040 = vmul.f32 %v346, %v5031
        %v5041 = vmul.f32 %v347, %v5031
        %v5042 = vmul.f32 %v348, %v5031
        %v5043 = vmul.f32 %v349, %v5031
        %v5044 = vmul.f32 %v350, %v5031
        %v5045 = vmul.f32 %v351, %v5031
        %v5046 = vmul.f32 %v352, %v5031
        %v5047 = vmul.f32 %v353, %v5031
        %5048 = vadd.xlane.f32.xlu0 %v5032
        %v5049 = vpop.xlane.xlu0 %5048
        %5050 = vadd.xlane.f32.xlu0 %v5033
        %v5051 = vpop.xlane.xlu0 %5050
        %5052 = vadd.xlane.f32.xlu0 %v5034
        %v5053 = vpop.xlane.xlu0 %5052
        %5054 = vadd.xlane.f32.xlu0 %v5035
        %v5055 = vpop.xlane.xlu0 %5054
        %5056 = vadd.xlane.f32.xlu0 %v5036
        %v5057 = vpop.xlane.xlu0 %5056
        %5058 = vadd.xlane.f32.xlu0 %v5037
        %v5059 = vpop.xlane.xlu0 %5058
        %5060 = vadd.xlane.f32.xlu0 %v5038
        %v5061 = vpop.xlane.xlu0 %5060
        %5062 = vadd.xlane.f32.xlu0 %v5039
        %v5063 = vpop.xlane.xlu0 %5062
        %5064 = vadd.xlane.f32.xlu0 %v5040
        %v5065 = vpop.xlane.xlu0 %5064
        %5066 = vadd.xlane.f32.xlu0 %v5041
        %v5067 = vpop.xlane.xlu0 %5066
        %5068 = vadd.xlane.f32.xlu0 %v5042
        %v5069 = vpop.xlane.xlu0 %5068
        %5070 = vadd.xlane.f32.xlu0 %v5043
        %v5071 = vpop.xlane.xlu0 %5070
        %5072 = vadd.xlane.f32.xlu0 %v5044
        %v5073 = vpop.xlane.xlu0 %5072
        %5074 = vadd.xlane.f32.xlu0 %v5045
        %v5075 = vpop.xlane.xlu0 %5074
        %5076 = vadd.xlane.f32.xlu0 %v5046
        %v5077 = vpop.xlane.xlu0 %5076
        %5078 = vadd.xlane.f32.xlu0 %v5047
        %v5079 = vpop.xlane.xlu0 %5078
        %v5080 = vmul.f32 %v386, %v5031
        %v5081 = vmul.f32 %v387, %v5031
        %v5082 = vmul.f32 %v388, %v5031
        %v5083 = vmul.f32 %v389, %v5031
        %v5084 = vmul.f32 %v390, %v5031
        %v5085 = vmul.f32 %v391, %v5031
        %v5086 = vmul.f32 %v392, %v5031
        %v5087 = vmul.f32 %v393, %v5031
        %v5088 = vmul.f32 %v394, %v5031
        %v5089 = vmul.f32 %v395, %v5031
        %v5090 = vmul.f32 %v396, %v5031
        %v5091 = vmul.f32 %v397, %v5031
        %v5092 = vmul.f32 %v398, %v5031
        %v5093 = vmul.f32 %v399, %v5031
        %v5094 = vmul.f32 %v400, %v5031
        %v5095 = vmul.f32 %v401, %v5031
        %5096 = vadd.xlane.f32.xlu0 %v5080
        %v5097 = vpop.xlane.xlu0 %5096
        %5098 = vadd.xlane.f32.xlu0 %v5081
        %v5099 = vpop.xlane.xlu0 %5098
        %5100 = vadd.xlane.f32.xlu0 %v5082
        %v5101 = vpop.xlane.xlu0 %5100
        %5102 = vadd.xlane.f32.xlu0 %v5083
        %v5103 = vpop.xlane.xlu0 %5102
        %5104 = vadd.xlane.f32.xlu0 %v5084
        %v5105 = vpop.xlane.xlu0 %5104
        %5106 = vadd.xlane.f32.xlu0 %v5085
        %v5107 = vpop.xlane.xlu0 %5106
        %5108 = vadd.xlane.f32.xlu0 %v5086
        %v5109 = vpop.xlane.xlu0 %5108
        %5110 = vadd.xlane.f32.xlu0 %v5087
        %v5111 = vpop.xlane.xlu0 %5110
        %5112 = vadd.xlane.f32.xlu0 %v5088
        %v5113 = vpop.xlane.xlu0 %5112
        %5114 = vadd.xlane.f32.xlu0 %v5089
        %v5115 = vpop.xlane.xlu0 %5114
        %5116 = vadd.xlane.f32.xlu0 %v5090
        %v5117 = vpop.xlane.xlu0 %5116
        %5118 = vadd.xlane.f32.xlu0 %v5091
        %v5119 = vpop.xlane.xlu0 %5118
        %5120 = vadd.xlane.f32.xlu0 %v5092
        %v5121 = vpop.xlane.xlu0 %5120
        %5122 = vadd.xlane.f32.xlu0 %v5093
        %v5123 = vpop.xlane.xlu0 %5122
        %5124 = vadd.xlane.f32.xlu0 %v5094
        %v5125 = vpop.xlane.xlu0 %5124
        %5126 = vadd.xlane.f32.xlu0 %v5095
        %v5127 = vpop.xlane.xlu0 %5126
        %v5128 = vsel %vm402, 1e+30, %v5049
        %v5129 = vsel %vm403, 1e+30, %v5051
        %v5130 = vsel %vm404, 1e+30, %v5053
        %v5131 = vsel %vm405, 1e+30, %v5055
        %v5132 = vsel %vm406, 1e+30, %v5057
        %v5133 = vsel %vm407, 1e+30, %v5059
        %v5134 = vsel %vm408, 1e+30, %v5061
        %v5135 = vsel %vm409, 1e+30, %v5063
        %v5136 = vsel %vm410, 1e+30, %v5065
        %v5137 = vsel %vm411, 1e+30, %v5067
        %v5138 = vsel %vm412, 1e+30, %v5069
        %v5139 = vsel %vm413, 1e+30, %v5071
        %v5140 = vsel %vm414, 1e+30, %v5073
        %v5141 = vsel %vm415, 1e+30, %v5075
        %v5142 = vsel %vm416, 1e+30, %v5077
        %v5143 = vsel %vm417, 1e+30, %v5079
        %v5144 = vld [vmem:[%s269 + $0x5] sm:$0x1]
        %v5145 = vlaneseq
        %v5146 = vshrl.u32 %v5145, 7
        %v5147 = vsub.s32 0, %v5146
        %v5148 = vrot.slane %v5144, %v5147
        %vm5149 = vcmp.le.f32.partialorder %v5097, %v5148
        %vm5150 = vcmp.le.f32.partialorder %v5099, %v5148
        %vm5151 = vcmp.le.f32.partialorder %v5101, %v5148
        %vm5152 = vcmp.le.f32.partialorder %v5103, %v5148
        %vm5153 = vcmp.le.f32.partialorder %v5105, %v5148
        %vm5154 = vcmp.le.f32.partialorder %v5107, %v5148
        %vm5155 = vcmp.le.f32.partialorder %v5109, %v5148
        %vm5156 = vcmp.le.f32.partialorder %v5111, %v5148
        %vm5157 = vcmp.le.f32.partialorder %v5113, %v5148
        %vm5158 = vcmp.le.f32.partialorder %v5115, %v5148
        %vm5159 = vcmp.le.f32.partialorder %v5117, %v5148
        %vm5160 = vcmp.le.f32.partialorder %v5119, %v5148
        %vm5161 = vcmp.le.f32.partialorder %v5121, %v5148
        %vm5162 = vcmp.le.f32.partialorder %v5123, %v5148
        %vm5163 = vcmp.le.f32.partialorder %v5125, %v5148
        %vm5164 = vcmp.le.f32.partialorder %v5127, %v5148
        %vm5165 = vcmp.lt.f32.partialorder %v5148, %v5128
        %vm5166 = vcmp.lt.f32.partialorder %v5148, %v5129
        %vm5167 = vcmp.lt.f32.partialorder %v5148, %v5130
        %vm5168 = vcmp.lt.f32.partialorder %v5148, %v5131
        %vm5169 = vcmp.lt.f32.partialorder %v5148, %v5132
        %vm5170 = vcmp.lt.f32.partialorder %v5148, %v5133
        %vm5171 = vcmp.lt.f32.partialorder %v5148, %v5134
        %vm5172 = vcmp.lt.f32.partialorder %v5148, %v5135
        %vm5173 = vcmp.lt.f32.partialorder %v5148, %v5136
        %vm5174 = vcmp.lt.f32.partialorder %v5148, %v5137
        %vm5175 = vcmp.lt.f32.partialorder %v5148, %v5138
        %vm5176 = vcmp.lt.f32.partialorder %v5148, %v5139
        %vm5177 = vcmp.lt.f32.partialorder %v5148, %v5140
        %vm5178 = vcmp.lt.f32.partialorder %v5148, %v5141
        %vm5179 = vcmp.lt.f32.partialorder %v5148, %v5142
        %vm5180 = vcmp.lt.f32.partialorder %v5148, %v5143
        %vm5181 = vmand %vm5149, %vm5165
        %vm5182 = vmand %vm5150, %vm5166
        %vm5183 = vmand %vm5151, %vm5167
        %vm5184 = vmand %vm5152, %vm5168
        %vm5185 = vmand %vm5153, %vm5169
        %vm5186 = vmand %vm5154, %vm5170
        %vm5187 = vmand %vm5155, %vm5171
        %vm5188 = vmand %vm5156, %vm5172
        %vm5189 = vmand %vm5157, %vm5173
        %vm5190 = vmand %vm5158, %vm5174
        %vm5191 = vmand %vm5159, %vm5175
        %vm5192 = vmand %vm5160, %vm5176
        %vm5193 = vmand %vm5161, %vm5177
        %vm5194 = vmand %vm5162, %vm5178
        %vm5195 = vmand %vm5163, %vm5179
        %vm5196 = vmand %vm5164, %vm5180
        %v5197 = vsel %vm5181, 1, 0
        %v5198 = vsel %vm5182, 1, 0
        %v5199 = vsel %vm5183, 1, 0
        %v5200 = vsel %vm5184, 1, 0
        %v5201 = vsel %vm5185, 1, 0
        %v5202 = vsel %vm5186, 1, 0
        %v5203 = vsel %vm5187, 1, 0
        %v5204 = vsel %vm5188, 1, 0
        %v5205 = vsel %vm5189, 1, 0
        %v5206 = vsel %vm5190, 1, 0
        %v5207 = vsel %vm5191, 1, 0
        %v5208 = vsel %vm5192, 1, 0
        %v5209 = vsel %vm5193, 1, 0
        %v5210 = vsel %vm5194, 1, 0
        %v5211 = vsel %vm5195, 1, 0
        %v5212 = vsel %vm5196, 1, 0
        %v5213 = vcvt.s32.f32 %v5197
        %v5214 = vcvt.s32.f32 %v5198
        %v5215 = vcvt.s32.f32 %v5199
        %v5216 = vcvt.s32.f32 %v5200
        %v5217 = vcvt.s32.f32 %v5201
        %v5218 = vcvt.s32.f32 %v5202
        %v5219 = vcvt.s32.f32 %v5203
        %v5220 = vcvt.s32.f32 %v5204
        %v5221 = vcvt.s32.f32 %v5205
        %v5222 = vcvt.s32.f32 %v5206
        %v5223 = vcvt.s32.f32 %v5207
        %v5224 = vcvt.s32.f32 %v5208
        %v5225 = vcvt.s32.f32 %v5209
        %v5226 = vcvt.s32.f32 %v5210
        %v5227 = vcvt.s32.f32 %v5211
        %v5228 = vcvt.s32.f32 %v5212
        %s5229 = scalar_lea.vmem %s217, 96 [#allocation2]
        %v5230 = vld [vmem:[%s5229] sm:$0xff]
        %v5231 = vld [vmem:[%s5229 + $0x8] sm:$0xff]
        %v5232 = vmul.f32 %v5230, 0.1
        %v5233 = vmul.f32 %v5231, 0.1
        %5234 = vmatprep.subr.mxu0 0.0
        %v5235 = vand.u32 %v5213, 4294901760
        %5236 = vmatpush1.msra.mxu0 %v5235
        %5237 = vmatprep.subr.mxu0 0.0
        %v5238 = vand.u32 %v5214, 4294901760
        %5239 = vmatpush1.msra.mxu0 %v5238
        %5240 = vmatprep.subr.mxu0 0.0
        %v5241 = vand.u32 %v5215, 4294901760
        %5242 = vmatpush1.msra.mxu0 %v5241
        %5243 = vmatprep.subr.mxu0 0.0
        %v5244 = vand.u32 %v5216, 4294901760
        %5245 = vmatpush1.msra.mxu0 %v5244
        %5246 = vmatprep.subr.mxu0 0.0
        %v5247 = vand.u32 %v5217, 4294901760
        %5248 = vmatpush1.msra.mxu0 %v5247
        %5249 = vmatprep.subr.mxu0 0.0
        %v5250 = vand.u32 %v5218, 4294901760
        %5251 = vmatpush1.msra.mxu0 %v5250
        %5252 = vmatprep.subr.mxu0 0.0
        %v5253 = vand.u32 %v5219, 4294901760
        %5254 = vmatpush1.msra.mxu0 %v5253
        %5255 = vmatprep.subr.mxu0 0.0
        %v5256 = vand.u32 %v5220, 4294901760
        %5257 = vmatpush1.msra.mxu0 %v5256
        %5258 = vmatprep.subr.mxu0 0.0
        %v5259 = vand.u32 %v5221, 4294901760
        %5260 = vmatpush1.msra.mxu0 %v5259
        %5261 = vmatprep.subr.mxu0 0.0
        %v5262 = vand.u32 %v5222, 4294901760
        %5263 = vmatpush1.msra.mxu0 %v5262
        %5264 = vmatprep.subr.mxu0 0.0
        %v5265 = vand.u32 %v5223, 4294901760
        %5266 = vmatpush1.msra.mxu0 %v5265
        %5267 = vmatprep.subr.mxu0 0.0
        %v5268 = vand.u32 %v5224, 4294901760
        %5269 = vmatpush1.msra.mxu0 %v5268
        %5270 = vmatprep.subr.mxu0 0.0
        %v5271 = vand.u32 %v5225, 4294901760
        %5272 = vmatpush1.msra.mxu0 %v5271
        %5273 = vmatprep.subr.mxu0 0.0
        %v5274 = vand.u32 %v5226, 4294901760
        %5275 = vmatpush1.msra.mxu0 %v5274
        %5276 = vmatprep.subr.mxu0 0.0
        %v5277 = vand.u32 %v5227, 4294901760
        %5278 = vmatpush1.msra.mxu0 %v5277
        %5279 = vmatprep.subr.mxu0 0.0
        %v5280 = vand.u32 %v5228, 4294901760
        %5281 = vmatpush1.msra.mxu0 %v5280
        %5282 = vmatprep.subr.mxu0 0.0
        %5283 = vmatpush1.msra.mxu0 0.0
        %5284 = vmatprep.subr.mxu0 0.0
        %5285 = vmatpush1.msra.mxu0 0.0
        %5286 = vmatprep.subr.mxu0 0.0
        %5287 = vmatpush1.msra.mxu0 0.0
        %5288 = vmatprep.subr.mxu0 0.0
        %5289 = vmatpush1.msra.mxu0 0.0
        %5290 = vmatprep.subr.mxu0 0.0
        %5291 = vmatpush1.msra.mxu0 0.0
        %5292 = vmatprep.subr.mxu0 0.0
        %5293 = vmatpush1.msra.mxu0 0.0
        %5294 = vmatprep.subr.mxu0 0.0
        %5295 = vmatpush1.msra.mxu0 0.0
        %5296 = vmatprep.subr.mxu0 0.0
        %5297 = vmatpush1.msra.mxu0 0.0
        %5298 = vmatprep.subr.mxu0 0.0
        %5299 = vmatpush1.msra.mxu0 0.0
        %5300 = vmatprep.subr.mxu0 0.0
        %5301 = vmatpush1.msra.mxu0 0.0
        %5302 = vmatprep.subr.mxu0 0.0
        %5303 = vmatpush1.msra.mxu0 0.0
        %5304 = vmatprep.subr.mxu0 0.0
        %5305 = vmatpush1.msra.mxu0 0.0
        %5306 = vmatprep.subr.mxu0 0.0
        %5307 = vmatpush1.msra.mxu0 0.0
        %5308 = vmatprep.subr.mxu0 0.0
        %5309 = vmatpush1.msra.mxu0 0.0
        %5310 = vmatprep.subr.mxu0 0.0
        %5311 = vmatpush1.msra.mxu0 0.0
        %5312 = vmatprep.subr.mxu0 0.0
        %5313 = vmatpush1.msra.mxu0 0.0
        %5314 = vmatprep.mubr.f32.mxu0 0.0
        %v5315 = vand.u32 %v4994, 4294901760
        %v5316 = vsub.f32 %v4994, %v5315
        %v5317 = vand.u32 %v5316, 4294901760
        %v5318 = vsub.f32 %v5316, %v5317
        %v5319 = vand.u32 %v5318, 4294901760
        %5320 = vmatmul.mubr.f32.gmra.mrb[0].mxu0 %v5319
        %v5321 = vpop.f32.mrb[0].mxu0
        %v5322 = vadd.f32 %v5232, %v5321
        %v5323 = vpop.f32.mrb[0].mxu0
        %5324 = vmatprep.mubr.f32.mxu0 0.0
        %v5325 = vand.u32 %v5000, 4294901760
        %v5326 = vsub.f32 %v5000, %v5325
        %v5327 = vand.u32 %v5326, 4294901760
        %v5328 = vsub.f32 %v5326, %v5327
        %v5329 = vand.u32 %v5328, 4294901760
        %5330 = vmatmul.mubr.f32.gmra.mrb[0].mxu0 %v5329
        %v5331 = vpop.f32.mrb[0].mxu0
        %v5332 = vadd.f32 %v5233, %v5331
        %v5333 = vpop.f32.mrb[0].mxu0
        %5334 = vdwg.mxu0
        %5335 = vmatprep.subr.mxu0 0.0
        %v5336 = vand.u32 %v5213, 4294901760
        %v5337 = vsub.f32 %v5213, %v5336
        %v5338 = vand.u32 %v5337, 4294901760
        %v5339 = vsub.f32 %v5337, %v5338
        %v5340 = vand.u32 %v5339, 4294901760
        %5341 = vmatpush1.msra.mxu0 %v5340
        %5342 = vmatprep.subr.mxu0 0.0
        %v5343 = vand.u32 %v5214, 4294901760
        %v5344 = vsub.f32 %v5214, %v5343
        %v5345 = vand.u32 %v5344, 4294901760
        %v5346 = vsub.f32 %v5344, %v5345
        %v5347 = vand.u32 %v5346, 4294901760
        %5348 = vmatpush1.msra.mxu0 %v5347
        %5349 = vmatprep.subr.mxu0 0.0
        %v5350 = vand.u32 %v5215, 4294901760
        %v5351 = vsub.f32 %v5215, %v5350
        %v5352 = vand.u32 %v5351, 4294901760
        %v5353 = vsub.f32 %v5351, %v5352
        %v5354 = vand.u32 %v5353, 4294901760
        %5355 = vmatpush1.msra.mxu0 %v5354
        %5356 = vmatprep.subr.mxu0 0.0
        %v5357 = vand.u32 %v5216, 4294901760
        %v5358 = vsub.f32 %v5216, %v5357
        %v5359 = vand.u32 %v5358, 4294901760
        %v5360 = vsub.f32 %v5358, %v5359
        %v5361 = vand.u32 %v5360, 4294901760
        %5362 = vmatpush1.msra.mxu0 %v5361
        %5363 = vmatprep.subr.mxu0 0.0
        %v5364 = vand.u32 %v5217, 4294901760
        %v5365 = vsub.f32 %v5217, %v5364
        %v5366 = vand.u32 %v5365, 4294901760
        %v5367 = vsub.f32 %v5365, %v5366
        %v5368 = vand.u32 %v5367, 4294901760
        %5369 = vmatpush1.msra.mxu0 %v5368
        %5370 = vmatprep.subr.mxu0 0.0
        %v5371 = vand.u32 %v5218, 4294901760
        %v5372 = vsub.f32 %v5218, %v5371
        %v5373 = vand.u32 %v5372, 4294901760
        %v5374 = vsub.f32 %v5372, %v5373
        %v5375 = vand.u32 %v5374, 4294901760
        %5376 = vmatpush1.msra.mxu0 %v5375
        %5377 = vmatprep.subr.mxu0 0.0
        %v5378 = vand.u32 %v5219, 4294901760
        %v5379 = vsub.f32 %v5219, %v5378
        %v5380 = vand.u32 %v5379, 4294901760
        %v5381 = vsub.f32 %v5379, %v5380
        %v5382 = vand.u32 %v5381, 4294901760
        %5383 = vmatpush1.msra.mxu0 %v5382
        %5384 = vmatprep.subr.mxu0 0.0
        %v5385 = vand.u32 %v5220, 4294901760
        %v5386 = vsub.f32 %v5220, %v5385
        %v5387 = vand.u32 %v5386, 4294901760
        %v5388 = vsub.f32 %v5386, %v5387
        %v5389 = vand.u32 %v5388, 4294901760
        %5390 = vmatpush1.msra.mxu0 %v5389
        %5391 = vmatprep.subr.mxu0 0.0
        %v5392 = vand.u32 %v5221, 4294901760
        %v5393 = vsub.f32 %v5221, %v5392
        %v5394 = vand.u32 %v5393, 4294901760
        %v5395 = vsub.f32 %v5393, %v5394
        %v5396 = vand.u32 %v5395, 4294901760
        %5397 = vmatpush1.msra.mxu0 %v5396
        %5398 = vmatprep.subr.mxu0 0.0
        %v5399 = vand.u32 %v5222, 4294901760
        %v5400 = vsub.f32 %v5222, %v5399
        %v5401 = vand.u32 %v5400, 4294901760
        %v5402 = vsub.f32 %v5400, %v5401
        %v5403 = vand.u32 %v5402, 4294901760
        %5404 = vmatpush1.msra.mxu0 %v5403
        %5405 = vmatprep.subr.mxu0 0.0
        %v5406 = vand.u32 %v5223, 4294901760
        %v5407 = vsub.f32 %v5223, %v5406
        %v5408 = vand.u32 %v5407, 4294901760
        %v5409 = vsub.f32 %v5407, %v5408
        %v5410 = vand.u32 %v5409, 4294901760
        %5411 = vmatpush1.msra.mxu0 %v5410
        %5412 = vmatprep.subr.mxu0 0.0
        %v5413 = vand.u32 %v5224, 4294901760
        %v5414 = vsub.f32 %v5224, %v5413
        %v5415 = vand.u32 %v5414, 4294901760
        %v5416 = vsub.f32 %v5414, %v5415
        %v5417 = vand.u32 %v5416, 4294901760
        %5418 = vmatpush1.msra.mxu0 %v5417
        %5419 = vmatprep.subr.mxu0 0.0
        %v5420 = vand.u32 %v5225, 4294901760
        %v5421 = vsub.f32 %v5225, %v5420
        %v5422 = vand.u32 %v5421, 4294901760
        %v5423 = vsub.f32 %v5421, %v5422
        %v5424 = vand.u32 %v5423, 4294901760
        %5425 = vmatpush1.msra.mxu0 %v5424
        %5426 = vmatprep.subr.mxu0 0.0
        %v5427 = vand.u32 %v5226, 4294901760
        %v5428 = vsub.f32 %v5226, %v5427
        %v5429 = vand.u32 %v5428, 4294901760
        %v5430 = vsub.f32 %v5428, %v5429
        %v5431 = vand.u32 %v5430, 4294901760
        %5432 = vmatpush1.msra.mxu0 %v5431
        %5433 = vmatprep.subr.mxu0 0.0
        %v5434 = vand.u32 %v5227, 4294901760
        %v5435 = vsub.f32 %v5227, %v5434
        %v5436 = vand.u32 %v5435, 4294901760
        %v5437 = vsub.f32 %v5435, %v5436
        %v5438 = vand.u32 %v5437, 4294901760
        %5439 = vmatpush1.msra.mxu0 %v5438
        %5440 = vmatprep.subr.mxu0 0.0
        %v5441 = vand.u32 %v5228, 4294901760
        %v5442 = vsub.f32 %v5228, %v5441
        %v5443 = vand.u32 %v5442, 4294901760
        %v5444 = vsub.f32 %v5442, %v5443
        %v5445 = vand.u32 %v5444, 4294901760
        %5446 = vmatpush1.msra.mxu0 %v5445
        %5447 = vmatprep.subr.mxu0 0.0
        %5448 = vmatpush1.msra.mxu0 0.0
        %5449 = vmatprep.subr.mxu0 0.0
        %5450 = vmatpush1.msra.mxu0 0.0
        %5451 = vmatprep.subr.mxu0 0.0
        %5452 = vmatpush1.msra.mxu0 0.0
        %5453 = vmatprep.subr.mxu0 0.0
        %5454 = vmatpush1.msra.mxu0 0.0
        %5455 = vmatprep.subr.mxu0 0.0
        %5456 = vmatpush1.msra.mxu0 0.0
        %5457 = vmatprep.subr.mxu0 0.0
        %5458 = vmatpush1.msra.mxu0 0.0
        %5459 = vmatprep.subr.mxu0 0.0
        %5460 = vmatpush1.msra.mxu0 0.0
        %5461 = vmatprep.subr.mxu0 0.0
        %5462 = vmatpush1.msra.mxu0 0.0
        %5463 = vmatprep.subr.mxu0 0.0
        %5464 = vmatpush1.msra.mxu0 0.0
        %5465 = vmatprep.subr.mxu0 0.0
        %5466 = vmatpush1.msra.mxu0 0.0
        %5467 = vmatprep.subr.mxu0 0.0
        %5468 = vmatpush1.msra.mxu0 0.0
        %5469 = vmatprep.subr.mxu0 0.0
        %5470 = vmatpush1.msra.mxu0 0.0
        %5471 = vmatprep.subr.mxu0 0.0
        %5472 = vmatpush1.msra.mxu0 0.0
        %5473 = vmatprep.subr.mxu0 0.0
        %5474 = vmatpush1.msra.mxu0 0.0
        %5475 = vmatprep.subr.mxu0 0.0
        %5476 = vmatpush1.msra.mxu0 0.0
        %5477 = vmatprep.subr.mxu0 0.0
        %5478 = vmatpush1.msra.mxu0 0.0
        %5479 = vmatprep.mubr.f32.mxu0 0.0
        %v5480 = vand.u32 %v4994, 4294901760
        %5481 = vmatmul.mubr.f32.gmra.mrb[0].mxu0 %v5480
        %v5482 = vpop.f32.mrb[0].mxu0
        %v5483 = vadd.f32 %v5322, %v5482
        %v5484 = vpop.f32.mrb[0].mxu0
        %5485 = vmatprep.mubr.f32.mxu0 0.0
        %v5486 = vand.u32 %v5000, 4294901760
        %5487 = vmatmul.mubr.f32.gmra.mrb[0].mxu0 %v5486
        %v5488 = vpop.f32.mrb[0].mxu0
        %v5489 = vadd.f32 %v5332, %v5488
        %v5490 = vpop.f32.mrb[0].mxu0
        %5491 = vdwg.mxu0
        %5492 = vmatprep.subr.mxu0 0.0
        %v5493 = vand.u32 %v5213, 4294901760
        %v5494 = vsub.f32 %v5213, %v5493
        %5495 = vmatpush1.msra.mxu0 %v5494
        %5496 = vmatprep.subr.mxu0 0.0
        %v5497 = vand.u32 %v5214, 4294901760
        %v5498 = vsub.f32 %v5214, %v5497
        %5499 = vmatpush1.msra.mxu0 %v5498
        %5500 = vmatprep.subr.mxu0 0.0
        %v5501 = vand.u32 %v5215, 4294901760
        %v5502 = vsub.f32 %v5215, %v5501
        %5503 = vmatpush1.msra.mxu0 %v5502
        %5504 = vmatprep.subr.mxu0 0.0
        %v5505 = vand.u32 %v5216, 4294901760
        %v5506 = vsub.f32 %v5216, %v5505
        %5507 = vmatpush1.msra.mxu0 %v5506
        %5508 = vmatprep.subr.mxu0 0.0
        %v5509 = vand.u32 %v5217, 4294901760
        %v5510 = vsub.f32 %v5217, %v5509
        %5511 = vmatpush1.msra.mxu0 %v5510
        %5512 = vmatprep.subr.mxu0 0.0
        %v5513 = vand.u32 %v5218, 4294901760
        %v5514 = vsub.f32 %v5218, %v5513
        %5515 = vmatpush1.msra.mxu0 %v5514
        %5516 = vmatprep.subr.mxu0 0.0
        %v5517 = vand.u32 %v5219, 4294901760
        %v5518 = vsub.f32 %v5219, %v5517
        %5519 = vmatpush1.msra.mxu0 %v5518
        %5520 = vmatprep.subr.mxu0 0.0
        %v5521 = vand.u32 %v5220, 4294901760
        %v5522 = vsub.f32 %v5220, %v5521
        %5523 = vmatpush1.msra.mxu0 %v5522
        %5524 = vmatprep.subr.mxu0 0.0
        %v5525 = vand.u32 %v5221, 4294901760
        %v5526 = vsub.f32 %v5221, %v5525
        %5527 = vmatpush1.msra.mxu0 %v5526
        %5528 = vmatprep.subr.mxu0 0.0
        %v5529 = vand.u32 %v5222, 4294901760
        %v5530 = vsub.f32 %v5222, %v5529
        %5531 = vmatpush1.msra.mxu0 %v5530
        %5532 = vmatprep.subr.mxu0 0.0
        %v5533 = vand.u32 %v5223, 4294901760
        %v5534 = vsub.f32 %v5223, %v5533
        %5535 = vmatpush1.msra.mxu0 %v5534
        %5536 = vmatprep.subr.mxu0 0.0
        %v5537 = vand.u32 %v5224, 4294901760
        %v5538 = vsub.f32 %v5224, %v5537
        %5539 = vmatpush1.msra.mxu0 %v5538
        %5540 = vmatprep.subr.mxu0 0.0
        %v5541 = vand.u32 %v5225, 4294901760
        %v5542 = vsub.f32 %v5225, %v5541
        %5543 = vmatpush1.msra.mxu0 %v5542
        %5544 = vmatprep.subr.mxu0 0.0
        %v5545 = vand.u32 %v5226, 4294901760
        %v5546 = vsub.f32 %v5226, %v5545
        %5547 = vmatpush1.msra.mxu0 %v5546
        %5548 = vmatprep.subr.mxu0 0.0
        %v5549 = vand.u32 %v5227, 4294901760
        %v5550 = vsub.f32 %v5227, %v5549
        %5551 = vmatpush1.msra.mxu0 %v5550
        %5552 = vmatprep.subr.mxu0 0.0
        %v5553 = vand.u32 %v5228, 4294901760
        %v5554 = vsub.f32 %v5228, %v5553
        %5555 = vmatpush1.msra.mxu0 %v5554
        %5556 = vmatprep.subr.mxu0 0.0
        %5557 = vmatpush1.msra.mxu0 0.0
        %5558 = vmatprep.subr.mxu0 0.0
        %5559 = vmatpush1.msra.mxu0 0.0
        %5560 = vmatprep.subr.mxu0 0.0
        %5561 = vmatpush1.msra.mxu0 0.0
        %5562 = vmatprep.subr.mxu0 0.0
        %5563 = vmatpush1.msra.mxu0 0.0
        %5564 = vmatprep.subr.mxu0 0.0
        %5565 = vmatpush1.msra.mxu0 0.0
        %5566 = vmatprep.subr.mxu0 0.0
        %5567 = vmatpush1.msra.mxu0 0.0
        %5568 = vmatprep.subr.mxu0 0.0
        %5569 = vmatpush1.msra.mxu0 0.0
        %5570 = vmatprep.subr.mxu0 0.0
        %5571 = vmatpush1.msra.mxu0 0.0
        %5572 = vmatprep.subr.mxu0 0.0
        %5573 = vmatpush1.msra.mxu0 0.0
        %5574 = vmatprep.subr.mxu0 0.0
        %5575 = vmatpush1.msra.mxu0 0.0
        %5576 = vmatprep.subr.mxu0 0.0
        %5577 = vmatpush1.msra.mxu0 0.0
        %5578 = vmatprep.subr.mxu0 0.0
        %5579 = vmatpush1.msra.mxu0 0.0
        %5580 = vmatprep.subr.mxu0 0.0
        %5581 = vmatpush1.msra.mxu0 0.0
        %5582 = vmatprep.subr.mxu0 0.0
        %5583 = vmatpush1.msra.mxu0 0.0
        %5584 = vmatprep.subr.mxu0 0.0
        %5585 = vmatpush1.msra.mxu0 0.0
        %5586 = vmatprep.subr.mxu0 0.0
        %5587 = vmatpush1.msra.mxu0 0.0
        %5588 = vmatprep.mubr.f32.mxu0 0.0
        %v5589 = vand.u32 %v4994, 4294901760
        %v5590 = vsub.f32 %v4994, %v5589
        %5591 = vmatmul.mubr.f32.gmra.mrb[0].mxu0 %v5590
        %v5592 = vpop.f32.mrb[0].mxu0
        %v5593 = vadd.f32 %v5483, %v5592
        %v5594 = vpop.f32.mrb[0].mxu0
        %5595 = vmatprep.mubr.f32.mxu0 0.0
        %v5596 = vand.u32 %v5000, 4294901760
        %v5597 = vsub.f32 %v5000, %v5596
        %5598 = vmatmul.mubr.f32.gmra.mrb[0].mxu0 %v5597
        %v5599 = vpop.f32.mrb[0].mxu0
        %v5600 = vadd.f32 %v5489, %v5599
        %v5601 = vpop.f32.mrb[0].mxu0
        %5602 = vdwg.mxu0
        %5603 = vmatprep.subr.mxu0 0.0
        %v5604 = vand.u32 %v5213, 4294901760
        %5605 = vmatpush1.msra.mxu0 %v5604
        %5606 = vmatprep.subr.mxu0 0.0
        %v5607 = vand.u32 %v5214, 4294901760
        %5608 = vmatpush1.msra.mxu0 %v5607
        %5609 = vmatprep.subr.mxu0 0.0
        %v5610 = vand.u32 %v5215, 4294901760
        %5611 = vmatpush1.msra.mxu0 %v5610
        %5612 = vmatprep.subr.mxu0 0.0
        %v5613 = vand.u32 %v5216, 4294901760
        %5614 = vmatpush1.msra.mxu0 %v5613
        %5615 = vmatprep.subr.mxu0 0.0
        %v5616 = vand.u32 %v5217, 4294901760
        %5617 = vmatpush1.msra.mxu0 %v5616
        %5618 = vmatprep.subr.mxu0 0.0
        %v5619 = vand.u32 %v5218, 4294901760
        %5620 = vmatpush1.msra.mxu0 %v5619
        %5621 = vmatprep.subr.mxu0 0.0
        %v5622 = vand.u32 %v5219, 4294901760
        %5623 = vmatpush1.msra.mxu0 %v5622
        %5624 = vmatprep.subr.mxu0 0.0
        %v5625 = vand.u32 %v5220, 4294901760
        %5626 = vmatpush1.msra.mxu0 %v5625
        %5627 = vmatprep.subr.mxu0 0.0
        %v5628 = vand.u32 %v5221, 4294901760
        %5629 = vmatpush1.msra.mxu0 %v5628
        %5630 = vmatprep.subr.mxu0 0.0
        %v5631 = vand.u32 %v5222, 4294901760
        %5632 = vmatpush1.msra.mxu0 %v5631
        %5633 = vmatprep.subr.mxu0 0.0
        %v5634 = vand.u32 %v5223, 4294901760
        %5635 = vmatpush1.msra.mxu0 %v5634
        %5636 = vmatprep.subr.mxu0 0.0
        %v5637 = vand.u32 %v5224, 4294901760
        %5638 = vmatpush1.msra.mxu0 %v5637
        %5639 = vmatprep.subr.mxu0 0.0
        %v5640 = vand.u32 %v5225, 4294901760
        %5641 = vmatpush1.msra.mxu0 %v5640
        %5642 = vmatprep.subr.mxu0 0.0
        %v5643 = vand.u32 %v5226, 4294901760
        %5644 = vmatpush1.msra.mxu0 %v5643
        %5645 = vmatprep.subr.mxu0 0.0
        %v5646 = vand.u32 %v5227, 4294901760
        %5647 = vmatpush1.msra.mxu0 %v5646
        %5648 = vmatprep.subr.mxu0 0.0
        %v5649 = vand.u32 %v5228, 4294901760
        %5650 = vmatpush1.msra.mxu0 %v5649
        %5651 = vmatprep.subr.mxu0 0.0
        %5652 = vmatpush1.msra.mxu0 0.0
        %5653 = vmatprep.subr.mxu0 0.0
        %5654 = vmatpush1.msra.mxu0 0.0
        %5655 = vmatprep.subr.mxu0 0.0
        %5656 = vmatpush1.msra.mxu0 0.0
        %5657 = vmatprep.subr.mxu0 0.0
        %5658 = vmatpush1.msra.mxu0 0.0
        %5659 = vmatprep.subr.mxu0 0.0
        %5660 = vmatpush1.msra.mxu0 0.0
        %5661 = vmatprep.subr.mxu0 0.0
        %5662 = vmatpush1.msra.mxu0 0.0
        %5663 = vmatprep.subr.mxu0 0.0
        %5664 = vmatpush1.msra.mxu0 0.0
        %5665 = vmatprep.subr.mxu0 0.0
        %5666 = vmatpush1.msra.mxu0 0.0
        %5667 = vmatprep.subr.mxu0 0.0
        %5668 = vmatpush1.msra.mxu0 0.0
        %5669 = vmatprep.subr.mxu0 0.0
        %5670 = vmatpush1.msra.mxu0 0.0
        %5671 = vmatprep.subr.mxu0 0.0
        %5672 = vmatpush1.msra.mxu0 0.0
        %5673 = vmatprep.subr.mxu0 0.0
        %5674 = vmatpush1.msra.mxu0 0.0
        %5675 = vmatprep.subr.mxu0 0.0
        %5676 = vmatpush1.msra.mxu0 0.0
        %5677 = vmatprep.subr.mxu0 0.0
        %5678 = vmatpush1.msra.mxu0 0.0
        %5679 = vmatprep.subr.mxu0 0.0
        %5680 = vmatpush1.msra.mxu0 0.0
        %5681 = vmatprep.subr.mxu0 0.0
        %5682 = vmatpush1.msra.mxu0 0.0
        %5683 = vmatprep.mubr.f32.mxu0 0.0
        %v5684 = vand.u32 %v4994, 4294901760
        %v5685 = vsub.f32 %v4994, %v5684
        %v5686 = vand.u32 %v5685, 4294901760
        %5687 = vmatmul.mubr.f32.gmra.mrb[0].mxu0 %v5686
        %v5688 = vpop.f32.mrb[0].mxu0
        %v5689 = vadd.f32 %v5593, %v5688
        %v5690 = vpop.f32.mrb[0].mxu0
        %5691 = vmatprep.mubr.f32.mxu0 0.0
        %v5692 = vand.u32 %v5000, 4294901760
        %v5693 = vsub.f32 %v5000, %v5692
        %v5694 = vand.u32 %v5693, 4294901760
        %5695 = vmatmul.mubr.f32.gmra.mrb[0].mxu0 %v5694
        %v5696 = vpop.f32.mrb[0].mxu0
        %v5697 = vadd.f32 %v5600, %v5696
        %v5698 = vpop.f32.mrb[0].mxu0
        %5699 = vdwg.mxu0
        %5700 = vmatprep.subr.mxu0 0.0
        %v5701 = vand.u32 %v5213, 4294901760
        %v5702 = vsub.f32 %v5213, %v5701
        %v5703 = vand.u32 %v5702, 4294901760
        %5704 = vmatpush1.msra.mxu0 %v5703
        %5705 = vmatprep.subr.mxu0 0.0
        %v5706 = vand.u32 %v5214, 4294901760
        %v5707 = vsub.f32 %v5214, %v5706
        %v5708 = vand.u32 %v5707, 4294901760
        %5709 = vmatpush1.msra.mxu0 %v5708
        %5710 = vmatprep.subr.mxu0 0.0
        %v5711 = vand.u32 %v5215, 4294901760
        %v5712 = vsub.f32 %v5215, %v5711
        %v5713 = vand.u32 %v5712, 4294901760
        %5714 = vmatpush1.msra.mxu0 %v5713
        %5715 = vmatprep.subr.mxu0 0.0
        %v5716 = vand.u32 %v5216, 4294901760
        %v5717 = vsub.f32 %v5216, %v5716
        %v5718 = vand.u32 %v5717, 4294901760
        %5719 = vmatpush1.msra.mxu0 %v5718
        %5720 = vmatprep.subr.mxu0 0.0
        %v5721 = vand.u32 %v5217, 4294901760
        %v5722 = vsub.f32 %v5217, %v5721
        %v5723 = vand.u32 %v5722, 4294901760
        %5724 = vmatpush1.msra.mxu0 %v5723
        %5725 = vmatprep.subr.mxu0 0.0
        %v5726 = vand.u32 %v5218, 4294901760
        %v5727 = vsub.f32 %v5218, %v5726
        %v5728 = vand.u32 %v5727, 4294901760
        %5729 = vmatpush1.msra.mxu0 %v5728
        %5730 = vmatprep.subr.mxu0 0.0
        %v5731 = vand.u32 %v5219, 4294901760
        %v5732 = vsub.f32 %v5219, %v5731
        %v5733 = vand.u32 %v5732, 4294901760
        %5734 = vmatpush1.msra.mxu0 %v5733
        %5735 = vmatprep.subr.mxu0 0.0
        %v5736 = vand.u32 %v5220, 4294901760
        %v5737 = vsub.f32 %v5220, %v5736
        %v5738 = vand.u32 %v5737, 4294901760
        %5739 = vmatpush1.msra.mxu0 %v5738
        %5740 = vmatprep.subr.mxu0 0.0
        %v5741 = vand.u32 %v5221, 4294901760
        %v5742 = vsub.f32 %v5221, %v5741
        %v5743 = vand.u32 %v5742, 4294901760
        %5744 = vmatpush1.msra.mxu0 %v5743
        %5745 = vmatprep.subr.mxu0 0.0
        %v5746 = vand.u32 %v5222, 4294901760
        %v5747 = vsub.f32 %v5222, %v5746
        %v5748 = vand.u32 %v5747, 4294901760
        %5749 = vmatpush1.msra.mxu0 %v5748
        %5750 = vmatprep.subr.mxu0 0.0
        %v5751 = vand.u32 %v5223, 4294901760
        %v5752 = vsub.f32 %v5223, %v5751
        %v5753 = vand.u32 %v5752, 4294901760
        %5754 = vmatpush1.msra.mxu0 %v5753
        %5755 = vmatprep.subr.mxu0 0.0
        %v5756 = vand.u32 %v5224, 4294901760
        %v5757 = vsub.f32 %v5224, %v5756
        %v5758 = vand.u32 %v5757, 4294901760
        %5759 = vmatpush1.msra.mxu0 %v5758
        %5760 = vmatprep.subr.mxu0 0.0
        %v5761 = vand.u32 %v5225, 4294901760
        %v5762 = vsub.f32 %v5225, %v5761
        %v5763 = vand.u32 %v5762, 4294901760
        %5764 = vmatpush1.msra.mxu0 %v5763
        %5765 = vmatprep.subr.mxu0 0.0
        %v5766 = vand.u32 %v5226, 4294901760
        %v5767 = vsub.f32 %v5226, %v5766
        %v5768 = vand.u32 %v5767, 4294901760
        %5769 = vmatpush1.msra.mxu0 %v5768
        %5770 = vmatprep.subr.mxu0 0.0
        %v5771 = vand.u32 %v5227, 4294901760
        %v5772 = vsub.f32 %v5227, %v5771
        %v5773 = vand.u32 %v5772, 4294901760
        %5774 = vmatpush1.msra.mxu0 %v5773
        %5775 = vmatprep.subr.mxu0 0.0
        %v5776 = vand.u32 %v5228, 4294901760
        %v5777 = vsub.f32 %v5228, %v5776
        %v5778 = vand.u32 %v5777, 4294901760
        %5779 = vmatpush1.msra.mxu0 %v5778
        %5780 = vmatprep.subr.mxu0 0.0
        %5781 = vmatpush1.msra.mxu0 0.0
        %5782 = vmatprep.subr.mxu0 0.0
        %5783 = vmatpush1.msra.mxu0 0.0
        %5784 = vmatprep.subr.mxu0 0.0
        %5785 = vmatpush1.msra.mxu0 0.0
        %5786 = vmatprep.subr.mxu0 0.0
        %5787 = vmatpush1.msra.mxu0 0.0
        %5788 = vmatprep.subr.mxu0 0.0
        %5789 = vmatpush1.msra.mxu0 0.0
        %5790 = vmatprep.subr.mxu0 0.0
        %5791 = vmatpush1.msra.mxu0 0.0
        %5792 = vmatprep.subr.mxu0 0.0
        %5793 = vmatpush1.msra.mxu0 0.0
        %5794 = vmatprep.subr.mxu0 0.0
        %5795 = vmatpush1.msra.mxu0 0.0
        %5796 = vmatprep.subr.mxu0 0.0
        %5797 = vmatpush1.msra.mxu0 0.0
        %5798 = vmatprep.subr.mxu0 0.0
        %5799 = vmatpush1.msra.mxu0 0.0
        %5800 = vmatprep.subr.mxu0 0.0
        %5801 = vmatpush1.msra.mxu0 0.0
        %5802 = vmatprep.subr.mxu0 0.0
        %5803 = vmatpush1.msra.mxu0 0.0
        %5804 = vmatprep.subr.mxu0 0.0
        %5805 = vmatpush1.msra.mxu0 0.0
        %5806 = vmatprep.subr.mxu0 0.0
        %5807 = vmatpush1.msra.mxu0 0.0
        %5808 = vmatprep.subr.mxu0 0.0
        %5809 = vmatpush1.msra.mxu0 0.0
        %5810 = vmatprep.subr.mxu0 0.0
        %5811 = vmatpush1.msra.mxu0 0.0
        %5812 = vmatprep.mubr.f32.mxu0 0.0
        %v5813 = vand.u32 %v4994, 4294901760
        %5814 = vmatmul.mubr.f32.gmra.mrb[0].mxu0 %v5813
        %v5815 = vpop.f32.mrb[0].mxu0
        %v5816 = vadd.f32 %v5689, %v5815
        %v5817 = vpop.f32.mrb[0].mxu0
        %5818 = vmatprep.mubr.f32.mxu0 0.0
        %v5819 = vand.u32 %v5000, 4294901760
        %5820 = vmatmul.mubr.f32.gmra.mrb[0].mxu0 %v5819
        %v5821 = vpop.f32.mrb[0].mxu0
        %v5822 = vadd.f32 %v5697, %v5821
        %v5823 = vpop.f32.mrb[0].mxu0
        %5824 = vdwg.mxu0
        %5825 = vmatprep.subr.mxu0 0.0
        %v5826 = vand.u32 %v5213, 4294901760
        %5827 = vmatpush1.msra.mxu0 %v5826
        %5828 = vmatprep.subr.mxu0 0.0
        %v5829 = vand.u32 %v5214, 4294901760
        %5830 = vmatpush1.msra.mxu0 %v5829
        %5831 = vmatprep.subr.mxu0 0.0
        %v5832 = vand.u32 %v5215, 4294901760
        %5833 = vmatpush1.msra.mxu0 %v5832
        %5834 = vmatprep.subr.mxu0 0.0
        %v5835 = vand.u32 %v5216, 4294901760
        %5836 = vmatpush1.msra.mxu0 %v5835
        %5837 = vmatprep.subr.mxu0 0.0
        %v5838 = vand.u32 %v5217, 4294901760
        %5839 = vmatpush1.msra.mxu0 %v5838
        %5840 = vmatprep.subr.mxu0 0.0
        %v5841 = vand.u32 %v5218, 4294901760
        %5842 = vmatpush1.msra.mxu0 %v5841
        %5843 = vmatprep.subr.mxu0 0.0
        %v5844 = vand.u32 %v5219, 4294901760
        %5845 = vmatpush1.msra.mxu0 %v5844
        %5846 = vmatprep.subr.mxu0 0.0
        %v5847 = vand.u32 %v5220, 4294901760
        %5848 = vmatpush1.msra.mxu0 %v5847
        %5849 = vmatprep.subr.mxu0 0.0
        %v5850 = vand.u32 %v5221, 4294901760
        %5851 = vmatpush1.msra.mxu0 %v5850
        %5852 = vmatprep.subr.mxu0 0.0
        %v5853 = vand.u32 %v5222, 4294901760
        %5854 = vmatpush1.msra.mxu0 %v5853
        %5855 = vmatprep.subr.mxu0 0.0
        %v5856 = vand.u32 %v5223, 4294901760
        %5857 = vmatpush1.msra.mxu0 %v5856
        %5858 = vmatprep.subr.mxu0 0.0
        %v5859 = vand.u32 %v5224, 4294901760
        %5860 = vmatpush1.msra.mxu0 %v5859
        %5861 = vmatprep.subr.mxu0 0.0
        %v5862 = vand.u32 %v5225, 4294901760
        %5863 = vmatpush1.msra.mxu0 %v5862
        %5864 = vmatprep.subr.mxu0 0.0
        %v5865 = vand.u32 %v5226, 4294901760
        %5866 = vmatpush1.msra.mxu0 %v5865
        %5867 = vmatprep.subr.mxu0 0.0
        %v5868 = vand.u32 %v5227, 4294901760
        %5869 = vmatpush1.msra.mxu0 %v5868
        %5870 = vmatprep.subr.mxu0 0.0
        %v5871 = vand.u32 %v5228, 4294901760
        %5872 = vmatpush1.msra.mxu0 %v5871
        %5873 = vmatprep.subr.mxu0 0.0
        %5874 = vmatpush1.msra.mxu0 0.0
        %5875 = vmatprep.subr.mxu0 0.0
        %5876 = vmatpush1.msra.mxu0 0.0
        %5877 = vmatprep.subr.mxu0 0.0
        %5878 = vmatpush1.msra.mxu0 0.0
        %5879 = vmatprep.subr.mxu0 0.0
        %5880 = vmatpush1.msra.mxu0 0.0
        %5881 = vmatprep.subr.mxu0 0.0
        %5882 = vmatpush1.msra.mxu0 0.0
        %5883 = vmatprep.subr.mxu0 0.0
        %5884 = vmatpush1.msra.mxu0 0.0
        %5885 = vmatprep.subr.mxu0 0.0
        %5886 = vmatpush1.msra.mxu0 0.0
        %5887 = vmatprep.subr.mxu0 0.0
        %5888 = vmatpush1.msra.mxu0 0.0
        %5889 = vmatprep.subr.mxu0 0.0
        %5890 = vmatpush1.msra.mxu0 0.0
        %5891 = vmatprep.subr.mxu0 0.0
        %5892 = vmatpush1.msra.mxu0 0.0
        %5893 = vmatprep.subr.mxu0 0.0
        %5894 = vmatpush1.msra.mxu0 0.0
        %5895 = vmatprep.subr.mxu0 0.0
        %5896 = vmatpush1.msra.mxu0 0.0
        %5897 = vmatprep.subr.mxu0 0.0
        %5898 = vmatpush1.msra.mxu0 0.0
        %5899 = vmatprep.subr.mxu0 0.0
        %5900 = vmatpush1.msra.mxu0 0.0
        %5901 = vmatprep.subr.mxu0 0.0
        %5902 = vmatpush1.msra.mxu0 0.0
        %5903 = vmatprep.subr.mxu0 0.0
        %5904 = vmatpush1.msra.mxu0 0.0
        %5905 = vmatprep.mubr.f32.mxu0 0.0
        %v5906 = vand.u32 %v4994, 4294901760
        %5907 = vmatmul.mubr.f32.gmra.mrb[0].mxu0 %v5906
        %v5908 = vpop.f32.mrb[0].mxu0
        %v5909 = vadd.f32 %v5816, %v5908
        %v5910 = vpop.f32.mrb[0].mxu0
        %5911 = vmatprep.mubr.f32.mxu0 0.0
        %v5912 = vand.u32 %v5000, 4294901760
        %5913 = vmatmul.mubr.f32.gmra.mrb[0].mxu0 %v5912
        %v5914 = vpop.f32.mrb[0].mxu0
        %v5915 = vadd.f32 %v5822, %v5914
        %v5916 = vpop.f32.mrb[0].mxu0
        %5917 = vdwg.mxu0
        %5918 = vset.pattern.permute.xlu0 6
        %5919 = vperm.xlu0 %5918, %v424
        %v5920 = vpop.permute.xlu0 %5919
        %5922 = vset.pattern.permute.xlu0 6
        %5923 = vperm.xlu0 %5922, %v425
        %v5924 = vpop.permute.xlu0 %5923
        %v5926 = vsub.f32 %v5909, %v5920
        %v5927 = vsub.f32 %v5915, %v5924
        %v5928 = vmul.f32 %v5926, %v5926
        %v5929 = vmul.f32 %v5927, %v5927
        %v5930 = vadd.f32 %v5928, %v5929
        %v5931 = vrot.slane %v5930, 4
        %v5932 = vadd.f32 %v5930, %v5931
        %v5933 = vrot.slane %v5932, 2
        %v5934 = vadd.f32 %v5932, %v5933
        %v5935 = vrot.slane %v5934, 1
        %v5936 = vadd.f32 %v5934, %v5935
        %v5937 = vmul.f32 %v5936, -0.5
        %v5938 = vmul.f32 %v5937, 1.442695
        %v5939 = vpow.pop %v5938
        %v5940 = vadd.f32 %v5939, 1e-08
        %v5941 = vmul.f32 %v5031, %v5940
        %v5942 = vadd.f32 %v5941, 1e-10
        %5943 = vadd.xlane.f32.xlu0 %v5942
        %v5944 = vpop.xlane.xlu0 %5943
        %v5945 = vrcp.pop %v5944
        %v5946 = vmul.f32 %v5942, %v5945
        %v5947 = vmul.f32 %v338, %v5946
        %v5948 = vmul.f32 %v339, %v5946
        %v5949 = vmul.f32 %v340, %v5946
        %v5950 = vmul.f32 %v341, %v5946
        %v5951 = vmul.f32 %v342, %v5946
        %v5952 = vmul.f32 %v343, %v5946
        %v5953 = vmul.f32 %v344, %v5946
        %v5954 = vmul.f32 %v345, %v5946
        %v5955 = vmul.f32 %v346, %v5946
        %v5956 = vmul.f32 %v347, %v5946
        %v5957 = vmul.f32 %v348, %v5946
        %v5958 = vmul.f32 %v349, %v5946
        %v5959 = vmul.f32 %v350, %v5946
        %v5960 = vmul.f32 %v351, %v5946
        %v5961 = vmul.f32 %v352, %v5946
        %v5962 = vmul.f32 %v353, %v5946
        %5963 = vadd.xlane.f32.xlu0 %v5947
        %v5964 = vpop.xlane.xlu0 %5963
        %5965 = vadd.xlane.f32.xlu0 %v5948
        %v5966 = vpop.xlane.xlu0 %5965
        %5967 = vadd.xlane.f32.xlu0 %v5949
        %v5968 = vpop.xlane.xlu0 %5967
        %5969 = vadd.xlane.f32.xlu0 %v5950
        %v5970 = vpop.xlane.xlu0 %5969
        %5971 = vadd.xlane.f32.xlu0 %v5951
        %v5972 = vpop.xlane.xlu0 %5971
        %5973 = vadd.xlane.f32.xlu0 %v5952
        %v5974 = vpop.xlane.xlu0 %5973
        %5975 = vadd.xlane.f32.xlu0 %v5953
        %v5976 = vpop.xlane.xlu0 %5975
        %5977 = vadd.xlane.f32.xlu0 %v5954
        %v5978 = vpop.xlane.xlu0 %5977
        %5979 = vadd.xlane.f32.xlu0 %v5955
        %v5980 = vpop.xlane.xlu0 %5979
        %5981 = vadd.xlane.f32.xlu0 %v5956
        %v5982 = vpop.xlane.xlu0 %5981
        %5983 = vadd.xlane.f32.xlu0 %v5957
        %v5984 = vpop.xlane.xlu0 %5983
        %5985 = vadd.xlane.f32.xlu0 %v5958
        %v5986 = vpop.xlane.xlu0 %5985
        %5987 = vadd.xlane.f32.xlu0 %v5959
        %v5988 = vpop.xlane.xlu0 %5987
        %5989 = vadd.xlane.f32.xlu0 %v5960
        %v5990 = vpop.xlane.xlu0 %5989
        %5991 = vadd.xlane.f32.xlu0 %v5961
        %v5992 = vpop.xlane.xlu0 %5991
        %5993 = vadd.xlane.f32.xlu0 %v5962
        %v5994 = vpop.xlane.xlu0 %5993
        %v5995 = vmul.f32 %v386, %v5946
        %v5996 = vmul.f32 %v387, %v5946
        %v5997 = vmul.f32 %v388, %v5946
        %v5998 = vmul.f32 %v389, %v5946
        %v5999 = vmul.f32 %v390, %v5946
        %v6000 = vmul.f32 %v391, %v5946
        %v6001 = vmul.f32 %v392, %v5946
        %v6002 = vmul.f32 %v393, %v5946
        %v6003 = vmul.f32 %v394, %v5946
        %v6004 = vmul.f32 %v395, %v5946
        %v6005 = vmul.f32 %v396, %v5946
        %v6006 = vmul.f32 %v397, %v5946
        %v6007 = vmul.f32 %v398, %v5946
        %v6008 = vmul.f32 %v399, %v5946
        %v6009 = vmul.f32 %v400, %v5946
        %v6010 = vmul.f32 %v401, %v5946
        %6011 = vadd.xlane.f32.xlu0 %v5995
        %v6012 = vpop.xlane.xlu0 %6011
        %6013 = vadd.xlane.f32.xlu0 %v5996
        %v6014 = vpop.xlane.xlu0 %6013
        %6015 = vadd.xlane.f32.xlu0 %v5997
        %v6016 = vpop.xlane.xlu0 %6015
        %6017 = vadd.xlane.f32.xlu0 %v5998
        %v6018 = vpop.xlane.xlu0 %6017
        %6019 = vadd.xlane.f32.xlu0 %v5999
        %v6020 = vpop.xlane.xlu0 %6019
        %6021 = vadd.xlane.f32.xlu0 %v6000
        %v6022 = vpop.xlane.xlu0 %6021
        %6023 = vadd.xlane.f32.xlu0 %v6001
        %v6024 = vpop.xlane.xlu0 %6023
        %6025 = vadd.xlane.f32.xlu0 %v6002
        %v6026 = vpop.xlane.xlu0 %6025
        %6027 = vadd.xlane.f32.xlu0 %v6003
        %v6028 = vpop.xlane.xlu0 %6027
        %6029 = vadd.xlane.f32.xlu0 %v6004
        %v6030 = vpop.xlane.xlu0 %6029
        %6031 = vadd.xlane.f32.xlu0 %v6005
        %v6032 = vpop.xlane.xlu0 %6031
        %6033 = vadd.xlane.f32.xlu0 %v6006
        %v6034 = vpop.xlane.xlu0 %6033
        %6035 = vadd.xlane.f32.xlu0 %v6007
        %v6036 = vpop.xlane.xlu0 %6035
        %6037 = vadd.xlane.f32.xlu0 %v6008
        %v6038 = vpop.xlane.xlu0 %6037
        %6039 = vadd.xlane.f32.xlu0 %v6009
        %v6040 = vpop.xlane.xlu0 %6039
        %6041 = vadd.xlane.f32.xlu0 %v6010
        %v6042 = vpop.xlane.xlu0 %6041
        %v6043 = vsel %vm402, 1e+30, %v5964
        %v6044 = vsel %vm403, 1e+30, %v5966
        %v6045 = vsel %vm404, 1e+30, %v5968
        %v6046 = vsel %vm405, 1e+30, %v5970
        %v6047 = vsel %vm406, 1e+30, %v5972
        %v6048 = vsel %vm407, 1e+30, %v5974
        %v6049 = vsel %vm408, 1e+30, %v5976
        %v6050 = vsel %vm409, 1e+30, %v5978
        %v6051 = vsel %vm410, 1e+30, %v5980
        %v6052 = vsel %vm411, 1e+30, %v5982
        %v6053 = vsel %vm412, 1e+30, %v5984
        %v6054 = vsel %vm413, 1e+30, %v5986
        %v6055 = vsel %vm414, 1e+30, %v5988
        %v6056 = vsel %vm415, 1e+30, %v5990
        %v6057 = vsel %vm416, 1e+30, %v5992
        %v6058 = vsel %vm417, 1e+30, %v5994
        %v6059 = vld [vmem:[%s269 + $0x6] sm:$0x1]
        %v6060 = vlaneseq
        %v6061 = vshrl.u32 %v6060, 7
        %v6062 = vsub.s32 0, %v6061
        %v6063 = vrot.slane %v6059, %v6062
        %vm6064 = vcmp.le.f32.partialorder %v6012, %v6063
        %vm6065 = vcmp.le.f32.partialorder %v6014, %v6063
        %vm6066 = vcmp.le.f32.partialorder %v6016, %v6063
        %vm6067 = vcmp.le.f32.partialorder %v6018, %v6063
        %vm6068 = vcmp.le.f32.partialorder %v6020, %v6063
        %vm6069 = vcmp.le.f32.partialorder %v6022, %v6063
        %vm6070 = vcmp.le.f32.partialorder %v6024, %v6063
        %vm6071 = vcmp.le.f32.partialorder %v6026, %v6063
        %vm6072 = vcmp.le.f32.partialorder %v6028, %v6063
        %vm6073 = vcmp.le.f32.partialorder %v6030, %v6063
        %vm6074 = vcmp.le.f32.partialorder %v6032, %v6063
        %vm6075 = vcmp.le.f32.partialorder %v6034, %v6063
        %vm6076 = vcmp.le.f32.partialorder %v6036, %v6063
        %vm6077 = vcmp.le.f32.partialorder %v6038, %v6063
        %vm6078 = vcmp.le.f32.partialorder %v6040, %v6063
        %vm6079 = vcmp.le.f32.partialorder %v6042, %v6063
        %vm6080 = vcmp.lt.f32.partialorder %v6063, %v6043
        %vm6081 = vcmp.lt.f32.partialorder %v6063, %v6044
        %vm6082 = vcmp.lt.f32.partialorder %v6063, %v6045
        %vm6083 = vcmp.lt.f32.partialorder %v6063, %v6046
        %vm6084 = vcmp.lt.f32.partialorder %v6063, %v6047
        %vm6085 = vcmp.lt.f32.partialorder %v6063, %v6048
        %vm6086 = vcmp.lt.f32.partialorder %v6063, %v6049
        %vm6087 = vcmp.lt.f32.partialorder %v6063, %v6050
        %vm6088 = vcmp.lt.f32.partialorder %v6063, %v6051
        %vm6089 = vcmp.lt.f32.partialorder %v6063, %v6052
        %vm6090 = vcmp.lt.f32.partialorder %v6063, %v6053
        %vm6091 = vcmp.lt.f32.partialorder %v6063, %v6054
        %vm6092 = vcmp.lt.f32.partialorder %v6063, %v6055
        %vm6093 = vcmp.lt.f32.partialorder %v6063, %v6056
        %vm6094 = vcmp.lt.f32.partialorder %v6063, %v6057
        %vm6095 = vcmp.lt.f32.partialorder %v6063, %v6058
        %vm6096 = vmand %vm6064, %vm6080
        %vm6097 = vmand %vm6065, %vm6081
        %vm6098 = vmand %vm6066, %vm6082
        %vm6099 = vmand %vm6067, %vm6083
        %vm6100 = vmand %vm6068, %vm6084
        %vm6101 = vmand %vm6069, %vm6085
        %vm6102 = vmand %vm6070, %vm6086
        %vm6103 = vmand %vm6071, %vm6087
        %vm6104 = vmand %vm6072, %vm6088
        %vm6105 = vmand %vm6073, %vm6089
        %vm6106 = vmand %vm6074, %vm6090
        %vm6107 = vmand %vm6075, %vm6091
        %vm6108 = vmand %vm6076, %vm6092
        %vm6109 = vmand %vm6077, %vm6093
        %vm6110 = vmand %vm6078, %vm6094
        %vm6111 = vmand %vm6079, %vm6095
        %v6112 = vsel %vm6096, 1, 0
        %v6113 = vsel %vm6097, 1, 0
        %v6114 = vsel %vm6098, 1, 0
        %v6115 = vsel %vm6099, 1, 0
        %v6116 = vsel %vm6100, 1, 0
        %v6117 = vsel %vm6101, 1, 0
        %v6118 = vsel %vm6102, 1, 0
        %v6119 = vsel %vm6103, 1, 0
        %v6120 = vsel %vm6104, 1, 0
        %v6121 = vsel %vm6105, 1, 0
        %v6122 = vsel %vm6106, 1, 0
        %v6123 = vsel %vm6107, 1, 0
        %v6124 = vsel %vm6108, 1, 0
        %v6125 = vsel %vm6109, 1, 0
        %v6126 = vsel %vm6110, 1, 0
        %v6127 = vsel %vm6111, 1, 0
        %v6128 = vcvt.s32.f32 %v6112
        %v6129 = vcvt.s32.f32 %v6113
        %v6130 = vcvt.s32.f32 %v6114
        %v6131 = vcvt.s32.f32 %v6115
        %v6132 = vcvt.s32.f32 %v6116
        %v6133 = vcvt.s32.f32 %v6117
        %v6134 = vcvt.s32.f32 %v6118
        %v6135 = vcvt.s32.f32 %v6119
        %v6136 = vcvt.s32.f32 %v6120
        %v6137 = vcvt.s32.f32 %v6121
        %v6138 = vcvt.s32.f32 %v6122
        %v6139 = vcvt.s32.f32 %v6123
        %v6140 = vcvt.s32.f32 %v6124
        %v6141 = vcvt.s32.f32 %v6125
        %v6142 = vcvt.s32.f32 %v6126
        %v6143 = vcvt.s32.f32 %v6127
        %s6144 = scalar_lea.vmem %s217, 112 [#allocation2]
        %v6145 = vld [vmem:[%s6144] sm:$0xff]
        %v6146 = vld [vmem:[%s6144 + $0x8] sm:$0xff]
        %v6147 = vmul.f32 %v6145, 0.1
        %v6148 = vmul.f32 %v6146, 0.1
        %6149 = vmatprep.subr.mxu0 0.0
        %v6150 = vand.u32 %v6128, 4294901760
        %6151 = vmatpush1.msra.mxu0 %v6150
        %6152 = vmatprep.subr.mxu0 0.0
        %v6153 = vand.u32 %v6129, 4294901760
        %6154 = vmatpush1.msra.mxu0 %v6153
        %6155 = vmatprep.subr.mxu0 0.0
        %v6156 = vand.u32 %v6130, 4294901760
        %6157 = vmatpush1.msra.mxu0 %v6156
        %6158 = vmatprep.subr.mxu0 0.0
        %v6159 = vand.u32 %v6131, 4294901760
        %6160 = vmatpush1.msra.mxu0 %v6159
        %6161 = vmatprep.subr.mxu0 0.0
        %v6162 = vand.u32 %v6132, 4294901760
        %6163 = vmatpush1.msra.mxu0 %v6162
        %6164 = vmatprep.subr.mxu0 0.0
        %v6165 = vand.u32 %v6133, 4294901760
        %6166 = vmatpush1.msra.mxu0 %v6165
        %6167 = vmatprep.subr.mxu0 0.0
        %v6168 = vand.u32 %v6134, 4294901760
        %6169 = vmatpush1.msra.mxu0 %v6168
        %6170 = vmatprep.subr.mxu0 0.0
        %v6171 = vand.u32 %v6135, 4294901760
        %6172 = vmatpush1.msra.mxu0 %v6171
        %6173 = vmatprep.subr.mxu0 0.0
        %v6174 = vand.u32 %v6136, 4294901760
        %6175 = vmatpush1.msra.mxu0 %v6174
        %6176 = vmatprep.subr.mxu0 0.0
        %v6177 = vand.u32 %v6137, 4294901760
        %6178 = vmatpush1.msra.mxu0 %v6177
        %6179 = vmatprep.subr.mxu0 0.0
        %v6180 = vand.u32 %v6138, 4294901760
        %6181 = vmatpush1.msra.mxu0 %v6180
        %6182 = vmatprep.subr.mxu0 0.0
        %v6183 = vand.u32 %v6139, 4294901760
        %6184 = vmatpush1.msra.mxu0 %v6183
        %6185 = vmatprep.subr.mxu0 0.0
        %v6186 = vand.u32 %v6140, 4294901760
        %6187 = vmatpush1.msra.mxu0 %v6186
        %6188 = vmatprep.subr.mxu0 0.0
        %v6189 = vand.u32 %v6141, 4294901760
        %6190 = vmatpush1.msra.mxu0 %v6189
        %6191 = vmatprep.subr.mxu0 0.0
        %v6192 = vand.u32 %v6142, 4294901760
        %6193 = vmatpush1.msra.mxu0 %v6192
        %6194 = vmatprep.subr.mxu0 0.0
        %v6195 = vand.u32 %v6143, 4294901760
        %6196 = vmatpush1.msra.mxu0 %v6195
        %6197 = vmatprep.subr.mxu0 0.0
        %6198 = vmatpush1.msra.mxu0 0.0
        %6199 = vmatprep.subr.mxu0 0.0
        %6200 = vmatpush1.msra.mxu0 0.0
        %6201 = vmatprep.subr.mxu0 0.0
        %6202 = vmatpush1.msra.mxu0 0.0
        %6203 = vmatprep.subr.mxu0 0.0
        %6204 = vmatpush1.msra.mxu0 0.0
        %6205 = vmatprep.subr.mxu0 0.0
        %6206 = vmatpush1.msra.mxu0 0.0
        %6207 = vmatprep.subr.mxu0 0.0
        %6208 = vmatpush1.msra.mxu0 0.0
        %6209 = vmatprep.subr.mxu0 0.0
        %6210 = vmatpush1.msra.mxu0 0.0
        %6211 = vmatprep.subr.mxu0 0.0
        %6212 = vmatpush1.msra.mxu0 0.0
        %6213 = vmatprep.subr.mxu0 0.0
        %6214 = vmatpush1.msra.mxu0 0.0
        %6215 = vmatprep.subr.mxu0 0.0
        %6216 = vmatpush1.msra.mxu0 0.0
        %6217 = vmatprep.subr.mxu0 0.0
        %6218 = vmatpush1.msra.mxu0 0.0
        %6219 = vmatprep.subr.mxu0 0.0
        %6220 = vmatpush1.msra.mxu0 0.0
        %6221 = vmatprep.subr.mxu0 0.0
        %6222 = vmatpush1.msra.mxu0 0.0
        %6223 = vmatprep.subr.mxu0 0.0
        %6224 = vmatpush1.msra.mxu0 0.0
        %6225 = vmatprep.subr.mxu0 0.0
        %6226 = vmatpush1.msra.mxu0 0.0
        %6227 = vmatprep.subr.mxu0 0.0
        %6228 = vmatpush1.msra.mxu0 0.0
        %6229 = vmatprep.mubr.f32.mxu0 0.0
        %v6230 = vand.u32 %v5909, 4294901760
        %v6231 = vsub.f32 %v5909, %v6230
        %v6232 = vand.u32 %v6231, 4294901760
        %v6233 = vsub.f32 %v6231, %v6232
        %v6234 = vand.u32 %v6233, 4294901760
        %6235 = vmatmul.mubr.f32.gmra.mrb[0].mxu0 %v6234
        %v6236 = vpop.f32.mrb[0].mxu0
        %v6237 = vadd.f32 %v6147, %v6236
        %v6238 = vpop.f32.mrb[0].mxu0
        %6239 = vmatprep.mubr.f32.mxu0 0.0
        %v6240 = vand.u32 %v5915, 4294901760
        %v6241 = vsub.f32 %v5915, %v6240
        %v6242 = vand.u32 %v6241, 4294901760
        %v6243 = vsub.f32 %v6241, %v6242
        %v6244 = vand.u32 %v6243, 4294901760
        %6245 = vmatmul.mubr.f32.gmra.mrb[0].mxu0 %v6244
        %v6246 = vpop.f32.mrb[0].mxu0
        %v6247 = vadd.f32 %v6148, %v6246
        %v6248 = vpop.f32.mrb[0].mxu0
        %6249 = vdwg.mxu0
        %6250 = vmatprep.subr.mxu0 0.0
        %v6251 = vand.u32 %v6128, 4294901760
        %v6252 = vsub.f32 %v6128, %v6251
        %v6253 = vand.u32 %v6252, 4294901760
        %v6254 = vsub.f32 %v6252, %v6253
        %v6255 = vand.u32 %v6254, 4294901760
        %6256 = vmatpush1.msra.mxu0 %v6255
        %6257 = vmatprep.subr.mxu0 0.0
        %v6258 = vand.u32 %v6129, 4294901760
        %v6259 = vsub.f32 %v6129, %v6258
        %v6260 = vand.u32 %v6259, 4294901760
        %v6261 = vsub.f32 %v6259, %v6260
        %v6262 = vand.u32 %v6261, 4294901760
        %6263 = vmatpush1.msra.mxu0 %v6262
        %6264 = vmatprep.subr.mxu0 0.0
        %v6265 = vand.u32 %v6130, 4294901760
        %v6266 = vsub.f32 %v6130, %v6265
        %v6267 = vand.u32 %v6266, 4294901760
        %v6268 = vsub.f32 %v6266, %v6267
        %v6269 = vand.u32 %v6268, 4294901760
        %6270 = vmatpush1.msra.mxu0 %v6269
        %6271 = vmatprep.subr.mxu0 0.0
        %v6272 = vand.u32 %v6131, 4294901760
        %v6273 = vsub.f32 %v6131, %v6272
        %v6274 = vand.u32 %v6273, 4294901760
        %v6275 = vsub.f32 %v6273, %v6274
        %v6276 = vand.u32 %v6275, 4294901760
        %6277 = vmatpush1.msra.mxu0 %v6276
        %6278 = vmatprep.subr.mxu0 0.0
        %v6279 = vand.u32 %v6132, 4294901760
        %v6280 = vsub.f32 %v6132, %v6279
        %v6281 = vand.u32 %v6280, 4294901760
        %v6282 = vsub.f32 %v6280, %v6281
        %v6283 = vand.u32 %v6282, 4294901760
        %6284 = vmatpush1.msra.mxu0 %v6283
        %6285 = vmatprep.subr.mxu0 0.0
        %v6286 = vand.u32 %v6133, 4294901760
        %v6287 = vsub.f32 %v6133, %v6286
        %v6288 = vand.u32 %v6287, 4294901760
        %v6289 = vsub.f32 %v6287, %v6288
        %v6290 = vand.u32 %v6289, 4294901760
        %6291 = vmatpush1.msra.mxu0 %v6290
        %6292 = vmatprep.subr.mxu0 0.0
        %v6293 = vand.u32 %v6134, 4294901760
        %v6294 = vsub.f32 %v6134, %v6293
        %v6295 = vand.u32 %v6294, 4294901760
        %v6296 = vsub.f32 %v6294, %v6295
        %v6297 = vand.u32 %v6296, 4294901760
        %6298 = vmatpush1.msra.mxu0 %v6297
        %6299 = vmatprep.subr.mxu0 0.0
        %v6300 = vand.u32 %v6135, 4294901760
        %v6301 = vsub.f32 %v6135, %v6300
        %v6302 = vand.u32 %v6301, 4294901760
        %v6303 = vsub.f32 %v6301, %v6302
        %v6304 = vand.u32 %v6303, 4294901760
        %6305 = vmatpush1.msra.mxu0 %v6304
        %6306 = vmatprep.subr.mxu0 0.0
        %v6307 = vand.u32 %v6136, 4294901760
        %v6308 = vsub.f32 %v6136, %v6307
        %v6309 = vand.u32 %v6308, 4294901760
        %v6310 = vsub.f32 %v6308, %v6309
        %v6311 = vand.u32 %v6310, 4294901760
        %6312 = vmatpush1.msra.mxu0 %v6311
        %6313 = vmatprep.subr.mxu0 0.0
        %v6314 = vand.u32 %v6137, 4294901760
        %v6315 = vsub.f32 %v6137, %v6314
        %v6316 = vand.u32 %v6315, 4294901760
        %v6317 = vsub.f32 %v6315, %v6316
        %v6318 = vand.u32 %v6317, 4294901760
        %6319 = vmatpush1.msra.mxu0 %v6318
        %6320 = vmatprep.subr.mxu0 0.0
        %v6321 = vand.u32 %v6138, 4294901760
        %v6322 = vsub.f32 %v6138, %v6321
        %v6323 = vand.u32 %v6322, 4294901760
        %v6324 = vsub.f32 %v6322, %v6323
        %v6325 = vand.u32 %v6324, 4294901760
        %6326 = vmatpush1.msra.mxu0 %v6325
        %6327 = vmatprep.subr.mxu0 0.0
        %v6328 = vand.u32 %v6139, 4294901760
        %v6329 = vsub.f32 %v6139, %v6328
        %v6330 = vand.u32 %v6329, 4294901760
        %v6331 = vsub.f32 %v6329, %v6330
        %v6332 = vand.u32 %v6331, 4294901760
        %6333 = vmatpush1.msra.mxu0 %v6332
        %6334 = vmatprep.subr.mxu0 0.0
        %v6335 = vand.u32 %v6140, 4294901760
        %v6336 = vsub.f32 %v6140, %v6335
        %v6337 = vand.u32 %v6336, 4294901760
        %v6338 = vsub.f32 %v6336, %v6337
        %v6339 = vand.u32 %v6338, 4294901760
        %6340 = vmatpush1.msra.mxu0 %v6339
        %6341 = vmatprep.subr.mxu0 0.0
        %v6342 = vand.u32 %v6141, 4294901760
        %v6343 = vsub.f32 %v6141, %v6342
        %v6344 = vand.u32 %v6343, 4294901760
        %v6345 = vsub.f32 %v6343, %v6344
        %v6346 = vand.u32 %v6345, 4294901760
        %6347 = vmatpush1.msra.mxu0 %v6346
        %6348 = vmatprep.subr.mxu0 0.0
        %v6349 = vand.u32 %v6142, 4294901760
        %v6350 = vsub.f32 %v6142, %v6349
        %v6351 = vand.u32 %v6350, 4294901760
        %v6352 = vsub.f32 %v6350, %v6351
        %v6353 = vand.u32 %v6352, 4294901760
        %6354 = vmatpush1.msra.mxu0 %v6353
        %6355 = vmatprep.subr.mxu0 0.0
        %v6356 = vand.u32 %v6143, 4294901760
        %v6357 = vsub.f32 %v6143, %v6356
        %v6358 = vand.u32 %v6357, 4294901760
        %v6359 = vsub.f32 %v6357, %v6358
        %v6360 = vand.u32 %v6359, 4294901760
        %6361 = vmatpush1.msra.mxu0 %v6360
        %6362 = vmatprep.subr.mxu0 0.0
        %6363 = vmatpush1.msra.mxu0 0.0
        %6364 = vmatprep.subr.mxu0 0.0
        %6365 = vmatpush1.msra.mxu0 0.0
        %6366 = vmatprep.subr.mxu0 0.0
        %6367 = vmatpush1.msra.mxu0 0.0
        %6368 = vmatprep.subr.mxu0 0.0
        %6369 = vmatpush1.msra.mxu0 0.0
        %6370 = vmatprep.subr.mxu0 0.0
        %6371 = vmatpush1.msra.mxu0 0.0
        %6372 = vmatprep.subr.mxu0 0.0
        %6373 = vmatpush1.msra.mxu0 0.0
        %6374 = vmatprep.subr.mxu0 0.0
        %6375 = vmatpush1.msra.mxu0 0.0
        %6376 = vmatprep.subr.mxu0 0.0
        %6377 = vmatpush1.msra.mxu0 0.0
        %6378 = vmatprep.subr.mxu0 0.0
        %6379 = vmatpush1.msra.mxu0 0.0
        %6380 = vmatprep.subr.mxu0 0.0
        %6381 = vmatpush1.msra.mxu0 0.0
        %6382 = vmatprep.subr.mxu0 0.0
        %6383 = vmatpush1.msra.mxu0 0.0
        %6384 = vmatprep.subr.mxu0 0.0
        %6385 = vmatpush1.msra.mxu0 0.0
        %6386 = vmatprep.subr.mxu0 0.0
        %6387 = vmatpush1.msra.mxu0 0.0
        %6388 = vmatprep.subr.mxu0 0.0
        %6389 = vmatpush1.msra.mxu0 0.0
        %6390 = vmatprep.subr.mxu0 0.0
        %6391 = vmatpush1.msra.mxu0 0.0
        %6392 = vmatprep.subr.mxu0 0.0
        %6393 = vmatpush1.msra.mxu0 0.0
        %6394 = vmatprep.mubr.f32.mxu0 0.0
        %v6395 = vand.u32 %v5909, 4294901760
        %6396 = vmatmul.mubr.f32.gmra.mrb[0].mxu0 %v6395
        %v6397 = vpop.f32.mrb[0].mxu0
        %v6398 = vadd.f32 %v6237, %v6397
        %v6399 = vpop.f32.mrb[0].mxu0
        %6400 = vmatprep.mubr.f32.mxu0 0.0
        %v6401 = vand.u32 %v5915, 4294901760
        %6402 = vmatmul.mubr.f32.gmra.mrb[0].mxu0 %v6401
        %v6403 = vpop.f32.mrb[0].mxu0
        %v6404 = vadd.f32 %v6247, %v6403
        %v6405 = vpop.f32.mrb[0].mxu0
        %6406 = vdwg.mxu0
        %6407 = vmatprep.subr.mxu0 0.0
        %v6408 = vand.u32 %v6128, 4294901760
        %v6409 = vsub.f32 %v6128, %v6408
        %6410 = vmatpush1.msra.mxu0 %v6409
        %6411 = vmatprep.subr.mxu0 0.0
        %v6412 = vand.u32 %v6129, 4294901760
        %v6413 = vsub.f32 %v6129, %v6412
        %6414 = vmatpush1.msra.mxu0 %v6413
        %6415 = vmatprep.subr.mxu0 0.0
        %v6416 = vand.u32 %v6130, 4294901760
        %v6417 = vsub.f32 %v6130, %v6416
        %6418 = vmatpush1.msra.mxu0 %v6417
        %6419 = vmatprep.subr.mxu0 0.0
        %v6420 = vand.u32 %v6131, 4294901760
        %v6421 = vsub.f32 %v6131, %v6420
        %6422 = vmatpush1.msra.mxu0 %v6421
        %6423 = vmatprep.subr.mxu0 0.0
        %v6424 = vand.u32 %v6132, 4294901760
        %v6425 = vsub.f32 %v6132, %v6424
        %6426 = vmatpush1.msra.mxu0 %v6425
        %6427 = vmatprep.subr.mxu0 0.0
        %v6428 = vand.u32 %v6133, 4294901760
        %v6429 = vsub.f32 %v6133, %v6428
        %6430 = vmatpush1.msra.mxu0 %v6429
        %6431 = vmatprep.subr.mxu0 0.0
        %v6432 = vand.u32 %v6134, 4294901760
        %v6433 = vsub.f32 %v6134, %v6432
        %6434 = vmatpush1.msra.mxu0 %v6433
        %6435 = vmatprep.subr.mxu0 0.0
        %v6436 = vand.u32 %v6135, 4294901760
        %v6437 = vsub.f32 %v6135, %v6436
        %6438 = vmatpush1.msra.mxu0 %v6437
        %6439 = vmatprep.subr.mxu0 0.0
        %v6440 = vand.u32 %v6136, 4294901760
        %v6441 = vsub.f32 %v6136, %v6440
        %6442 = vmatpush1.msra.mxu0 %v6441
        %6443 = vmatprep.subr.mxu0 0.0
        %v6444 = vand.u32 %v6137, 4294901760
        %v6445 = vsub.f32 %v6137, %v6444
        %6446 = vmatpush1.msra.mxu0 %v6445
        %6447 = vmatprep.subr.mxu0 0.0
        %v6448 = vand.u32 %v6138, 4294901760
        %v6449 = vsub.f32 %v6138, %v6448
        %6450 = vmatpush1.msra.mxu0 %v6449
        %6451 = vmatprep.subr.mxu0 0.0
        %v6452 = vand.u32 %v6139, 4294901760
        %v6453 = vsub.f32 %v6139, %v6452
        %6454 = vmatpush1.msra.mxu0 %v6453
        %6455 = vmatprep.subr.mxu0 0.0
        %v6456 = vand.u32 %v6140, 4294901760
        %v6457 = vsub.f32 %v6140, %v6456
        %6458 = vmatpush1.msra.mxu0 %v6457
        %6459 = vmatprep.subr.mxu0 0.0
        %v6460 = vand.u32 %v6141, 4294901760
        %v6461 = vsub.f32 %v6141, %v6460
        %6462 = vmatpush1.msra.mxu0 %v6461
        %6463 = vmatprep.subr.mxu0 0.0
        %v6464 = vand.u32 %v6142, 4294901760
        %v6465 = vsub.f32 %v6142, %v6464
        %6466 = vmatpush1.msra.mxu0 %v6465
        %6467 = vmatprep.subr.mxu0 0.0
        %v6468 = vand.u32 %v6143, 4294901760
        %v6469 = vsub.f32 %v6143, %v6468
        %6470 = vmatpush1.msra.mxu0 %v6469
        %6471 = vmatprep.subr.mxu0 0.0
        %6472 = vmatpush1.msra.mxu0 0.0
        %6473 = vmatprep.subr.mxu0 0.0
        %6474 = vmatpush1.msra.mxu0 0.0
        %6475 = vmatprep.subr.mxu0 0.0
        %6476 = vmatpush1.msra.mxu0 0.0
        %6477 = vmatprep.subr.mxu0 0.0
        %6478 = vmatpush1.msra.mxu0 0.0
        %6479 = vmatprep.subr.mxu0 0.0
        %6480 = vmatpush1.msra.mxu0 0.0
        %6481 = vmatprep.subr.mxu0 0.0
        %6482 = vmatpush1.msra.mxu0 0.0
        %6483 = vmatprep.subr.mxu0 0.0
        %6484 = vmatpush1.msra.mxu0 0.0
        %6485 = vmatprep.subr.mxu0 0.0
        %6486 = vmatpush1.msra.mxu0 0.0
        %6487 = vmatprep.subr.mxu0 0.0
        %6488 = vmatpush1.msra.mxu0 0.0
        %6489 = vmatprep.subr.mxu0 0.0
        %6490 = vmatpush1.msra.mxu0 0.0
        %6491 = vmatprep.subr.mxu0 0.0
        %6492 = vmatpush1.msra.mxu0 0.0
        %6493 = vmatprep.subr.mxu0 0.0
        %6494 = vmatpush1.msra.mxu0 0.0
        %6495 = vmatprep.subr.mxu0 0.0
        %6496 = vmatpush1.msra.mxu0 0.0
        %6497 = vmatprep.subr.mxu0 0.0
        %6498 = vmatpush1.msra.mxu0 0.0
        %6499 = vmatprep.subr.mxu0 0.0
        %6500 = vmatpush1.msra.mxu0 0.0
        %6501 = vmatprep.subr.mxu0 0.0
        %6502 = vmatpush1.msra.mxu0 0.0
        %6503 = vmatprep.mubr.f32.mxu0 0.0
        %v6504 = vand.u32 %v5909, 4294901760
        %v6505 = vsub.f32 %v5909, %v6504
        %6506 = vmatmul.mubr.f32.gmra.mrb[0].mxu0 %v6505
        %v6507 = vpop.f32.mrb[0].mxu0
        %v6508 = vadd.f32 %v6398, %v6507
        %v6509 = vpop.f32.mrb[0].mxu0
        %6510 = vmatprep.mubr.f32.mxu0 0.0
        %v6511 = vand.u32 %v5915, 4294901760
        %v6512 = vsub.f32 %v5915, %v6511
        %6513 = vmatmul.mubr.f32.gmra.mrb[0].mxu0 %v6512
        %v6514 = vpop.f32.mrb[0].mxu0
        %v6515 = vadd.f32 %v6404, %v6514
        %v6516 = vpop.f32.mrb[0].mxu0
        %6517 = vdwg.mxu0
        %6518 = vmatprep.subr.mxu0 0.0
        %v6519 = vand.u32 %v6128, 4294901760
        %6520 = vmatpush1.msra.mxu0 %v6519
        %6521 = vmatprep.subr.mxu0 0.0
        %v6522 = vand.u32 %v6129, 4294901760
        %6523 = vmatpush1.msra.mxu0 %v6522
        %6524 = vmatprep.subr.mxu0 0.0
        %v6525 = vand.u32 %v6130, 4294901760
        %6526 = vmatpush1.msra.mxu0 %v6525
        %6527 = vmatprep.subr.mxu0 0.0
        %v6528 = vand.u32 %v6131, 4294901760
        %6529 = vmatpush1.msra.mxu0 %v6528
        %6530 = vmatprep.subr.mxu0 0.0
        %v6531 = vand.u32 %v6132, 4294901760
        %6532 = vmatpush1.msra.mxu0 %v6531
        %6533 = vmatprep.subr.mxu0 0.0
        %v6534 = vand.u32 %v6133, 4294901760
        %6535 = vmatpush1.msra.mxu0 %v6534
        %6536 = vmatprep.subr.mxu0 0.0
        %v6537 = vand.u32 %v6134, 4294901760
        %6538 = vmatpush1.msra.mxu0 %v6537
        %6539 = vmatprep.subr.mxu0 0.0
        %v6540 = vand.u32 %v6135, 4294901760
        %6541 = vmatpush1.msra.mxu0 %v6540
        %6542 = vmatprep.subr.mxu0 0.0
        %v6543 = vand.u32 %v6136, 4294901760
        %6544 = vmatpush1.msra.mxu0 %v6543
        %6545 = vmatprep.subr.mxu0 0.0
        %v6546 = vand.u32 %v6137, 4294901760
        %6547 = vmatpush1.msra.mxu0 %v6546
        %6548 = vmatprep.subr.mxu0 0.0
        %v6549 = vand.u32 %v6138, 4294901760
        %6550 = vmatpush1.msra.mxu0 %v6549
        %6551 = vmatprep.subr.mxu0 0.0
        %v6552 = vand.u32 %v6139, 4294901760
        %6553 = vmatpush1.msra.mxu0 %v6552
        %6554 = vmatprep.subr.mxu0 0.0
        %v6555 = vand.u32 %v6140, 4294901760
        %6556 = vmatpush1.msra.mxu0 %v6555
        %6557 = vmatprep.subr.mxu0 0.0
        %v6558 = vand.u32 %v6141, 4294901760
        %6559 = vmatpush1.msra.mxu0 %v6558
        %6560 = vmatprep.subr.mxu0 0.0
        %v6561 = vand.u32 %v6142, 4294901760
        %6562 = vmatpush1.msra.mxu0 %v6561
        %6563 = vmatprep.subr.mxu0 0.0
        %v6564 = vand.u32 %v6143, 4294901760
        %6565 = vmatpush1.msra.mxu0 %v6564
        %6566 = vmatprep.subr.mxu0 0.0
        %6567 = vmatpush1.msra.mxu0 0.0
        %6568 = vmatprep.subr.mxu0 0.0
        %6569 = vmatpush1.msra.mxu0 0.0
        %6570 = vmatprep.subr.mxu0 0.0
        %6571 = vmatpush1.msra.mxu0 0.0
        %6572 = vmatprep.subr.mxu0 0.0
        %6573 = vmatpush1.msra.mxu0 0.0
        %6574 = vmatprep.subr.mxu0 0.0
        %6575 = vmatpush1.msra.mxu0 0.0
        %6576 = vmatprep.subr.mxu0 0.0
        %6577 = vmatpush1.msra.mxu0 0.0
        %6578 = vmatprep.subr.mxu0 0.0
        %6579 = vmatpush1.msra.mxu0 0.0
        %6580 = vmatprep.subr.mxu0 0.0
        %6581 = vmatpush1.msra.mxu0 0.0
        %6582 = vmatprep.subr.mxu0 0.0
        %6583 = vmatpush1.msra.mxu0 0.0
        %6584 = vmatprep.subr.mxu0 0.0
        %6585 = vmatpush1.msra.mxu0 0.0
        %6586 = vmatprep.subr.mxu0 0.0
        %6587 = vmatpush1.msra.mxu0 0.0
        %6588 = vmatprep.subr.mxu0 0.0
        %6589 = vmatpush1.msra.mxu0 0.0
        %6590 = vmatprep.subr.mxu0 0.0
        %6591 = vmatpush1.msra.mxu0 0.0
        %6592 = vmatprep.subr.mxu0 0.0
        %6593 = vmatpush1.msra.mxu0 0.0
        %6594 = vmatprep.subr.mxu0 0.0
        %6595 = vmatpush1.msra.mxu0 0.0
        %6596 = vmatprep.subr.mxu0 0.0
        %6597 = vmatpush1.msra.mxu0 0.0
        %6598 = vmatprep.mubr.f32.mxu0 0.0
        %v6599 = vand.u32 %v5909, 4294901760
        %v6600 = vsub.f32 %v5909, %v6599
        %v6601 = vand.u32 %v6600, 4294901760
        %6602 = vmatmul.mubr.f32.gmra.mrb[0].mxu0 %v6601
        %v6603 = vpop.f32.mrb[0].mxu0
        %v6604 = vadd.f32 %v6508, %v6603
        %v6605 = vpop.f32.mrb[0].mxu0
        %6606 = vmatprep.mubr.f32.mxu0 0.0
        %v6607 = vand.u32 %v5915, 4294901760
        %v6608 = vsub.f32 %v5915, %v6607
        %v6609 = vand.u32 %v6608, 4294901760
        %6610 = vmatmul.mubr.f32.gmra.mrb[0].mxu0 %v6609
        %v6611 = vpop.f32.mrb[0].mxu0
        %v6612 = vadd.f32 %v6515, %v6611
        %v6613 = vpop.f32.mrb[0].mxu0
        %6614 = vdwg.mxu0
        %6615 = vmatprep.subr.mxu0 0.0
        %v6616 = vand.u32 %v6128, 4294901760
        %v6617 = vsub.f32 %v6128, %v6616
        %v6618 = vand.u32 %v6617, 4294901760
        %6619 = vmatpush1.msra.mxu0 %v6618
        %6620 = vmatprep.subr.mxu0 0.0
        %v6621 = vand.u32 %v6129, 4294901760
        %v6622 = vsub.f32 %v6129, %v6621
        %v6623 = vand.u32 %v6622, 4294901760
        %6624 = vmatpush1.msra.mxu0 %v6623
        %6625 = vmatprep.subr.mxu0 0.0
        %v6626 = vand.u32 %v6130, 4294901760
        %v6627 = vsub.f32 %v6130, %v6626
        %v6628 = vand.u32 %v6627, 4294901760
        %6629 = vmatpush1.msra.mxu0 %v6628
        %6630 = vmatprep.subr.mxu0 0.0
        %v6631 = vand.u32 %v6131, 4294901760
        %v6632 = vsub.f32 %v6131, %v6631
        %v6633 = vand.u32 %v6632, 4294901760
        %6634 = vmatpush1.msra.mxu0 %v6633
        %6635 = vmatprep.subr.mxu0 0.0
        %v6636 = vand.u32 %v6132, 4294901760
        %v6637 = vsub.f32 %v6132, %v6636
        %v6638 = vand.u32 %v6637, 4294901760
        %6639 = vmatpush1.msra.mxu0 %v6638
        %6640 = vmatprep.subr.mxu0 0.0
        %v6641 = vand.u32 %v6133, 4294901760
        %v6642 = vsub.f32 %v6133, %v6641
        %v6643 = vand.u32 %v6642, 4294901760
        %6644 = vmatpush1.msra.mxu0 %v6643
        %6645 = vmatprep.subr.mxu0 0.0
        %v6646 = vand.u32 %v6134, 4294901760
        %v6647 = vsub.f32 %v6134, %v6646
        %v6648 = vand.u32 %v6647, 4294901760
        %6649 = vmatpush1.msra.mxu0 %v6648
        %6650 = vmatprep.subr.mxu0 0.0
        %v6651 = vand.u32 %v6135, 4294901760
        %v6652 = vsub.f32 %v6135, %v6651
        %v6653 = vand.u32 %v6652, 4294901760
        %6654 = vmatpush1.msra.mxu0 %v6653
        %6655 = vmatprep.subr.mxu0 0.0
        %v6656 = vand.u32 %v6136, 4294901760
        %v6657 = vsub.f32 %v6136, %v6656
        %v6658 = vand.u32 %v6657, 4294901760
        %6659 = vmatpush1.msra.mxu0 %v6658
        %6660 = vmatprep.subr.mxu0 0.0
        %v6661 = vand.u32 %v6137, 4294901760
        %v6662 = vsub.f32 %v6137, %v6661
        %v6663 = vand.u32 %v6662, 4294901760
        %6664 = vmatpush1.msra.mxu0 %v6663
        %6665 = vmatprep.subr.mxu0 0.0
        %v6666 = vand.u32 %v6138, 4294901760
        %v6667 = vsub.f32 %v6138, %v6666
        %v6668 = vand.u32 %v6667, 4294901760
        %6669 = vmatpush1.msra.mxu0 %v6668
        %6670 = vmatprep.subr.mxu0 0.0
        %v6671 = vand.u32 %v6139, 4294901760
        %v6672 = vsub.f32 %v6139, %v6671
        %v6673 = vand.u32 %v6672, 4294901760
        %6674 = vmatpush1.msra.mxu0 %v6673
        %6675 = vmatprep.subr.mxu0 0.0
        %v6676 = vand.u32 %v6140, 4294901760
        %v6677 = vsub.f32 %v6140, %v6676
        %v6678 = vand.u32 %v6677, 4294901760
        %6679 = vmatpush1.msra.mxu0 %v6678
        %6680 = vmatprep.subr.mxu0 0.0
        %v6681 = vand.u32 %v6141, 4294901760
        %v6682 = vsub.f32 %v6141, %v6681
        %v6683 = vand.u32 %v6682, 4294901760
        %6684 = vmatpush1.msra.mxu0 %v6683
        %6685 = vmatprep.subr.mxu0 0.0
        %v6686 = vand.u32 %v6142, 4294901760
        %v6687 = vsub.f32 %v6142, %v6686
        %v6688 = vand.u32 %v6687, 4294901760
        %6689 = vmatpush1.msra.mxu0 %v6688
        %6690 = vmatprep.subr.mxu0 0.0
        %v6691 = vand.u32 %v6143, 4294901760
        %v6692 = vsub.f32 %v6143, %v6691
        %v6693 = vand.u32 %v6692, 4294901760
        %6694 = vmatpush1.msra.mxu0 %v6693
        %6695 = vmatprep.subr.mxu0 0.0
        %6696 = vmatpush1.msra.mxu0 0.0
        %6697 = vmatprep.subr.mxu0 0.0
        %6698 = vmatpush1.msra.mxu0 0.0
        %6699 = vmatprep.subr.mxu0 0.0
        %6700 = vmatpush1.msra.mxu0 0.0
        %6701 = vmatprep.subr.mxu0 0.0
        %6702 = vmatpush1.msra.mxu0 0.0
        %6703 = vmatprep.subr.mxu0 0.0
        %6704 = vmatpush1.msra.mxu0 0.0
        %6705 = vmatprep.subr.mxu0 0.0
        %6706 = vmatpush1.msra.mxu0 0.0
        %6707 = vmatprep.subr.mxu0 0.0
        %6708 = vmatpush1.msra.mxu0 0.0
        %6709 = vmatprep.subr.mxu0 0.0
        %6710 = vmatpush1.msra.mxu0 0.0
        %6711 = vmatprep.subr.mxu0 0.0
        %6712 = vmatpush1.msra.mxu0 0.0
        %6713 = vmatprep.subr.mxu0 0.0
        %6714 = vmatpush1.msra.mxu0 0.0
        %6715 = vmatprep.subr.mxu0 0.0
        %6716 = vmatpush1.msra.mxu0 0.0
        %6717 = vmatprep.subr.mxu0 0.0
        %6718 = vmatpush1.msra.mxu0 0.0
        %6719 = vmatprep.subr.mxu0 0.0
        %6720 = vmatpush1.msra.mxu0 0.0
        %6721 = vmatprep.subr.mxu0 0.0
        %6722 = vmatpush1.msra.mxu0 0.0
        %6723 = vmatprep.subr.mxu0 0.0
        %6724 = vmatpush1.msra.mxu0 0.0
        %6725 = vmatprep.subr.mxu0 0.0
        %6726 = vmatpush1.msra.mxu0 0.0
        %6727 = vmatprep.mubr.f32.mxu0 0.0
        %v6728 = vand.u32 %v5909, 4294901760
        %6729 = vmatmul.mubr.f32.gmra.mrb[0].mxu0 %v6728
        %v6730 = vpop.f32.mrb[0].mxu0
        %v6731 = vadd.f32 %v6604, %v6730
        %v6732 = vpop.f32.mrb[0].mxu0
        %6733 = vmatprep.mubr.f32.mxu0 0.0
        %v6734 = vand.u32 %v5915, 4294901760
        %6735 = vmatmul.mubr.f32.gmra.mrb[0].mxu0 %v6734
        %v6736 = vpop.f32.mrb[0].mxu0
        %v6737 = vadd.f32 %v6612, %v6736
        %v6738 = vpop.f32.mrb[0].mxu0
        %6739 = vdwg.mxu0
        %6740 = vmatprep.subr.mxu0 0.0
        %v6741 = vand.u32 %v6128, 4294901760
        %6742 = vmatpush1.msra.mxu0 %v6741
        %6743 = vmatprep.subr.mxu0 0.0
        %v6744 = vand.u32 %v6129, 4294901760
        %6745 = vmatpush1.msra.mxu0 %v6744
        %6746 = vmatprep.subr.mxu0 0.0
        %v6747 = vand.u32 %v6130, 4294901760
        %6748 = vmatpush1.msra.mxu0 %v6747
        %6749 = vmatprep.subr.mxu0 0.0
        %v6750 = vand.u32 %v6131, 4294901760
        %6751 = vmatpush1.msra.mxu0 %v6750
        %6752 = vmatprep.subr.mxu0 0.0
        %v6753 = vand.u32 %v6132, 4294901760
        %6754 = vmatpush1.msra.mxu0 %v6753
        %6755 = vmatprep.subr.mxu0 0.0
        %v6756 = vand.u32 %v6133, 4294901760
        %6757 = vmatpush1.msra.mxu0 %v6756
        %6758 = vmatprep.subr.mxu0 0.0
        %v6759 = vand.u32 %v6134, 4294901760
        %6760 = vmatpush1.msra.mxu0 %v6759
        %6761 = vmatprep.subr.mxu0 0.0
        %v6762 = vand.u32 %v6135, 4294901760
        %6763 = vmatpush1.msra.mxu0 %v6762
        %6764 = vmatprep.subr.mxu0 0.0
        %v6765 = vand.u32 %v6136, 4294901760
        %6766 = vmatpush1.msra.mxu0 %v6765
        %6767 = vmatprep.subr.mxu0 0.0
        %v6768 = vand.u32 %v6137, 4294901760
        %6769 = vmatpush1.msra.mxu0 %v6768
        %6770 = vmatprep.subr.mxu0 0.0
        %v6771 = vand.u32 %v6138, 4294901760
        %6772 = vmatpush1.msra.mxu0 %v6771
        %6773 = vmatprep.subr.mxu0 0.0
        %v6774 = vand.u32 %v6139, 4294901760
        %6775 = vmatpush1.msra.mxu0 %v6774
        %6776 = vmatprep.subr.mxu0 0.0
        %v6777 = vand.u32 %v6140, 4294901760
        %6778 = vmatpush1.msra.mxu0 %v6777
        %6779 = vmatprep.subr.mxu0 0.0
        %v6780 = vand.u32 %v6141, 4294901760
        %6781 = vmatpush1.msra.mxu0 %v6780
        %6782 = vmatprep.subr.mxu0 0.0
        %v6783 = vand.u32 %v6142, 4294901760
        %6784 = vmatpush1.msra.mxu0 %v6783
        %6785 = vmatprep.subr.mxu0 0.0
        %v6786 = vand.u32 %v6143, 4294901760
        %6787 = vmatpush1.msra.mxu0 %v6786
        %6788 = vmatprep.subr.mxu0 0.0
        %6789 = vmatpush1.msra.mxu0 0.0
        %6790 = vmatprep.subr.mxu0 0.0
        %6791 = vmatpush1.msra.mxu0 0.0
        %6792 = vmatprep.subr.mxu0 0.0
        %6793 = vmatpush1.msra.mxu0 0.0
        %6794 = vmatprep.subr.mxu0 0.0
        %6795 = vmatpush1.msra.mxu0 0.0
        %6796 = vmatprep.subr.mxu0 0.0
        %6797 = vmatpush1.msra.mxu0 0.0
        %6798 = vmatprep.subr.mxu0 0.0
        %6799 = vmatpush1.msra.mxu0 0.0
        %6800 = vmatprep.subr.mxu0 0.0
        %6801 = vmatpush1.msra.mxu0 0.0
        %6802 = vmatprep.subr.mxu0 0.0
        %6803 = vmatpush1.msra.mxu0 0.0
        %6804 = vmatprep.subr.mxu0 0.0
        %6805 = vmatpush1.msra.mxu0 0.0
        %6806 = vmatprep.subr.mxu0 0.0
        %6807 = vmatpush1.msra.mxu0 0.0
        %6808 = vmatprep.subr.mxu0 0.0
        %6809 = vmatpush1.msra.mxu0 0.0
        %6810 = vmatprep.subr.mxu0 0.0
        %6811 = vmatpush1.msra.mxu0 0.0
        %6812 = vmatprep.subr.mxu0 0.0
        %6813 = vmatpush1.msra.mxu0 0.0
        %6814 = vmatprep.subr.mxu0 0.0
        %6815 = vmatpush1.msra.mxu0 0.0
        %6816 = vmatprep.subr.mxu0 0.0
        %6817 = vmatpush1.msra.mxu0 0.0
        %6818 = vmatprep.subr.mxu0 0.0
        %6819 = vmatpush1.msra.mxu0 0.0
        %6820 = vmatprep.mubr.f32.mxu0 0.0
        %v6821 = vand.u32 %v5909, 4294901760
        %6822 = vmatmul.mubr.f32.gmra.mrb[0].mxu0 %v6821
        %v6823 = vpop.f32.mrb[0].mxu0
        %v6824 = vadd.f32 %v6731, %v6823
        %v6825 = vpop.f32.mrb[0].mxu0
        %6826 = vmatprep.mubr.f32.mxu0 0.0
        %v6827 = vand.u32 %v5915, 4294901760
        %6828 = vmatmul.mubr.f32.gmra.mrb[0].mxu0 %v6827
        %v6829 = vpop.f32.mrb[0].mxu0
        %v6830 = vadd.f32 %v6737, %v6829
        %v6831 = vpop.f32.mrb[0].mxu0
        %6832 = vdwg.mxu0
        %6833 = vset.pattern.permute.xlu0 7
        %6834 = vperm.xlu0 %6833, %v424
        %v6835 = vpop.permute.xlu0 %6834
        %6837 = vset.pattern.permute.xlu0 7
        %6838 = vperm.xlu0 %6837, %v425
        %v6839 = vpop.permute.xlu0 %6838
        %v6841 = vsub.f32 %v6824, %v6835
        %v6842 = vsub.f32 %v6830, %v6839
        %v6843 = vmul.f32 %v6841, %v6841
        %v6844 = vmul.f32 %v6842, %v6842
        %v6845 = vadd.f32 %v6843, %v6844
        %v6846 = vrot.slane %v6845, 4
        %v6847 = vadd.f32 %v6845, %v6846
        %v6848 = vrot.slane %v6847, 2
        %v6849 = vadd.f32 %v6847, %v6848
        %v6850 = vrot.slane %v6849, 1
        %v6851 = vadd.f32 %v6849, %v6850
        %v6852 = vmul.f32 %v6851, -0.5
        %v6853 = vmul.f32 %v6852, 1.442695
        %v6854 = vpow.pop %v6853
        %v6855 = vadd.f32 %v6854, 1e-08
        %v6856 = vmul.f32 %v5946, %v6855
        %v6857 = vadd.f32 %v6856, 1e-10
        %6858 = vadd.xlane.f32.xlu0 %v6857
        %v6859 = vpop.xlane.xlu0 %6858
        %v6860 = vrcp.pop %v6859
        %v6861 = vmul.f32 %v6857, %v6860
        %v6862 = vmul.f32 %v338, %v6861
        %v6863 = vmul.f32 %v339, %v6861
        %v6864 = vmul.f32 %v340, %v6861
        %v6865 = vmul.f32 %v341, %v6861
        %v6866 = vmul.f32 %v342, %v6861
        %v6867 = vmul.f32 %v343, %v6861
        %v6868 = vmul.f32 %v344, %v6861
        %v6869 = vmul.f32 %v345, %v6861
        %v6870 = vmul.f32 %v346, %v6861
        %v6871 = vmul.f32 %v347, %v6861
        %v6872 = vmul.f32 %v348, %v6861
        %v6873 = vmul.f32 %v349, %v6861
        %v6874 = vmul.f32 %v350, %v6861
        %v6875 = vmul.f32 %v351, %v6861
        %v6876 = vmul.f32 %v352, %v6861
        %v6877 = vmul.f32 %v353, %v6861
        %6878 = vadd.xlane.f32.xlu0 %v6862
        %v6879 = vpop.xlane.xlu0 %6878
        %6880 = vadd.xlane.f32.xlu0 %v6863
        %v6881 = vpop.xlane.xlu0 %6880
        %6882 = vadd.xlane.f32.xlu0 %v6864
        %v6883 = vpop.xlane.xlu0 %6882
        %6884 = vadd.xlane.f32.xlu0 %v6865
        %v6885 = vpop.xlane.xlu0 %6884
        %6886 = vadd.xlane.f32.xlu0 %v6866
        %v6887 = vpop.xlane.xlu0 %6886
        %6888 = vadd.xlane.f32.xlu0 %v6867
        %v6889 = vpop.xlane.xlu0 %6888
        %6890 = vadd.xlane.f32.xlu0 %v6868
        %v6891 = vpop.xlane.xlu0 %6890
        %6892 = vadd.xlane.f32.xlu0 %v6869
        %v6893 = vpop.xlane.xlu0 %6892
        %6894 = vadd.xlane.f32.xlu0 %v6870
        %v6895 = vpop.xlane.xlu0 %6894
        %6896 = vadd.xlane.f32.xlu0 %v6871
        %v6897 = vpop.xlane.xlu0 %6896
        %6898 = vadd.xlane.f32.xlu0 %v6872
        %v6899 = vpop.xlane.xlu0 %6898
        %6900 = vadd.xlane.f32.xlu0 %v6873
        %v6901 = vpop.xlane.xlu0 %6900
        %6902 = vadd.xlane.f32.xlu0 %v6874
        %v6903 = vpop.xlane.xlu0 %6902
        %6904 = vadd.xlane.f32.xlu0 %v6875
        %v6905 = vpop.xlane.xlu0 %6904
        %6906 = vadd.xlane.f32.xlu0 %v6876
        %v6907 = vpop.xlane.xlu0 %6906
        %6908 = vadd.xlane.f32.xlu0 %v6877
        %v6909 = vpop.xlane.xlu0 %6908
        %v6910 = vmul.f32 %v386, %v6861
        %v6911 = vmul.f32 %v387, %v6861
        %v6912 = vmul.f32 %v388, %v6861
        %v6913 = vmul.f32 %v389, %v6861
        %v6914 = vmul.f32 %v390, %v6861
        %v6915 = vmul.f32 %v391, %v6861
        %v6916 = vmul.f32 %v392, %v6861
        %v6917 = vmul.f32 %v393, %v6861
        %v6918 = vmul.f32 %v394, %v6861
        %v6919 = vmul.f32 %v395, %v6861
        %v6920 = vmul.f32 %v396, %v6861
        %v6921 = vmul.f32 %v397, %v6861
        %v6922 = vmul.f32 %v398, %v6861
        %v6923 = vmul.f32 %v399, %v6861
        %v6924 = vmul.f32 %v400, %v6861
        %v6925 = vmul.f32 %v401, %v6861
        %6926 = vadd.xlane.f32.xlu0 %v6910
        %v6927 = vpop.xlane.xlu0 %6926
        %6928 = vadd.xlane.f32.xlu0 %v6911
        %v6929 = vpop.xlane.xlu0 %6928
        %6930 = vadd.xlane.f32.xlu0 %v6912
        %v6931 = vpop.xlane.xlu0 %6930
        %6932 = vadd.xlane.f32.xlu0 %v6913
        %v6933 = vpop.xlane.xlu0 %6932
        %6934 = vadd.xlane.f32.xlu0 %v6914
        %v6935 = vpop.xlane.xlu0 %6934
        %6936 = vadd.xlane.f32.xlu0 %v6915
        %v6937 = vpop.xlane.xlu0 %6936
        %6938 = vadd.xlane.f32.xlu0 %v6916
        %v6939 = vpop.xlane.xlu0 %6938
        %6940 = vadd.xlane.f32.xlu0 %v6917
        %v6941 = vpop.xlane.xlu0 %6940
        %6942 = vadd.xlane.f32.xlu0 %v6918
        %v6943 = vpop.xlane.xlu0 %6942
        %6944 = vadd.xlane.f32.xlu0 %v6919
        %v6945 = vpop.xlane.xlu0 %6944
        %6946 = vadd.xlane.f32.xlu0 %v6920
        %v6947 = vpop.xlane.xlu0 %6946
        %6948 = vadd.xlane.f32.xlu0 %v6921
        %v6949 = vpop.xlane.xlu0 %6948
        %6950 = vadd.xlane.f32.xlu0 %v6922
        %v6951 = vpop.xlane.xlu0 %6950
        %6952 = vadd.xlane.f32.xlu0 %v6923
        %v6953 = vpop.xlane.xlu0 %6952
        %6954 = vadd.xlane.f32.xlu0 %v6924
        %v6955 = vpop.xlane.xlu0 %6954
        %6956 = vadd.xlane.f32.xlu0 %v6925
        %v6957 = vpop.xlane.xlu0 %6956
        %v6958 = vsel %vm402, 1e+30, %v6879
        %v6959 = vsel %vm403, 1e+30, %v6881
        %v6960 = vsel %vm404, 1e+30, %v6883
        %v6961 = vsel %vm405, 1e+30, %v6885
        %v6962 = vsel %vm406, 1e+30, %v6887
        %v6963 = vsel %vm407, 1e+30, %v6889
        %v6964 = vsel %vm408, 1e+30, %v6891
        %v6965 = vsel %vm409, 1e+30, %v6893
        %v6966 = vsel %vm410, 1e+30, %v6895
        %v6967 = vsel %vm411, 1e+30, %v6897
        %v6968 = vsel %vm412, 1e+30, %v6899
        %v6969 = vsel %vm413, 1e+30, %v6901
        %v6970 = vsel %vm414, 1e+30, %v6903
        %v6971 = vsel %vm415, 1e+30, %v6905
        %v6972 = vsel %vm416, 1e+30, %v6907
        %v6973 = vsel %vm417, 1e+30, %v6909
        %v6974 = vld [vmem:[%s269 + $0x7] sm:$0x1]
        %v6975 = vlaneseq
        %v6976 = vshrl.u32 %v6975, 7
        %v6977 = vsub.s32 0, %v6976
        %v6978 = vrot.slane %v6974, %v6977
        %vm6979 = vcmp.le.f32.partialorder %v6927, %v6978
        %vm6980 = vcmp.le.f32.partialorder %v6929, %v6978
        %vm6981 = vcmp.le.f32.partialorder %v6931, %v6978
        %vm6982 = vcmp.le.f32.partialorder %v6933, %v6978
        %vm6983 = vcmp.le.f32.partialorder %v6935, %v6978
        %vm6984 = vcmp.le.f32.partialorder %v6937, %v6978
        %vm6985 = vcmp.le.f32.partialorder %v6939, %v6978
        %vm6986 = vcmp.le.f32.partialorder %v6941, %v6978
        %vm6987 = vcmp.le.f32.partialorder %v6943, %v6978
        %vm6988 = vcmp.le.f32.partialorder %v6945, %v6978
        %vm6989 = vcmp.le.f32.partialorder %v6947, %v6978
        %vm6990 = vcmp.le.f32.partialorder %v6949, %v6978
        %vm6991 = vcmp.le.f32.partialorder %v6951, %v6978
        %vm6992 = vcmp.le.f32.partialorder %v6953, %v6978
        %vm6993 = vcmp.le.f32.partialorder %v6955, %v6978
        %vm6994 = vcmp.le.f32.partialorder %v6957, %v6978
        %vm6995 = vcmp.lt.f32.partialorder %v6978, %v6958
        %vm6996 = vcmp.lt.f32.partialorder %v6978, %v6959
        %vm6997 = vcmp.lt.f32.partialorder %v6978, %v6960
        %vm6998 = vcmp.lt.f32.partialorder %v6978, %v6961
        %vm6999 = vcmp.lt.f32.partialorder %v6978, %v6962
        %vm7000 = vcmp.lt.f32.partialorder %v6978, %v6963
        %vm7001 = vcmp.lt.f32.partialorder %v6978, %v6964
        %vm7002 = vcmp.lt.f32.partialorder %v6978, %v6965
        %vm7003 = vcmp.lt.f32.partialorder %v6978, %v6966
        %vm7004 = vcmp.lt.f32.partialorder %v6978, %v6967
        %vm7005 = vcmp.lt.f32.partialorder %v6978, %v6968
        %vm7006 = vcmp.lt.f32.partialorder %v6978, %v6969
        %vm7007 = vcmp.lt.f32.partialorder %v6978, %v6970
        %vm7008 = vcmp.lt.f32.partialorder %v6978, %v6971
        %vm7009 = vcmp.lt.f32.partialorder %v6978, %v6972
        %vm7010 = vcmp.lt.f32.partialorder %v6978, %v6973
        %vm7011 = vmand %vm6979, %vm6995
        %vm7012 = vmand %vm6980, %vm6996
        %vm7013 = vmand %vm6981, %vm6997
        %vm7014 = vmand %vm6982, %vm6998
        %vm7015 = vmand %vm6983, %vm6999
        %vm7016 = vmand %vm6984, %vm7000
        %vm7017 = vmand %vm6985, %vm7001
        %vm7018 = vmand %vm6986, %vm7002
        %vm7019 = vmand %vm6987, %vm7003
        %vm7020 = vmand %vm6988, %vm7004
        %vm7021 = vmand %vm6989, %vm7005
        %vm7022 = vmand %vm6990, %vm7006
        %vm7023 = vmand %vm6991, %vm7007
        %vm7024 = vmand %vm6992, %vm7008
        %vm7025 = vmand %vm6993, %vm7009
        %vm7026 = vmand %vm6994, %vm7010
        %v7027 = vsel %vm7011, 1, 0
        %v7028 = vsel %vm7012, 1, 0
        %v7029 = vsel %vm7013, 1, 0
        %v7030 = vsel %vm7014, 1, 0
        %v7031 = vsel %vm7015, 1, 0
        %v7032 = vsel %vm7016, 1, 0
        %v7033 = vsel %vm7017, 1, 0
        %v7034 = vsel %vm7018, 1, 0
        %v7035 = vsel %vm7019, 1, 0
        %v7036 = vsel %vm7020, 1, 0
        %v7037 = vsel %vm7021, 1, 0
        %v7038 = vsel %vm7022, 1, 0
        %v7039 = vsel %vm7023, 1, 0
        %v7040 = vsel %vm7024, 1, 0
        %v7041 = vsel %vm7025, 1, 0
        %v7042 = vsel %vm7026, 1, 0
        %v7043 = vcvt.s32.f32 %v7027
        %v7044 = vcvt.s32.f32 %v7028
        %v7045 = vcvt.s32.f32 %v7029
        %v7046 = vcvt.s32.f32 %v7030
        %v7047 = vcvt.s32.f32 %v7031
        %v7048 = vcvt.s32.f32 %v7032
        %v7049 = vcvt.s32.f32 %v7033
        %v7050 = vcvt.s32.f32 %v7034
        %v7051 = vcvt.s32.f32 %v7035
        %v7052 = vcvt.s32.f32 %v7036
        %v7053 = vcvt.s32.f32 %v7037
        %v7054 = vcvt.s32.f32 %v7038
        %v7055 = vcvt.s32.f32 %v7039
        %v7056 = vcvt.s32.f32 %v7040
        %v7057 = vcvt.s32.f32 %v7041
        %v7058 = vcvt.s32.f32 %v7042
        %7059 = vmatprep.subr.mxu0 0.0
        %v7060 = vand.u32 %v7043, 4294901760
        %7061 = vmatpush1.msra.mxu0 %v7060
        %7062 = vmatprep.subr.mxu0 0.0
        %v7063 = vand.u32 %v7044, 4294901760
        %7064 = vmatpush1.msra.mxu0 %v7063
        %7065 = vmatprep.subr.mxu0 0.0
        %v7066 = vand.u32 %v7045, 4294901760
        %7067 = vmatpush1.msra.mxu0 %v7066
        %7068 = vmatprep.subr.mxu0 0.0
        %v7069 = vand.u32 %v7046, 4294901760
        %7070 = vmatpush1.msra.mxu0 %v7069
        %7071 = vmatprep.subr.mxu0 0.0
        %v7072 = vand.u32 %v7047, 4294901760
        %7073 = vmatpush1.msra.mxu0 %v7072
        %7074 = vmatprep.subr.mxu0 0.0
        %v7075 = vand.u32 %v7048, 4294901760
        %7076 = vmatpush1.msra.mxu0 %v7075
        %7077 = vmatprep.subr.mxu0 0.0
        %v7078 = vand.u32 %v7049, 4294901760
        %7079 = vmatpush1.msra.mxu0 %v7078
        %7080 = vmatprep.subr.mxu0 0.0
        %v7081 = vand.u32 %v7050, 4294901760
        %7082 = vmatpush1.msra.mxu0 %v7081
        %7083 = vmatprep.subr.mxu0 0.0
        %v7084 = vand.u32 %v7051, 4294901760
        %7085 = vmatpush1.msra.mxu0 %v7084
        %7086 = vmatprep.subr.mxu0 0.0
        %v7087 = vand.u32 %v7052, 4294901760
        %7088 = vmatpush1.msra.mxu0 %v7087
        %7089 = vmatprep.subr.mxu0 0.0
        %v7090 = vand.u32 %v7053, 4294901760
        %7091 = vmatpush1.msra.mxu0 %v7090
        %7092 = vmatprep.subr.mxu0 0.0
        %v7093 = vand.u32 %v7054, 4294901760
        %7094 = vmatpush1.msra.mxu0 %v7093
        %7095 = vmatprep.subr.mxu0 0.0
        %v7096 = vand.u32 %v7055, 4294901760
        %7097 = vmatpush1.msra.mxu0 %v7096
        %7098 = vmatprep.subr.mxu0 0.0
        %v7099 = vand.u32 %v7056, 4294901760
        %7100 = vmatpush1.msra.mxu0 %v7099
        %7101 = vmatprep.subr.mxu0 0.0
        %v7102 = vand.u32 %v7057, 4294901760
        %7103 = vmatpush1.msra.mxu0 %v7102
        %7104 = vmatprep.subr.mxu0 0.0
        %v7105 = vand.u32 %v7058, 4294901760
        %7106 = vmatpush1.msra.mxu0 %v7105
        %7107 = vmatprep.subr.mxu0 0.0
        %7108 = vmatpush1.msra.mxu0 0.0
        %7109 = vmatprep.subr.mxu0 0.0
        %7110 = vmatpush1.msra.mxu0 0.0
        %7111 = vmatprep.subr.mxu0 0.0
        %7112 = vmatpush1.msra.mxu0 0.0
        %7113 = vmatprep.subr.mxu0 0.0
        %7114 = vmatpush1.msra.mxu0 0.0
        %7115 = vmatprep.subr.mxu0 0.0
        %7116 = vmatpush1.msra.mxu0 0.0
        %7117 = vmatprep.subr.mxu0 0.0
        %7118 = vmatpush1.msra.mxu0 0.0
        %7119 = vmatprep.subr.mxu0 0.0
        %7120 = vmatpush1.msra.mxu0 0.0
        %7121 = vmatprep.subr.mxu0 0.0
        %7122 = vmatpush1.msra.mxu0 0.0
        %7123 = vmatprep.subr.mxu0 0.0
        %7124 = vmatpush1.msra.mxu0 0.0
        %7125 = vmatprep.subr.mxu0 0.0
        %7126 = vmatpush1.msra.mxu0 0.0
        %7127 = vmatprep.subr.mxu0 0.0
        %7128 = vmatpush1.msra.mxu0 0.0
        %7129 = vmatprep.subr.mxu0 0.0
        %7130 = vmatpush1.msra.mxu0 0.0
        %7131 = vmatprep.subr.mxu0 0.0
        %7132 = vmatpush1.msra.mxu0 0.0
        %7133 = vmatprep.subr.mxu0 0.0
        %7134 = vmatpush1.msra.mxu0 0.0
        %7135 = vmatprep.subr.mxu0 0.0
        %7136 = vmatpush1.msra.mxu0 0.0
        %7137 = vmatprep.subr.mxu0 0.0
        %7138 = vmatpush1.msra.mxu0 0.0
        %7139 = vmatprep.mubr.f32.mxu0 0.0
        %v7140 = vand.u32 %v6824, 4294901760
        %v7141 = vsub.f32 %v6824, %v7140
        %v7142 = vand.u32 %v7141, 4294901760
        %v7143 = vsub.f32 %v7141, %v7142
        %v7144 = vand.u32 %v7143, 4294901760
        %7145 = vmatmul.mubr.f32.gmra.mrb[0].mxu0 %v7144
        %v7146 = vpop.f32.mrb[0].mxu0
        %v7147 = vadd.f32 0.0, %v7146
        %v7148 = vpop.f32.mrb[0].mxu0
        %7149 = vmatprep.mubr.f32.mxu0 0.0
        %v7150 = vand.u32 %v6830, 4294901760
        %v7151 = vsub.f32 %v6830, %v7150
        %v7152 = vand.u32 %v7151, 4294901760
        %v7153 = vsub.f32 %v7151, %v7152
        %v7154 = vand.u32 %v7153, 4294901760
        %7155 = vmatmul.mubr.f32.gmra.mrb[0].mxu0 %v7154
        %v7156 = vpop.f32.mrb[0].mxu0
        %v7157 = vadd.f32 0.0, %v7156
        %v7158 = vpop.f32.mrb[0].mxu0
        %7159 = vdwg.mxu0
        %7160 = vmatprep.subr.mxu0 0.0
        %v7161 = vand.u32 %v7043, 4294901760
        %v7162 = vsub.f32 %v7043, %v7161
        %v7163 = vand.u32 %v7162, 4294901760
        %v7164 = vsub.f32 %v7162, %v7163
        %v7165 = vand.u32 %v7164, 4294901760
        %7166 = vmatpush1.msra.mxu0 %v7165
        %7167 = vmatprep.subr.mxu0 0.0
        %v7168 = vand.u32 %v7044, 4294901760
        %v7169 = vsub.f32 %v7044, %v7168
        %v7170 = vand.u32 %v7169, 4294901760
        %v7171 = vsub.f32 %v7169, %v7170
        %v7172 = vand.u32 %v7171, 4294901760
        %7173 = vmatpush1.msra.mxu0 %v7172
        %7174 = vmatprep.subr.mxu0 0.0
        %v7175 = vand.u32 %v7045, 4294901760
        %v7176 = vsub.f32 %v7045, %v7175
        %v7177 = vand.u32 %v7176, 4294901760
        %v7178 = vsub.f32 %v7176, %v7177
        %v7179 = vand.u32 %v7178, 4294901760
        %7180 = vmatpush1.msra.mxu0 %v7179
        %7181 = vmatprep.subr.mxu0 0.0
        %v7182 = vand.u32 %v7046, 4294901760
        %v7183 = vsub.f32 %v7046, %v7182
        %v7184 = vand.u32 %v7183, 4294901760
        %v7185 = vsub.f32 %v7183, %v7184
        %v7186 = vand.u32 %v7185, 4294901760
        %7187 = vmatpush1.msra.mxu0 %v7186
        %7188 = vmatprep.subr.mxu0 0.0
        %v7189 = vand.u32 %v7047, 4294901760
        %v7190 = vsub.f32 %v7047, %v7189
        %v7191 = vand.u32 %v7190, 4294901760
        %v7192 = vsub.f32 %v7190, %v7191
        %v7193 = vand.u32 %v7192, 4294901760
        %7194 = vmatpush1.msra.mxu0 %v7193
        %7195 = vmatprep.subr.mxu0 0.0
        %v7196 = vand.u32 %v7048, 4294901760
        %v7197 = vsub.f32 %v7048, %v7196
        %v7198 = vand.u32 %v7197, 4294901760
        %v7199 = vsub.f32 %v7197, %v7198
        %v7200 = vand.u32 %v7199, 4294901760
        %7201 = vmatpush1.msra.mxu0 %v7200
        %7202 = vmatprep.subr.mxu0 0.0
        %v7203 = vand.u32 %v7049, 4294901760
        %v7204 = vsub.f32 %v7049, %v7203
        %v7205 = vand.u32 %v7204, 4294901760
        %v7206 = vsub.f32 %v7204, %v7205
        %v7207 = vand.u32 %v7206, 4294901760
        %7208 = vmatpush1.msra.mxu0 %v7207
        %7209 = vmatprep.subr.mxu0 0.0
        %v7210 = vand.u32 %v7050, 4294901760
        %v7211 = vsub.f32 %v7050, %v7210
        %v7212 = vand.u32 %v7211, 4294901760
        %v7213 = vsub.f32 %v7211, %v7212
        %v7214 = vand.u32 %v7213, 4294901760
        %7215 = vmatpush1.msra.mxu0 %v7214
        %7216 = vmatprep.subr.mxu0 0.0
        %v7217 = vand.u32 %v7051, 4294901760
        %v7218 = vsub.f32 %v7051, %v7217
        %v7219 = vand.u32 %v7218, 4294901760
        %v7220 = vsub.f32 %v7218, %v7219
        %v7221 = vand.u32 %v7220, 4294901760
        %7222 = vmatpush1.msra.mxu0 %v7221
        %7223 = vmatprep.subr.mxu0 0.0
        %v7224 = vand.u32 %v7052, 4294901760
        %v7225 = vsub.f32 %v7052, %v7224
        %v7226 = vand.u32 %v7225, 4294901760
        %v7227 = vsub.f32 %v7225, %v7226
        %v7228 = vand.u32 %v7227, 4294901760
        %7229 = vmatpush1.msra.mxu0 %v7228
        %7230 = vmatprep.subr.mxu0 0.0
        %v7231 = vand.u32 %v7053, 4294901760
        %v7232 = vsub.f32 %v7053, %v7231
        %v7233 = vand.u32 %v7232, 4294901760
        %v7234 = vsub.f32 %v7232, %v7233
        %v7235 = vand.u32 %v7234, 4294901760
        %7236 = vmatpush1.msra.mxu0 %v7235
        %7237 = vmatprep.subr.mxu0 0.0
        %v7238 = vand.u32 %v7054, 4294901760
        %v7239 = vsub.f32 %v7054, %v7238
        %v7240 = vand.u32 %v7239, 4294901760
        %v7241 = vsub.f32 %v7239, %v7240
        %v7242 = vand.u32 %v7241, 4294901760
        %7243 = vmatpush1.msra.mxu0 %v7242
        %7244 = vmatprep.subr.mxu0 0.0
        %v7245 = vand.u32 %v7055, 4294901760
        %v7246 = vsub.f32 %v7055, %v7245
        %v7247 = vand.u32 %v7246, 4294901760
        %v7248 = vsub.f32 %v7246, %v7247
        %v7249 = vand.u32 %v7248, 4294901760
        %7250 = vmatpush1.msra.mxu0 %v7249
        %7251 = vmatprep.subr.mxu0 0.0
        %v7252 = vand.u32 %v7056, 4294901760
        %v7253 = vsub.f32 %v7056, %v7252
        %v7254 = vand.u32 %v7253, 4294901760
        %v7255 = vsub.f32 %v7253, %v7254
        %v7256 = vand.u32 %v7255, 4294901760
        %7257 = vmatpush1.msra.mxu0 %v7256
        %7258 = vmatprep.subr.mxu0 0.0
        %v7259 = vand.u32 %v7057, 4294901760
        %v7260 = vsub.f32 %v7057, %v7259
        %v7261 = vand.u32 %v7260, 4294901760
        %v7262 = vsub.f32 %v7260, %v7261
        %v7263 = vand.u32 %v7262, 4294901760
        %7264 = vmatpush1.msra.mxu0 %v7263
        %7265 = vmatprep.subr.mxu0 0.0
        %v7266 = vand.u32 %v7058, 4294901760
        %v7267 = vsub.f32 %v7058, %v7266
        %v7268 = vand.u32 %v7267, 4294901760
        %v7269 = vsub.f32 %v7267, %v7268
        %v7270 = vand.u32 %v7269, 4294901760
        %7271 = vmatpush1.msra.mxu0 %v7270
        %7272 = vmatprep.subr.mxu0 0.0
        %7273 = vmatpush1.msra.mxu0 0.0
        %7274 = vmatprep.subr.mxu0 0.0
        %7275 = vmatpush1.msra.mxu0 0.0
        %7276 = vmatprep.subr.mxu0 0.0
        %7277 = vmatpush1.msra.mxu0 0.0
        %7278 = vmatprep.subr.mxu0 0.0
        %7279 = vmatpush1.msra.mxu0 0.0
        %7280 = vmatprep.subr.mxu0 0.0
        %7281 = vmatpush1.msra.mxu0 0.0
        %7282 = vmatprep.subr.mxu0 0.0
        %7283 = vmatpush1.msra.mxu0 0.0
        %7284 = vmatprep.subr.mxu0 0.0
        %7285 = vmatpush1.msra.mxu0 0.0
        %7286 = vmatprep.subr.mxu0 0.0
        %7287 = vmatpush1.msra.mxu0 0.0
        %7288 = vmatprep.subr.mxu0 0.0
        %7289 = vmatpush1.msra.mxu0 0.0
        %7290 = vmatprep.subr.mxu0 0.0
        %7291 = vmatpush1.msra.mxu0 0.0
        %7292 = vmatprep.subr.mxu0 0.0
        %7293 = vmatpush1.msra.mxu0 0.0
        %7294 = vmatprep.subr.mxu0 0.0
        %7295 = vmatpush1.msra.mxu0 0.0
        %7296 = vmatprep.subr.mxu0 0.0
        %7297 = vmatpush1.msra.mxu0 0.0
        %7298 = vmatprep.subr.mxu0 0.0
        %7299 = vmatpush1.msra.mxu0 0.0
        %7300 = vmatprep.subr.mxu0 0.0
        %7301 = vmatpush1.msra.mxu0 0.0
        %7302 = vmatprep.subr.mxu0 0.0
        %7303 = vmatpush1.msra.mxu0 0.0
        %7304 = vmatprep.mubr.f32.mxu0 0.0
        %v7305 = vand.u32 %v6824, 4294901760
        %7306 = vmatmul.mubr.f32.gmra.mrb[0].mxu0 %v7305
        %v7307 = vpop.f32.mrb[0].mxu0
        %v7308 = vadd.f32 %v7147, %v7307
        %v7309 = vpop.f32.mrb[0].mxu0
        %7310 = vmatprep.mubr.f32.mxu0 0.0
        %v7311 = vand.u32 %v6830, 4294901760
        %7312 = vmatmul.mubr.f32.gmra.mrb[0].mxu0 %v7311
        %v7313 = vpop.f32.mrb[0].mxu0
        %v7314 = vadd.f32 %v7157, %v7313
        %v7315 = vpop.f32.mrb[0].mxu0
        %7316 = vdwg.mxu0
        %7317 = vmatprep.subr.mxu0 0.0
        %v7318 = vand.u32 %v7043, 4294901760
        %v7319 = vsub.f32 %v7043, %v7318
        %7320 = vmatpush1.msra.mxu0 %v7319
        %7321 = vmatprep.subr.mxu0 0.0
        %v7322 = vand.u32 %v7044, 4294901760
        %v7323 = vsub.f32 %v7044, %v7322
        %7324 = vmatpush1.msra.mxu0 %v7323
        %7325 = vmatprep.subr.mxu0 0.0
        %v7326 = vand.u32 %v7045, 4294901760
        %v7327 = vsub.f32 %v7045, %v7326
        %7328 = vmatpush1.msra.mxu0 %v7327
        %7329 = vmatprep.subr.mxu0 0.0
        %v7330 = vand.u32 %v7046, 4294901760
        %v7331 = vsub.f32 %v7046, %v7330
        %7332 = vmatpush1.msra.mxu0 %v7331
        %7333 = vmatprep.subr.mxu0 0.0
        %v7334 = vand.u32 %v7047, 4294901760
        %v7335 = vsub.f32 %v7047, %v7334
        %7336 = vmatpush1.msra.mxu0 %v7335
        %7337 = vmatprep.subr.mxu0 0.0
        %v7338 = vand.u32 %v7048, 4294901760
        %v7339 = vsub.f32 %v7048, %v7338
        %7340 = vmatpush1.msra.mxu0 %v7339
        %7341 = vmatprep.subr.mxu0 0.0
        %v7342 = vand.u32 %v7049, 4294901760
        %v7343 = vsub.f32 %v7049, %v7342
        %7344 = vmatpush1.msra.mxu0 %v7343
        %7345 = vmatprep.subr.mxu0 0.0
        %v7346 = vand.u32 %v7050, 4294901760
        %v7347 = vsub.f32 %v7050, %v7346
        %7348 = vmatpush1.msra.mxu0 %v7347
        %7349 = vmatprep.subr.mxu0 0.0
        %v7350 = vand.u32 %v7051, 4294901760
        %v7351 = vsub.f32 %v7051, %v7350
        %7352 = vmatpush1.msra.mxu0 %v7351
        %7353 = vmatprep.subr.mxu0 0.0
        %v7354 = vand.u32 %v7052, 4294901760
        %v7355 = vsub.f32 %v7052, %v7354
        %7356 = vmatpush1.msra.mxu0 %v7355
        %7357 = vmatprep.subr.mxu0 0.0
        %v7358 = vand.u32 %v7053, 4294901760
        %v7359 = vsub.f32 %v7053, %v7358
        %7360 = vmatpush1.msra.mxu0 %v7359
        %7361 = vmatprep.subr.mxu0 0.0
        %v7362 = vand.u32 %v7054, 4294901760
        %v7363 = vsub.f32 %v7054, %v7362
        %7364 = vmatpush1.msra.mxu0 %v7363
        %7365 = vmatprep.subr.mxu0 0.0
        %v7366 = vand.u32 %v7055, 4294901760
        %v7367 = vsub.f32 %v7055, %v7366
        %7368 = vmatpush1.msra.mxu0 %v7367
        %7369 = vmatprep.subr.mxu0 0.0
        %v7370 = vand.u32 %v7056, 4294901760
        %v7371 = vsub.f32 %v7056, %v7370
        %7372 = vmatpush1.msra.mxu0 %v7371
        %7373 = vmatprep.subr.mxu0 0.0
        %v7374 = vand.u32 %v7057, 4294901760
        %v7375 = vsub.f32 %v7057, %v7374
        %7376 = vmatpush1.msra.mxu0 %v7375
        %7377 = vmatprep.subr.mxu0 0.0
        %v7378 = vand.u32 %v7058, 4294901760
        %v7379 = vsub.f32 %v7058, %v7378
        %7380 = vmatpush1.msra.mxu0 %v7379
        %7381 = vmatprep.subr.mxu0 0.0
        %7382 = vmatpush1.msra.mxu0 0.0
        %7383 = vmatprep.subr.mxu0 0.0
        %7384 = vmatpush1.msra.mxu0 0.0
        %7385 = vmatprep.subr.mxu0 0.0
        %7386 = vmatpush1.msra.mxu0 0.0
        %7387 = vmatprep.subr.mxu0 0.0
        %7388 = vmatpush1.msra.mxu0 0.0
        %7389 = vmatprep.subr.mxu0 0.0
        %7390 = vmatpush1.msra.mxu0 0.0
        %7391 = vmatprep.subr.mxu0 0.0
        %7392 = vmatpush1.msra.mxu0 0.0
        %7393 = vmatprep.subr.mxu0 0.0
        %7394 = vmatpush1.msra.mxu0 0.0
        %7395 = vmatprep.subr.mxu0 0.0
        %7396 = vmatpush1.msra.mxu0 0.0
        %7397 = vmatprep.subr.mxu0 0.0
        %7398 = vmatpush1.msra.mxu0 0.0
        %7399 = vmatprep.subr.mxu0 0.0
        %7400 = vmatpush1.msra.mxu0 0.0
        %7401 = vmatprep.subr.mxu0 0.0
        %7402 = vmatpush1.msra.mxu0 0.0
        %7403 = vmatprep.subr.mxu0 0.0
        %7404 = vmatpush1.msra.mxu0 0.0
        %7405 = vmatprep.subr.mxu0 0.0
        %7406 = vmatpush1.msra.mxu0 0.0
        %7407 = vmatprep.subr.mxu0 0.0
        %7408 = vmatpush1.msra.mxu0 0.0
        %7409 = vmatprep.subr.mxu0 0.0
        %7410 = vmatpush1.msra.mxu0 0.0
        %7411 = vmatprep.subr.mxu0 0.0
        %7412 = vmatpush1.msra.mxu0 0.0
        %7413 = vmatprep.mubr.f32.mxu0 0.0
        %v7414 = vand.u32 %v6824, 4294901760
        %v7415 = vsub.f32 %v6824, %v7414
        %7416 = vmatmul.mubr.f32.gmra.mrb[0].mxu0 %v7415
        %v7417 = vpop.f32.mrb[0].mxu0
        %v7418 = vadd.f32 %v7308, %v7417
        %v7419 = vpop.f32.mrb[0].mxu0
        %7420 = vmatprep.mubr.f32.mxu0 0.0
        %v7421 = vand.u32 %v6830, 4294901760
        %v7422 = vsub.f32 %v6830, %v7421
        %7423 = vmatmul.mubr.f32.gmra.mrb[0].mxu0 %v7422
        %v7424 = vpop.f32.mrb[0].mxu0
        %v7425 = vadd.f32 %v7314, %v7424
        %v7426 = vpop.f32.mrb[0].mxu0
        %7427 = vdwg.mxu0
        %7428 = vmatprep.subr.mxu0 0.0
        %v7429 = vand.u32 %v7043, 4294901760
        %7430 = vmatpush1.msra.mxu0 %v7429
        %7431 = vmatprep.subr.mxu0 0.0
        %v7432 = vand.u32 %v7044, 4294901760
        %7433 = vmatpush1.msra.mxu0 %v7432
        %7434 = vmatprep.subr.mxu0 0.0
        %v7435 = vand.u32 %v7045, 4294901760
        %7436 = vmatpush1.msra.mxu0 %v7435
        %7437 = vmatprep.subr.mxu0 0.0
        %v7438 = vand.u32 %v7046, 4294901760
        %7439 = vmatpush1.msra.mxu0 %v7438
        %7440 = vmatprep.subr.mxu0 0.0
        %v7441 = vand.u32 %v7047, 4294901760
        %7442 = vmatpush1.msra.mxu0 %v7441
        %7443 = vmatprep.subr.mxu0 0.0
        %v7444 = vand.u32 %v7048, 4294901760
        %7445 = vmatpush1.msra.mxu0 %v7444
        %7446 = vmatprep.subr.mxu0 0.0
        %v7447 = vand.u32 %v7049, 4294901760
        %7448 = vmatpush1.msra.mxu0 %v7447
        %7449 = vmatprep.subr.mxu0 0.0
        %v7450 = vand.u32 %v7050, 4294901760
        %7451 = vmatpush1.msra.mxu0 %v7450
        %7452 = vmatprep.subr.mxu0 0.0
        %v7453 = vand.u32 %v7051, 4294901760
        %7454 = vmatpush1.msra.mxu0 %v7453
        %7455 = vmatprep.subr.mxu0 0.0
        %v7456 = vand.u32 %v7052, 4294901760
        %7457 = vmatpush1.msra.mxu0 %v7456
        %7458 = vmatprep.subr.mxu0 0.0
        %v7459 = vand.u32 %v7053, 4294901760
        %7460 = vmatpush1.msra.mxu0 %v7459
        %7461 = vmatprep.subr.mxu0 0.0
        %v7462 = vand.u32 %v7054, 4294901760
        %7463 = vmatpush1.msra.mxu0 %v7462
        %7464 = vmatprep.subr.mxu0 0.0
        %v7465 = vand.u32 %v7055, 4294901760
        %7466 = vmatpush1.msra.mxu0 %v7465
        %7467 = vmatprep.subr.mxu0 0.0
        %v7468 = vand.u32 %v7056, 4294901760
        %7469 = vmatpush1.msra.mxu0 %v7468
        %7470 = vmatprep.subr.mxu0 0.0
        %v7471 = vand.u32 %v7057, 4294901760
        %7472 = vmatpush1.msra.mxu0 %v7471
        %7473 = vmatprep.subr.mxu0 0.0
        %v7474 = vand.u32 %v7058, 4294901760
        %7475 = vmatpush1.msra.mxu0 %v7474
        %7476 = vmatprep.subr.mxu0 0.0
        %7477 = vmatpush1.msra.mxu0 0.0
        %7478 = vmatprep.subr.mxu0 0.0
        %7479 = vmatpush1.msra.mxu0 0.0
        %7480 = vmatprep.subr.mxu0 0.0
        %7481 = vmatpush1.msra.mxu0 0.0
        %7482 = vmatprep.subr.mxu0 0.0
        %7483 = vmatpush1.msra.mxu0 0.0
        %7484 = vmatprep.subr.mxu0 0.0
        %7485 = vmatpush1.msra.mxu0 0.0
        %7486 = vmatprep.subr.mxu0 0.0
        %7487 = vmatpush1.msra.mxu0 0.0
        %7488 = vmatprep.subr.mxu0 0.0
        %7489 = vmatpush1.msra.mxu0 0.0
        %7490 = vmatprep.subr.mxu0 0.0
        %7491 = vmatpush1.msra.mxu0 0.0
        %7492 = vmatprep.subr.mxu0 0.0
        %7493 = vmatpush1.msra.mxu0 0.0
        %7494 = vmatprep.subr.mxu0 0.0
        %7495 = vmatpush1.msra.mxu0 0.0
        %7496 = vmatprep.subr.mxu0 0.0
        %7497 = vmatpush1.msra.mxu0 0.0
        %7498 = vmatprep.subr.mxu0 0.0
        %7499 = vmatpush1.msra.mxu0 0.0
        %7500 = vmatprep.subr.mxu0 0.0
        %7501 = vmatpush1.msra.mxu0 0.0
        %7502 = vmatprep.subr.mxu0 0.0
        %7503 = vmatpush1.msra.mxu0 0.0
        %7504 = vmatprep.subr.mxu0 0.0
        %7505 = vmatpush1.msra.mxu0 0.0
        %7506 = vmatprep.subr.mxu0 0.0
        %7507 = vmatpush1.msra.mxu0 0.0
        %7508 = vmatprep.mubr.f32.mxu0 0.0
        %v7509 = vand.u32 %v6824, 4294901760
        %v7510 = vsub.f32 %v6824, %v7509
        %v7511 = vand.u32 %v7510, 4294901760
        %7512 = vmatmul.mubr.f32.gmra.mrb[0].mxu0 %v7511
        %v7513 = vpop.f32.mrb[0].mxu0
        %v7514 = vadd.f32 %v7418, %v7513
        %v7515 = vpop.f32.mrb[0].mxu0
        %7516 = vmatprep.mubr.f32.mxu0 0.0
        %v7517 = vand.u32 %v6830, 4294901760
        %v7518 = vsub.f32 %v6830, %v7517
        %v7519 = vand.u32 %v7518, 4294901760
        %7520 = vmatmul.mubr.f32.gmra.mrb[0].mxu0 %v7519
        %v7521 = vpop.f32.mrb[0].mxu0
        %v7522 = vadd.f32 %v7425, %v7521
        %v7523 = vpop.f32.mrb[0].mxu0
        %7524 = vdwg.mxu0
        %7525 = vmatprep.subr.mxu0 0.0
        %v7526 = vand.u32 %v7043, 4294901760
        %v7527 = vsub.f32 %v7043, %v7526
        %v7528 = vand.u32 %v7527, 4294901760
        %7529 = vmatpush1.msra.mxu0 %v7528
        %7530 = vmatprep.subr.mxu0 0.0
        %v7531 = vand.u32 %v7044, 4294901760
        %v7532 = vsub.f32 %v7044, %v7531
        %v7533 = vand.u32 %v7532, 4294901760
        %7534 = vmatpush1.msra.mxu0 %v7533
        %7535 = vmatprep.subr.mxu0 0.0
        %v7536 = vand.u32 %v7045, 4294901760
        %v7537 = vsub.f32 %v7045, %v7536
        %v7538 = vand.u32 %v7537, 4294901760
        %7539 = vmatpush1.msra.mxu0 %v7538
        %7540 = vmatprep.subr.mxu0 0.0
        %v7541 = vand.u32 %v7046, 4294901760
        %v7542 = vsub.f32 %v7046, %v7541
        %v7543 = vand.u32 %v7542, 4294901760
        %7544 = vmatpush1.msra.mxu0 %v7543
        %7545 = vmatprep.subr.mxu0 0.0
        %v7546 = vand.u32 %v7047, 4294901760
        %v7547 = vsub.f32 %v7047, %v7546
        %v7548 = vand.u32 %v7547, 4294901760
        %7549 = vmatpush1.msra.mxu0 %v7548
        %7550 = vmatprep.subr.mxu0 0.0
        %v7551 = vand.u32 %v7048, 4294901760
        %v7552 = vsub.f32 %v7048, %v7551
        %v7553 = vand.u32 %v7552, 4294901760
        %7554 = vmatpush1.msra.mxu0 %v7553
        %7555 = vmatprep.subr.mxu0 0.0
        %v7556 = vand.u32 %v7049, 4294901760
        %v7557 = vsub.f32 %v7049, %v7556
        %v7558 = vand.u32 %v7557, 4294901760
        %7559 = vmatpush1.msra.mxu0 %v7558
        %7560 = vmatprep.subr.mxu0 0.0
        %v7561 = vand.u32 %v7050, 4294901760
        %v7562 = vsub.f32 %v7050, %v7561
        %v7563 = vand.u32 %v7562, 4294901760
        %7564 = vmatpush1.msra.mxu0 %v7563
        %7565 = vmatprep.subr.mxu0 0.0
        %v7566 = vand.u32 %v7051, 4294901760
        %v7567 = vsub.f32 %v7051, %v7566
        %v7568 = vand.u32 %v7567, 4294901760
        %7569 = vmatpush1.msra.mxu0 %v7568
        %7570 = vmatprep.subr.mxu0 0.0
        %v7571 = vand.u32 %v7052, 4294901760
        %v7572 = vsub.f32 %v7052, %v7571
        %v7573 = vand.u32 %v7572, 4294901760
        %7574 = vmatpush1.msra.mxu0 %v7573
        %7575 = vmatprep.subr.mxu0 0.0
        %v7576 = vand.u32 %v7053, 4294901760
        %v7577 = vsub.f32 %v7053, %v7576
        %v7578 = vand.u32 %v7577, 4294901760
        %7579 = vmatpush1.msra.mxu0 %v7578
        %7580 = vmatprep.subr.mxu0 0.0
        %v7581 = vand.u32 %v7054, 4294901760
        %v7582 = vsub.f32 %v7054, %v7581
        %v7583 = vand.u32 %v7582, 4294901760
        %7584 = vmatpush1.msra.mxu0 %v7583
        %7585 = vmatprep.subr.mxu0 0.0
        %v7586 = vand.u32 %v7055, 4294901760
        %v7587 = vsub.f32 %v7055, %v7586
        %v7588 = vand.u32 %v7587, 4294901760
        %7589 = vmatpush1.msra.mxu0 %v7588
        %7590 = vmatprep.subr.mxu0 0.0
        %v7591 = vand.u32 %v7056, 4294901760
        %v7592 = vsub.f32 %v7056, %v7591
        %v7593 = vand.u32 %v7592, 4294901760
        %7594 = vmatpush1.msra.mxu0 %v7593
        %7595 = vmatprep.subr.mxu0 0.0
        %v7596 = vand.u32 %v7057, 4294901760
        %v7597 = vsub.f32 %v7057, %v7596
        %v7598 = vand.u32 %v7597, 4294901760
        %7599 = vmatpush1.msra.mxu0 %v7598
        %7600 = vmatprep.subr.mxu0 0.0
        %v7601 = vand.u32 %v7058, 4294901760
        %v7602 = vsub.f32 %v7058, %v7601
        %v7603 = vand.u32 %v7602, 4294901760
        %7604 = vmatpush1.msra.mxu0 %v7603
        %7605 = vmatprep.subr.mxu0 0.0
        %7606 = vmatpush1.msra.mxu0 0.0
        %7607 = vmatprep.subr.mxu0 0.0
        %7608 = vmatpush1.msra.mxu0 0.0
        %7609 = vmatprep.subr.mxu0 0.0
        %7610 = vmatpush1.msra.mxu0 0.0
        %7611 = vmatprep.subr.mxu0 0.0
        %7612 = vmatpush1.msra.mxu0 0.0
        %7613 = vmatprep.subr.mxu0 0.0
        %7614 = vmatpush1.msra.mxu0 0.0
        %7615 = vmatprep.subr.mxu0 0.0
        %7616 = vmatpush1.msra.mxu0 0.0
        %7617 = vmatprep.subr.mxu0 0.0
        %7618 = vmatpush1.msra.mxu0 0.0
        %7619 = vmatprep.subr.mxu0 0.0
        %7620 = vmatpush1.msra.mxu0 0.0
        %7621 = vmatprep.subr.mxu0 0.0
        %7622 = vmatpush1.msra.mxu0 0.0
        %7623 = vmatprep.subr.mxu0 0.0
        %7624 = vmatpush1.msra.mxu0 0.0
        %7625 = vmatprep.subr.mxu0 0.0
        %7626 = vmatpush1.msra.mxu0 0.0
        %7627 = vmatprep.subr.mxu0 0.0
        %7628 = vmatpush1.msra.mxu0 0.0
        %7629 = vmatprep.subr.mxu0 0.0
        %7630 = vmatpush1.msra.mxu0 0.0
        %7631 = vmatprep.subr.mxu0 0.0
        %7632 = vmatpush1.msra.mxu0 0.0
        %7633 = vmatprep.subr.mxu0 0.0
        %7634 = vmatpush1.msra.mxu0 0.0
        %7635 = vmatprep.subr.mxu0 0.0
        %7636 = vmatpush1.msra.mxu0 0.0
        %7637 = vmatprep.mubr.f32.mxu0 0.0
        %v7638 = vand.u32 %v6824, 4294901760
        %7639 = vmatmul.mubr.f32.gmra.mrb[0].mxu0 %v7638
        %v7640 = vpop.f32.mrb[0].mxu0
        %v7641 = vadd.f32 %v7514, %v7640
        %v7642 = vpop.f32.mrb[0].mxu0
        %7643 = vmatprep.mubr.f32.mxu0 0.0
        %v7644 = vand.u32 %v6830, 4294901760
        %7645 = vmatmul.mubr.f32.gmra.mrb[0].mxu0 %v7644
        %v7646 = vpop.f32.mrb[0].mxu0
        %v7647 = vadd.f32 %v7522, %v7646
        %v7648 = vpop.f32.mrb[0].mxu0
        %7649 = vdwg.mxu0
        %7650 = vmatprep.subr.mxu0 0.0
        %v7651 = vand.u32 %v7043, 4294901760
        %7652 = vmatpush1.msra.mxu0 %v7651
        %7653 = vmatprep.subr.mxu0 0.0
        %v7654 = vand.u32 %v7044, 4294901760
        %7655 = vmatpush1.msra.mxu0 %v7654
        %7656 = vmatprep.subr.mxu0 0.0
        %v7657 = vand.u32 %v7045, 4294901760
        %7658 = vmatpush1.msra.mxu0 %v7657
        %7659 = vmatprep.subr.mxu0 0.0
        %v7660 = vand.u32 %v7046, 4294901760
        %7661 = vmatpush1.msra.mxu0 %v7660
        %7662 = vmatprep.subr.mxu0 0.0
        %v7663 = vand.u32 %v7047, 4294901760
        %7664 = vmatpush1.msra.mxu0 %v7663
        %7665 = vmatprep.subr.mxu0 0.0
        %v7666 = vand.u32 %v7048, 4294901760
        %7667 = vmatpush1.msra.mxu0 %v7666
        %7668 = vmatprep.subr.mxu0 0.0
        %v7669 = vand.u32 %v7049, 4294901760
        %7670 = vmatpush1.msra.mxu0 %v7669
        %7671 = vmatprep.subr.mxu0 0.0
        %v7672 = vand.u32 %v7050, 4294901760
        %7673 = vmatpush1.msra.mxu0 %v7672
        %7674 = vmatprep.subr.mxu0 0.0
        %v7675 = vand.u32 %v7051, 4294901760
        %7676 = vmatpush1.msra.mxu0 %v7675
        %7677 = vmatprep.subr.mxu0 0.0
        %v7678 = vand.u32 %v7052, 4294901760
        %7679 = vmatpush1.msra.mxu0 %v7678
        %7680 = vmatprep.subr.mxu0 0.0
        %v7681 = vand.u32 %v7053, 4294901760
        %7682 = vmatpush1.msra.mxu0 %v7681
        %7683 = vmatprep.subr.mxu0 0.0
        %v7684 = vand.u32 %v7054, 4294901760
        %7685 = vmatpush1.msra.mxu0 %v7684
        %7686 = vmatprep.subr.mxu0 0.0
        %v7687 = vand.u32 %v7055, 4294901760
        %7688 = vmatpush1.msra.mxu0 %v7687
        %7689 = vmatprep.subr.mxu0 0.0
        %v7690 = vand.u32 %v7056, 4294901760
        %7691 = vmatpush1.msra.mxu0 %v7690
        %7692 = vmatprep.subr.mxu0 0.0
        %v7693 = vand.u32 %v7057, 4294901760
        %7694 = vmatpush1.msra.mxu0 %v7693
        %7695 = vmatprep.subr.mxu0 0.0
        %v7696 = vand.u32 %v7058, 4294901760
        %7697 = vmatpush1.msra.mxu0 %v7696
        %7698 = vmatprep.subr.mxu0 0.0
        %7699 = vmatpush1.msra.mxu0 0.0
        %7700 = vmatprep.subr.mxu0 0.0
        %7701 = vmatpush1.msra.mxu0 0.0
        %7702 = vmatprep.subr.mxu0 0.0
        %7703 = vmatpush1.msra.mxu0 0.0
        %7704 = vmatprep.subr.mxu0 0.0
        %7705 = vmatpush1.msra.mxu0 0.0
        %7706 = vmatprep.subr.mxu0 0.0
        %7707 = vmatpush1.msra.mxu0 0.0
        %7708 = vmatprep.subr.mxu0 0.0
        %7709 = vmatpush1.msra.mxu0 0.0
        %7710 = vmatprep.subr.mxu0 0.0
        %7711 = vmatpush1.msra.mxu0 0.0
        %7712 = vmatprep.subr.mxu0 0.0
        %7713 = vmatpush1.msra.mxu0 0.0
        %7714 = vmatprep.subr.mxu0 0.0
        %7715 = vmatpush1.msra.mxu0 0.0
        %7716 = vmatprep.subr.mxu0 0.0
        %7717 = vmatpush1.msra.mxu0 0.0
        %7718 = vmatprep.subr.mxu0 0.0
        %7719 = vmatpush1.msra.mxu0 0.0
        %7720 = vmatprep.subr.mxu0 0.0
        %7721 = vmatpush1.msra.mxu0 0.0
        %7722 = vmatprep.subr.mxu0 0.0
        %7723 = vmatpush1.msra.mxu0 0.0
        %7724 = vmatprep.subr.mxu0 0.0
        %7725 = vmatpush1.msra.mxu0 0.0
        %7726 = vmatprep.subr.mxu0 0.0
        %7727 = vmatpush1.msra.mxu0 0.0
        %7728 = vmatprep.subr.mxu0 0.0
        %7729 = vmatpush1.msra.mxu0 0.0
        %7730 = vmatprep.mubr.f32.mxu0 0.0
        %v7731 = vand.u32 %v6824, 4294901760
        %7732 = vmatmul.mubr.f32.gmra.mrb[0].mxu0 %v7731
        %v7733 = vpop.f32.mrb[0].mxu0
        %v7734 = vadd.f32 %v7641, %v7733
        %v7735 = vpop.f32.mrb[0].mxu0
        %7736 = vmatprep.mubr.f32.mxu0 0.0
        %v7737 = vand.u32 %v6830, 4294901760
        %7738 = vmatmul.mubr.f32.gmra.mrb[0].mxu0 %v7737
        %v7739 = vpop.f32.mrb[0].mxu0
        %v7740 = vadd.f32 %v7647, %v7739
        %v7741 = vpop.f32.mrb[0].mxu0
        %7742 = vdwg.mxu0
        %7743 = vadd.xlane.f32.xlu0 %v7734
        %v7744 = vpop.xlane.xlu0 %7743
        %7745 = vadd.xlane.f32.xlu0 %v7740
        %v7746 = vpop.xlane.xlu0 %7745
        %v7747 = vrcp.pop 128.0
        %v7748 = vmul.f32 %v7744, %v7747
        %v7749 = vmul.f32 %v7746, %v7747
        %vm7750 = vcmask 7168
        %7751 = vst.msk [vmem:[%s274] sm:$0xff] %vm7750, %v7748
        %7752 = vst.msk [vmem:[%s274 + $0x8] sm:$0xff] %vm7750, %v7749
        %p7753 = scmp.lt.s32.totalorder %s18, 1
        %s7754 = scalar_select %p7753, %s18, 1
        %s7755 = smul.addr %s7754, 2
        %s7756 = smul.addr %s7755, 8
        %s7757 = scalar_lea.vmem %s4, %s7756
        // Predicated region
        $region41: #{tpu_custom_call.1} parent=35 // pred_check
          %p7758 = pneg %p140
        $region42: #{tpu_custom_call.1} parent=35 // pred_check_branch
          %7760 = sbr.rel (%p7758) target = $region44
        $region43: #{tpu_custom_call.1} parent=35 // pred_region
          _
        $region44: #{tpu_custom_call.1} parent=35 // pred_fallthru
          _
      $region36: #{tpu_custom_call.1} parent=5 // pred_fallthru
        _
      %p7761 = scmp.le.s32.totalorder 2, %s13
      // Predicated region
      $region45: #{tpu_custom_call.1} parent=5 // pred_check
        %p7762 = pneg %p7761
      $region46: #{tpu_custom_call.1} parent=5 // pred_check_branch
        %7764 = sbr.rel (%p7762) target = $region48
      $region47: #{tpu_custom_call.1} parent=5 // pred_region
        %s7765 = ssub.s32 %s13, 2
        // Predicated region
        $region49: #{tpu_custom_call.1} parent=47 // pred_check
          %p7766 = pneg %p146
        $region50: #{tpu_custom_call.1} parent=47 // pred_check_branch
          %7768 = sbr.rel (%p7766) target = $region52
        $region51: #{tpu_custom_call.1} parent=47 // pred_region
          %p7769 = scmp.lt.s32.totalorder %s19, 1
          %s7770 = scalar_select %p7769, %s19, 1
          %s7771 = smul.addr %s7770, 2
          %s7772 = smul.addr %s7771, 8
          %s7773 = scalar_lea.vmem %s4, %s7772
        $region52: #{tpu_custom_call.1} parent=47 // pred_fallthru
          _
      $region48: #{tpu_custom_call.1} parent=5 // pred_fallthru
        _
    $region6: #{tpu_custom_call.1} parent=1 // loop_footer
      %s17 = sadd.s32 1, %s13
    $region7: #{tpu_custom_call.1} parent=1 // loop_footer_branch
      %12 = sbr.rel target = $region3
    $region8: #{tpu_custom_call.1} parent=1 // loop_exit
      _
    %7774 = vsyncpa [#allocation3], 1
    %s7775 = scalar_lea.sflag [#allocation3], 1
    %7776 = vsyncpa %s7775, 1

</llo_original>
